<compile_context>
chip_gen: v7x
topology: tpu7x:2x2x1
jax: 0.10.0
libtpu: 0.0.40
codegen_flags: <defaults>
</compile_context>

<pallas_src>
import numpy as np

import jax
import jax.numpy as jnp
from jax.experimental import pallas as pl
from jax.experimental.pallas import tpu as pltpu

C1, C2 = 10, 20  # channel counts fixed by the module


# ----------------------------------------------------------------------------
# PyTorch adaptive-pool window indices, padded to a rectangular gather
# ----------------------------------------------------------------------------
def adaptive_pool_indices(in_size, out_size):
    windows = []
    for i in range(out_size):
        start = (i * in_size) // out_size
        end = ((i + 1) * in_size + out_size - 1) // out_size    # ceil
        windows.append((start, end))
    K = max(e - s for s, e in windows)
    gather = np.zeros((out_size, K), dtype=np.int32)
    for i, (s, e) in enumerate(windows):
        for k in range(K):
            gather[i, k] = min(s + k, e - 1)   # duplicating last elem is max-safe
    return gather, K


# ----------------------------------------------------------------------------
# Kernel A: conv1 -> maxpool -> batchnorm -> relu -> conv2 -> maxpool -> relu
# Flat-frame layout: rows = G guard rows + (n, i, j) flattened with stride W
# (+ G trailing guard rows in the input patches), channels on the lane dim.
# ----------------------------------------------------------------------------
def make_conv_kernel(N, H, W, eps=1e-5):
    G = W + 1                 # guard rows; also the flat offset of (i+1, j+1)
    F = N * H * W             # frame size without guards
    L1 = F + G                # rows after pool1   (= F + 2G - (W+1))
    L2 = F - G                # rows of the conv2 output frame
    L3 = L2 - G               # rows after pool2
    cnt = float(N * (H - 1) * (W - 1))   # BN element count per channel

    def pool_s1(x, L):
        # 2x2 / stride-1 max pool expressed as row-shifted maxes in the frame
        return jnp.maximum(jnp.maximum(x[0:L], x[1:L + 1]),
                           jnp.maximum(x[W:W + L], x[W + 1:W + 1 + L]))

    def kernel(xp_ref, w1_ref, b1_ref, g_ref, be_ref, mask_ref, w2_ref,
               b2_ref, o_ref):
        xp = xp_ref[...]                     # (F + 2G, 9)   conv1 im2col patches
        b1 = b1_ref[...][0]                  # (10,)
        gamma = g_ref[...][0]                # (10,)
        beta = be_ref[...][0]                # (10,)
        b2 = b2_ref[...][0]                  # (20,)
        mask = mask_ref[...]                 # (L1, 1) 1.0 at valid pooled rows

        # Conv2d(1 -> 10), padding=1: one (F+2G, 9) @ (9, 10) MXU matmul
        c1 = jnp.dot(xp, w1_ref[...],
                     preferred_element_type=jnp.float32) + b1      # (F+2G, 10)

        # MaxPool2d(2, stride=1)
        p1 = pool_s1(c1, L1)                                       # (L1, 10)

        # BatchNorm2d(10): training-mode batch stats (biased variance) over
        # the valid rows only.
        mean = jnp.sum(p1 * mask, axis=0) / cnt                    # (10,)
        xc = p1 - mean
        var = jnp.sum(xc * xc * mask, axis=0) / cnt                # (10,)
        r1 = jnp.maximum(xc * jax.lax.rsqrt(var + eps) * gamma + beta, 0.0)
        # zero every guard / invalid row -> doubles as conv2's zero padding
        r1m = r1 * mask                                            # (L1, 10)

        # Conv2d(10 -> 20), padding=1: 9 taps, each a (L2,10)@(10,20) matmul.
        acc = None
        for dh in range(3):
            for dw in range(3):
                s = G + (dh - 1) * W + (dw - 1)                    # in [0, 2G]
                t = jnp.dot(r1m[s:s + L2], w2_ref[dh * 3 + dw],
                            preferred_element_type=jnp.float32)
                acc = t if acc is None else acc + t
        c2 = acc + b2                                              # (L2, 20)

        # MaxPool2d(2, stride=1) + ReLU
        o_ref[...] = jnp.maximum(pool_s1(c2, L3), 0.0)             # (L3, 20)

    return kernel, L1, L2, L3


# ----------------------------------------------------------------------------
# Kernel B1: adaptive-max-pool H pass.
# rm[i, (b*W2 + w)] = max_k feat[b, gh[i,k], w]; one (OH,H2)@(H2,B*W2) matmul
# per tap (batch collapsed into the matmul N dim).
# ----------------------------------------------------------------------------
def make_hpool_kernel(K_h):
    def kernel(x_ref, sh_ref, o_ref):
        x = x_ref[...]                                   # (H2, B*W2)
        r = None
        for k in range(K_h):
            t = jnp.dot(sh_ref[k], x, preferred_element_type=jnp.float32)
            r = t if r is None else jnp.maximum(r, t)
        o_ref[...] = r                                   # (OH, B*W2)
    return kernel


# ----------------------------------------------------------------------------
# Kernel B2: adaptive-max-pool W pass.
# out[(b*OH + i), j] = max_l rm[b, i, gw[j,l]]; one (rows,W2)@(W2,128) matmul
# per tap.  Lane-dense 128-wide output; gridded (parallel) over batch blocks.
# ----------------------------------------------------------------------------
def make_wpool_kernel(K_w):
    def kernel(x_ref, sw_ref, o_ref):
        x = x_ref[...]                                   # (rows_blk, W2)
        r = None
        for l in range(K_w):
            t = jnp.dot(x, sw_ref[l], preferred_element_type=jnp.float32)
            r = t if r is None else jnp.maximum(r, t)
        o_ref[...] = r                                   # (rows_blk, 128)
    return kernel


# ----------------------------------------------------------------------------
# Wrapper: full Encoder forward (NCHW in / NCHW out, like PyTorch)
# ----------------------------------------------------------------------------
def encoder_forward(x_nchw, params, out_hw=(100, 100)):
    N, Cin, H, W = x_nchw.shape
    assert Cin == 1, "Encoder expects a single input channel"
    OH, OW = out_hw
    OWp = 128                              # lane-dense padded output width
    H1, W1 = H - 1, W - 1
    H2, W2 = H - 2, W - 2
    G = W + 1
    F = N * H * W
    B = N * C2

    vmem = pl.BlockSpec(memory_space=pltpu.MemorySpace.VMEM)

    # --- glue: conv1 im2col patches in the guarded flat frame (XLA) ---------
    x = x_nchw[:, 0].astype(jnp.float32)                     # (N, H, W)
    xpad = jnp.pad(x, ((0, 0), (1, 1), (1, 1)))              # (N, H+2, W+2)
    taps = [xpad[:, dh:dh + H, dw:dw + W] for dh in range(3) for dw in range(3)]
    pat = jnp.stack(taps, axis=-1).reshape(F, 9)             # (F, 9)
    zg = jnp.zeros((G, 9), jnp.float32)
    xp_flat = jnp.concatenate([zg, pat, zg], axis=0)         # (F + 2G, 9)

    kernel_a, L1, L2, L3 = make_conv_kernel(N, H, W)

    # valid-row mask for the pooled frame (BN stats + conv2 zero padding)
    e = np.arange(L1)
    p = e - G
    ii = (p % (H * W)) // W
    jj = p % W
    mask_np = ((e >= G) & (ii < H1) & (jj < W1)).astype(np.float32)
    maskv = jnp.asarray(mask_np.reshape(L1, 1))

    # parameter re-layout (PyTorch OIHW -> tap-major matmul weights)
    w1col = jnp.transpose(params['w1'], (2, 3, 1, 0)).reshape(9, C1)      # (9,10)
    w2taps = jnp.transpose(params['w2'], (2, 3, 1, 0)).reshape(9, C1, C2)  # (9,10,20)
    b1 = params['b1'].reshape(1, C1)
    b2 = params['b2'].reshape(1, C2)
    gamma = params['gamma'].reshape(1, C1)
    beta = params['beta'].reshape(1, C1)

    # Gridless: BatchNorm couples the whole batch; everything here is tiny.
    feat_flat = pl.pallas_call(
        kernel_a,
        out_shape=jax.ShapeDtypeStruct((L3, C2), jnp.float32),
        in_specs=[vmem] * 8,
        out_specs=vmem,
    )(xp_flat, w1col, b1, gamma, beta, maskv, w2taps, b2)

    # --- glue: flat frame -> spatial -> (H2, B*W2) layout for the H pass ----
    feat = jnp.pad(feat_flat, ((0, F - L3), (0, 0)))
    feat = feat.reshape(N, H, W, C2)[:, :H2, :W2, :]          # (N, H2, W2, C2)
    xT = jnp.transpose(feat, (1, 0, 3, 2)).reshape(H2, B * W2)

    # one-hot selection matrices for the static adaptive-pool windows
    gh, K_h = adaptive_pool_indices(H2, OH)
    gw, K_w = adaptive_pool_indices(W2, OW)
    sh_np = np.zeros((K_h, OH, H2), np.float32)
    for k in range(K_h):
        sh_np[k, np.arange(OH), gh[:, k]] = 1.0
    sw_np = np.zeros((K_w, W2, OWp), np.float32)              # OW padded to 128
    for l in range(K_w):
        sw_np[l, gw[:, l], np.arange(OW)] = 1.0
    shs = jnp.asarray(sh_np)
    sws = jnp.asarray(sw_np)

    # --- adaptive max pool, H pass (gridless, tiny) --------------------------
    rm = pl.pallas_call(
        make_hpool_kernel(K_h),
        out_shape=jax.ShapeDtypeStruct((OH, B * W2), jnp.float32),
        in_specs=[vmem, vmem],
        out_specs=vmem,
    )(xT, shs)

    # --- glue: (OH, B, W2) -> (B*OH, W2) -------------------------------------
    rm2 = jnp.transpose(rm.reshape(OH, B, W2), (1, 0, 2)).reshape(B * OH, W2)

    # --- adaptive max pool, W pass: batch-blocked parallel grid --------------
    nblk = 1
    for cand in (8, 4, 2, 1):
        if B % cand == 0 and ((B // cand) * OH) % 8 == 0:
            nblk = cand
            break
    rows_blk = (B // nblk) * OH
    outp = pl.pallas_call(
        make_wpool_kernel(K_w),
        out_shape=jax.ShapeDtypeStruct((B * OH, OWp), jnp.float32),
        grid=(nblk,),
        in_specs=[pl.BlockSpec((rows_blk, W2), lambda i: (i, 0)),
                  pl.BlockSpec((K_w, W2, OWp), lambda i: (0, 0, 0))],
        out_specs=pl.BlockSpec((rows_blk, OWp), lambda i: (i, 0)),
        compiler_params=pltpu.CompilerParams(
            dimension_semantics=("parallel",)),
    )(rm2, sws)

    # lane-padded columns -> real output, NCHW like PyTorch
    return outp.reshape(N, C2, OH, OWp)[..., :OW]


# ----------------------------------------------------------------------------
# Pure-JAX reference (for correctness checking)
# ----------------------------------------------------------------------------
def reference_forward(x, params, out_hw=(100, 100)):
    dn = ('NCHW', 'OIHW', 'NCHW')
    w1, b1 = params['w1'], params['b1']
    w2, b2 = params['w2'], params['b2']
    gamma, beta = params['gamma'], params['beta']

    c1 = jax.lax.conv_general_dilated(x, w1, (1, 1), ((1, 1), (1, 1)),
                                      dimension_numbers=dn)
    c1 = c1 + b1[None, :, None, None]
    p1 = jax.lax.reduce_window(c1, -jnp.inf, jax.lax.max,
                               (1, 1, 2, 2), (1, 1, 1, 1), 'VALID')
    mean = p1.mean(axis=(0, 2, 3), keepdims=True)
    var = ((p1 - mean) ** 2).mean(axis=(0, 2, 3), keepdims=True)
    bn = (p1 - mean) / jnp.sqrt(var + 1e-5)
    bn = bn * gamma[None, :, None, None] + beta[None, :, None, None]
    r1 = jnp.maximum(bn, 0.0)

    c2 = jax.lax.conv_general_dilated(r1, w2, (1, 1), ((1, 1), (1, 1)),
                                      dimension_numbers=dn)
    c2 = c2 + b2[None, :, None, None]
    p2 = jax.lax.reduce_window(c2, -jnp.inf, jax.lax.max,
                               (1, 1, 2, 2), (1, 1, 1, 1), 'VALID')
    r2 = jnp.maximum(p2, 0.0)

    OH, OW = out_hw
    gh, K_h = adaptive_pool_indices(r2.shape[2], OH)
    gw, K_w = adaptive_pool_indices(r2.shape[3], OW)
    rows = jnp.stack([r2[:, :, gh[:, k], :] for k in range(K_h)], 0).max(0)
    out = jnp.stack([rows[:, :, :, gw[:, l]] for l in range(K_w)], 0).max(0)
    return out


if __name__ == "__main__":
    key = jax.random.PRNGKey(0)
    k_x, k_w1, k_b1, k_g, k_be, k_w2, k_b2 = jax.random.split(key, 7)

    # Small input consistent with the module: N=2, C=1, H=W=16
    x = jax.random.normal(k_x, (2, 1, 16, 16), dtype=jnp.float32)

    # Deterministic synthetic parameters (shapes from the module's __init__)
    params = {
        'w1': 0.2 * jax.random.normal(k_w1, (10, 1, 3, 3), dtype=jnp.float32),
        'b1': 0.1 * jax.random.normal(k_b1, (10,), dtype=jnp.float32),
        'gamma': 1.0 + 0.1 * jax.random.normal(k_g, (10,), dtype=jnp.float32),
        'beta': 0.1 * jax.random.normal(k_be, (10,), dtype=jnp.float32),
        'w2': 0.1 * jax.random.normal(k_w2, (20, 10, 3, 3), dtype=jnp.float32),
        'b2': 0.1 * jax.random.normal(k_b2, (20,), dtype=jnp.float32),
    }
    # TODO(synk): BatchNorm running-stat buffer updates (training-mode state
    # mutation) are not modeled; the forward output itself uses batch stats,
    # matching PyTorch training-mode behavior.

    out = encoder_forward(x, params)
    out = jax.block_until_ready(out)
    assert out.shape == (2, 20, 100, 100), out.shape

    ref = jax.block_until_ready(reference_forward(x, params))
    np.testing.assert_allclose(np.asarray(out), np.asarray(ref),
                               rtol=1e-4, atol=1e-4)
    print("KERNEL_OK")
</pallas_src>

<mosaic_0001>
module attributes {stable_mosaic.version = 11 : i64} {
  func.func @kernel(%arg0: memref<546x9xf32, #tpu.memory_space<vmem>>, %arg1: memref<9x10xf32, #tpu.memory_space<vmem>>, %arg2: memref<1x10xf32, #tpu.memory_space<vmem>>, %arg3: memref<1x10xf32, #tpu.memory_space<vmem>>, %arg4: memref<1x10xf32, #tpu.memory_space<vmem>>, %arg5: memref<529x1xf32, #tpu.memory_space<vmem>>, %arg6: memref<9x10x20xf32, #tpu.memory_space<vmem>>, %arg7: memref<1x20xf32, #tpu.memory_space<vmem>>, %arg8: memref<478x20xf32, #tpu.memory_space<vmem>>) attributes {dimension_semantics = [], scalar_prefetch = 0 : i64, scratch_operands = 0 : i64, tpu.core_type = #tpu.core_type<tc>} {
    %c0 = arith.constant 0 : index
    %c0_0 = arith.constant 0 : index
    %0 = vector.load %arg0[%c0, %c0_0] : memref<546x9xf32, #tpu.memory_space<vmem>>, vector<546x9xf32>
    %c0_1 = arith.constant 0 : index
    %c0_2 = arith.constant 0 : index
    %1 = vector.load %arg2[%c0_1, %c0_2] : memref<1x10xf32, #tpu.memory_space<vmem>>, vector<1x10xf32>
    %2 = vector.shape_cast %1 : vector<1x10xf32> to vector<10xf32>
    %c0_3 = arith.constant 0 : index
    %c0_4 = arith.constant 0 : index
    %3 = vector.load %arg3[%c0_3, %c0_4] : memref<1x10xf32, #tpu.memory_space<vmem>>, vector<1x10xf32>
    %4 = vector.shape_cast %3 : vector<1x10xf32> to vector<10xf32>
    %c0_5 = arith.constant 0 : index
    %c0_6 = arith.constant 0 : index
    %5 = vector.load %arg4[%c0_5, %c0_6] : memref<1x10xf32, #tpu.memory_space<vmem>>, vector<1x10xf32>
    %6 = vector.shape_cast %5 : vector<1x10xf32> to vector<10xf32>
    %c0_7 = arith.constant 0 : index
    %c0_8 = arith.constant 0 : index
    %7 = vector.load %arg7[%c0_7, %c0_8] : memref<1x20xf32, #tpu.memory_space<vmem>>, vector<1x20xf32>
    %8 = vector.shape_cast %7 : vector<1x20xf32> to vector<20xf32>
    %c0_9 = arith.constant 0 : index
    %c0_10 = arith.constant 0 : index
    %9 = vector.load %arg5[%c0_9, %c0_10] : memref<529x1xf32, #tpu.memory_space<vmem>>, vector<529x1xf32>
    %c0_11 = arith.constant 0 : index
    %c0_12 = arith.constant 0 : index
    %10 = vector.load %arg1[%c0_11, %c0_12] : memref<9x10xf32, #tpu.memory_space<vmem>>, vector<9x10xf32>
    %cst = arith.constant dense<0.000000e+00> : vector<546x10xf32>
    %11 = tpu.matmul %0, %10, %cst {dimension_numbers = #tpu.dot_dimension_numbers<[1], [0], [0], [1], [0, 0, 1, 1], [], []>} : vector<546x9xf32>, vector<9x10xf32>, vector<546x10xf32> -> vector<546x10xf32>
    %12 = vector.shape_cast %2 : vector<10xf32> to vector<1x10xf32>
    %13 = vector.broadcast %12 : vector<1x10xf32> to vector<546x10xf32>
    %14 = arith.addf %11, %13 : vector<546x10xf32>
    %15 = vector.extract_strided_slice %14 {offsets = [0, 0], sizes = [529, 10], strides = [1, 1]} : vector<546x10xf32> to vector<529x10xf32>
    %16 = vector.extract_strided_slice %14 {offsets = [1, 0], sizes = [529, 10], strides = [1, 1]} : vector<546x10xf32> to vector<529x10xf32>
    %17 = arith.maximumf %15, %16 : vector<529x10xf32>
    %18 = vector.extract_strided_slice %14 {offsets = [16, 0], sizes = [529, 10], strides = [1, 1]} : vector<546x10xf32> to vector<529x10xf32>
    %19 = vector.extract_strided_slice %14 {offsets = [17, 0], sizes = [529, 10], strides = [1, 1]} : vector<546x10xf32> to vector<529x10xf32>
    %20 = arith.maximumf %18, %19 : vector<529x10xf32>
    %21 = arith.maximumf %17, %20 : vector<529x10xf32>
    %22 = vector.broadcast %9 : vector<529x1xf32> to vector<529x10xf32>
    %23 = arith.mulf %21, %22 : vector<529x10xf32>
    %cst_13 = arith.constant dense<0.000000e+00> : vector<10xf32>
    %24 = vector.multi_reduction <add>, %23, %cst_13 [0] : vector<529x10xf32> to vector<10xf32>
    %cst_14 = arith.constant 4.500000e+02 : f32
    %25 = vector.broadcast %cst_14 : f32 to vector<10xf32>
    %26 = arith.divf %24, %25 : vector<10xf32>
    %27 = vector.shape_cast %26 : vector<10xf32> to vector<1x10xf32>
    %28 = vector.broadcast %27 : vector<1x10xf32> to vector<529x10xf32>
    %29 = arith.subf %21, %28 : vector<529x10xf32>
    %30 = arith.mulf %29, %29 : vector<529x10xf32>
    %31 = vector.broadcast %9 : vector<529x1xf32> to vector<529x10xf32>
    %32 = arith.mulf %30, %31 : vector<529x10xf32>
    %cst_15 = arith.constant dense<0.000000e+00> : vector<10xf32>
    %33 = vector.multi_reduction <add>, %32, %cst_15 [0] : vector<529x10xf32> to vector<10xf32>
    %cst_16 = arith.constant 4.500000e+02 : f32
    %34 = vector.broadcast %cst_16 : f32 to vector<10xf32>
    %35 = arith.divf %33, %34 : vector<10xf32>
    %cst_17 = arith.constant 9.99999974E-6 : f32
    %36 = vector.broadcast %cst_17 : f32 to vector<10xf32>
    %37 = arith.addf %35, %36 : vector<10xf32>
    %38 = math.rsqrt %37 : vector<10xf32>
    %39 = vector.shape_cast %38 : vector<10xf32> to vector<1x10xf32>
    %40 = vector.broadcast %39 : vector<1x10xf32> to vector<529x10xf32>
    %41 = arith.mulf %29, %40 : vector<529x10xf32>
    %42 = vector.shape_cast %4 : vector<10xf32> to vector<1x10xf32>
    %43 = vector.broadcast %42 : vector<1x10xf32> to vector<529x10xf32>
    %44 = arith.mulf %41, %43 : vector<529x10xf32>
    %45 = vector.shape_cast %6 : vector<10xf32> to vector<1x10xf32>
    %46 = vector.broadcast %45 : vector<1x10xf32> to vector<529x10xf32>
    %47 = arith.addf %44, %46 : vector<529x10xf32>
    %cst_18 = arith.constant 0.000000e+00 : f32
    %48 = vector.broadcast %cst_18 : f32 to vector<529x10xf32>
    %49 = arith.maximumf %47, %48 : vector<529x10xf32>
    %50 = vector.broadcast %9 : vector<529x1xf32> to vector<529x10xf32>
    %51 = arith.mulf %49, %50 : vector<529x10xf32>
    %52 = vector.extract_strided_slice %51 {offsets = [0, 0], sizes = [495, 10], strides = [1, 1]} : vector<529x10xf32> to vector<495x10xf32>
    %c0_19 = arith.constant 0 : index
    %c0_20 = arith.constant 0 : index
    %c0_21 = arith.constant 0 : index
    %53 = vector.load %arg6[%c0_19, %c0_20, %c0_21] : memref<9x10x20xf32, #tpu.memory_space<vmem>>, vector<1x10x20xf32>
    %54 = vector.shape_cast %53 : vector<1x10x20xf32> to vector<10x20xf32>
    %cst_22 = arith.constant dense<0.000000e+00> : vector<495x20xf32>
    %55 = tpu.matmul %52, %54, %cst_22 {dimension_numbers = #tpu.dot_dimension_numbers<[1], [0], [0], [1], [0, 0, 1, 1], [], []>} : vector<495x10xf32>, vector<10x20xf32>, vector<495x20xf32> -> vector<495x20xf32>
    %56 = vector.extract_strided_slice %51 {offsets = [1, 0], sizes = [495, 10], strides = [1, 1]} : vector<529x10xf32> to vector<495x10xf32>
    %c1 = arith.constant 1 : index
    %c0_23 = arith.constant 0 : index
    %c0_24 = arith.constant 0 : index
    %57 = vector.load %arg6[%c1, %c0_23, %c0_24] : memref<9x10x20xf32, #tpu.memory_space<vmem>>, vector<1x10x20xf32>
    %58 = vector.shape_cast %57 : vector<1x10x20xf32> to vector<10x20xf32>
    %cst_25 = arith.constant dense<0.000000e+00> : vector<495x20xf32>
    %59 = tpu.matmul %56, %58, %cst_25 {dimension_numbers = #tpu.dot_dimension_numbers<[1], [0], [0], [1], [0, 0, 1, 1], [], []>} : vector<495x10xf32>, vector<10x20xf32>, vector<495x20xf32> -> vector<495x20xf32>
    %60 = arith.addf %55, %59 : vector<495x20xf32>
    %61 = vector.extract_strided_slice %51 {offsets = [2, 0], sizes = [495, 10], strides = [1, 1]} : vector<529x10xf32> to vector<495x10xf32>
    %c2 = arith.constant 2 : index
    %c0_26 = arith.constant 0 : index
    %c0_27 = arith.constant 0 : index
    %62 = vector.load %arg6[%c2, %c0_26, %c0_27] : memref<9x10x20xf32, #tpu.memory_space<vmem>>, vector<1x10x20xf32>
    %63 = vector.shape_cast %62 : vector<1x10x20xf32> to vector<10x20xf32>
    %cst_28 = arith.constant dense<0.000000e+00> : vector<495x20xf32>
    %64 = tpu.matmul %61, %63, %cst_28 {dimension_numbers = #tpu.dot_dimension_numbers<[1], [0], [0], [1], [0, 0, 1, 1], [], []>} : vector<495x10xf32>, vector<10x20xf32>, vector<495x20xf32> -> vector<495x20xf32>
    %65 = arith.addf %60, %64 : vector<495x20xf32>
    %66 = vector.extract_strided_slice %51 {offsets = [16, 0], sizes = [495, 10], strides = [1, 1]} : vector<529x10xf32> to vector<495x10xf32>
    %c3 = arith.constant 3 : index
    %c0_29 = arith.constant 0 : index
    %c0_30 = arith.constant 0 : index
    %67 = vector.load %arg6[%c3, %c0_29, %c0_30] : memref<9x10x20xf32, #tpu.memory_space<vmem>>, vector<1x10x20xf32>
    %68 = vector.shape_cast %67 : vector<1x10x20xf32> to vector<10x20xf32>
    %cst_31 = arith.constant dense<0.000000e+00> : vector<495x20xf32>
    %69 = tpu.matmul %66, %68, %cst_31 {dimension_numbers = #tpu.dot_dimension_numbers<[1], [0], [0], [1], [0, 0, 1, 1], [], []>} : vector<495x10xf32>, vector<10x20xf32>, vector<495x20xf32> -> vector<495x20xf32>
    %70 = arith.addf %65, %69 : vector<495x20xf32>
    %71 = vector.extract_strided_slice %51 {offsets = [17, 0], sizes = [495, 10], strides = [1, 1]} : vector<529x10xf32> to vector<495x10xf32>
    %c4 = arith.constant 4 : index
    %c0_32 = arith.constant 0 : index
    %c0_33 = arith.constant 0 : index
    %72 = vector.load %arg6[%c4, %c0_32, %c0_33] : memref<9x10x20xf32, #tpu.memory_space<vmem>>, vector<1x10x20xf32>
    %73 = vector.shape_cast %72 : vector<1x10x20xf32> to vector<10x20xf32>
    %cst_34 = arith.constant dense<0.000000e+00> : vector<495x20xf32>
    %74 = tpu.matmul %71, %73, %cst_34 {dimension_numbers = #tpu.dot_dimension_numbers<[1], [0], [0], [1], [0, 0, 1, 1], [], []>} : vector<495x10xf32>, vector<10x20xf32>, vector<495x20xf32> -> vector<495x20xf32>
    %75 = arith.addf %70, %74 : vector<495x20xf32>
    %76 = vector.extract_strided_slice %51 {offsets = [18, 0], sizes = [495, 10], strides = [1, 1]} : vector<529x10xf32> to vector<495x10xf32>
    %c5 = arith.constant 5 : index
    %c0_35 = arith.constant 0 : index
    %c0_36 = arith.constant 0 : index
    %77 = vector.load %arg6[%c5, %c0_35, %c0_36] : memref<9x10x20xf32, #tpu.memory_space<vmem>>, vector<1x10x20xf32>
    %78 = vector.shape_cast %77 : vector<1x10x20xf32> to vector<10x20xf32>
    %cst_37 = arith.constant dense<0.000000e+00> : vector<495x20xf32>
    %79 = tpu.matmul %76, %78, %cst_37 {dimension_numbers = #tpu.dot_dimension_numbers<[1], [0], [0], [1], [0, 0, 1, 1], [], []>} : vector<495x10xf32>, vector<10x20xf32>, vector<495x20xf32> -> vector<495x20xf32>
    %80 = arith.addf %75, %79 : vector<495x20xf32>
    %81 = vector.extract_strided_slice %51 {offsets = [32, 0], sizes = [495, 10], strides = [1, 1]} : vector<529x10xf32> to vector<495x10xf32>
    %c6 = arith.constant 6 : index
    %c0_38 = arith.constant 0 : index
    %c0_39 = arith.constant 0 : index
    %82 = vector.load %arg6[%c6, %c0_38, %c0_39] : memref<9x10x20xf32, #tpu.memory_space<vmem>>, vector<1x10x20xf32>
    %83 = vector.shape_cast %82 : vector<1x10x20xf32> to vector<10x20xf32>
    %cst_40 = arith.constant dense<0.000000e+00> : vector<495x20xf32>
    %84 = tpu.matmul %81, %83, %cst_40 {dimension_numbers = #tpu.dot_dimension_numbers<[1], [0], [0], [1], [0, 0, 1, 1], [], []>} : vector<495x10xf32>, vector<10x20xf32>, vector<495x20xf32> -> vector<495x20xf32>
    %85 = arith.addf %80, %84 : vector<495x20xf32>
    %86 = vector.extract_strided_slice %51 {offsets = [33, 0], sizes = [495, 10], strides = [1, 1]} : vector<529x10xf32> to vector<495x10xf32>
    %c7 = arith.constant 7 : index
    %c0_41 = arith.constant 0 : index
    %c0_42 = arith.constant 0 : index
    %87 = vector.load %arg6[%c7, %c0_41, %c0_42] : memref<9x10x20xf32, #tpu.memory_space<vmem>>, vector<1x10x20xf32>
    %88 = vector.shape_cast %87 : vector<1x10x20xf32> to vector<10x20xf32>
    %cst_43 = arith.constant dense<0.000000e+00> : vector<495x20xf32>
    %89 = tpu.matmul %86, %88, %cst_43 {dimension_numbers = #tpu.dot_dimension_numbers<[1], [0], [0], [1], [0, 0, 1, 1], [], []>} : vector<495x10xf32>, vector<10x20xf32>, vector<495x20xf32> -> vector<495x20xf32>
    %90 = arith.addf %85, %89 : vector<495x20xf32>
    %91 = vector.extract_strided_slice %51 {offsets = [34, 0], sizes = [495, 10], strides = [1, 1]} : vector<529x10xf32> to vector<495x10xf32>
    %c8 = arith.constant 8 : index
    %c0_44 = arith.constant 0 : index
    %c0_45 = arith.constant 0 : index
    %92 = vector.load %arg6[%c8, %c0_44, %c0_45] : memref<9x10x20xf32, #tpu.memory_space<vmem>>, vector<1x10x20xf32>
    %93 = vector.shape_cast %92 : vector<1x10x20xf32> to vector<10x20xf32>
    %cst_46 = arith.constant dense<0.000000e+00> : vector<495x20xf32>
    %94 = tpu.matmul %91, %93, %cst_46 {dimension_numbers = #tpu.dot_dimension_numbers<[1], [0], [0], [1], [0, 0, 1, 1], [], []>} : vector<495x10xf32>, vector<10x20xf32>, vector<495x20xf32> -> vector<495x20xf32>
    %95 = arith.addf %90, %94 : vector<495x20xf32>
    %96 = vector.shape_cast %8 : vector<20xf32> to vector<1x20xf32>
    %97 = vector.broadcast %96 : vector<1x20xf32> to vector<495x20xf32>
    %98 = arith.addf %95, %97 : vector<495x20xf32>
    %99 = vector.extract_strided_slice %98 {offsets = [0, 0], sizes = [478, 20], strides = [1, 1]} : vector<495x20xf32> to vector<478x20xf32>
    %100 = vector.extract_strided_slice %98 {offsets = [1, 0], sizes = [478, 20], strides = [1, 1]} : vector<495x20xf32> to vector<478x20xf32>
    %101 = arith.maximumf %99, %100 : vector<478x20xf32>
    %102 = vector.extract_strided_slice %98 {offsets = [16, 0], sizes = [478, 20], strides = [1, 1]} : vector<495x20xf32> to vector<478x20xf32>
    %103 = vector.extract_strided_slice %98 {offsets = [17, 0], sizes = [478, 20], strides = [1, 1]} : vector<495x20xf32> to vector<478x20xf32>
    %104 = arith.maximumf %102, %103 : vector<478x20xf32>
    %105 = arith.maximumf %101, %104 : vector<478x20xf32>
    %cst_47 = arith.constant 0.000000e+00 : f32
    %106 = vector.broadcast %cst_47 : f32 to vector<478x20xf32>
    %107 = arith.maximumf %105, %106 : vector<478x20xf32>
    %c0_48 = arith.constant 0 : index
    %c0_49 = arith.constant 0 : index
    %108 = vector.load %arg8[%c0_48, %c0_49] : memref<478x20xf32, #tpu.memory_space<vmem>>, vector<478x20xf32>
    tpu.vector_store %arg8[%c0_48, %c0_49], %107 {strides = array<i32>} : memref<478x20xf32, #tpu.memory_space<vmem>>, vector<478x20xf32>,
    return
  }
}

</mosaic_0001>

<llo_original>
// kernel: tpu_custom_call.1
$region0: #{tpu_custom_call.1}
  #allocation0 [shape = 'u32[]', space=smem, size = 0x4, offset = 0x4, fixed_abs, tag = 'smem constant byte address 0x4 - core index']
  #allocation1 [shape = 'u32[144,128]{1,0:T(1,128)}', space=vmem, size = 0x12000, scoped, tag = 'internal scratch']
  %s0 = inlined_call_operand.vmem [shape: f32[546,9], index: 0, kind: input, shape index: {}]
  %s1 = inlined_call_operand.vmem [shape: f32[9,10], index: 1, kind: input, shape index: {}]
  %s2 = inlined_call_operand.vmem [shape: f32[1,10], index: 2, kind: input, shape index: {}]
  %s3 = inlined_call_operand.vmem [shape: f32[1,10], index: 3, kind: input, shape index: {}]
  %s4 = inlined_call_operand.vmem [shape: f32[1,10], index: 4, kind: input, shape index: {}]
  %s5 = inlined_call_operand.vmem [shape: f32[529,1], index: 5, kind: input, shape index: {}]
  %s6 = inlined_call_operand.vmem [shape: f32[9,10,20], index: 6, kind: input, shape index: {}]
  %s7 = inlined_call_operand.vmem [shape: f32[1,20], index: 7, kind: input, shape index: {}]
  %s8 = inlined_call_operand.vmem [shape: f32[478,20], index: 8, kind: output, shape index: {}]
  %s9 = sld [smem:[#allocation0]]
  $region42: #{tpu_custom_call.1} parent=0
    _
  %s11 = ssub.s32 1, %s9
  %s12 = scalar_select 0, %s11, %s9
  // Predicated region
  $region2: #{tpu_custom_call.1} parent=0 // pred_check
    _
  $region3: #{tpu_custom_call.1} parent=0 // pred_check_branch
    %14 = sbr.rel (0) target = $region5
  $region4: #{tpu_custom_call.1} parent=0 // pred_region
    _
  $region5: #{tpu_custom_call.1} parent=0 // pred_fallthru
    _
  // Predicated region
  $region6: #{tpu_custom_call.1} parent=0 // pred_check
    _
  $region7: #{tpu_custom_call.1} parent=0 // pred_check_branch
    %16 = sbr.rel (0) target = $region9
  $region8: #{tpu_custom_call.1} parent=0 // pred_region
    _
  $region9: #{tpu_custom_call.1} parent=0 // pred_fallthru
    _
  // Predicated region
  $region10: #{tpu_custom_call.1} parent=0 // pred_check
    _
  $region11: #{tpu_custom_call.1} parent=0 // pred_check_branch
    %18 = sbr.rel (0) target = $region13
  $region12: #{tpu_custom_call.1} parent=0 // pred_region
    _
  $region13: #{tpu_custom_call.1} parent=0 // pred_fallthru
    _
  // Predicated region
  $region14: #{tpu_custom_call.1} parent=0 // pred_check
    _
  $region15: #{tpu_custom_call.1} parent=0 // pred_check_branch
    %20 = sbr.rel (0) target = $region17
  $region16: #{tpu_custom_call.1} parent=0 // pred_region
    _
  $region17: #{tpu_custom_call.1} parent=0 // pred_fallthru
    _
  // Predicated region
  $region18: #{tpu_custom_call.1} parent=0 // pred_check
    _
  $region19: #{tpu_custom_call.1} parent=0 // pred_check_branch
    %22 = sbr.rel (0) target = $region21
  $region20: #{tpu_custom_call.1} parent=0 // pred_region
    _
  $region21: #{tpu_custom_call.1} parent=0 // pred_fallthru
    _
  // Predicated region
  $region22: #{tpu_custom_call.1} parent=0 // pred_check
    _
  $region23: #{tpu_custom_call.1} parent=0 // pred_check_branch
    %24 = sbr.rel (0) target = $region25
  $region24: #{tpu_custom_call.1} parent=0 // pred_region
    _
  $region25: #{tpu_custom_call.1} parent=0 // pred_fallthru
    _
  // Predicated region
  $region26: #{tpu_custom_call.1} parent=0 // pred_check
    _
  $region27: #{tpu_custom_call.1} parent=0 // pred_check_branch
    %26 = sbr.rel (0) target = $region29
  $region28: #{tpu_custom_call.1} parent=0 // pred_region
    _
  $region29: #{tpu_custom_call.1} parent=0 // pred_fallthru
    _
  // Predicated region
  $region30: #{tpu_custom_call.1} parent=0 // pred_check
    _
  $region31: #{tpu_custom_call.1} parent=0 // pred_check_branch
    %28 = sbr.rel (0) target = $region33
  $region32: #{tpu_custom_call.1} parent=0 // pred_region
    _
  $region33: #{tpu_custom_call.1} parent=0 // pred_fallthru
    _
  %v29 = vld [vmem:[%s0] sm:$0xff]
  %v30 = vld [vmem:[%s0 + $0x8] sm:$0xff]
  %v31 = vld [vmem:[%s0 + $0x10] sm:$0xff]
  %v32 = vld [vmem:[%s0 + $0x18] sm:$0xff]
  %v33 = vld [vmem:[%s0 + $0x20] sm:$0xff]
  %v34 = vld [vmem:[%s0 + $0x28] sm:$0xff]
  %v35 = vld [vmem:[%s0 + $0x30] sm:$0xff]
  %v36 = vld [vmem:[%s0 + $0x38] sm:$0xff]
  %v37 = vld [vmem:[%s0 + $0x40] sm:$0xff]
  %v38 = vld [vmem:[%s0 + $0x48] sm:$0xff]
  %v39 = vld [vmem:[%s0 + $0x50] sm:$0xff]
  %v40 = vld [vmem:[%s0 + $0x58] sm:$0xff]
  %v41 = vld [vmem:[%s0 + $0x60] sm:$0xff]
  %v42 = vld [vmem:[%s0 + $0x68] sm:$0xff]
  %v43 = vld [vmem:[%s0 + $0x70] sm:$0xff]
  %v44 = vld [vmem:[%s0 + $0x78] sm:$0xff]
  %v45 = vld [vmem:[%s0 + $0x80] sm:$0xff]
  %v46 = vld [vmem:[%s0 + $0x88] sm:$0xff]
  %v47 = vld [vmem:[%s0 + $0x90] sm:$0xff]
  %v48 = vld [vmem:[%s0 + $0x98] sm:$0xff]
  %v49 = vld [vmem:[%s0 + $0xa0] sm:$0xff]
  %v50 = vld [vmem:[%s0 + $0xa8] sm:$0xff]
  %v51 = vld [vmem:[%s0 + $0xb0] sm:$0xff]
  %v52 = vld [vmem:[%s0 + $0xb8] sm:$0xff]
  %v53 = vld [vmem:[%s0 + $0xc0] sm:$0xff]
  %v54 = vld [vmem:[%s0 + $0xc8] sm:$0xff]
  %v55 = vld [vmem:[%s0 + $0xd0] sm:$0xff]
  %v56 = vld [vmem:[%s0 + $0xd8] sm:$0xff]
  %v57 = vld [vmem:[%s0 + $0xe0] sm:$0xff]
  %v58 = vld [vmem:[%s0 + $0xe8] sm:$0xff]
  %v59 = vld [vmem:[%s0 + $0xf0] sm:$0xff]
  %v60 = vld [vmem:[%s0 + $0xf8] sm:$0xff]
  %v61 = vld [vmem:[%s0 + $0x100] sm:$0xff]
  %v62 = vld [vmem:[%s0 + $0x108] sm:$0xff]
  %v63 = vld [vmem:[%s0 + $0x110] sm:$0xff]
  %v64 = vld [vmem:[%s0 + $0x118] sm:$0xff]
  %v65 = vld [vmem:[%s0 + $0x120] sm:$0xff]
  %v66 = vld [vmem:[%s0 + $0x128] sm:$0xff]
  %v67 = vld [vmem:[%s0 + $0x130] sm:$0xff]
  %v68 = vld [vmem:[%s0 + $0x138] sm:$0xff]
  %v69 = vld [vmem:[%s0 + $0x140] sm:$0xff]
  %v70 = vld [vmem:[%s0 + $0x148] sm:$0xff]
  %v71 = vld [vmem:[%s0 + $0x150] sm:$0xff]
  %v72 = vld [vmem:[%s0 + $0x158] sm:$0xff]
  %v73 = vld [vmem:[%s0 + $0x160] sm:$0xff]
  %v74 = vld [vmem:[%s0 + $0x168] sm:$0xff]
  %v75 = vld [vmem:[%s0 + $0x170] sm:$0xff]
  %v76 = vld [vmem:[%s0 + $0x178] sm:$0xff]
  %v77 = vld [vmem:[%s0 + $0x180] sm:$0xff]
  %v78 = vld [vmem:[%s0 + $0x188] sm:$0xff]
  %v79 = vld [vmem:[%s0 + $0x190] sm:$0xff]
  %v80 = vld [vmem:[%s0 + $0x198] sm:$0xff]
  %v81 = vld [vmem:[%s0 + $0x1a0] sm:$0xff]
  %v82 = vld [vmem:[%s0 + $0x1a8] sm:$0xff]
  %v83 = vld [vmem:[%s0 + $0x1b0] sm:$0xff]
  %v84 = vld [vmem:[%s0 + $0x1b8] sm:$0xff]
  %v85 = vld [vmem:[%s0 + $0x1c0] sm:$0xff]
  %v86 = vld [vmem:[%s0 + $0x1c8] sm:$0xff]
  %v87 = vld [vmem:[%s0 + $0x1d0] sm:$0xff]
  %v88 = vld [vmem:[%s0 + $0x1d8] sm:$0xff]
  %v89 = vld [vmem:[%s0 + $0x1e0] sm:$0xff]
  %v90 = vld [vmem:[%s0 + $0x1e8] sm:$0xff]
  %v91 = vld [vmem:[%s0 + $0x1f0] sm:$0xff]
  %v92 = vld [vmem:[%s0 + $0x1f8] sm:$0xff]
  %v93 = vld [vmem:[%s0 + $0x200] sm:$0xff]
  %v94 = vld [vmem:[%s0 + $0x208] sm:$0xff]
  %v95 = vld [vmem:[%s0 + $0x210] sm:$0xff]
  %v96 = vld [vmem:[%s0 + $0x218] sm:$0xff]
  %v97 = vld [vmem:[%s0 + $0x220] sm:$0x3]
  %v98 = vld [vmem:[%s2] sm:$0x1]
  %v99 = vld [vmem:[%s3] sm:$0x1]
  %v100 = vld [vmem:[%s4] sm:$0x1]
  %v101 = vld [vmem:[%s7] sm:$0x1]
  %v102 = vld [vmem:[%s5] sm:$0xff]
  %v103 = vld [vmem:[%s5 + $0x8] sm:$0xff]
  %v104 = vld [vmem:[%s5 + $0x10] sm:$0xff]
  %v105 = vld [vmem:[%s5 + $0x18] sm:$0xff]
  %v106 = vld [vmem:[%s5 + $0x20] sm:$0xff]
  %v107 = vld [vmem:[%s5 + $0x28] sm:$0xff]
  %v108 = vld [vmem:[%s5 + $0x30] sm:$0xff]
  %v109 = vld [vmem:[%s5 + $0x38] sm:$0xff]
  %v110 = vld [vmem:[%s5 + $0x40] sm:$0xff]
  %v111 = vld [vmem:[%s5 + $0x48] sm:$0xff]
  %v112 = vld [vmem:[%s5 + $0x50] sm:$0xff]
  %v113 = vld [vmem:[%s5 + $0x58] sm:$0xff]
  %v114 = vld [vmem:[%s5 + $0x60] sm:$0xff]
  %v115 = vld [vmem:[%s5 + $0x68] sm:$0xff]
  %v116 = vld [vmem:[%s5 + $0x70] sm:$0xff]
  %v117 = vld [vmem:[%s5 + $0x78] sm:$0xff]
  %v118 = vld [vmem:[%s5 + $0x80] sm:$0xff]
  %v119 = vld [vmem:[%s5 + $0x88] sm:$0xff]
  %v120 = vld [vmem:[%s5 + $0x90] sm:$0xff]
  %v121 = vld [vmem:[%s5 + $0x98] sm:$0xff]
  %v122 = vld [vmem:[%s5 + $0xa0] sm:$0xff]
  %v123 = vld [vmem:[%s5 + $0xa8] sm:$0xff]
  %v124 = vld [vmem:[%s5 + $0xb0] sm:$0xff]
  %v125 = vld [vmem:[%s5 + $0xb8] sm:$0xff]
  %v126 = vld [vmem:[%s5 + $0xc0] sm:$0xff]
  %v127 = vld [vmem:[%s5 + $0xc8] sm:$0xff]
  %v128 = vld [vmem:[%s5 + $0xd0] sm:$0xff]
  %v129 = vld [vmem:[%s5 + $0xd8] sm:$0xff]
  %v130 = vld [vmem:[%s5 + $0xe0] sm:$0xff]
  %v131 = vld [vmem:[%s5 + $0xe8] sm:$0xff]
  %v132 = vld [vmem:[%s5 + $0xf0] sm:$0xff]
  %v133 = vld [vmem:[%s5 + $0xf8] sm:$0xff]
  %v134 = vld [vmem:[%s5 + $0x100] sm:$0xff]
  %v135 = vld [vmem:[%s5 + $0x108] sm:$0xff]
  %v136 = vld [vmem:[%s5 + $0x110] sm:$0xff]
  %v137 = vld [vmem:[%s5 + $0x118] sm:$0xff]
  %v138 = vld [vmem:[%s5 + $0x120] sm:$0xff]
  %v139 = vld [vmem:[%s5 + $0x128] sm:$0xff]
  %v140 = vld [vmem:[%s5 + $0x130] sm:$0xff]
  %v141 = vld [vmem:[%s5 + $0x138] sm:$0xff]
  %v142 = vld [vmem:[%s5 + $0x140] sm:$0xff]
  %v143 = vld [vmem:[%s5 + $0x148] sm:$0xff]
  %v144 = vld [vmem:[%s5 + $0x150] sm:$0xff]
  %v145 = vld [vmem:[%s5 + $0x158] sm:$0xff]
  %v146 = vld [vmem:[%s5 + $0x160] sm:$0xff]
  %v147 = vld [vmem:[%s5 + $0x168] sm:$0xff]
  %v148 = vld [vmem:[%s5 + $0x170] sm:$0xff]
  %v149 = vld [vmem:[%s5 + $0x178] sm:$0xff]
  %v150 = vld [vmem:[%s5 + $0x180] sm:$0xff]
  %v151 = vld [vmem:[%s5 + $0x188] sm:$0xff]
  %v152 = vld [vmem:[%s5 + $0x190] sm:$0xff]
  %v153 = vld [vmem:[%s5 + $0x198] sm:$0xff]
  %v154 = vld [vmem:[%s5 + $0x1a0] sm:$0xff]
  %v155 = vld [vmem:[%s5 + $0x1a8] sm:$0xff]
  %v156 = vld [vmem:[%s5 + $0x1b0] sm:$0xff]
  %v157 = vld [vmem:[%s5 + $0x1b8] sm:$0xff]
  %v158 = vld [vmem:[%s5 + $0x1c0] sm:$0xff]
  %v159 = vld [vmem:[%s5 + $0x1c8] sm:$0xff]
  %v160 = vld [vmem:[%s5 + $0x1d0] sm:$0xff]
  %v161 = vld [vmem:[%s5 + $0x1d8] sm:$0xff]
  %v162 = vld [vmem:[%s5 + $0x1e0] sm:$0xff]
  %v163 = vld [vmem:[%s5 + $0x1e8] sm:$0xff]
  %v164 = vld [vmem:[%s5 + $0x1f0] sm:$0xff]
  %v165 = vld [vmem:[%s5 + $0x1f8] sm:$0xff]
  %v166 = vld [vmem:[%s5 + $0x200] sm:$0xff]
  %v167 = vld [vmem:[%s5 + $0x208] sm:$0xff]
  %v168 = vld [vmem:[%s5 + $0x210] sm:$0x1]
  %v169 = vld [vmem:[%s1] sm:$0xff]
  %v170 = vld [vmem:[%s1 + $0x8] sm:$0x1]
  %v172 = vlaneseq
  %v173 = vshrl.u32 %v172, 7
  %v174 = vsub.s32 0, %v173
  %v175 = vrot.slane %v98, %v174
  %vm177 = vcmask 72704
  %v179 = vsel %vm177, %v29, 0
  %v182 = vsel %vm177, %v30, 0
  %v185 = vsel %vm177, %v31, 0
  %v188 = vsel %vm177, %v32, 0
  %v191 = vsel %vm177, %v33, 0
  %v194 = vsel %vm177, %v34, 0
  %v197 = vsel %vm177, %v35, 0
  %v200 = vsel %vm177, %v36, 0
  %v203 = vsel %vm177, %v37, 0
  %v206 = vsel %vm177, %v38, 0
  %v209 = vsel %vm177, %v39, 0
  %v212 = vsel %vm177, %v40, 0
  %v215 = vsel %vm177, %v41, 0
  %v218 = vsel %vm177, %v42, 0
  %v221 = vsel %vm177, %v43, 0
  %v224 = vsel %vm177, %v44, 0
  %v227 = vsel %vm177, %v45, 0
  %v230 = vsel %vm177, %v46, 0
  %v233 = vsel %vm177, %v47, 0
  %v236 = vsel %vm177, %v48, 0
  %v239 = vsel %vm177, %v49, 0
  %v242 = vsel %vm177, %v50, 0
  %v245 = vsel %vm177, %v51, 0
  %v248 = vsel %vm177, %v52, 0
  %v251 = vsel %vm177, %v53, 0
  %v254 = vsel %vm177, %v54, 0
  %v257 = vsel %vm177, %v55, 0
  %v260 = vsel %vm177, %v56, 0
  %v263 = vsel %vm177, %v57, 0
  %v266 = vsel %vm177, %v58, 0
  %v269 = vsel %vm177, %v59, 0
  %v272 = vsel %vm177, %v60, 0
  %v275 = vsel %vm177, %v61, 0
  %v278 = vsel %vm177, %v62, 0
  %v281 = vsel %vm177, %v63, 0
  %v284 = vsel %vm177, %v64, 0
  %v287 = vsel %vm177, %v65, 0
  %v290 = vsel %vm177, %v66, 0
  %v293 = vsel %vm177, %v67, 0
  %v296 = vsel %vm177, %v68, 0
  %v299 = vsel %vm177, %v69, 0
  %v302 = vsel %vm177, %v70, 0
  %v305 = vsel %vm177, %v71, 0
  %v308 = vsel %vm177, %v72, 0
  %v311 = vsel %vm177, %v73, 0
  %v314 = vsel %vm177, %v74, 0
  %v317 = vsel %vm177, %v75, 0
  %v320 = vsel %vm177, %v76, 0
  %v323 = vsel %vm177, %v77, 0
  %v326 = vsel %vm177, %v78, 0
  %v329 = vsel %vm177, %v79, 0
  %v332 = vsel %vm177, %v80, 0
  %v335 = vsel %vm177, %v81, 0
  %v338 = vsel %vm177, %v82, 0
  %v341 = vsel %vm177, %v83, 0
  %v344 = vsel %vm177, %v84, 0
  %v347 = vsel %vm177, %v85, 0
  %v350 = vsel %vm177, %v86, 0
  %v353 = vsel %vm177, %v87, 0
  %v356 = vsel %vm177, %v88, 0
  %v359 = vsel %vm177, %v89, 0
  %v362 = vsel %vm177, %v90, 0
  %v365 = vsel %vm177, %v91, 0
  %v368 = vsel %vm177, %v92, 0
  %v371 = vsel %vm177, %v93, 0
  %v374 = vsel %vm177, %v94, 0
  %v377 = vsel %vm177, %v95, 0
  %v380 = vsel %vm177, %v96, 0
  %v383 = vsel %vm177, %v97, 0
  %vm385 = vcmask 1040384
  %v387 = vsel %vm385, %v170, 0
  %389 = vmatprep.subr.mxu0 0.0
  %390 = vmatpush1.msra.mxu0 %v169
  %391 = vmatprep.subr.mxu0 0.0
  %392 = vmatpush1.msra.mxu0 %v387
  %393 = vmatprep.subr.mxu0 0.0
  %394 = vmatpush1.msra.mxu0 0.0
  %395 = vmatprep.subr.mxu0 0.0
  %396 = vmatpush1.msra.mxu0 0.0
  %397 = vmatprep.subr.mxu0 0.0
  %398 = vmatpush1.msra.mxu0 0.0
  %399 = vmatprep.subr.mxu0 0.0
  %400 = vmatpush1.msra.mxu0 0.0
  %401 = vmatprep.subr.mxu0 0.0
  %402 = vmatpush1.msra.mxu0 0.0
  %403 = vmatprep.subr.mxu0 0.0
  %404 = vmatpush1.msra.mxu0 0.0
  %405 = vmatprep.subr.mxu0 0.0
  %406 = vmatpush1.msra.mxu0 0.0
  %407 = vmatprep.subr.mxu0 0.0
  %408 = vmatpush1.msra.mxu0 0.0
  %409 = vmatprep.subr.mxu0 0.0
  %410 = vmatpush1.msra.mxu0 0.0
  %411 = vmatprep.subr.mxu0 0.0
  %412 = vmatpush1.msra.mxu0 0.0
  %413 = vmatprep.subr.mxu0 0.0
  %414 = vmatpush1.msra.mxu0 0.0
  %415 = vmatprep.subr.mxu0 0.0
  %416 = vmatpush1.msra.mxu0 0.0
  %417 = vmatprep.subr.mxu0 0.0
  %418 = vmatpush1.msra.mxu0 0.0
  %419 = vmatprep.subr.mxu0 0.0
  %420 = vmatpush1.msra.mxu0 0.0
  %421 = vmatprep.subr.mxu0 0.0
  %422 = vmatpush1.msra.mxu0 0.0
  %423 = vmatprep.subr.mxu0 0.0
  %424 = vmatpush1.msra.mxu0 0.0
  %425 = vmatprep.subr.mxu0 0.0
  %426 = vmatpush1.msra.mxu0 0.0
  %427 = vmatprep.subr.mxu0 0.0
  %428 = vmatpush1.msra.mxu0 0.0
  %429 = vmatprep.subr.mxu0 0.0
  %430 = vmatpush1.msra.mxu0 0.0
  %431 = vmatprep.subr.mxu0 0.0
  %432 = vmatpush1.msra.mxu0 0.0
  %433 = vmatprep.subr.mxu0 0.0
  %434 = vmatpush1.msra.mxu0 0.0
  %435 = vmatprep.subr.mxu0 0.0
  %436 = vmatpush1.msra.mxu0 0.0
  %437 = vmatprep.subr.mxu0 0.0
  %438 = vmatpush1.msra.mxu0 0.0
  %439 = vmatprep.subr.mxu0 0.0
  %440 = vmatpush1.msra.mxu0 0.0
  %441 = vmatprep.subr.mxu0 0.0
  %442 = vmatpush1.msra.mxu0 0.0
  %443 = vmatprep.subr.mxu0 0.0
  %444 = vmatpush1.msra.mxu0 0.0
  %445 = vmatprep.subr.mxu0 0.0
  %446 = vmatpush1.msra.mxu0 0.0
  %447 = vmatprep.subr.mxu0 0.0
  %448 = vmatpush1.msra.mxu0 0.0
  %449 = vmatprep.subr.mxu0 0.0
  %450 = vmatpush1.msra.mxu0 0.0
  %451 = vmatprep.subr.mxu0 0.0
  %452 = vmatpush1.msra.mxu0 0.0
  %453 = vmatprep.mubr.f32.mxu0 0.0
  %454 = vmatmul.mubr.f32.gmra.mrb[0].mxu0 %v179
  %v455 = vpop.f32.mrb[0].mxu0
  %v456 = vadd.f32 %v175, %v455
  %v457 = vpop.f32.mrb[0].mxu0
  %458 = vmatprep.mubr.f32.mxu0 0.0
  %459 = vmatmul.mubr.f32.gmra.mrb[0].mxu0 %v182
  %v460 = vpop.f32.mrb[0].mxu0
  %v461 = vadd.f32 %v175, %v460
  %v462 = vpop.f32.mrb[0].mxu0
  %463 = vmatprep.mubr.f32.mxu0 0.0
  %464 = vmatmul.mubr.f32.gmra.mrb[0].mxu0 %v185
  %v465 = vpop.f32.mrb[0].mxu0
  %v466 = vadd.f32 %v175, %v465
  %v467 = vpop.f32.mrb[0].mxu0
  %468 = vmatprep.mubr.f32.mxu0 0.0
  %469 = vmatmul.mubr.f32.gmra.mrb[0].mxu0 %v188
  %v470 = vpop.f32.mrb[0].mxu0
  %v471 = vadd.f32 %v175, %v470
  %v472 = vpop.f32.mrb[0].mxu0
  %473 = vmatprep.mubr.f32.mxu0 0.0
  %474 = vmatmul.mubr.f32.gmra.mrb[0].mxu0 %v191
  %v475 = vpop.f32.mrb[0].mxu0
  %v476 = vadd.f32 %v175, %v475
  %v477 = vpop.f32.mrb[0].mxu0
  %478 = vmatprep.mubr.f32.mxu0 0.0
  %479 = vmatmul.mubr.f32.gmra.mrb[0].mxu0 %v194
  %v480 = vpop.f32.mrb[0].mxu0
  %v481 = vadd.f32 %v175, %v480
  %v482 = vpop.f32.mrb[0].mxu0
  %483 = vmatprep.mubr.f32.mxu0 0.0
  %484 = vmatmul.mubr.f32.gmra.mrb[0].mxu0 %v197
  %v485 = vpop.f32.mrb[0].mxu0
  %v486 = vadd.f32 %v175, %v485
  %v487 = vpop.f32.mrb[0].mxu0
  %488 = vmatprep.mubr.f32.mxu0 0.0
  %489 = vmatmul.mubr.f32.gmra.mrb[0].mxu0 %v200
  %v490 = vpop.f32.mrb[0].mxu0
  %v491 = vadd.f32 %v175, %v490
  %v492 = vpop.f32.mrb[0].mxu0
  %493 = vmatprep.mubr.f32.mxu0 0.0
  %494 = vmatmul.mubr.f32.gmra.mrb[0].mxu0 %v203
  %v495 = vpop.f32.mrb[0].mxu0
  %v496 = vadd.f32 %v175, %v495
  %v497 = vpop.f32.mrb[0].mxu0
  %498 = vmatprep.mubr.f32.mxu0 0.0
  %499 = vmatmul.mubr.f32.gmra.mrb[0].mxu0 %v206
  %v500 = vpop.f32.mrb[0].mxu0
  %v501 = vadd.f32 %v175, %v500
  %v502 = vpop.f32.mrb[0].mxu0
  %503 = vmatprep.mubr.f32.mxu0 0.0
  %504 = vmatmul.mubr.f32.gmra.mrb[0].mxu0 %v209
  %v505 = vpop.f32.mrb[0].mxu0
  %v506 = vadd.f32 %v175, %v505
  %v507 = vpop.f32.mrb[0].mxu0
  %508 = vmatprep.mubr.f32.mxu0 0.0
  %509 = vmatmul.mubr.f32.gmra.mrb[0].mxu0 %v212
  %v510 = vpop.f32.mrb[0].mxu0
  %v511 = vadd.f32 %v175, %v510
  %v512 = vpop.f32.mrb[0].mxu0
  %513 = vmatprep.mubr.f32.mxu0 0.0
  %514 = vmatmul.mubr.f32.gmra.mrb[0].mxu0 %v215
  %v515 = vpop.f32.mrb[0].mxu0
  %v516 = vadd.f32 %v175, %v515
  %v517 = vpop.f32.mrb[0].mxu0
  %518 = vmatprep.mubr.f32.mxu0 0.0
  %519 = vmatmul.mubr.f32.gmra.mrb[0].mxu0 %v218
  %v520 = vpop.f32.mrb[0].mxu0
  %v521 = vadd.f32 %v175, %v520
  %v522 = vpop.f32.mrb[0].mxu0
  %523 = vmatprep.mubr.f32.mxu0 0.0
  %524 = vmatmul.mubr.f32.gmra.mrb[0].mxu0 %v221
  %v525 = vpop.f32.mrb[0].mxu0
  %v526 = vadd.f32 %v175, %v525
  %v527 = vpop.f32.mrb[0].mxu0
  %528 = vmatprep.mubr.f32.mxu0 0.0
  %529 = vmatmul.mubr.f32.gmra.mrb[0].mxu0 %v224
  %v530 = vpop.f32.mrb[0].mxu0
  %v531 = vadd.f32 %v175, %v530
  %v532 = vpop.f32.mrb[0].mxu0
  %533 = vmatprep.mubr.f32.mxu0 0.0
  %534 = vmatmul.mubr.f32.gmra.mrb[0].mxu0 %v227
  %v535 = vpop.f32.mrb[0].mxu0
  %v536 = vadd.f32 %v175, %v535
  %v537 = vpop.f32.mrb[0].mxu0
  %538 = vmatprep.mubr.f32.mxu0 0.0
  %539 = vmatmul.mubr.f32.gmra.mrb[0].mxu0 %v230
  %v540 = vpop.f32.mrb[0].mxu0
  %v541 = vadd.f32 %v175, %v540
  %v542 = vpop.f32.mrb[0].mxu0
  %543 = vmatprep.mubr.f32.mxu0 0.0
  %544 = vmatmul.mubr.f32.gmra.mrb[0].mxu0 %v233
  %v545 = vpop.f32.mrb[0].mxu0
  %v546 = vadd.f32 %v175, %v545
  %v547 = vpop.f32.mrb[0].mxu0
  %548 = vmatprep.mubr.f32.mxu0 0.0
  %549 = vmatmul.mubr.f32.gmra.mrb[0].mxu0 %v236
  %v550 = vpop.f32.mrb[0].mxu0
  %v551 = vadd.f32 %v175, %v550
  %v552 = vpop.f32.mrb[0].mxu0
  %553 = vmatprep.mubr.f32.mxu0 0.0
  %554 = vmatmul.mubr.f32.gmra.mrb[0].mxu0 %v239
  %v555 = vpop.f32.mrb[0].mxu0
  %v556 = vadd.f32 %v175, %v555
  %v557 = vpop.f32.mrb[0].mxu0
  %558 = vmatprep.mubr.f32.mxu0 0.0
  %559 = vmatmul.mubr.f32.gmra.mrb[0].mxu0 %v242
  %v560 = vpop.f32.mrb[0].mxu0
  %v561 = vadd.f32 %v175, %v560
  %v562 = vpop.f32.mrb[0].mxu0
  %563 = vmatprep.mubr.f32.mxu0 0.0
  %564 = vmatmul.mubr.f32.gmra.mrb[0].mxu0 %v245
  %v565 = vpop.f32.mrb[0].mxu0
  %v566 = vadd.f32 %v175, %v565
  %v567 = vpop.f32.mrb[0].mxu0
  %568 = vmatprep.mubr.f32.mxu0 0.0
  %569 = vmatmul.mubr.f32.gmra.mrb[0].mxu0 %v248
  %v570 = vpop.f32.mrb[0].mxu0
  %v571 = vadd.f32 %v175, %v570
  %v572 = vpop.f32.mrb[0].mxu0
  %573 = vmatprep.mubr.f32.mxu0 0.0
  %574 = vmatmul.mubr.f32.gmra.mrb[0].mxu0 %v251
  %v575 = vpop.f32.mrb[0].mxu0
  %v576 = vadd.f32 %v175, %v575
  %v577 = vpop.f32.mrb[0].mxu0
  %578 = vmatprep.mubr.f32.mxu0 0.0
  %579 = vmatmul.mubr.f32.gmra.mrb[0].mxu0 %v254
  %v580 = vpop.f32.mrb[0].mxu0
  %v581 = vadd.f32 %v175, %v580
  %v582 = vpop.f32.mrb[0].mxu0
  %583 = vmatprep.mubr.f32.mxu0 0.0
  %584 = vmatmul.mubr.f32.gmra.mrb[0].mxu0 %v257
  %v585 = vpop.f32.mrb[0].mxu0
  %v586 = vadd.f32 %v175, %v585
  %v587 = vpop.f32.mrb[0].mxu0
  %588 = vmatprep.mubr.f32.mxu0 0.0
  %589 = vmatmul.mubr.f32.gmra.mrb[0].mxu0 %v260
  %v590 = vpop.f32.mrb[0].mxu0
  %v591 = vadd.f32 %v175, %v590
  %v592 = vpop.f32.mrb[0].mxu0
  %593 = vmatprep.mubr.f32.mxu0 0.0
  %594 = vmatmul.mubr.f32.gmra.mrb[0].mxu0 %v263
  %v595 = vpop.f32.mrb[0].mxu0
  %v596 = vadd.f32 %v175, %v595
  %v597 = vpop.f32.mrb[0].mxu0
  %598 = vmatprep.mubr.f32.mxu0 0.0
  %599 = vmatmul.mubr.f32.gmra.mrb[0].mxu0 %v266
  %v600 = vpop.f32.mrb[0].mxu0
  %v601 = vadd.f32 %v175, %v600
  %v602 = vpop.f32.mrb[0].mxu0
  %603 = vmatprep.mubr.f32.mxu0 0.0
  %604 = vmatmul.mubr.f32.gmra.mrb[0].mxu0 %v269
  %v605 = vpop.f32.mrb[0].mxu0
  %v606 = vadd.f32 %v175, %v605
  %v607 = vpop.f32.mrb[0].mxu0
  %608 = vmatprep.mubr.f32.mxu0 0.0
  %609 = vmatmul.mubr.f32.gmra.mrb[0].mxu0 %v272
  %v610 = vpop.f32.mrb[0].mxu0
  %v611 = vadd.f32 %v175, %v610
  %v612 = vpop.f32.mrb[0].mxu0
  %613 = vmatprep.mubr.f32.mxu0 0.0
  %614 = vmatmul.mubr.f32.gmra.mrb[0].mxu0 %v275
  %v615 = vpop.f32.mrb[0].mxu0
  %v616 = vadd.f32 %v175, %v615
  %v617 = vpop.f32.mrb[0].mxu0
  %618 = vmatprep.mubr.f32.mxu0 0.0
  %619 = vmatmul.mubr.f32.gmra.mrb[0].mxu0 %v278
  %v620 = vpop.f32.mrb[0].mxu0
  %v621 = vadd.f32 %v175, %v620
  %v622 = vpop.f32.mrb[0].mxu0
  %623 = vmatprep.mubr.f32.mxu0 0.0
  %624 = vmatmul.mubr.f32.gmra.mrb[0].mxu0 %v281
  %v625 = vpop.f32.mrb[0].mxu0
  %v626 = vadd.f32 %v175, %v625
  %v627 = vpop.f32.mrb[0].mxu0
  %628 = vmatprep.mubr.f32.mxu0 0.0
  %629 = vmatmul.mubr.f32.gmra.mrb[0].mxu0 %v284
  %v630 = vpop.f32.mrb[0].mxu0
  %v631 = vadd.f32 %v175, %v630
  %v632 = vpop.f32.mrb[0].mxu0
  %633 = vmatprep.mubr.f32.mxu0 0.0
  %634 = vmatmul.mubr.f32.gmra.mrb[0].mxu0 %v287
  %v635 = vpop.f32.mrb[0].mxu0
  %v636 = vadd.f32 %v175, %v635
  %v637 = vpop.f32.mrb[0].mxu0
  %638 = vmatprep.mubr.f32.mxu0 0.0
  %639 = vmatmul.mubr.f32.gmra.mrb[0].mxu0 %v290
  %v640 = vpop.f32.mrb[0].mxu0
  %v641 = vadd.f32 %v175, %v640
  %v642 = vpop.f32.mrb[0].mxu0
  %643 = vmatprep.mubr.f32.mxu0 0.0
  %644 = vmatmul.mubr.f32.gmra.mrb[0].mxu0 %v293
  %v645 = vpop.f32.mrb[0].mxu0
  %v646 = vadd.f32 %v175, %v645
  %v647 = vpop.f32.mrb[0].mxu0
  %648 = vmatprep.mubr.f32.mxu0 0.0
  %649 = vmatmul.mubr.f32.gmra.mrb[0].mxu0 %v296
  %v650 = vpop.f32.mrb[0].mxu0
  %v651 = vadd.f32 %v175, %v650
  %v652 = vpop.f32.mrb[0].mxu0
  %653 = vmatprep.mubr.f32.mxu0 0.0
  %654 = vmatmul.mubr.f32.gmra.mrb[0].mxu0 %v299
  %v655 = vpop.f32.mrb[0].mxu0
  %v656 = vadd.f32 %v175, %v655
  %v657 = vpop.f32.mrb[0].mxu0
  %658 = vmatprep.mubr.f32.mxu0 0.0
  %659 = vmatmul.mubr.f32.gmra.mrb[0].mxu0 %v302
  %v660 = vpop.f32.mrb[0].mxu0
  %v661 = vadd.f32 %v175, %v660
  %v662 = vpop.f32.mrb[0].mxu0
  %663 = vmatprep.mubr.f32.mxu0 0.0
  %664 = vmatmul.mubr.f32.gmra.mrb[0].mxu0 %v305
  %v665 = vpop.f32.mrb[0].mxu0
  %v666 = vadd.f32 %v175, %v665
  %v667 = vpop.f32.mrb[0].mxu0
  %668 = vmatprep.mubr.f32.mxu0 0.0
  %669 = vmatmul.mubr.f32.gmra.mrb[0].mxu0 %v308
  %v670 = vpop.f32.mrb[0].mxu0
  %v671 = vadd.f32 %v175, %v670
  %v672 = vpop.f32.mrb[0].mxu0
  %673 = vmatprep.mubr.f32.mxu0 0.0
  %674 = vmatmul.mubr.f32.gmra.mrb[0].mxu0 %v311
  %v675 = vpop.f32.mrb[0].mxu0
  %v676 = vadd.f32 %v175, %v675
  %v677 = vpop.f32.mrb[0].mxu0
  %678 = vmatprep.mubr.f32.mxu0 0.0
  %679 = vmatmul.mubr.f32.gmra.mrb[0].mxu0 %v314
  %v680 = vpop.f32.mrb[0].mxu0
  %v681 = vadd.f32 %v175, %v680
  %v682 = vpop.f32.mrb[0].mxu0
  %683 = vmatprep.mubr.f32.mxu0 0.0
  %684 = vmatmul.mubr.f32.gmra.mrb[0].mxu0 %v317
  %v685 = vpop.f32.mrb[0].mxu0
  %v686 = vadd.f32 %v175, %v685
  %v687 = vpop.f32.mrb[0].mxu0
  %688 = vmatprep.mubr.f32.mxu0 0.0
  %689 = vmatmul.mubr.f32.gmra.mrb[0].mxu0 %v320
  %v690 = vpop.f32.mrb[0].mxu0
  %v691 = vadd.f32 %v175, %v690
  %v692 = vpop.f32.mrb[0].mxu0
  %693 = vmatprep.mubr.f32.mxu0 0.0
  %694 = vmatmul.mubr.f32.gmra.mrb[0].mxu0 %v323
  %v695 = vpop.f32.mrb[0].mxu0
  %v696 = vadd.f32 %v175, %v695
  %v697 = vpop.f32.mrb[0].mxu0
  %698 = vmatprep.mubr.f32.mxu0 0.0
  %699 = vmatmul.mubr.f32.gmra.mrb[0].mxu0 %v326
  %v700 = vpop.f32.mrb[0].mxu0
  %v701 = vadd.f32 %v175, %v700
  %v702 = vpop.f32.mrb[0].mxu0
  %703 = vmatprep.mubr.f32.mxu0 0.0
  %704 = vmatmul.mubr.f32.gmra.mrb[0].mxu0 %v329
  %v705 = vpop.f32.mrb[0].mxu0
  %v706 = vadd.f32 %v175, %v705
  %v707 = vpop.f32.mrb[0].mxu0
  %708 = vmatprep.mubr.f32.mxu0 0.0
  %709 = vmatmul.mubr.f32.gmra.mrb[0].mxu0 %v332
  %v710 = vpop.f32.mrb[0].mxu0
  %v711 = vadd.f32 %v175, %v710
  %v712 = vpop.f32.mrb[0].mxu0
  %713 = vmatprep.mubr.f32.mxu0 0.0
  %714 = vmatmul.mubr.f32.gmra.mrb[0].mxu0 %v335
  %v715 = vpop.f32.mrb[0].mxu0
  %v716 = vadd.f32 %v175, %v715
  %v717 = vpop.f32.mrb[0].mxu0
  %718 = vmatprep.mubr.f32.mxu0 0.0
  %719 = vmatmul.mubr.f32.gmra.mrb[0].mxu0 %v338
  %v720 = vpop.f32.mrb[0].mxu0
  %v721 = vadd.f32 %v175, %v720
  %v722 = vpop.f32.mrb[0].mxu0
  %723 = vmatprep.mubr.f32.mxu0 0.0
  %724 = vmatmul.mubr.f32.gmra.mrb[0].mxu0 %v341
  %v725 = vpop.f32.mrb[0].mxu0
  %v726 = vadd.f32 %v175, %v725
  %v727 = vpop.f32.mrb[0].mxu0
  %728 = vmatprep.mubr.f32.mxu0 0.0
  %729 = vmatmul.mubr.f32.gmra.mrb[0].mxu0 %v344
  %v730 = vpop.f32.mrb[0].mxu0
  %v731 = vadd.f32 %v175, %v730
  %v732 = vpop.f32.mrb[0].mxu0
  %733 = vmatprep.mubr.f32.mxu0 0.0
  %734 = vmatmul.mubr.f32.gmra.mrb[0].mxu0 %v347
  %v735 = vpop.f32.mrb[0].mxu0
  %v736 = vadd.f32 %v175, %v735
  %v737 = vpop.f32.mrb[0].mxu0
  %738 = vmatprep.mubr.f32.mxu0 0.0
  %739 = vmatmul.mubr.f32.gmra.mrb[0].mxu0 %v350
  %v740 = vpop.f32.mrb[0].mxu0
  %v741 = vadd.f32 %v175, %v740
  %v742 = vpop.f32.mrb[0].mxu0
  %743 = vmatprep.mubr.f32.mxu0 0.0
  %744 = vmatmul.mubr.f32.gmra.mrb[0].mxu0 %v353
  %v745 = vpop.f32.mrb[0].mxu0
  %v746 = vadd.f32 %v175, %v745
  %v747 = vpop.f32.mrb[0].mxu0
  %748 = vmatprep.mubr.f32.mxu0 0.0
  %749 = vmatmul.mubr.f32.gmra.mrb[0].mxu0 %v356
  %v750 = vpop.f32.mrb[0].mxu0
  %v751 = vadd.f32 %v175, %v750
  %v752 = vpop.f32.mrb[0].mxu0
  %753 = vmatprep.mubr.f32.mxu0 0.0
  %754 = vmatmul.mubr.f32.gmra.mrb[0].mxu0 %v359
  %v755 = vpop.f32.mrb[0].mxu0
  %v756 = vadd.f32 %v175, %v755
  %v757 = vpop.f32.mrb[0].mxu0
  %758 = vmatprep.mubr.f32.mxu0 0.0
  %759 = vmatmul.mubr.f32.gmra.mrb[0].mxu0 %v362
  %v760 = vpop.f32.mrb[0].mxu0
  %v761 = vadd.f32 %v175, %v760
  %v762 = vpop.f32.mrb[0].mxu0
  %763 = vmatprep.mubr.f32.mxu0 0.0
  %764 = vmatmul.mubr.f32.gmra.mrb[0].mxu0 %v365
  %v765 = vpop.f32.mrb[0].mxu0
  %v766 = vadd.f32 %v175, %v765
  %v767 = vpop.f32.mrb[0].mxu0
  %768 = vmatprep.mubr.f32.mxu0 0.0
  %769 = vmatmul.mubr.f32.gmra.mrb[0].mxu0 %v368
  %v770 = vpop.f32.mrb[0].mxu0
  %v771 = vadd.f32 %v175, %v770
  %v772 = vpop.f32.mrb[0].mxu0
  %773 = vmatprep.mubr.f32.mxu0 0.0
  %774 = vmatmul.mubr.f32.gmra.mrb[0].mxu0 %v371
  %v775 = vpop.f32.mrb[0].mxu0
  %v776 = vadd.f32 %v175, %v775
  %v777 = vpop.f32.mrb[0].mxu0
  %778 = vmatprep.mubr.f32.mxu0 0.0
  %779 = vmatmul.mubr.f32.gmra.mrb[0].mxu0 %v374
  %v780 = vpop.f32.mrb[0].mxu0
  %v781 = vadd.f32 %v175, %v780
  %v782 = vpop.f32.mrb[0].mxu0
  %783 = vmatprep.mubr.f32.mxu0 0.0
  %784 = vmatmul.mubr.f32.gmra.mrb[0].mxu0 %v377
  %v785 = vpop.f32.mrb[0].mxu0
  %v786 = vadd.f32 %v175, %v785
  %v787 = vpop.f32.mrb[0].mxu0
  %788 = vmatprep.mubr.f32.mxu0 0.0
  %789 = vmatmul.mubr.f32.gmra.mrb[0].mxu0 %v380
  %v790 = vpop.f32.mrb[0].mxu0
  %v791 = vadd.f32 %v175, %v790
  %v792 = vpop.f32.mrb[0].mxu0
  %793 = vmatprep.mubr.f32.mxu0 0.0
  %794 = vmatmul.mubr.f32.gmra.mrb[0].mxu0 %v383
  %v795 = vpop.f32.mrb[0].mxu0
  %v796 = vadd.f32 %v175, %v795
  %v797 = vpop.f32.mrb[0].mxu0
  %798 = vdwg.mxu0
  %vm866 = vcmask 1046528
  %v867 = vrot.slane %v456, 1
  %v868 = vrot.slane %v461, 1
  %v869 = vsel %vm866, %v867, %v868
  %v870 = vrot.slane %v466, 1
  %v871 = vsel %vm866, %v868, %v870
  %v872 = vrot.slane %v471, 1
  %v873 = vsel %vm866, %v870, %v872
  %v874 = vrot.slane %v476, 1
  %v875 = vsel %vm866, %v872, %v874
  %v876 = vrot.slane %v481, 1
  %v877 = vsel %vm866, %v874, %v876
  %v878 = vrot.slane %v486, 1
  %v879 = vsel %vm866, %v876, %v878
  %v880 = vrot.slane %v491, 1
  %v881 = vsel %vm866, %v878, %v880
  %v882 = vrot.slane %v496, 1
  %v883 = vsel %vm866, %v880, %v882
  %v884 = vrot.slane %v501, 1
  %v885 = vsel %vm866, %v882, %v884
  %v886 = vrot.slane %v506, 1
  %v887 = vsel %vm866, %v884, %v886
  %v888 = vrot.slane %v511, 1
  %v889 = vsel %vm866, %v886, %v888
  %v890 = vrot.slane %v516, 1
  %v891 = vsel %vm866, %v888, %v890
  %v892 = vrot.slane %v521, 1
  %v893 = vsel %vm866, %v890, %v892
  %v894 = vrot.slane %v526, 1
  %v895 = vsel %vm866, %v892, %v894
  %v896 = vrot.slane %v531, 1
  %v897 = vsel %vm866, %v894, %v896
  %v898 = vrot.slane %v536, 1
  %v899 = vsel %vm866, %v896, %v898
  %v900 = vrot.slane %v541, 1
  %v901 = vsel %vm866, %v898, %v900
  %v902 = vrot.slane %v546, 1
  %v903 = vsel %vm866, %v900, %v902
  %v904 = vrot.slane %v551, 1
  %v905 = vsel %vm866, %v902, %v904
  %v906 = vrot.slane %v556, 1
  %v907 = vsel %vm866, %v904, %v906
  %v908 = vrot.slane %v561, 1
  %v909 = vsel %vm866, %v906, %v908
  %v910 = vrot.slane %v566, 1
  %v911 = vsel %vm866, %v908, %v910
  %v912 = vrot.slane %v571, 1
  %v913 = vsel %vm866, %v910, %v912
  %v914 = vrot.slane %v576, 1
  %v915 = vsel %vm866, %v912, %v914
  %v916 = vrot.slane %v581, 1
  %v917 = vsel %vm866, %v914, %v916
  %v918 = vrot.slane %v586, 1
  %v919 = vsel %vm866, %v916, %v918
  %v920 = vrot.slane %v591, 1
  %v921 = vsel %vm866, %v918, %v920
  %v922 = vrot.slane %v596, 1
  %v923 = vsel %vm866, %v920, %v922
  %v924 = vrot.slane %v601, 1
  %v925 = vsel %vm866, %v922, %v924
  %v926 = vrot.slane %v606, 1
  %v927 = vsel %vm866, %v924, %v926
  %v928 = vrot.slane %v611, 1
  %v929 = vsel %vm866, %v926, %v928
  %v930 = vrot.slane %v616, 1
  %v931 = vsel %vm866, %v928, %v930
  %v932 = vrot.slane %v621, 1
  %v933 = vsel %vm866, %v930, %v932
  %v934 = vrot.slane %v626, 1
  %v935 = vsel %vm866, %v932, %v934
  %v936 = vrot.slane %v631, 1
  %v937 = vsel %vm866, %v934, %v936
  %v938 = vrot.slane %v636, 1
  %v939 = vsel %vm866, %v936, %v938
  %v940 = vrot.slane %v641, 1
  %v941 = vsel %vm866, %v938, %v940
  %v942 = vrot.slane %v646, 1
  %v943 = vsel %vm866, %v940, %v942
  %v944 = vrot.slane %v651, 1
  %v945 = vsel %vm866, %v942, %v944
  %v946 = vrot.slane %v656, 1
  %v947 = vsel %vm866, %v944, %v946
  %v948 = vrot.slane %v661, 1
  %v949 = vsel %vm866, %v946, %v948
  %v950 = vrot.slane %v666, 1
  %v951 = vsel %vm866, %v948, %v950
  %v952 = vrot.slane %v671, 1
  %v953 = vsel %vm866, %v950, %v952
  %v954 = vrot.slane %v676, 1
  %v955 = vsel %vm866, %v952, %v954
  %v956 = vrot.slane %v681, 1
  %v957 = vsel %vm866, %v954, %v956
  %v958 = vrot.slane %v686, 1
  %v959 = vsel %vm866, %v956, %v958
  %v960 = vrot.slane %v691, 1
  %v961 = vsel %vm866, %v958, %v960
  %v962 = vrot.slane %v696, 1
  %v963 = vsel %vm866, %v960, %v962
  %v964 = vrot.slane %v701, 1
  %v965 = vsel %vm866, %v962, %v964
  %v966 = vrot.slane %v706, 1
  %v967 = vsel %vm866, %v964, %v966
  %v968 = vrot.slane %v711, 1
  %v969 = vsel %vm866, %v966, %v968
  %v970 = vrot.slane %v716, 1
  %v971 = vsel %vm866, %v968, %v970
  %v972 = vrot.slane %v721, 1
  %v973 = vsel %vm866, %v970, %v972
  %v974 = vrot.slane %v726, 1
  %v975 = vsel %vm866, %v972, %v974
  %v976 = vrot.slane %v731, 1
  %v977 = vsel %vm866, %v974, %v976
  %v978 = vrot.slane %v736, 1
  %v979 = vsel %vm866, %v976, %v978
  %v980 = vrot.slane %v741, 1
  %v981 = vsel %vm866, %v978, %v980
  %v982 = vrot.slane %v746, 1
  %v983 = vsel %vm866, %v980, %v982
  %v984 = vrot.slane %v751, 1
  %v985 = vsel %vm866, %v982, %v984
  %v986 = vrot.slane %v756, 1
  %v987 = vsel %vm866, %v984, %v986
  %v988 = vrot.slane %v761, 1
  %v989 = vsel %vm866, %v986, %v988
  %v990 = vrot.slane %v766, 1
  %v991 = vsel %vm866, %v988, %v990
  %v992 = vrot.slane %v771, 1
  %v993 = vsel %vm866, %v990, %v992
  %v994 = vrot.slane %v776, 1
  %v995 = vsel %vm866, %v992, %v994
  %v996 = vrot.slane %v781, 1
  %v997 = vsel %vm866, %v994, %v996
  %v998 = vrot.slane %v786, 1
  %v999 = vsel %vm866, %v996, %v998
  %v1067 = vmax.f32 %v456, %v869
  %v1068 = vmax.f32 %v461, %v871
  %v1069 = vmax.f32 %v466, %v873
  %v1070 = vmax.f32 %v471, %v875
  %v1071 = vmax.f32 %v476, %v877
  %v1072 = vmax.f32 %v481, %v879
  %v1073 = vmax.f32 %v486, %v881
  %v1074 = vmax.f32 %v491, %v883
  %v1075 = vmax.f32 %v496, %v885
  %v1076 = vmax.f32 %v501, %v887
  %v1077 = vmax.f32 %v506, %v889
  %v1078 = vmax.f32 %v511, %v891
  %v1079 = vmax.f32 %v516, %v893
  %v1080 = vmax.f32 %v521, %v895
  %v1081 = vmax.f32 %v526, %v897
  %v1082 = vmax.f32 %v531, %v899
  %v1083 = vmax.f32 %v536, %v901
  %v1084 = vmax.f32 %v541, %v903
  %v1085 = vmax.f32 %v546, %v905
  %v1086 = vmax.f32 %v551, %v907
  %v1087 = vmax.f32 %v556, %v909
  %v1088 = vmax.f32 %v561, %v911
  %v1089 = vmax.f32 %v566, %v913
  %v1090 = vmax.f32 %v571, %v915
  %v1091 = vmax.f32 %v576, %v917
  %v1092 = vmax.f32 %v581, %v919
  %v1093 = vmax.f32 %v586, %v921
  %v1094 = vmax.f32 %v591, %v923
  %v1095 = vmax.f32 %v596, %v925
  %v1096 = vmax.f32 %v601, %v927
  %v1097 = vmax.f32 %v606, %v929
  %v1098 = vmax.f32 %v611, %v931
  %v1099 = vmax.f32 %v616, %v933
  %v1100 = vmax.f32 %v621, %v935
  %v1101 = vmax.f32 %v626, %v937
  %v1102 = vmax.f32 %v631, %v939
  %v1103 = vmax.f32 %v636, %v941
  %v1104 = vmax.f32 %v641, %v943
  %v1105 = vmax.f32 %v646, %v945
  %v1106 = vmax.f32 %v651, %v947
  %v1107 = vmax.f32 %v656, %v949
  %v1108 = vmax.f32 %v661, %v951
  %v1109 = vmax.f32 %v666, %v953
  %v1110 = vmax.f32 %v671, %v955
  %v1111 = vmax.f32 %v676, %v957
  %v1112 = vmax.f32 %v681, %v959
  %v1113 = vmax.f32 %v686, %v961
  %v1114 = vmax.f32 %v691, %v963
  %v1115 = vmax.f32 %v696, %v965
  %v1116 = vmax.f32 %v701, %v967
  %v1117 = vmax.f32 %v706, %v969
  %v1118 = vmax.f32 %v711, %v971
  %v1119 = vmax.f32 %v716, %v973
  %v1120 = vmax.f32 %v721, %v975
  %v1121 = vmax.f32 %v726, %v977
  %v1122 = vmax.f32 %v731, %v979
  %v1123 = vmax.f32 %v736, %v981
  %v1124 = vmax.f32 %v741, %v983
  %v1125 = vmax.f32 %v746, %v985
  %v1126 = vmax.f32 %v751, %v987
  %v1127 = vmax.f32 %v756, %v989
  %v1128 = vmax.f32 %v761, %v991
  %v1129 = vmax.f32 %v766, %v993
  %v1130 = vmax.f32 %v771, %v995
  %v1131 = vmax.f32 %v776, %v997
  %v1132 = vmax.f32 %v781, %v999
  %v1133 = vmax.f32 %v786, %v998
  %v1136 = vrot.slane %v791, 1
  %v1137 = vsel %vm866, %v998, %v1136
  %v1138 = vrot.slane %v796, 1
  %v1139 = vsel %vm866, %v1136, %v1138
  %v1143 = vmax.f32 %v786, %v1137
  %v1144 = vmax.f32 %v791, %v1139
  %v1145 = vmax.f32 %v796, %v1138
  %v1146 = vmax.f32 %v1067, %v1069
  %v1147 = vmax.f32 %v1068, %v1070
  %v1148 = vmax.f32 %v1069, %v1071
  %v1149 = vmax.f32 %v1070, %v1072
  %v1150 = vmax.f32 %v1071, %v1073
  %v1151 = vmax.f32 %v1072, %v1074
  %v1152 = vmax.f32 %v1073, %v1075
  %v1153 = vmax.f32 %v1074, %v1076
  %v1154 = vmax.f32 %v1075, %v1077
  %v1155 = vmax.f32 %v1076, %v1078
  %v1156 = vmax.f32 %v1077, %v1079
  %v1157 = vmax.f32 %v1078, %v1080
  %v1158 = vmax.f32 %v1079, %v1081
  %v1159 = vmax.f32 %v1080, %v1082
  %v1160 = vmax.f32 %v1081, %v1083
  %v1161 = vmax.f32 %v1082, %v1084
  %v1162 = vmax.f32 %v1083, %v1085
  %v1163 = vmax.f32 %v1084, %v1086
  %v1164 = vmax.f32 %v1085, %v1087
  %v1165 = vmax.f32 %v1086, %v1088
  %v1166 = vmax.f32 %v1087, %v1089
  %v1167 = vmax.f32 %v1088, %v1090
  %v1168 = vmax.f32 %v1089, %v1091
  %v1169 = vmax.f32 %v1090, %v1092
  %v1170 = vmax.f32 %v1091, %v1093
  %v1171 = vmax.f32 %v1092, %v1094
  %v1172 = vmax.f32 %v1093, %v1095
  %v1173 = vmax.f32 %v1094, %v1096
  %v1174 = vmax.f32 %v1095, %v1097
  %v1175 = vmax.f32 %v1096, %v1098
  %v1176 = vmax.f32 %v1097, %v1099
  %v1177 = vmax.f32 %v1098, %v1100
  %v1178 = vmax.f32 %v1099, %v1101
  %v1179 = vmax.f32 %v1100, %v1102
  %v1180 = vmax.f32 %v1101, %v1103
  %v1181 = vmax.f32 %v1102, %v1104
  %v1182 = vmax.f32 %v1103, %v1105
  %v1183 = vmax.f32 %v1104, %v1106
  %v1184 = vmax.f32 %v1105, %v1107
  %v1185 = vmax.f32 %v1106, %v1108
  %v1186 = vmax.f32 %v1107, %v1109
  %v1187 = vmax.f32 %v1108, %v1110
  %v1188 = vmax.f32 %v1109, %v1111
  %v1189 = vmax.f32 %v1110, %v1112
  %v1190 = vmax.f32 %v1111, %v1113
  %v1191 = vmax.f32 %v1112, %v1114
  %v1192 = vmax.f32 %v1113, %v1115
  %v1193 = vmax.f32 %v1114, %v1116
  %v1194 = vmax.f32 %v1115, %v1117
  %v1195 = vmax.f32 %v1116, %v1118
  %v1196 = vmax.f32 %v1117, %v1119
  %v1197 = vmax.f32 %v1118, %v1120
  %v1198 = vmax.f32 %v1119, %v1121
  %v1199 = vmax.f32 %v1120, %v1122
  %v1200 = vmax.f32 %v1121, %v1123
  %v1201 = vmax.f32 %v1122, %v1124
  %v1202 = vmax.f32 %v1123, %v1125
  %v1203 = vmax.f32 %v1124, %v1126
  %v1204 = vmax.f32 %v1125, %v1127
  %v1205 = vmax.f32 %v1126, %v1128
  %v1206 = vmax.f32 %v1127, %v1129
  %v1207 = vmax.f32 %v1128, %v1130
  %v1208 = vmax.f32 %v1129, %v1131
  %v1209 = vmax.f32 %v1130, %v1132
  %v1210 = vmax.f32 %v1131, %v1143
  %v1211 = vmax.f32 %v1132, %v1144
  %v1212 = vmax.f32 %v1133, %v1145
  %1214 = vset.pattern.permute.xlu0 0
  %1215 = vperm.xlu0 %1214, %v102
  %v1216 = vpop.permute.xlu0 %1215
  %1219 = vset.pattern.permute.xlu0 0
  %1220 = vperm.xlu0 %1219, %v103
  %v1221 = vpop.permute.xlu0 %1220
  %1224 = vset.pattern.permute.xlu0 0
  %1225 = vperm.xlu0 %1224, %v104
  %v1226 = vpop.permute.xlu0 %1225
  %1229 = vset.pattern.permute.xlu0 0
  %1230 = vperm.xlu0 %1229, %v105
  %v1231 = vpop.permute.xlu0 %1230
  %1234 = vset.pattern.permute.xlu0 0
  %1235 = vperm.xlu0 %1234, %v106
  %v1236 = vpop.permute.xlu0 %1235
  %1239 = vset.pattern.permute.xlu0 0
  %1240 = vperm.xlu0 %1239, %v107
  %v1241 = vpop.permute.xlu0 %1240
  %1244 = vset.pattern.permute.xlu0 0
  %1245 = vperm.xlu0 %1244, %v108
  %v1246 = vpop.permute.xlu0 %1245
  %1249 = vset.pattern.permute.xlu0 0
  %1250 = vperm.xlu0 %1249, %v109
  %v1251 = vpop.permute.xlu0 %1250
  %1254 = vset.pattern.permute.xlu0 0
  %1255 = vperm.xlu0 %1254, %v110
  %v1256 = vpop.permute.xlu0 %1255
  %1259 = vset.pattern.permute.xlu0 0
  %1260 = vperm.xlu0 %1259, %v111
  %v1261 = vpop.permute.xlu0 %1260
  %1264 = vset.pattern.permute.xlu0 0
  %1265 = vperm.xlu0 %1264, %v112
  %v1266 = vpop.permute.xlu0 %1265
  %1269 = vset.pattern.permute.xlu0 0
  %1270 = vperm.xlu0 %1269, %v113
  %v1271 = vpop.permute.xlu0 %1270
  %1274 = vset.pattern.permute.xlu0 0
  %1275 = vperm.xlu0 %1274, %v114
  %v1276 = vpop.permute.xlu0 %1275
  %1279 = vset.pattern.permute.xlu0 0
  %1280 = vperm.xlu0 %1279, %v115
  %v1281 = vpop.permute.xlu0 %1280
  %1284 = vset.pattern.permute.xlu0 0
  %1285 = vperm.xlu0 %1284, %v116
  %v1286 = vpop.permute.xlu0 %1285
  %1289 = vset.pattern.permute.xlu0 0
  %1290 = vperm.xlu0 %1289, %v117
  %v1291 = vpop.permute.xlu0 %1290
  %1294 = vset.pattern.permute.xlu0 0
  %1295 = vperm.xlu0 %1294, %v118
  %v1296 = vpop.permute.xlu0 %1295
  %1299 = vset.pattern.permute.xlu0 0
  %1300 = vperm.xlu0 %1299, %v119
  %v1301 = vpop.permute.xlu0 %1300
  %1304 = vset.pattern.permute.xlu0 0
  %1305 = vperm.xlu0 %1304, %v120
  %v1306 = vpop.permute.xlu0 %1305
  %1309 = vset.pattern.permute.xlu0 0
  %1310 = vperm.xlu0 %1309, %v121
  %v1311 = vpop.permute.xlu0 %1310
  %1314 = vset.pattern.permute.xlu0 0
  %1315 = vperm.xlu0 %1314, %v122
  %v1316 = vpop.permute.xlu0 %1315
  %1319 = vset.pattern.permute.xlu0 0
  %1320 = vperm.xlu0 %1319, %v123
  %v1321 = vpop.permute.xlu0 %1320
  %1324 = vset.pattern.permute.xlu0 0
  %1325 = vperm.xlu0 %1324, %v124
  %v1326 = vpop.permute.xlu0 %1325
  %1329 = vset.pattern.permute.xlu0 0
  %1330 = vperm.xlu0 %1329, %v125
  %v1331 = vpop.permute.xlu0 %1330
  %1334 = vset.pattern.permute.xlu0 0
  %1335 = vperm.xlu0 %1334, %v126
  %v1336 = vpop.permute.xlu0 %1335
  %1339 = vset.pattern.permute.xlu0 0
  %1340 = vperm.xlu0 %1339, %v127
  %v1341 = vpop.permute.xlu0 %1340
  %1344 = vset.pattern.permute.xlu0 0
  %1345 = vperm.xlu0 %1344, %v128
  %v1346 = vpop.permute.xlu0 %1345
  %1349 = vset.pattern.permute.xlu0 0
  %1350 = vperm.xlu0 %1349, %v129
  %v1351 = vpop.permute.xlu0 %1350
  %1354 = vset.pattern.permute.xlu0 0
  %1355 = vperm.xlu0 %1354, %v130
  %v1356 = vpop.permute.xlu0 %1355
  %1359 = vset.pattern.permute.xlu0 0
  %1360 = vperm.xlu0 %1359, %v131
  %v1361 = vpop.permute.xlu0 %1360
  %1364 = vset.pattern.permute.xlu0 0
  %1365 = vperm.xlu0 %1364, %v132
  %v1366 = vpop.permute.xlu0 %1365
  %1369 = vset.pattern.permute.xlu0 0
  %1370 = vperm.xlu0 %1369, %v133
  %v1371 = vpop.permute.xlu0 %1370
  %1374 = vset.pattern.permute.xlu0 0
  %1375 = vperm.xlu0 %1374, %v134
  %v1376 = vpop.permute.xlu0 %1375
  %1379 = vset.pattern.permute.xlu0 0
  %1380 = vperm.xlu0 %1379, %v135
  %v1381 = vpop.permute.xlu0 %1380
  %1384 = vset.pattern.permute.xlu0 0
  %1385 = vperm.xlu0 %1384, %v136
  %v1386 = vpop.permute.xlu0 %1385
  %1389 = vset.pattern.permute.xlu0 0
  %1390 = vperm.xlu0 %1389, %v137
  %v1391 = vpop.permute.xlu0 %1390
  %1394 = vset.pattern.permute.xlu0 0
  %1395 = vperm.xlu0 %1394, %v138
  %v1396 = vpop.permute.xlu0 %1395
  %1399 = vset.pattern.permute.xlu0 0
  %1400 = vperm.xlu0 %1399, %v139
  %v1401 = vpop.permute.xlu0 %1400
  %1404 = vset.pattern.permute.xlu0 0
  %1405 = vperm.xlu0 %1404, %v140
  %v1406 = vpop.permute.xlu0 %1405
  %1409 = vset.pattern.permute.xlu0 0
  %1410 = vperm.xlu0 %1409, %v141
  %v1411 = vpop.permute.xlu0 %1410
  %1414 = vset.pattern.permute.xlu0 0
  %1415 = vperm.xlu0 %1414, %v142
  %v1416 = vpop.permute.xlu0 %1415
  %1419 = vset.pattern.permute.xlu0 0
  %1420 = vperm.xlu0 %1419, %v143
  %v1421 = vpop.permute.xlu0 %1420
  %1424 = vset.pattern.permute.xlu0 0
  %1425 = vperm.xlu0 %1424, %v144
  %v1426 = vpop.permute.xlu0 %1425
  %1429 = vset.pattern.permute.xlu0 0
  %1430 = vperm.xlu0 %1429, %v145
  %v1431 = vpop.permute.xlu0 %1430
  %1434 = vset.pattern.permute.xlu0 0
  %1435 = vperm.xlu0 %1434, %v146
  %v1436 = vpop.permute.xlu0 %1435
  %1439 = vset.pattern.permute.xlu0 0
  %1440 = vperm.xlu0 %1439, %v147
  %v1441 = vpop.permute.xlu0 %1440
  %1444 = vset.pattern.permute.xlu0 0
  %1445 = vperm.xlu0 %1444, %v148
  %v1446 = vpop.permute.xlu0 %1445
  %1449 = vset.pattern.permute.xlu0 0
  %1450 = vperm.xlu0 %1449, %v149
  %v1451 = vpop.permute.xlu0 %1450
  %1454 = vset.pattern.permute.xlu0 0
  %1455 = vperm.xlu0 %1454, %v150
  %v1456 = vpop.permute.xlu0 %1455
  %1459 = vset.pattern.permute.xlu0 0
  %1460 = vperm.xlu0 %1459, %v151
  %v1461 = vpop.permute.xlu0 %1460
  %1464 = vset.pattern.permute.xlu0 0
  %1465 = vperm.xlu0 %1464, %v152
  %v1466 = vpop.permute.xlu0 %1465
  %1469 = vset.pattern.permute.xlu0 0
  %1470 = vperm.xlu0 %1469, %v153
  %v1471 = vpop.permute.xlu0 %1470
  %1474 = vset.pattern.permute.xlu0 0
  %1475 = vperm.xlu0 %1474, %v154
  %v1476 = vpop.permute.xlu0 %1475
  %1479 = vset.pattern.permute.xlu0 0
  %1480 = vperm.xlu0 %1479, %v155
  %v1481 = vpop.permute.xlu0 %1480
  %1484 = vset.pattern.permute.xlu0 0
  %1485 = vperm.xlu0 %1484, %v156
  %v1486 = vpop.permute.xlu0 %1485
  %1489 = vset.pattern.permute.xlu0 0
  %1490 = vperm.xlu0 %1489, %v157
  %v1491 = vpop.permute.xlu0 %1490
  %1494 = vset.pattern.permute.xlu0 0
  %1495 = vperm.xlu0 %1494, %v158
  %v1496 = vpop.permute.xlu0 %1495
  %1499 = vset.pattern.permute.xlu0 0
  %1500 = vperm.xlu0 %1499, %v159
  %v1501 = vpop.permute.xlu0 %1500
  %1504 = vset.pattern.permute.xlu0 0
  %1505 = vperm.xlu0 %1504, %v160
  %v1506 = vpop.permute.xlu0 %1505
  %1509 = vset.pattern.permute.xlu0 0
  %1510 = vperm.xlu0 %1509, %v161
  %v1511 = vpop.permute.xlu0 %1510
  %1514 = vset.pattern.permute.xlu0 0
  %1515 = vperm.xlu0 %1514, %v162
  %v1516 = vpop.permute.xlu0 %1515
  %1519 = vset.pattern.permute.xlu0 0
  %1520 = vperm.xlu0 %1519, %v163
  %v1521 = vpop.permute.xlu0 %1520
  %1524 = vset.pattern.permute.xlu0 0
  %1525 = vperm.xlu0 %1524, %v164
  %v1526 = vpop.permute.xlu0 %1525
  %1529 = vset.pattern.permute.xlu0 0
  %1530 = vperm.xlu0 %1529, %v165
  %v1531 = vpop.permute.xlu0 %1530
  %1534 = vset.pattern.permute.xlu0 0
  %1535 = vperm.xlu0 %1534, %v166
  %v1536 = vpop.permute.xlu0 %1535
  %1539 = vset.pattern.permute.xlu0 0
  %1540 = vperm.xlu0 %1539, %v167
  %v1541 = vpop.permute.xlu0 %1540
  %1544 = vset.pattern.permute.xlu0 0
  %1545 = vperm.xlu0 %1544, %v168
  %v1546 = vpop.permute.xlu0 %1545
  %v1548 = vmul.f32 %v1146, %v1216
  %v1549 = vmul.f32 %v1147, %v1221
  %v1550 = vmul.f32 %v1148, %v1226
  %v1551 = vmul.f32 %v1149, %v1231
  %v1552 = vmul.f32 %v1150, %v1236
  %v1553 = vmul.f32 %v1151, %v1241
  %v1554 = vmul.f32 %v1152, %v1246
  %v1555 = vmul.f32 %v1153, %v1251
  %v1556 = vmul.f32 %v1154, %v1256
  %v1557 = vmul.f32 %v1155, %v1261
  %v1558 = vmul.f32 %v1156, %v1266
  %v1559 = vmul.f32 %v1157, %v1271
  %v1560 = vmul.f32 %v1158, %v1276
  %v1561 = vmul.f32 %v1159, %v1281
  %v1562 = vmul.f32 %v1160, %v1286
  %v1563 = vmul.f32 %v1161, %v1291
  %v1564 = vmul.f32 %v1162, %v1296
  %v1565 = vmul.f32 %v1163, %v1301
  %v1566 = vmul.f32 %v1164, %v1306
  %v1567 = vmul.f32 %v1165, %v1311
  %v1568 = vmul.f32 %v1166, %v1316
  %v1569 = vmul.f32 %v1167, %v1321
  %v1570 = vmul.f32 %v1168, %v1326
  %v1571 = vmul.f32 %v1169, %v1331
  %v1572 = vmul.f32 %v1170, %v1336
  %v1573 = vmul.f32 %v1171, %v1341
  %v1574 = vmul.f32 %v1172, %v1346
  %v1575 = vmul.f32 %v1173, %v1351
  %v1576 = vmul.f32 %v1174, %v1356
  %v1577 = vmul.f32 %v1175, %v1361
  %v1578 = vmul.f32 %v1176, %v1366
  %v1579 = vmul.f32 %v1177, %v1371
  %v1580 = vmul.f32 %v1178, %v1376
  %v1581 = vmul.f32 %v1179, %v1381
  %v1582 = vmul.f32 %v1180, %v1386
  %v1583 = vmul.f32 %v1181, %v1391
  %v1584 = vmul.f32 %v1182, %v1396
  %v1585 = vmul.f32 %v1183, %v1401
  %v1586 = vmul.f32 %v1184, %v1406
  %v1587 = vmul.f32 %v1185, %v1411
  %v1588 = vmul.f32 %v1186, %v1416
  %v1589 = vmul.f32 %v1187, %v1421
  %v1590 = vmul.f32 %v1188, %v1426
  %v1591 = vmul.f32 %v1189, %v1431
  %v1592 = vmul.f32 %v1190, %v1436
  %v1593 = vmul.f32 %v1191, %v1441
  %v1594 = vmul.f32 %v1192, %v1446
  %v1595 = vmul.f32 %v1193, %v1451
  %v1596 = vmul.f32 %v1194, %v1456
  %v1597 = vmul.f32 %v1195, %v1461
  %v1598 = vmul.f32 %v1196, %v1466
  %v1599 = vmul.f32 %v1197, %v1471
  %v1600 = vmul.f32 %v1198, %v1476
  %v1601 = vmul.f32 %v1199, %v1481
  %v1602 = vmul.f32 %v1200, %v1486
  %v1603 = vmul.f32 %v1201, %v1491
  %v1604 = vmul.f32 %v1202, %v1496
  %v1605 = vmul.f32 %v1203, %v1501
  %v1606 = vmul.f32 %v1204, %v1506
  %v1607 = vmul.f32 %v1205, %v1511
  %v1608 = vmul.f32 %v1206, %v1516
  %v1609 = vmul.f32 %v1207, %v1521
  %v1610 = vmul.f32 %v1208, %v1526
  %v1611 = vmul.f32 %v1209, %v1531
  %v1612 = vmul.f32 %v1210, %v1536
  %v1613 = vmul.f32 %v1211, %v1541
  %v1614 = vmul.f32 %v1212, %v1546
  %vm1615 = vcmask 80896
  %v1616 = vsel %vm1615, %v1548, 0.0
  %v1617 = vsel %vm1615, %v1549, 0.0
  %v1618 = vadd.f32 %v1616, %v1617
  %v1619 = vsel %vm1615, %v1550, 0.0
  %v1620 = vadd.f32 %v1618, %v1619
  %v1621 = vsel %vm1615, %v1551, 0.0
  %v1622 = vadd.f32 %v1620, %v1621
  %v1623 = vsel %vm1615, %v1552, 0.0
  %v1624 = vadd.f32 %v1622, %v1623
  %v1625 = vsel %vm1615, %v1553, 0.0
  %v1626 = vadd.f32 %v1624, %v1625
  %v1627 = vsel %vm1615, %v1554, 0.0
  %v1628 = vadd.f32 %v1626, %v1627
  %v1629 = vsel %vm1615, %v1555, 0.0
  %v1630 = vadd.f32 %v1628, %v1629
  %v1631 = vsel %vm1615, %v1556, 0.0
  %v1632 = vadd.f32 %v1630, %v1631
  %v1633 = vsel %vm1615, %v1557, 0.0
  %v1634 = vadd.f32 %v1632, %v1633
  %v1635 = vsel %vm1615, %v1558, 0.0
  %v1636 = vadd.f32 %v1634, %v1635
  %v1637 = vsel %vm1615, %v1559, 0.0
  %v1638 = vadd.f32 %v1636, %v1637
  %v1639 = vsel %vm1615, %v1560, 0.0
  %v1640 = vadd.f32 %v1638, %v1639
  %v1641 = vsel %vm1615, %v1561, 0.0
  %v1642 = vadd.f32 %v1640, %v1641
  %v1643 = vsel %vm1615, %v1562, 0.0
  %v1644 = vadd.f32 %v1642, %v1643
  %v1645 = vsel %vm1615, %v1563, 0.0
  %v1646 = vadd.f32 %v1644, %v1645
  %v1647 = vsel %vm1615, %v1564, 0.0
  %v1648 = vadd.f32 %v1646, %v1647
  %v1649 = vsel %vm1615, %v1565, 0.0
  %v1650 = vadd.f32 %v1648, %v1649
  %v1651 = vsel %vm1615, %v1566, 0.0
  %v1652 = vadd.f32 %v1650, %v1651
  %v1653 = vsel %vm1615, %v1567, 0.0
  %v1654 = vadd.f32 %v1652, %v1653
  %v1655 = vsel %vm1615, %v1568, 0.0
  %v1656 = vadd.f32 %v1654, %v1655
  %v1657 = vsel %vm1615, %v1569, 0.0
  %v1658 = vadd.f32 %v1656, %v1657
  %v1659 = vsel %vm1615, %v1570, 0.0
  %v1660 = vadd.f32 %v1658, %v1659
  %v1661 = vsel %vm1615, %v1571, 0.0
  %v1662 = vadd.f32 %v1660, %v1661
  %v1663 = vsel %vm1615, %v1572, 0.0
  %v1664 = vadd.f32 %v1662, %v1663
  %v1665 = vsel %vm1615, %v1573, 0.0
  %v1666 = vadd.f32 %v1664, %v1665
  %v1667 = vsel %vm1615, %v1574, 0.0
  %v1668 = vadd.f32 %v1666, %v1667
  %v1669 = vsel %vm1615, %v1575, 0.0
  %v1670 = vadd.f32 %v1668, %v1669
  %v1671 = vsel %vm1615, %v1576, 0.0
  %v1672 = vadd.f32 %v1670, %v1671
  %v1673 = vsel %vm1615, %v1577, 0.0
  %v1674 = vadd.f32 %v1672, %v1673
  %v1675 = vsel %vm1615, %v1578, 0.0
  %v1676 = vadd.f32 %v1674, %v1675
  %v1677 = vsel %vm1615, %v1579, 0.0
  %v1678 = vadd.f32 %v1676, %v1677
  %v1679 = vsel %vm1615, %v1580, 0.0
  %v1680 = vadd.f32 %v1678, %v1679
  %v1681 = vsel %vm1615, %v1581, 0.0
  %v1682 = vadd.f32 %v1680, %v1681
  %v1683 = vsel %vm1615, %v1582, 0.0
  %v1684 = vadd.f32 %v1682, %v1683
  %v1685 = vsel %vm1615, %v1583, 0.0
  %v1686 = vadd.f32 %v1684, %v1685
  %v1687 = vsel %vm1615, %v1584, 0.0
  %v1688 = vadd.f32 %v1686, %v1687
  %v1689 = vsel %vm1615, %v1585, 0.0
  %v1690 = vadd.f32 %v1688, %v1689
  %v1691 = vsel %vm1615, %v1586, 0.0
  %v1692 = vadd.f32 %v1690, %v1691
  %v1693 = vsel %vm1615, %v1587, 0.0
  %v1694 = vadd.f32 %v1692, %v1693
  %v1695 = vsel %vm1615, %v1588, 0.0
  %v1696 = vadd.f32 %v1694, %v1695
  %v1697 = vsel %vm1615, %v1589, 0.0
  %v1698 = vadd.f32 %v1696, %v1697
  %v1699 = vsel %vm1615, %v1590, 0.0
  %v1700 = vadd.f32 %v1698, %v1699
  %v1701 = vsel %vm1615, %v1591, 0.0
  %v1702 = vadd.f32 %v1700, %v1701
  %v1703 = vsel %vm1615, %v1592, 0.0
  %v1704 = vadd.f32 %v1702, %v1703
  %v1705 = vsel %vm1615, %v1593, 0.0
  %v1706 = vadd.f32 %v1704, %v1705
  %v1707 = vsel %vm1615, %v1594, 0.0
  %v1708 = vadd.f32 %v1706, %v1707
  %v1709 = vsel %vm1615, %v1595, 0.0
  %v1710 = vadd.f32 %v1708, %v1709
  %v1711 = vsel %vm1615, %v1596, 0.0
  %v1712 = vadd.f32 %v1710, %v1711
  %v1713 = vsel %vm1615, %v1597, 0.0
  %v1714 = vadd.f32 %v1712, %v1713
  %v1715 = vsel %vm1615, %v1598, 0.0
  %v1716 = vadd.f32 %v1714, %v1715
  %v1717 = vsel %vm1615, %v1599, 0.0
  %v1718 = vadd.f32 %v1716, %v1717
  %v1719 = vsel %vm1615, %v1600, 0.0
  %v1720 = vadd.f32 %v1718, %v1719
  %v1721 = vsel %vm1615, %v1601, 0.0
  %v1722 = vadd.f32 %v1720, %v1721
  %v1723 = vsel %vm1615, %v1602, 0.0
  %v1724 = vadd.f32 %v1722, %v1723
  %v1725 = vsel %vm1615, %v1603, 0.0
  %v1726 = vadd.f32 %v1724, %v1725
  %v1727 = vsel %vm1615, %v1604, 0.0
  %v1728 = vadd.f32 %v1726, %v1727
  %v1729 = vsel %vm1615, %v1605, 0.0
  %v1730 = vadd.f32 %v1728, %v1729
  %v1731 = vsel %vm1615, %v1606, 0.0
  %v1732 = vadd.f32 %v1730, %v1731
  %v1733 = vsel %vm1615, %v1607, 0.0
  %v1734 = vadd.f32 %v1732, %v1733
  %v1735 = vsel %vm1615, %v1608, 0.0
  %v1736 = vadd.f32 %v1734, %v1735
  %v1737 = vsel %vm1615, %v1609, 0.0
  %v1738 = vadd.f32 %v1736, %v1737
  %v1739 = vsel %vm1615, %v1610, 0.0
  %v1740 = vadd.f32 %v1738, %v1739
  %v1741 = vsel %vm1615, %v1611, 0.0
  %v1742 = vadd.f32 %v1740, %v1741
  %v1743 = vsel %vm1615, %v1612, 0.0
  %v1744 = vadd.f32 %v1742, %v1743
  %v1745 = vsel %vm1615, %v1613, 0.0
  %v1746 = vadd.f32 %v1744, %v1745
  %vm1747 = vcmask 73728
  %v1748 = vsel %vm1747, %v1614, 0.0
  %v1749 = vadd.f32 %v1746, %v1748
  %v1750 = vrot.slane %v1749, 4
  %v1751 = vadd.f32 %v1749, %v1750
  %v1752 = vrot.slane %v1751, 2
  %v1753 = vadd.f32 %v1751, %v1752
  %v1754 = vrot.slane %v1753, 1
  %v1755 = vadd.f32 %v1753, %v1754
  %v1756 = vrcp.pop 450.0
  %v1757 = vmul.f32 %v1755, %v1756
  %v1758 = vsub.f32 %v1146, %v1757
  %v1759 = vsub.f32 %v1147, %v1757
  %v1760 = vsub.f32 %v1148, %v1757
  %v1761 = vsub.f32 %v1149, %v1757
  %v1762 = vsub.f32 %v1150, %v1757
  %v1763 = vsub.f32 %v1151, %v1757
  %v1764 = vsub.f32 %v1152, %v1757
  %v1765 = vsub.f32 %v1153, %v1757
  %v1766 = vsub.f32 %v1154, %v1757
  %v1767 = vsub.f32 %v1155, %v1757
  %v1768 = vsub.f32 %v1156, %v1757
  %v1769 = vsub.f32 %v1157, %v1757
  %v1770 = vsub.f32 %v1158, %v1757
  %v1771 = vsub.f32 %v1159, %v1757
  %v1772 = vsub.f32 %v1160, %v1757
  %v1773 = vsub.f32 %v1161, %v1757
  %v1774 = vsub.f32 %v1162, %v1757
  %v1775 = vsub.f32 %v1163, %v1757
  %v1776 = vsub.f32 %v1164, %v1757
  %v1777 = vsub.f32 %v1165, %v1757
  %v1778 = vsub.f32 %v1166, %v1757
  %v1779 = vsub.f32 %v1167, %v1757
  %v1780 = vsub.f32 %v1168, %v1757
  %v1781 = vsub.f32 %v1169, %v1757
  %v1782 = vsub.f32 %v1170, %v1757
  %v1783 = vsub.f32 %v1171, %v1757
  %v1784 = vsub.f32 %v1172, %v1757
  %v1785 = vsub.f32 %v1173, %v1757
  %v1786 = vsub.f32 %v1174, %v1757
  %v1787 = vsub.f32 %v1175, %v1757
  %v1788 = vsub.f32 %v1176, %v1757
  %v1789 = vsub.f32 %v1177, %v1757
  %v1790 = vsub.f32 %v1178, %v1757
  %v1791 = vsub.f32 %v1179, %v1757
  %v1792 = vsub.f32 %v1180, %v1757
  %v1793 = vsub.f32 %v1181, %v1757
  %v1794 = vsub.f32 %v1182, %v1757
  %v1795 = vsub.f32 %v1183, %v1757
  %v1796 = vsub.f32 %v1184, %v1757
  %v1797 = vsub.f32 %v1185, %v1757
  %v1798 = vsub.f32 %v1186, %v1757
  %v1799 = vsub.f32 %v1187, %v1757
  %v1800 = vsub.f32 %v1188, %v1757
  %v1801 = vsub.f32 %v1189, %v1757
  %v1802 = vsub.f32 %v1190, %v1757
  %v1803 = vsub.f32 %v1191, %v1757
  %v1804 = vsub.f32 %v1192, %v1757
  %v1805 = vsub.f32 %v1193, %v1757
  %v1806 = vsub.f32 %v1194, %v1757
  %v1807 = vsub.f32 %v1195, %v1757
  %v1808 = vsub.f32 %v1196, %v1757
  %v1809 = vsub.f32 %v1197, %v1757
  %v1810 = vsub.f32 %v1198, %v1757
  %v1811 = vsub.f32 %v1199, %v1757
  %v1812 = vsub.f32 %v1200, %v1757
  %v1813 = vsub.f32 %v1201, %v1757
  %v1814 = vsub.f32 %v1202, %v1757
  %v1815 = vsub.f32 %v1203, %v1757
  %v1816 = vsub.f32 %v1204, %v1757
  %v1817 = vsub.f32 %v1205, %v1757
  %v1818 = vsub.f32 %v1206, %v1757
  %v1819 = vsub.f32 %v1207, %v1757
  %v1820 = vsub.f32 %v1208, %v1757
  %v1821 = vsub.f32 %v1209, %v1757
  %v1822 = vsub.f32 %v1210, %v1757
  %v1823 = vsub.f32 %v1211, %v1757
  %v1824 = vsub.f32 %v1212, %v1757
  %v1825 = vmul.f32 %v1758, %v1758
  %v1826 = vmul.f32 %v1759, %v1759
  %v1827 = vmul.f32 %v1760, %v1760
  %v1828 = vmul.f32 %v1761, %v1761
  %v1829 = vmul.f32 %v1762, %v1762
  %v1830 = vmul.f32 %v1763, %v1763
  %v1831 = vmul.f32 %v1764, %v1764
  %v1832 = vmul.f32 %v1765, %v1765
  %v1833 = vmul.f32 %v1766, %v1766
  %v1834 = vmul.f32 %v1767, %v1767
  %v1835 = vmul.f32 %v1768, %v1768
  %v1836 = vmul.f32 %v1769, %v1769
  %v1837 = vmul.f32 %v1770, %v1770
  %v1838 = vmul.f32 %v1771, %v1771
  %v1839 = vmul.f32 %v1772, %v1772
  %v1840 = vmul.f32 %v1773, %v1773
  %v1841 = vmul.f32 %v1774, %v1774
  %v1842 = vmul.f32 %v1775, %v1775
  %v1843 = vmul.f32 %v1776, %v1776
  %v1844 = vmul.f32 %v1777, %v1777
  %v1845 = vmul.f32 %v1778, %v1778
  %v1846 = vmul.f32 %v1779, %v1779
  %v1847 = vmul.f32 %v1780, %v1780
  %v1848 = vmul.f32 %v1781, %v1781
  %v1849 = vmul.f32 %v1782, %v1782
  %v1850 = vmul.f32 %v1783, %v1783
  %v1851 = vmul.f32 %v1784, %v1784
  %v1852 = vmul.f32 %v1785, %v1785
  %v1853 = vmul.f32 %v1786, %v1786
  %v1854 = vmul.f32 %v1787, %v1787
  %v1855 = vmul.f32 %v1788, %v1788
  %v1856 = vmul.f32 %v1789, %v1789
  %v1857 = vmul.f32 %v1790, %v1790
  %v1858 = vmul.f32 %v1791, %v1791
  %v1859 = vmul.f32 %v1792, %v1792
  %v1860 = vmul.f32 %v1793, %v1793
  %v1861 = vmul.f32 %v1794, %v1794
  %v1862 = vmul.f32 %v1795, %v1795
  %v1863 = vmul.f32 %v1796, %v1796
  %v1864 = vmul.f32 %v1797, %v1797
  %v1865 = vmul.f32 %v1798, %v1798
  %v1866 = vmul.f32 %v1799, %v1799
  %v1867 = vmul.f32 %v1800, %v1800
  %v1868 = vmul.f32 %v1801, %v1801
  %v1869 = vmul.f32 %v1802, %v1802
  %v1870 = vmul.f32 %v1803, %v1803
  %v1871 = vmul.f32 %v1804, %v1804
  %v1872 = vmul.f32 %v1805, %v1805
  %v1873 = vmul.f32 %v1806, %v1806
  %v1874 = vmul.f32 %v1807, %v1807
  %v1875 = vmul.f32 %v1808, %v1808
  %v1876 = vmul.f32 %v1809, %v1809
  %v1877 = vmul.f32 %v1810, %v1810
  %v1878 = vmul.f32 %v1811, %v1811
  %v1879 = vmul.f32 %v1812, %v1812
  %v1880 = vmul.f32 %v1813, %v1813
  %v1881 = vmul.f32 %v1814, %v1814
  %v1882 = vmul.f32 %v1815, %v1815
  %v1883 = vmul.f32 %v1816, %v1816
  %v1884 = vmul.f32 %v1817, %v1817
  %v1885 = vmul.f32 %v1818, %v1818
  %v1886 = vmul.f32 %v1819, %v1819
  %v1887 = vmul.f32 %v1820, %v1820
  %v1888 = vmul.f32 %v1821, %v1821
  %v1889 = vmul.f32 %v1822, %v1822
  %v1890 = vmul.f32 %v1823, %v1823
  %v1891 = vmul.f32 %v1824, %v1824
  %v1892 = vmul.f32 %v1825, %v1216
  %v1893 = vmul.f32 %v1826, %v1221
  %v1894 = vmul.f32 %v1827, %v1226
  %v1895 = vmul.f32 %v1828, %v1231
  %v1896 = vmul.f32 %v1829, %v1236
  %v1897 = vmul.f32 %v1830, %v1241
  %v1898 = vmul.f32 %v1831, %v1246
  %v1899 = vmul.f32 %v1832, %v1251
  %v1900 = vmul.f32 %v1833, %v1256
  %v1901 = vmul.f32 %v1834, %v1261
  %v1902 = vmul.f32 %v1835, %v1266
  %v1903 = vmul.f32 %v1836, %v1271
  %v1904 = vmul.f32 %v1837, %v1276
  %v1905 = vmul.f32 %v1838, %v1281
  %v1906 = vmul.f32 %v1839, %v1286
  %v1907 = vmul.f32 %v1840, %v1291
  %v1908 = vmul.f32 %v1841, %v1296
  %v1909 = vmul.f32 %v1842, %v1301
  %v1910 = vmul.f32 %v1843, %v1306
  %v1911 = vmul.f32 %v1844, %v1311
  %v1912 = vmul.f32 %v1845, %v1316
  %v1913 = vmul.f32 %v1846, %v1321
  %v1914 = vmul.f32 %v1847, %v1326
  %v1915 = vmul.f32 %v1848, %v1331
  %v1916 = vmul.f32 %v1849, %v1336
  %v1917 = vmul.f32 %v1850, %v1341
  %v1918 = vmul.f32 %v1851, %v1346
  %v1919 = vmul.f32 %v1852, %v1351
  %v1920 = vmul.f32 %v1853, %v1356
  %v1921 = vmul.f32 %v1854, %v1361
  %v1922 = vmul.f32 %v1855, %v1366
  %v1923 = vmul.f32 %v1856, %v1371
  %v1924 = vmul.f32 %v1857, %v1376
  %v1925 = vmul.f32 %v1858, %v1381
  %v1926 = vmul.f32 %v1859, %v1386
  %v1927 = vmul.f32 %v1860, %v1391
  %v1928 = vmul.f32 %v1861, %v1396
  %v1929 = vmul.f32 %v1862, %v1401
  %v1930 = vmul.f32 %v1863, %v1406
  %v1931 = vmul.f32 %v1864, %v1411
  %v1932 = vmul.f32 %v1865, %v1416
  %v1933 = vmul.f32 %v1866, %v1421
  %v1934 = vmul.f32 %v1867, %v1426
  %v1935 = vmul.f32 %v1868, %v1431
  %v1936 = vmul.f32 %v1869, %v1436
  %v1937 = vmul.f32 %v1870, %v1441
  %v1938 = vmul.f32 %v1871, %v1446
  %v1939 = vmul.f32 %v1872, %v1451
  %v1940 = vmul.f32 %v1873, %v1456
  %v1941 = vmul.f32 %v1874, %v1461
  %v1942 = vmul.f32 %v1875, %v1466
  %v1943 = vmul.f32 %v1876, %v1471
  %v1944 = vmul.f32 %v1877, %v1476
  %v1945 = vmul.f32 %v1878, %v1481
  %v1946 = vmul.f32 %v1879, %v1486
  %v1947 = vmul.f32 %v1880, %v1491
  %v1948 = vmul.f32 %v1881, %v1496
  %v1949 = vmul.f32 %v1882, %v1501
  %v1950 = vmul.f32 %v1883, %v1506
  %v1951 = vmul.f32 %v1884, %v1511
  %v1952 = vmul.f32 %v1885, %v1516
  %v1953 = vmul.f32 %v1886, %v1521
  %v1954 = vmul.f32 %v1887, %v1526
  %v1955 = vmul.f32 %v1888, %v1531
  %v1956 = vmul.f32 %v1889, %v1536
  %v1957 = vmul.f32 %v1890, %v1541
  %v1958 = vmul.f32 %v1891, %v1546
  %v1959 = vsel %vm1615, %v1892, 0.0
  %v1960 = vsel %vm1615, %v1893, 0.0
  %v1961 = vadd.f32 %v1959, %v1960
  %v1962 = vsel %vm1615, %v1894, 0.0
  %v1963 = vadd.f32 %v1961, %v1962
  %v1964 = vsel %vm1615, %v1895, 0.0
  %v1965 = vadd.f32 %v1963, %v1964
  %v1966 = vsel %vm1615, %v1896, 0.0
  %v1967 = vadd.f32 %v1965, %v1966
  %v1968 = vsel %vm1615, %v1897, 0.0
  %v1969 = vadd.f32 %v1967, %v1968
  %v1970 = vsel %vm1615, %v1898, 0.0
  %v1971 = vadd.f32 %v1969, %v1970
  %v1972 = vsel %vm1615, %v1899, 0.0
  %v1973 = vadd.f32 %v1971, %v1972
  %v1974 = vsel %vm1615, %v1900, 0.0
  %v1975 = vadd.f32 %v1973, %v1974
  %v1976 = vsel %vm1615, %v1901, 0.0
  %v1977 = vadd.f32 %v1975, %v1976
  %v1978 = vsel %vm1615, %v1902, 0.0
  %v1979 = vadd.f32 %v1977, %v1978
  %v1980 = vsel %vm1615, %v1903, 0.0
  %v1981 = vadd.f32 %v1979, %v1980
  %v1982 = vsel %vm1615, %v1904, 0.0
  %v1983 = vadd.f32 %v1981, %v1982
  %v1984 = vsel %vm1615, %v1905, 0.0
  %v1985 = vadd.f32 %v1983, %v1984
  %v1986 = vsel %vm1615, %v1906, 0.0
  %v1987 = vadd.f32 %v1985, %v1986
  %v1988 = vsel %vm1615, %v1907, 0.0
  %v1989 = vadd.f32 %v1987, %v1988
  %v1990 = vsel %vm1615, %v1908, 0.0
  %v1991 = vadd.f32 %v1989, %v1990
  %v1992 = vsel %vm1615, %v1909, 0.0
  %v1993 = vadd.f32 %v1991, %v1992
  %v1994 = vsel %vm1615, %v1910, 0.0
  %v1995 = vadd.f32 %v1993, %v1994
  %v1996 = vsel %vm1615, %v1911, 0.0
  %v1997 = vadd.f32 %v1995, %v1996
  %v1998 = vsel %vm1615, %v1912, 0.0
  %v1999 = vadd.f32 %v1997, %v1998
  %v2000 = vsel %vm1615, %v1913, 0.0
  %v2001 = vadd.f32 %v1999, %v2000
  %v2002 = vsel %vm1615, %v1914, 0.0
  %v2003 = vadd.f32 %v2001, %v2002
  %v2004 = vsel %vm1615, %v1915, 0.0
  %v2005 = vadd.f32 %v2003, %v2004
  %v2006 = vsel %vm1615, %v1916, 0.0
  %v2007 = vadd.f32 %v2005, %v2006
  %v2008 = vsel %vm1615, %v1917, 0.0
  %v2009 = vadd.f32 %v2007, %v2008
  %v2010 = vsel %vm1615, %v1918, 0.0
  %v2011 = vadd.f32 %v2009, %v2010
  %v2012 = vsel %vm1615, %v1919, 0.0
  %v2013 = vadd.f32 %v2011, %v2012
  %v2014 = vsel %vm1615, %v1920, 0.0
  %v2015 = vadd.f32 %v2013, %v2014
  %v2016 = vsel %vm1615, %v1921, 0.0
  %v2017 = vadd.f32 %v2015, %v2016
  %v2018 = vsel %vm1615, %v1922, 0.0
  %v2019 = vadd.f32 %v2017, %v2018
  %v2020 = vsel %vm1615, %v1923, 0.0
  %v2021 = vadd.f32 %v2019, %v2020
  %v2022 = vsel %vm1615, %v1924, 0.0
  %v2023 = vadd.f32 %v2021, %v2022
  %v2024 = vsel %vm1615, %v1925, 0.0
  %v2025 = vadd.f32 %v2023, %v2024
  %v2026 = vsel %vm1615, %v1926, 0.0
  %v2027 = vadd.f32 %v2025, %v2026
  %v2028 = vsel %vm1615, %v1927, 0.0
  %v2029 = vadd.f32 %v2027, %v2028
  %v2030 = vsel %vm1615, %v1928, 0.0
  %v2031 = vadd.f32 %v2029, %v2030
  %v2032 = vsel %vm1615, %v1929, 0.0
  %v2033 = vadd.f32 %v2031, %v2032
  %v2034 = vsel %vm1615, %v1930, 0.0
  %v2035 = vadd.f32 %v2033, %v2034
  %v2036 = vsel %vm1615, %v1931, 0.0
  %v2037 = vadd.f32 %v2035, %v2036
  %v2038 = vsel %vm1615, %v1932, 0.0
  %v2039 = vadd.f32 %v2037, %v2038
  %v2040 = vsel %vm1615, %v1933, 0.0
  %v2041 = vadd.f32 %v2039, %v2040
  %v2042 = vsel %vm1615, %v1934, 0.0
  %v2043 = vadd.f32 %v2041, %v2042
  %v2044 = vsel %vm1615, %v1935, 0.0
  %v2045 = vadd.f32 %v2043, %v2044
  %v2046 = vsel %vm1615, %v1936, 0.0
  %v2047 = vadd.f32 %v2045, %v2046
  %v2048 = vsel %vm1615, %v1937, 0.0
  %v2049 = vadd.f32 %v2047, %v2048
  %v2050 = vsel %vm1615, %v1938, 0.0
  %v2051 = vadd.f32 %v2049, %v2050
  %v2052 = vsel %vm1615, %v1939, 0.0
  %v2053 = vadd.f32 %v2051, %v2052
  %v2054 = vsel %vm1615, %v1940, 0.0
  %v2055 = vadd.f32 %v2053, %v2054
  %v2056 = vsel %vm1615, %v1941, 0.0
  %v2057 = vadd.f32 %v2055, %v2056
  %v2058 = vsel %vm1615, %v1942, 0.0
  %v2059 = vadd.f32 %v2057, %v2058
  %v2060 = vsel %vm1615, %v1943, 0.0
  %v2061 = vadd.f32 %v2059, %v2060
  %v2062 = vsel %vm1615, %v1944, 0.0
  %v2063 = vadd.f32 %v2061, %v2062
  %v2064 = vsel %vm1615, %v1945, 0.0
  %v2065 = vadd.f32 %v2063, %v2064
  %v2066 = vsel %vm1615, %v1946, 0.0
  %v2067 = vadd.f32 %v2065, %v2066
  %v2068 = vsel %vm1615, %v1947, 0.0
  %v2069 = vadd.f32 %v2067, %v2068
  %v2070 = vsel %vm1615, %v1948, 0.0
  %v2071 = vadd.f32 %v2069, %v2070
  %v2072 = vsel %vm1615, %v1949, 0.0
  %v2073 = vadd.f32 %v2071, %v2072
  %v2074 = vsel %vm1615, %v1950, 0.0
  %v2075 = vadd.f32 %v2073, %v2074
  %v2076 = vsel %vm1615, %v1951, 0.0
  %v2077 = vadd.f32 %v2075, %v2076
  %v2078 = vsel %vm1615, %v1952, 0.0
  %v2079 = vadd.f32 %v2077, %v2078
  %v2080 = vsel %vm1615, %v1953, 0.0
  %v2081 = vadd.f32 %v2079, %v2080
  %v2082 = vsel %vm1615, %v1954, 0.0
  %v2083 = vadd.f32 %v2081, %v2082
  %v2084 = vsel %vm1615, %v1955, 0.0
  %v2085 = vadd.f32 %v2083, %v2084
  %v2086 = vsel %vm1615, %v1956, 0.0
  %v2087 = vadd.f32 %v2085, %v2086
  %v2088 = vsel %vm1615, %v1957, 0.0
  %v2089 = vadd.f32 %v2087, %v2088
  %v2090 = vsel %vm1747, %v1958, 0.0
  %v2091 = vadd.f32 %v2089, %v2090
  %v2092 = vrot.slane %v2091, 4
  %v2093 = vadd.f32 %v2091, %v2092
  %v2094 = vrot.slane %v2093, 2
  %v2095 = vadd.f32 %v2093, %v2094
  %v2096 = vrot.slane %v2095, 1
  %v2097 = vadd.f32 %v2095, %v2096
  %v2098 = vmul.f32 %v2097, %v1756
  %v2099 = vadd.f32 %v2098, 1e-05
  %v2100 = vrsqrt.pop %v2099
  %v2101 = vmul.f32 %v1758, %v2100
  %v2102 = vmul.f32 %v1759, %v2100
  %v2103 = vmul.f32 %v1760, %v2100
  %v2104 = vmul.f32 %v1761, %v2100
  %v2105 = vmul.f32 %v1762, %v2100
  %v2106 = vmul.f32 %v1763, %v2100
  %v2107 = vmul.f32 %v1764, %v2100
  %v2108 = vmul.f32 %v1765, %v2100
  %v2109 = vmul.f32 %v1766, %v2100
  %v2110 = vmul.f32 %v1767, %v2100
  %v2111 = vmul.f32 %v1768, %v2100
  %v2112 = vmul.f32 %v1769, %v2100
  %v2113 = vmul.f32 %v1770, %v2100
  %v2114 = vmul.f32 %v1771, %v2100
  %v2115 = vmul.f32 %v1772, %v2100
  %v2116 = vmul.f32 %v1773, %v2100
  %v2117 = vmul.f32 %v1774, %v2100
  %v2118 = vmul.f32 %v1775, %v2100
  %v2119 = vmul.f32 %v1776, %v2100
  %v2120 = vmul.f32 %v1777, %v2100
  %v2121 = vmul.f32 %v1778, %v2100
  %v2122 = vmul.f32 %v1779, %v2100
  %v2123 = vmul.f32 %v1780, %v2100
  %v2124 = vmul.f32 %v1781, %v2100
  %v2125 = vmul.f32 %v1782, %v2100
  %v2126 = vmul.f32 %v1783, %v2100
  %v2127 = vmul.f32 %v1784, %v2100
  %v2128 = vmul.f32 %v1785, %v2100
  %v2129 = vmul.f32 %v1786, %v2100
  %v2130 = vmul.f32 %v1787, %v2100
  %v2131 = vmul.f32 %v1788, %v2100
  %v2132 = vmul.f32 %v1789, %v2100
  %v2133 = vmul.f32 %v1790, %v2100
  %v2134 = vmul.f32 %v1791, %v2100
  %v2135 = vmul.f32 %v1792, %v2100
  %v2136 = vmul.f32 %v1793, %v2100
  %v2137 = vmul.f32 %v1794, %v2100
  %v2138 = vmul.f32 %v1795, %v2100
  %v2139 = vmul.f32 %v1796, %v2100
  %v2140 = vmul.f32 %v1797, %v2100
  %v2141 = vmul.f32 %v1798, %v2100
  %v2142 = vmul.f32 %v1799, %v2100
  %v2143 = vmul.f32 %v1800, %v2100
  %v2144 = vmul.f32 %v1801, %v2100
  %v2145 = vmul.f32 %v1802, %v2100
  %v2146 = vmul.f32 %v1803, %v2100
  %v2147 = vmul.f32 %v1804, %v2100
  %v2148 = vmul.f32 %v1805, %v2100
  %v2149 = vmul.f32 %v1806, %v2100
  %v2150 = vmul.f32 %v1807, %v2100
  %v2151 = vmul.f32 %v1808, %v2100
  %v2152 = vmul.f32 %v1809, %v2100
  %v2153 = vmul.f32 %v1810, %v2100
  %v2154 = vmul.f32 %v1811, %v2100
  %v2155 = vmul.f32 %v1812, %v2100
  %v2156 = vmul.f32 %v1813, %v2100
  %v2157 = vmul.f32 %v1814, %v2100
  %v2158 = vmul.f32 %v1815, %v2100
  %v2159 = vmul.f32 %v1816, %v2100
  %v2160 = vmul.f32 %v1817, %v2100
  %v2161 = vmul.f32 %v1818, %v2100
  %v2162 = vmul.f32 %v1819, %v2100
  %v2163 = vmul.f32 %v1820, %v2100
  %v2164 = vmul.f32 %v1821, %v2100
  %v2165 = vmul.f32 %v1822, %v2100
  %v2166 = vmul.f32 %v1823, %v2100
  %v2167 = vmul.f32 %v1824, %v2100
  %v2169 = vlaneseq
  %v2170 = vshrl.u32 %v2169, 7
  %v2171 = vsub.s32 0, %v2170
  %v2172 = vrot.slane %v99, %v2171
  %v2174 = vmul.f32 %v2101, %v2172
  %v2175 = vmul.f32 %v2102, %v2172
  %v2176 = vmul.f32 %v2103, %v2172
  %v2177 = vmul.f32 %v2104, %v2172
  %v2178 = vmul.f32 %v2105, %v2172
  %v2179 = vmul.f32 %v2106, %v2172
  %v2180 = vmul.f32 %v2107, %v2172
  %v2181 = vmul.f32 %v2108, %v2172
  %v2182 = vmul.f32 %v2109, %v2172
  %v2183 = vmul.f32 %v2110, %v2172
  %v2184 = vmul.f32 %v2111, %v2172
  %v2185 = vmul.f32 %v2112, %v2172
  %v2186 = vmul.f32 %v2113, %v2172
  %v2187 = vmul.f32 %v2114, %v2172
  %v2188 = vmul.f32 %v2115, %v2172
  %v2189 = vmul.f32 %v2116, %v2172
  %v2190 = vmul.f32 %v2117, %v2172
  %v2191 = vmul.f32 %v2118, %v2172
  %v2192 = vmul.f32 %v2119, %v2172
  %v2193 = vmul.f32 %v2120, %v2172
  %v2194 = vmul.f32 %v2121, %v2172
  %v2195 = vmul.f32 %v2122, %v2172
  %v2196 = vmul.f32 %v2123, %v2172
  %v2197 = vmul.f32 %v2124, %v2172
  %v2198 = vmul.f32 %v2125, %v2172
  %v2199 = vmul.f32 %v2126, %v2172
  %v2200 = vmul.f32 %v2127, %v2172
  %v2201 = vmul.f32 %v2128, %v2172
  %v2202 = vmul.f32 %v2129, %v2172
  %v2203 = vmul.f32 %v2130, %v2172
  %v2204 = vmul.f32 %v2131, %v2172
  %v2205 = vmul.f32 %v2132, %v2172
  %v2206 = vmul.f32 %v2133, %v2172
  %v2207 = vmul.f32 %v2134, %v2172
  %v2208 = vmul.f32 %v2135, %v2172
  %v2209 = vmul.f32 %v2136, %v2172
  %v2210 = vmul.f32 %v2137, %v2172
  %v2211 = vmul.f32 %v2138, %v2172
  %v2212 = vmul.f32 %v2139, %v2172
  %v2213 = vmul.f32 %v2140, %v2172
  %v2214 = vmul.f32 %v2141, %v2172
  %v2215 = vmul.f32 %v2142, %v2172
  %v2216 = vmul.f32 %v2143, %v2172
  %v2217 = vmul.f32 %v2144, %v2172
  %v2218 = vmul.f32 %v2145, %v2172
  %v2219 = vmul.f32 %v2146, %v2172
  %v2220 = vmul.f32 %v2147, %v2172
  %v2221 = vmul.f32 %v2148, %v2172
  %v2222 = vmul.f32 %v2149, %v2172
  %v2223 = vmul.f32 %v2150, %v2172
  %v2224 = vmul.f32 %v2151, %v2172
  %v2225 = vmul.f32 %v2152, %v2172
  %v2226 = vmul.f32 %v2153, %v2172
  %v2227 = vmul.f32 %v2154, %v2172
  %v2228 = vmul.f32 %v2155, %v2172
  %v2229 = vmul.f32 %v2156, %v2172
  %v2230 = vmul.f32 %v2157, %v2172
  %v2231 = vmul.f32 %v2158, %v2172
  %v2232 = vmul.f32 %v2159, %v2172
  %v2233 = vmul.f32 %v2160, %v2172
  %v2234 = vmul.f32 %v2161, %v2172
  %v2235 = vmul.f32 %v2162, %v2172
  %v2236 = vmul.f32 %v2163, %v2172
  %v2237 = vmul.f32 %v2164, %v2172
  %v2238 = vmul.f32 %v2165, %v2172
  %v2239 = vmul.f32 %v2166, %v2172
  %v2240 = vmul.f32 %v2167, %v2172
  %v2242 = vlaneseq
  %v2243 = vshrl.u32 %v2242, 7
  %v2244 = vsub.s32 0, %v2243
  %v2245 = vrot.slane %v100, %v2244
  %v2247 = vadd.f32 %v2174, %v2245
  %v2248 = vadd.f32 %v2175, %v2245
  %v2249 = vadd.f32 %v2176, %v2245
  %v2250 = vadd.f32 %v2177, %v2245
  %v2251 = vadd.f32 %v2178, %v2245
  %v2252 = vadd.f32 %v2179, %v2245
  %v2253 = vadd.f32 %v2180, %v2245
  %v2254 = vadd.f32 %v2181, %v2245
  %v2255 = vadd.f32 %v2182, %v2245
  %v2256 = vadd.f32 %v2183, %v2245
  %v2257 = vadd.f32 %v2184, %v2245
  %v2258 = vadd.f32 %v2185, %v2245
  %v2259 = vadd.f32 %v2186, %v2245
  %v2260 = vadd.f32 %v2187, %v2245
  %v2261 = vadd.f32 %v2188, %v2245
  %v2262 = vadd.f32 %v2189, %v2245
  %v2263 = vadd.f32 %v2190, %v2245
  %v2264 = vadd.f32 %v2191, %v2245
  %v2265 = vadd.f32 %v2192, %v2245
  %v2266 = vadd.f32 %v2193, %v2245
  %v2267 = vadd.f32 %v2194, %v2245
  %v2268 = vadd.f32 %v2195, %v2245
  %v2269 = vadd.f32 %v2196, %v2245
  %v2270 = vadd.f32 %v2197, %v2245
  %v2271 = vadd.f32 %v2198, %v2245
  %v2272 = vadd.f32 %v2199, %v2245
  %v2273 = vadd.f32 %v2200, %v2245
  %v2274 = vadd.f32 %v2201, %v2245
  %v2275 = vadd.f32 %v2202, %v2245
  %v2276 = vadd.f32 %v2203, %v2245
  %v2277 = vadd.f32 %v2204, %v2245
  %v2278 = vadd.f32 %v2205, %v2245
  %v2279 = vadd.f32 %v2206, %v2245
  %v2280 = vadd.f32 %v2207, %v2245
  %v2281 = vadd.f32 %v2208, %v2245
  %v2282 = vadd.f32 %v2209, %v2245
  %v2283 = vadd.f32 %v2210, %v2245
  %v2284 = vadd.f32 %v2211, %v2245
  %v2285 = vadd.f32 %v2212, %v2245
  %v2286 = vadd.f32 %v2213, %v2245
  %v2287 = vadd.f32 %v2214, %v2245
  %v2288 = vadd.f32 %v2215, %v2245
  %v2289 = vadd.f32 %v2216, %v2245
  %v2290 = vadd.f32 %v2217, %v2245
  %v2291 = vadd.f32 %v2218, %v2245
  %v2292 = vadd.f32 %v2219, %v2245
  %v2293 = vadd.f32 %v2220, %v2245
  %v2294 = vadd.f32 %v2221, %v2245
  %v2295 = vadd.f32 %v2222, %v2245
  %v2296 = vadd.f32 %v2223, %v2245
  %v2297 = vadd.f32 %v2224, %v2245
  %v2298 = vadd.f32 %v2225, %v2245
  %v2299 = vadd.f32 %v2226, %v2245
  %v2300 = vadd.f32 %v2227, %v2245
  %v2301 = vadd.f32 %v2228, %v2245
  %v2302 = vadd.f32 %v2229, %v2245
  %v2303 = vadd.f32 %v2230, %v2245
  %v2304 = vadd.f32 %v2231, %v2245
  %v2305 = vadd.f32 %v2232, %v2245
  %v2306 = vadd.f32 %v2233, %v2245
  %v2307 = vadd.f32 %v2234, %v2245
  %v2308 = vadd.f32 %v2235, %v2245
  %v2309 = vadd.f32 %v2236, %v2245
  %v2310 = vadd.f32 %v2237, %v2245
  %v2311 = vadd.f32 %v2238, %v2245
  %v2312 = vadd.f32 %v2239, %v2245
  %v2313 = vadd.f32 %v2240, %v2245
  %v2314 = vmax.f32 %v2247, 0.0
  %v2315 = vmax.f32 %v2248, 0.0
  %v2316 = vmax.f32 %v2249, 0.0
  %v2317 = vmax.f32 %v2250, 0.0
  %v2318 = vmax.f32 %v2251, 0.0
  %v2319 = vmax.f32 %v2252, 0.0
  %v2320 = vmax.f32 %v2253, 0.0
  %v2321 = vmax.f32 %v2254, 0.0
  %v2322 = vmax.f32 %v2255, 0.0
  %v2323 = vmax.f32 %v2256, 0.0
  %v2324 = vmax.f32 %v2257, 0.0
  %v2325 = vmax.f32 %v2258, 0.0
  %v2326 = vmax.f32 %v2259, 0.0
  %v2327 = vmax.f32 %v2260, 0.0
  %v2328 = vmax.f32 %v2261, 0.0
  %v2329 = vmax.f32 %v2262, 0.0
  %v2330 = vmax.f32 %v2263, 0.0
  %v2331 = vmax.f32 %v2264, 0.0
  %v2332 = vmax.f32 %v2265, 0.0
  %v2333 = vmax.f32 %v2266, 0.0
  %v2334 = vmax.f32 %v2267, 0.0
  %v2335 = vmax.f32 %v2268, 0.0
  %v2336 = vmax.f32 %v2269, 0.0
  %v2337 = vmax.f32 %v2270, 0.0
  %v2338 = vmax.f32 %v2271, 0.0
  %v2339 = vmax.f32 %v2272, 0.0
  %v2340 = vmax.f32 %v2273, 0.0
  %v2341 = vmax.f32 %v2274, 0.0
  %v2342 = vmax.f32 %v2275, 0.0
  %v2343 = vmax.f32 %v2276, 0.0
  %v2344 = vmax.f32 %v2277, 0.0
  %v2345 = vmax.f32 %v2278, 0.0
  %v2346 = vmax.f32 %v2279, 0.0
  %v2347 = vmax.f32 %v2280, 0.0
  %v2348 = vmax.f32 %v2281, 0.0
  %v2349 = vmax.f32 %v2282, 0.0
  %v2350 = vmax.f32 %v2283, 0.0
  %v2351 = vmax.f32 %v2284, 0.0
  %v2352 = vmax.f32 %v2285, 0.0
  %v2353 = vmax.f32 %v2286, 0.0
  %v2354 = vmax.f32 %v2287, 0.0
  %v2355 = vmax.f32 %v2288, 0.0
  %v2356 = vmax.f32 %v2289, 0.0
  %v2357 = vmax.f32 %v2290, 0.0
  %v2358 = vmax.f32 %v2291, 0.0
  %v2359 = vmax.f32 %v2292, 0.0
  %v2360 = vmax.f32 %v2293, 0.0
  %v2361 = vmax.f32 %v2294, 0.0
  %v2362 = vmax.f32 %v2295, 0.0
  %v2363 = vmax.f32 %v2296, 0.0
  %v2364 = vmax.f32 %v2297, 0.0
  %v2365 = vmax.f32 %v2298, 0.0
  %v2366 = vmax.f32 %v2299, 0.0
  %v2367 = vmax.f32 %v2300, 0.0
  %v2368 = vmax.f32 %v2301, 0.0
  %v2369 = vmax.f32 %v2302, 0.0
  %v2370 = vmax.f32 %v2303, 0.0
  %v2371 = vmax.f32 %v2304, 0.0
  %v2372 = vmax.f32 %v2305, 0.0
  %v2373 = vmax.f32 %v2306, 0.0
  %v2374 = vmax.f32 %v2307, 0.0
  %v2375 = vmax.f32 %v2308, 0.0
  %v2376 = vmax.f32 %v2309, 0.0
  %v2377 = vmax.f32 %v2310, 0.0
  %v2378 = vmax.f32 %v2311, 0.0
  %v2379 = vmax.f32 %v2312, 0.0
  %v2380 = vmax.f32 %v2313, 0.0
  %v2381 = vmul.f32 %v2314, %v1216
  %v2382 = vmul.f32 %v2315, %v1221
  %v2383 = vmul.f32 %v2316, %v1226
  %v2384 = vmul.f32 %v2317, %v1231
  %v2385 = vmul.f32 %v2318, %v1236
  %v2386 = vmul.f32 %v2319, %v1241
  %v2387 = vmul.f32 %v2320, %v1246
  %v2388 = vmul.f32 %v2321, %v1251
  %v2389 = vmul.f32 %v2322, %v1256
  %v2390 = vmul.f32 %v2323, %v1261
  %v2391 = vmul.f32 %v2324, %v1266
  %v2392 = vmul.f32 %v2325, %v1271
  %v2393 = vmul.f32 %v2326, %v1276
  %v2394 = vmul.f32 %v2327, %v1281
  %v2395 = vmul.f32 %v2328, %v1286
  %v2396 = vmul.f32 %v2329, %v1291
  %v2397 = vmul.f32 %v2330, %v1296
  %v2398 = vmul.f32 %v2331, %v1301
  %v2399 = vmul.f32 %v2332, %v1306
  %v2400 = vmul.f32 %v2333, %v1311
  %v2401 = vmul.f32 %v2334, %v1316
  %v2402 = vmul.f32 %v2335, %v1321
  %v2403 = vmul.f32 %v2336, %v1326
  %v2404 = vmul.f32 %v2337, %v1331
  %v2405 = vmul.f32 %v2338, %v1336
  %v2406 = vmul.f32 %v2339, %v1341
  %v2407 = vmul.f32 %v2340, %v1346
  %v2408 = vmul.f32 %v2341, %v1351
  %v2409 = vmul.f32 %v2342, %v1356
  %v2410 = vmul.f32 %v2343, %v1361
  %v2411 = vmul.f32 %v2344, %v1366
  %v2412 = vmul.f32 %v2345, %v1371
  %v2413 = vmul.f32 %v2346, %v1376
  %v2414 = vmul.f32 %v2347, %v1381
  %v2415 = vmul.f32 %v2348, %v1386
  %v2416 = vmul.f32 %v2349, %v1391
  %v2417 = vmul.f32 %v2350, %v1396
  %v2418 = vmul.f32 %v2351, %v1401
  %v2419 = vmul.f32 %v2352, %v1406
  %v2420 = vmul.f32 %v2353, %v1411
  %v2421 = vmul.f32 %v2354, %v1416
  %v2422 = vmul.f32 %v2355, %v1421
  %v2423 = vmul.f32 %v2356, %v1426
  %v2424 = vmul.f32 %v2357, %v1431
  %v2425 = vmul.f32 %v2358, %v1436
  %v2426 = vmul.f32 %v2359, %v1441
  %v2427 = vmul.f32 %v2360, %v1446
  %v2428 = vmul.f32 %v2361, %v1451
  %v2429 = vmul.f32 %v2362, %v1456
  %v2430 = vmul.f32 %v2363, %v1461
  %v2431 = vmul.f32 %v2364, %v1466
  %v2432 = vmul.f32 %v2365, %v1471
  %v2433 = vmul.f32 %v2366, %v1476
  %v2434 = vmul.f32 %v2367, %v1481
  %v2435 = vmul.f32 %v2368, %v1486
  %v2436 = vmul.f32 %v2369, %v1491
  %v2437 = vmul.f32 %v2370, %v1496
  %v2438 = vmul.f32 %v2371, %v1501
  %v2439 = vmul.f32 %v2372, %v1506
  %v2440 = vmul.f32 %v2373, %v1511
  %v2441 = vmul.f32 %v2374, %v1516
  %v2442 = vmul.f32 %v2375, %v1521
  %v2443 = vmul.f32 %v2376, %v1526
  %v2444 = vmul.f32 %v2377, %v1531
  %v2445 = vmul.f32 %v2378, %v1536
  %v2446 = vmul.f32 %v2379, %v1541
  %v2447 = vmul.f32 %v2380, %v1546
  %v2448 = vld [vmem:[%s6] sm:$0xff]
  %v2449 = vld [vmem:[%s6 + $0x8] sm:$0x3]
  %s2450 = scalar_lea.vmem %s6, 16
  %v2451 = vld [vmem:[%s2450] sm:$0xff]
  %v2452 = vld [vmem:[%s2450 + $0x8] sm:$0x3]
  %v2515 = vrot.slane %v2381, 1
  %v2516 = vrot.slane %v2382, 1
  %v2517 = vsel %vm866, %v2515, %v2516
  %v2518 = vrot.slane %v2383, 1
  %v2519 = vsel %vm866, %v2516, %v2518
  %v2520 = vrot.slane %v2384, 1
  %v2521 = vsel %vm866, %v2518, %v2520
  %v2522 = vrot.slane %v2385, 1
  %v2523 = vsel %vm866, %v2520, %v2522
  %v2524 = vrot.slane %v2386, 1
  %v2525 = vsel %vm866, %v2522, %v2524
  %v2526 = vrot.slane %v2387, 1
  %v2527 = vsel %vm866, %v2524, %v2526
  %v2528 = vrot.slane %v2388, 1
  %v2529 = vsel %vm866, %v2526, %v2528
  %v2530 = vrot.slane %v2389, 1
  %v2531 = vsel %vm866, %v2528, %v2530
  %v2532 = vrot.slane %v2390, 1
  %v2533 = vsel %vm866, %v2530, %v2532
  %v2534 = vrot.slane %v2391, 1
  %v2535 = vsel %vm866, %v2532, %v2534
  %v2536 = vrot.slane %v2392, 1
  %v2537 = vsel %vm866, %v2534, %v2536
  %v2538 = vrot.slane %v2393, 1
  %v2539 = vsel %vm866, %v2536, %v2538
  %v2540 = vrot.slane %v2394, 1
  %v2541 = vsel %vm866, %v2538, %v2540
  %v2542 = vrot.slane %v2395, 1
  %v2543 = vsel %vm866, %v2540, %v2542
  %v2544 = vrot.slane %v2396, 1
  %v2545 = vsel %vm866, %v2542, %v2544
  %v2546 = vrot.slane %v2397, 1
  %v2547 = vsel %vm866, %v2544, %v2546
  %v2548 = vrot.slane %v2398, 1
  %v2549 = vsel %vm866, %v2546, %v2548
  %v2550 = vrot.slane %v2399, 1
  %v2551 = vsel %vm866, %v2548, %v2550
  %v2552 = vrot.slane %v2400, 1
  %v2553 = vsel %vm866, %v2550, %v2552
  %v2554 = vrot.slane %v2401, 1
  %v2555 = vsel %vm866, %v2552, %v2554
  %v2556 = vrot.slane %v2402, 1
  %v2557 = vsel %vm866, %v2554, %v2556
  %v2558 = vrot.slane %v2403, 1
  %v2559 = vsel %vm866, %v2556, %v2558
  %v2560 = vrot.slane %v2404, 1
  %v2561 = vsel %vm866, %v2558, %v2560
  %v2562 = vrot.slane %v2405, 1
  %v2563 = vsel %vm866, %v2560, %v2562
  %v2564 = vrot.slane %v2406, 1
  %v2565 = vsel %vm866, %v2562, %v2564
  %v2566 = vrot.slane %v2407, 1
  %v2567 = vsel %vm866, %v2564, %v2566
  %v2568 = vrot.slane %v2408, 1
  %v2569 = vsel %vm866, %v2566, %v2568
  %v2570 = vrot.slane %v2409, 1
  %v2571 = vsel %vm866, %v2568, %v2570
  %v2572 = vrot.slane %v2410, 1
  %v2573 = vsel %vm866, %v2570, %v2572
  %v2574 = vrot.slane %v2411, 1
  %v2575 = vsel %vm866, %v2572, %v2574
  %v2576 = vrot.slane %v2412, 1
  %v2577 = vsel %vm866, %v2574, %v2576
  %v2578 = vrot.slane %v2413, 1
  %v2579 = vsel %vm866, %v2576, %v2578
  %v2580 = vrot.slane %v2414, 1
  %v2581 = vsel %vm866, %v2578, %v2580
  %v2582 = vrot.slane %v2415, 1
  %v2583 = vsel %vm866, %v2580, %v2582
  %v2584 = vrot.slane %v2416, 1
  %v2585 = vsel %vm866, %v2582, %v2584
  %v2586 = vrot.slane %v2417, 1
  %v2587 = vsel %vm866, %v2584, %v2586
  %v2588 = vrot.slane %v2418, 1
  %v2589 = vsel %vm866, %v2586, %v2588
  %v2590 = vrot.slane %v2419, 1
  %v2591 = vsel %vm866, %v2588, %v2590
  %v2592 = vrot.slane %v2420, 1
  %v2593 = vsel %vm866, %v2590, %v2592
  %v2594 = vrot.slane %v2421, 1
  %v2595 = vsel %vm866, %v2592, %v2594
  %v2596 = vrot.slane %v2422, 1
  %v2597 = vsel %vm866, %v2594, %v2596
  %v2598 = vrot.slane %v2423, 1
  %v2599 = vsel %vm866, %v2596, %v2598
  %v2600 = vrot.slane %v2424, 1
  %v2601 = vsel %vm866, %v2598, %v2600
  %v2602 = vrot.slane %v2425, 1
  %v2603 = vsel %vm866, %v2600, %v2602
  %v2604 = vrot.slane %v2426, 1
  %v2605 = vsel %vm866, %v2602, %v2604
  %v2606 = vrot.slane %v2427, 1
  %v2607 = vsel %vm866, %v2604, %v2606
  %v2608 = vrot.slane %v2428, 1
  %v2609 = vsel %vm866, %v2606, %v2608
  %v2610 = vrot.slane %v2429, 1
  %v2611 = vsel %vm866, %v2608, %v2610
  %v2612 = vrot.slane %v2430, 1
  %v2613 = vsel %vm866, %v2610, %v2612
  %v2614 = vrot.slane %v2431, 1
  %v2615 = vsel %vm866, %v2612, %v2614
  %v2616 = vrot.slane %v2432, 1
  %v2617 = vsel %vm866, %v2614, %v2616
  %v2618 = vrot.slane %v2433, 1
  %v2619 = vsel %vm866, %v2616, %v2618
  %v2620 = vrot.slane %v2434, 1
  %v2621 = vsel %vm866, %v2618, %v2620
  %v2622 = vrot.slane %v2435, 1
  %v2623 = vsel %vm866, %v2620, %v2622
  %v2624 = vrot.slane %v2436, 1
  %v2625 = vsel %vm866, %v2622, %v2624
  %v2626 = vrot.slane %v2437, 1
  %v2627 = vsel %vm866, %v2624, %v2626
  %v2628 = vrot.slane %v2438, 1
  %v2629 = vsel %vm866, %v2626, %v2628
  %v2630 = vrot.slane %v2439, 1
  %v2631 = vsel %vm866, %v2628, %v2630
  %v2632 = vrot.slane %v2440, 1
  %v2633 = vsel %vm866, %v2630, %v2632
  %v2634 = vrot.slane %v2441, 1
  %v2635 = vsel %vm866, %v2632, %v2634
  %v2636 = vrot.slane %v2442, 1
  %v2637 = vsel %vm866, %v2634, %v2636
  %v2638 = vsel %vm1615, %v2517, 0
  %v2640 = vsel %vm1615, %v2519, 0
  %v2642 = vsel %vm1615, %v2521, 0
  %v2644 = vsel %vm1615, %v2523, 0
  %v2646 = vsel %vm1615, %v2525, 0
  %v2648 = vsel %vm1615, %v2527, 0
  %v2650 = vsel %vm1615, %v2529, 0
  %v2652 = vsel %vm1615, %v2531, 0
  %v2654 = vsel %vm1615, %v2533, 0
  %v2656 = vsel %vm1615, %v2535, 0
  %v2658 = vsel %vm1615, %v2537, 0
  %v2660 = vsel %vm1615, %v2539, 0
  %v2662 = vsel %vm1615, %v2541, 0
  %v2664 = vsel %vm1615, %v2543, 0
  %v2666 = vsel %vm1615, %v2545, 0
  %v2668 = vsel %vm1615, %v2547, 0
  %v2670 = vsel %vm1615, %v2549, 0
  %v2672 = vsel %vm1615, %v2551, 0
  %v2674 = vsel %vm1615, %v2553, 0
  %v2676 = vsel %vm1615, %v2555, 0
  %v2678 = vsel %vm1615, %v2557, 0
  %v2680 = vsel %vm1615, %v2559, 0
  %v2682 = vsel %vm1615, %v2561, 0
  %v2684 = vsel %vm1615, %v2563, 0
  %v2686 = vsel %vm1615, %v2565, 0
  %v2688 = vsel %vm1615, %v2567, 0
  %v2690 = vsel %vm1615, %v2569, 0
  %v2692 = vsel %vm1615, %v2571, 0
  %v2694 = vsel %vm1615, %v2573, 0
  %v2696 = vsel %vm1615, %v2575, 0
  %v2698 = vsel %vm1615, %v2577, 0
  %v2700 = vsel %vm1615, %v2579, 0
  %v2702 = vsel %vm1615, %v2581, 0
  %v2704 = vsel %vm1615, %v2583, 0
  %v2706 = vsel %vm1615, %v2585, 0
  %v2708 = vsel %vm1615, %v2587, 0
  %v2710 = vsel %vm1615, %v2589, 0
  %v2712 = vsel %vm1615, %v2591, 0
  %v2714 = vsel %vm1615, %v2593, 0
  %v2716 = vsel %vm1615, %v2595, 0
  %v2718 = vsel %vm1615, %v2597, 0
  %v2720 = vsel %vm1615, %v2599, 0
  %v2722 = vsel %vm1615, %v2601, 0
  %v2724 = vsel %vm1615, %v2603, 0
  %v2726 = vsel %vm1615, %v2605, 0
  %v2728 = vsel %vm1615, %v2607, 0
  %v2730 = vsel %vm1615, %v2609, 0
  %v2732 = vsel %vm1615, %v2611, 0
  %v2734 = vsel %vm1615, %v2613, 0
  %v2736 = vsel %vm1615, %v2615, 0
  %v2738 = vsel %vm1615, %v2617, 0
  %v2740 = vsel %vm1615, %v2619, 0
  %v2742 = vsel %vm1615, %v2621, 0
  %v2744 = vsel %vm1615, %v2623, 0
  %v2746 = vsel %vm1615, %v2625, 0
  %v2748 = vsel %vm1615, %v2627, 0
  %v2750 = vsel %vm1615, %v2629, 0
  %v2752 = vsel %vm1615, %v2631, 0
  %v2754 = vsel %vm1615, %v2633, 0
  %v2756 = vsel %vm1615, %v2635, 0
  %v2758 = vsel %vm1615, %v2637, 0
  %v2760 = vsel %vm1615, %v2636, 0
  %vm2762 = vcmask 1041408
  %v2764 = vsel %vm2762, %v2452, 0
  %2766 = vmatprep.subr.mxu0 0.0
  %2767 = vmatpush1.msra.mxu0 %v2451
  %2768 = vmatprep.subr.mxu0 0.0
  %2769 = vmatpush1.msra.mxu0 %v2764
  %2770 = vmatprep.subr.mxu0 0.0
  %2771 = vmatpush1.msra.mxu0 0.0
  %2772 = vmatprep.subr.mxu0 0.0
  %2773 = vmatpush1.msra.mxu0 0.0
  %2774 = vmatprep.subr.mxu0 0.0
  %2775 = vmatpush1.msra.mxu0 0.0
  %2776 = vmatprep.subr.mxu0 0.0
  %2777 = vmatpush1.msra.mxu0 0.0
  %2778 = vmatprep.subr.mxu0 0.0
  %2779 = vmatpush1.msra.mxu0 0.0
  %2780 = vmatprep.subr.mxu0 0.0
  %2781 = vmatpush1.msra.mxu0 0.0
  %2782 = vmatprep.subr.mxu0 0.0
  %2783 = vmatpush1.msra.mxu0 0.0
  %2784 = vmatprep.subr.mxu0 0.0
  %2785 = vmatpush1.msra.mxu0 0.0
  %2786 = vmatprep.subr.mxu0 0.0
  %2787 = vmatpush1.msra.mxu0 0.0
  %2788 = vmatprep.subr.mxu0 0.0
  %2789 = vmatpush1.msra.mxu0 0.0
  %2790 = vmatprep.subr.mxu0 0.0
  %2791 = vmatpush1.msra.mxu0 0.0
  %2792 = vmatprep.subr.mxu0 0.0
  %2793 = vmatpush1.msra.mxu0 0.0
  %2794 = vmatprep.subr.mxu0 0.0
  %2795 = vmatpush1.msra.mxu0 0.0
  %2796 = vmatprep.subr.mxu0 0.0
  %2797 = vmatpush1.msra.mxu0 0.0
  %2798 = vmatprep.subr.mxu0 0.0
  %2799 = vmatpush1.msra.mxu0 0.0
  %2800 = vmatprep.subr.mxu0 0.0
  %2801 = vmatpush1.msra.mxu0 0.0
  %2802 = vmatprep.subr.mxu0 0.0
  %2803 = vmatpush1.msra.mxu0 0.0
  %2804 = vmatprep.subr.mxu0 0.0
  %2805 = vmatpush1.msra.mxu0 0.0
  %2806 = vmatprep.subr.mxu0 0.0
  %2807 = vmatpush1.msra.mxu0 0.0
  %2808 = vmatprep.subr.mxu0 0.0
  %2809 = vmatpush1.msra.mxu0 0.0
  %2810 = vmatprep.subr.mxu0 0.0
  %2811 = vmatpush1.msra.mxu0 0.0
  %2812 = vmatprep.subr.mxu0 0.0
  %2813 = vmatpush1.msra.mxu0 0.0
  %2814 = vmatprep.subr.mxu0 0.0
  %2815 = vmatpush1.msra.mxu0 0.0
  %2816 = vmatprep.subr.mxu0 0.0
  %2817 = vmatpush1.msra.mxu0 0.0
  %2818 = vmatprep.subr.mxu0 0.0
  %2819 = vmatpush1.msra.mxu0 0.0
  %2820 = vmatprep.subr.mxu0 0.0
  %2821 = vmatpush1.msra.mxu0 0.0
  %2822 = vmatprep.subr.mxu0 0.0
  %2823 = vmatpush1.msra.mxu0 0.0
  %2824 = vmatprep.subr.mxu0 0.0
  %2825 = vmatpush1.msra.mxu0 0.0
  %2826 = vmatprep.subr.mxu0 0.0
  %2827 = vmatpush1.msra.mxu0 0.0
  %2828 = vmatprep.subr.mxu0 0.0
  %2829 = vmatpush1.msra.mxu0 0.0
  %2830 = vmatprep.mubr.f32.mxu0 0.0
  %2831 = vmatmul.mubr.f32.gmra.mrb[0].mxu0 %v2638
  %v2832 = vpop.f32.mrb[0].mxu0
  %v2833 = vadd.f32 0.0, %v2832
  %v2834 = vpop.f32.mrb[0].mxu0
  %2835 = vmatprep.mubr.f32.mxu0 0.0
  %2836 = vmatmul.mubr.f32.gmra.mrb[0].mxu0 %v2640
  %v2837 = vpop.f32.mrb[0].mxu0
  %v2838 = vadd.f32 0.0, %v2837
  %v2839 = vpop.f32.mrb[0].mxu0
  %2840 = vmatprep.mubr.f32.mxu0 0.0
  %2841 = vmatmul.mubr.f32.gmra.mrb[0].mxu0 %v2642
  %v2842 = vpop.f32.mrb[0].mxu0
  %v2843 = vadd.f32 0.0, %v2842
  %v2844 = vpop.f32.mrb[0].mxu0
  %2845 = vmatprep.mubr.f32.mxu0 0.0
  %2846 = vmatmul.mubr.f32.gmra.mrb[0].mxu0 %v2644
  %v2847 = vpop.f32.mrb[0].mxu0
  %v2848 = vadd.f32 0.0, %v2847
  %v2849 = vpop.f32.mrb[0].mxu0
  %2850 = vmatprep.mubr.f32.mxu0 0.0
  %2851 = vmatmul.mubr.f32.gmra.mrb[0].mxu0 %v2646
  %v2852 = vpop.f32.mrb[0].mxu0
  %v2853 = vadd.f32 0.0, %v2852
  %v2854 = vpop.f32.mrb[0].mxu0
  %2855 = vmatprep.mubr.f32.mxu0 0.0
  %2856 = vmatmul.mubr.f32.gmra.mrb[0].mxu0 %v2648
  %v2857 = vpop.f32.mrb[0].mxu0
  %v2858 = vadd.f32 0.0, %v2857
  %v2859 = vpop.f32.mrb[0].mxu0
  %2860 = vmatprep.mubr.f32.mxu0 0.0
  %2861 = vmatmul.mubr.f32.gmra.mrb[0].mxu0 %v2650
  %v2862 = vpop.f32.mrb[0].mxu0
  %v2863 = vadd.f32 0.0, %v2862
  %v2864 = vpop.f32.mrb[0].mxu0
  %2865 = vmatprep.mubr.f32.mxu0 0.0
  %2866 = vmatmul.mubr.f32.gmra.mrb[0].mxu0 %v2652
  %v2867 = vpop.f32.mrb[0].mxu0
  %v2868 = vadd.f32 0.0, %v2867
  %v2869 = vpop.f32.mrb[0].mxu0
  %2870 = vmatprep.mubr.f32.mxu0 0.0
  %2871 = vmatmul.mubr.f32.gmra.mrb[0].mxu0 %v2654
  %v2872 = vpop.f32.mrb[0].mxu0
  %v2873 = vadd.f32 0.0, %v2872
  %v2874 = vpop.f32.mrb[0].mxu0
  %2875 = vmatprep.mubr.f32.mxu0 0.0
  %2876 = vmatmul.mubr.f32.gmra.mrb[0].mxu0 %v2656
  %v2877 = vpop.f32.mrb[0].mxu0
  %v2878 = vadd.f32 0.0, %v2877
  %v2879 = vpop.f32.mrb[0].mxu0
  %2880 = vmatprep.mubr.f32.mxu0 0.0
  %2881 = vmatmul.mubr.f32.gmra.mrb[0].mxu0 %v2658
  %v2882 = vpop.f32.mrb[0].mxu0
  %v2883 = vadd.f32 0.0, %v2882
  %v2884 = vpop.f32.mrb[0].mxu0
  %2885 = vmatprep.mubr.f32.mxu0 0.0
  %2886 = vmatmul.mubr.f32.gmra.mrb[0].mxu0 %v2660
  %v2887 = vpop.f32.mrb[0].mxu0
  %v2888 = vadd.f32 0.0, %v2887
  %v2889 = vpop.f32.mrb[0].mxu0
  %2890 = vmatprep.mubr.f32.mxu0 0.0
  %2891 = vmatmul.mubr.f32.gmra.mrb[0].mxu0 %v2662
  %v2892 = vpop.f32.mrb[0].mxu0
  %v2893 = vadd.f32 0.0, %v2892
  %v2894 = vpop.f32.mrb[0].mxu0
  %2895 = vmatprep.mubr.f32.mxu0 0.0
  %2896 = vmatmul.mubr.f32.gmra.mrb[0].mxu0 %v2664
  %v2897 = vpop.f32.mrb[0].mxu0
  %v2898 = vadd.f32 0.0, %v2897
  %v2899 = vpop.f32.mrb[0].mxu0
  %2900 = vmatprep.mubr.f32.mxu0 0.0
  %2901 = vmatmul.mubr.f32.gmra.mrb[0].mxu0 %v2666
  %v2902 = vpop.f32.mrb[0].mxu0
  %v2903 = vadd.f32 0.0, %v2902
  %v2904 = vpop.f32.mrb[0].mxu0
  %2905 = vmatprep.mubr.f32.mxu0 0.0
  %2906 = vmatmul.mubr.f32.gmra.mrb[0].mxu0 %v2668
  %v2907 = vpop.f32.mrb[0].mxu0
  %v2908 = vadd.f32 0.0, %v2907
  %v2909 = vpop.f32.mrb[0].mxu0
  %2910 = vmatprep.mubr.f32.mxu0 0.0
  %2911 = vmatmul.mubr.f32.gmra.mrb[0].mxu0 %v2670
  %v2912 = vpop.f32.mrb[0].mxu0
  %v2913 = vadd.f32 0.0, %v2912
  %v2914 = vpop.f32.mrb[0].mxu0
  %2915 = vmatprep.mubr.f32.mxu0 0.0
  %2916 = vmatmul.mubr.f32.gmra.mrb[0].mxu0 %v2672
  %v2917 = vpop.f32.mrb[0].mxu0
  %v2918 = vadd.f32 0.0, %v2917
  %v2919 = vpop.f32.mrb[0].mxu0
  %2920 = vmatprep.mubr.f32.mxu0 0.0
  %2921 = vmatmul.mubr.f32.gmra.mrb[0].mxu0 %v2674
  %v2922 = vpop.f32.mrb[0].mxu0
  %v2923 = vadd.f32 0.0, %v2922
  %v2924 = vpop.f32.mrb[0].mxu0
  %2925 = vmatprep.mubr.f32.mxu0 0.0
  %2926 = vmatmul.mubr.f32.gmra.mrb[0].mxu0 %v2676
  %v2927 = vpop.f32.mrb[0].mxu0
  %v2928 = vadd.f32 0.0, %v2927
  %v2929 = vpop.f32.mrb[0].mxu0
  %2930 = vmatprep.mubr.f32.mxu0 0.0
  %2931 = vmatmul.mubr.f32.gmra.mrb[0].mxu0 %v2678
  %v2932 = vpop.f32.mrb[0].mxu0
  %v2933 = vadd.f32 0.0, %v2932
  %v2934 = vpop.f32.mrb[0].mxu0
  %2935 = vmatprep.mubr.f32.mxu0 0.0
  %2936 = vmatmul.mubr.f32.gmra.mrb[0].mxu0 %v2680
  %v2937 = vpop.f32.mrb[0].mxu0
  %v2938 = vadd.f32 0.0, %v2937
  %v2939 = vpop.f32.mrb[0].mxu0
  %2940 = vmatprep.mubr.f32.mxu0 0.0
  %2941 = vmatmul.mubr.f32.gmra.mrb[0].mxu0 %v2682
  %v2942 = vpop.f32.mrb[0].mxu0
  %v2943 = vadd.f32 0.0, %v2942
  %v2944 = vpop.f32.mrb[0].mxu0
  %2945 = vmatprep.mubr.f32.mxu0 0.0
  %2946 = vmatmul.mubr.f32.gmra.mrb[0].mxu0 %v2684
  %v2947 = vpop.f32.mrb[0].mxu0
  %v2948 = vadd.f32 0.0, %v2947
  %v2949 = vpop.f32.mrb[0].mxu0
  %2950 = vmatprep.mubr.f32.mxu0 0.0
  %2951 = vmatmul.mubr.f32.gmra.mrb[0].mxu0 %v2686
  %v2952 = vpop.f32.mrb[0].mxu0
  %v2953 = vadd.f32 0.0, %v2952
  %v2954 = vpop.f32.mrb[0].mxu0
  %2955 = vmatprep.mubr.f32.mxu0 0.0
  %2956 = vmatmul.mubr.f32.gmra.mrb[0].mxu0 %v2688
  %v2957 = vpop.f32.mrb[0].mxu0
  %v2958 = vadd.f32 0.0, %v2957
  %v2959 = vpop.f32.mrb[0].mxu0
  %2960 = vmatprep.mubr.f32.mxu0 0.0
  %2961 = vmatmul.mubr.f32.gmra.mrb[0].mxu0 %v2690
  %v2962 = vpop.f32.mrb[0].mxu0
  %v2963 = vadd.f32 0.0, %v2962
  %v2964 = vpop.f32.mrb[0].mxu0
  %2965 = vmatprep.mubr.f32.mxu0 0.0
  %2966 = vmatmul.mubr.f32.gmra.mrb[0].mxu0 %v2692
  %v2967 = vpop.f32.mrb[0].mxu0
  %v2968 = vadd.f32 0.0, %v2967
  %v2969 = vpop.f32.mrb[0].mxu0
  %2970 = vmatprep.mubr.f32.mxu0 0.0
  %2971 = vmatmul.mubr.f32.gmra.mrb[0].mxu0 %v2694
  %v2972 = vpop.f32.mrb[0].mxu0
  %v2973 = vadd.f32 0.0, %v2972
  %v2974 = vpop.f32.mrb[0].mxu0
  %2975 = vmatprep.mubr.f32.mxu0 0.0
  %2976 = vmatmul.mubr.f32.gmra.mrb[0].mxu0 %v2696
  %v2977 = vpop.f32.mrb[0].mxu0
  %v2978 = vadd.f32 0.0, %v2977
  %v2979 = vpop.f32.mrb[0].mxu0
  %2980 = vmatprep.mubr.f32.mxu0 0.0
  %2981 = vmatmul.mubr.f32.gmra.mrb[0].mxu0 %v2698
  %v2982 = vpop.f32.mrb[0].mxu0
  %v2983 = vadd.f32 0.0, %v2982
  %v2984 = vpop.f32.mrb[0].mxu0
  %2985 = vmatprep.mubr.f32.mxu0 0.0
  %2986 = vmatmul.mubr.f32.gmra.mrb[0].mxu0 %v2700
  %v2987 = vpop.f32.mrb[0].mxu0
  %v2988 = vadd.f32 0.0, %v2987
  %v2989 = vpop.f32.mrb[0].mxu0
  %2990 = vmatprep.mubr.f32.mxu0 0.0
  %2991 = vmatmul.mubr.f32.gmra.mrb[0].mxu0 %v2702
  %v2992 = vpop.f32.mrb[0].mxu0
  %v2993 = vadd.f32 0.0, %v2992
  %v2994 = vpop.f32.mrb[0].mxu0
  %2995 = vmatprep.mubr.f32.mxu0 0.0
  %2996 = vmatmul.mubr.f32.gmra.mrb[0].mxu0 %v2704
  %v2997 = vpop.f32.mrb[0].mxu0
  %v2998 = vadd.f32 0.0, %v2997
  %v2999 = vpop.f32.mrb[0].mxu0
  %3000 = vmatprep.mubr.f32.mxu0 0.0
  %3001 = vmatmul.mubr.f32.gmra.mrb[0].mxu0 %v2706
  %v3002 = vpop.f32.mrb[0].mxu0
  %v3003 = vadd.f32 0.0, %v3002
  %v3004 = vpop.f32.mrb[0].mxu0
  %3005 = vmatprep.mubr.f32.mxu0 0.0
  %3006 = vmatmul.mubr.f32.gmra.mrb[0].mxu0 %v2708
  %v3007 = vpop.f32.mrb[0].mxu0
  %v3008 = vadd.f32 0.0, %v3007
  %v3009 = vpop.f32.mrb[0].mxu0
  %3010 = vmatprep.mubr.f32.mxu0 0.0
  %3011 = vmatmul.mubr.f32.gmra.mrb[0].mxu0 %v2710
  %v3012 = vpop.f32.mrb[0].mxu0
  %v3013 = vadd.f32 0.0, %v3012
  %v3014 = vpop.f32.mrb[0].mxu0
  %3015 = vmatprep.mubr.f32.mxu0 0.0
  %3016 = vmatmul.mubr.f32.gmra.mrb[0].mxu0 %v2712
  %v3017 = vpop.f32.mrb[0].mxu0
  %v3018 = vadd.f32 0.0, %v3017
  %v3019 = vpop.f32.mrb[0].mxu0
  %3020 = vmatprep.mubr.f32.mxu0 0.0
  %3021 = vmatmul.mubr.f32.gmra.mrb[0].mxu0 %v2714
  %v3022 = vpop.f32.mrb[0].mxu0
  %v3023 = vadd.f32 0.0, %v3022
  %v3024 = vpop.f32.mrb[0].mxu0
  %3025 = vmatprep.mubr.f32.mxu0 0.0
  %3026 = vmatmul.mubr.f32.gmra.mrb[0].mxu0 %v2716
  %v3027 = vpop.f32.mrb[0].mxu0
  %v3028 = vadd.f32 0.0, %v3027
  %v3029 = vpop.f32.mrb[0].mxu0
  %3030 = vmatprep.mubr.f32.mxu0 0.0
  %3031 = vmatmul.mubr.f32.gmra.mrb[0].mxu0 %v2718
  %v3032 = vpop.f32.mrb[0].mxu0
  %v3033 = vadd.f32 0.0, %v3032
  %v3034 = vpop.f32.mrb[0].mxu0
  %3035 = vmatprep.mubr.f32.mxu0 0.0
  %3036 = vmatmul.mubr.f32.gmra.mrb[0].mxu0 %v2720
  %v3037 = vpop.f32.mrb[0].mxu0
  %v3038 = vadd.f32 0.0, %v3037
  %v3039 = vpop.f32.mrb[0].mxu0
  %3040 = vmatprep.mubr.f32.mxu0 0.0
  %3041 = vmatmul.mubr.f32.gmra.mrb[0].mxu0 %v2722
  %v3042 = vpop.f32.mrb[0].mxu0
  %v3043 = vadd.f32 0.0, %v3042
  %v3044 = vpop.f32.mrb[0].mxu0
  %3045 = vmatprep.mubr.f32.mxu0 0.0
  %3046 = vmatmul.mubr.f32.gmra.mrb[0].mxu0 %v2724
  %v3047 = vpop.f32.mrb[0].mxu0
  %v3048 = vadd.f32 0.0, %v3047
  %v3049 = vpop.f32.mrb[0].mxu0
  %3050 = vmatprep.mubr.f32.mxu0 0.0
  %3051 = vmatmul.mubr.f32.gmra.mrb[0].mxu0 %v2726
  %v3052 = vpop.f32.mrb[0].mxu0
  %v3053 = vadd.f32 0.0, %v3052
  %v3054 = vpop.f32.mrb[0].mxu0
  %3055 = vmatprep.mubr.f32.mxu0 0.0
  %3056 = vmatmul.mubr.f32.gmra.mrb[0].mxu0 %v2728
  %v3057 = vpop.f32.mrb[0].mxu0
  %v3058 = vadd.f32 0.0, %v3057
  %v3059 = vpop.f32.mrb[0].mxu0
  %3060 = vmatprep.mubr.f32.mxu0 0.0
  %3061 = vmatmul.mubr.f32.gmra.mrb[0].mxu0 %v2730
  %v3062 = vpop.f32.mrb[0].mxu0
  %v3063 = vadd.f32 0.0, %v3062
  %v3064 = vpop.f32.mrb[0].mxu0
  %3065 = vmatprep.mubr.f32.mxu0 0.0
  %3066 = vmatmul.mubr.f32.gmra.mrb[0].mxu0 %v2732
  %v3067 = vpop.f32.mrb[0].mxu0
  %v3068 = vadd.f32 0.0, %v3067
  %v3069 = vpop.f32.mrb[0].mxu0
  %3070 = vmatprep.mubr.f32.mxu0 0.0
  %3071 = vmatmul.mubr.f32.gmra.mrb[0].mxu0 %v2734
  %v3072 = vpop.f32.mrb[0].mxu0
  %v3073 = vadd.f32 0.0, %v3072
  %v3074 = vpop.f32.mrb[0].mxu0
  %3075 = vmatprep.mubr.f32.mxu0 0.0
  %3076 = vmatmul.mubr.f32.gmra.mrb[0].mxu0 %v2736
  %v3077 = vpop.f32.mrb[0].mxu0
  %v3078 = vadd.f32 0.0, %v3077
  %v3079 = vpop.f32.mrb[0].mxu0
  %3080 = vmatprep.mubr.f32.mxu0 0.0
  %3081 = vmatmul.mubr.f32.gmra.mrb[0].mxu0 %v2738
  %v3082 = vpop.f32.mrb[0].mxu0
  %v3083 = vadd.f32 0.0, %v3082
  %v3084 = vpop.f32.mrb[0].mxu0
  %3085 = vmatprep.mubr.f32.mxu0 0.0
  %3086 = vmatmul.mubr.f32.gmra.mrb[0].mxu0 %v2740
  %v3087 = vpop.f32.mrb[0].mxu0
  %v3088 = vadd.f32 0.0, %v3087
  %v3089 = vpop.f32.mrb[0].mxu0
  %3090 = vmatprep.mubr.f32.mxu0 0.0
  %3091 = vmatmul.mubr.f32.gmra.mrb[0].mxu0 %v2742
  %v3092 = vpop.f32.mrb[0].mxu0
  %v3093 = vadd.f32 0.0, %v3092
  %v3094 = vpop.f32.mrb[0].mxu0
  %3095 = vmatprep.mubr.f32.mxu0 0.0
  %3096 = vmatmul.mubr.f32.gmra.mrb[0].mxu0 %v2744
  %v3097 = vpop.f32.mrb[0].mxu0
  %v3098 = vadd.f32 0.0, %v3097
  %v3099 = vpop.f32.mrb[0].mxu0
  %3100 = vmatprep.mubr.f32.mxu0 0.0
  %3101 = vmatmul.mubr.f32.gmra.mrb[0].mxu0 %v2746
  %v3102 = vpop.f32.mrb[0].mxu0
  %v3103 = vadd.f32 0.0, %v3102
  %v3104 = vpop.f32.mrb[0].mxu0
  %3105 = vmatprep.mubr.f32.mxu0 0.0
  %3106 = vmatmul.mubr.f32.gmra.mrb[0].mxu0 %v2748
  %v3107 = vpop.f32.mrb[0].mxu0
  %v3108 = vadd.f32 0.0, %v3107
  %v3109 = vpop.f32.mrb[0].mxu0
  %3110 = vmatprep.mubr.f32.mxu0 0.0
  %3111 = vmatmul.mubr.f32.gmra.mrb[0].mxu0 %v2750
  %v3112 = vpop.f32.mrb[0].mxu0
  %v3113 = vadd.f32 0.0, %v3112
  %v3114 = vpop.f32.mrb[0].mxu0
  %3115 = vmatprep.mubr.f32.mxu0 0.0
  %3116 = vmatmul.mubr.f32.gmra.mrb[0].mxu0 %v2752
  %v3117 = vpop.f32.mrb[0].mxu0
  %v3118 = vadd.f32 0.0, %v3117
  %v3119 = vpop.f32.mrb[0].mxu0
  %3120 = vmatprep.mubr.f32.mxu0 0.0
  %3121 = vmatmul.mubr.f32.gmra.mrb[0].mxu0 %v2754
  %v3122 = vpop.f32.mrb[0].mxu0
  %v3123 = vadd.f32 0.0, %v3122
  %v3124 = vpop.f32.mrb[0].mxu0
  %3125 = vmatprep.mubr.f32.mxu0 0.0
  %3126 = vmatmul.mubr.f32.gmra.mrb[0].mxu0 %v2756
  %v3127 = vpop.f32.mrb[0].mxu0
  %v3128 = vadd.f32 0.0, %v3127
  %v3129 = vpop.f32.mrb[0].mxu0
  %3130 = vmatprep.mubr.f32.mxu0 0.0
  %3131 = vmatmul.mubr.f32.gmra.mrb[0].mxu0 %v2758
  %v3132 = vpop.f32.mrb[0].mxu0
  %v3133 = vadd.f32 0.0, %v3132
  %v3134 = vpop.f32.mrb[0].mxu0
  %3135 = vmatprep.mubr.f32.mxu0 0.0
  %3136 = vmatmul.mubr.f32.gmra.mrb[0].mxu0 %v2760
  %v3137 = vpop.f32.mrb[0].mxu0
  %v3138 = vadd.f32 0.0, %v3137
  %v3139 = vpop.f32.mrb[0].mxu0
  %3140 = vdwg.mxu0
  %v3141 = vsel %vm1615, %v2381, 0
  %v3143 = vsel %vm1615, %v2382, 0
  %v3145 = vsel %vm1615, %v2383, 0
  %v3147 = vsel %vm1615, %v2384, 0
  %v3149 = vsel %vm1615, %v2385, 0
  %v3151 = vsel %vm1615, %v2386, 0
  %v3153 = vsel %vm1615, %v2387, 0
  %v3155 = vsel %vm1615, %v2388, 0
  %v3157 = vsel %vm1615, %v2389, 0
  %v3159 = vsel %vm1615, %v2390, 0
  %v3161 = vsel %vm1615, %v2391, 0
  %v3163 = vsel %vm1615, %v2392, 0
  %v3165 = vsel %vm1615, %v2393, 0
  %v3167 = vsel %vm1615, %v2394, 0
  %v3169 = vsel %vm1615, %v2395, 0
  %v3171 = vsel %vm1615, %v2396, 0
  %v3173 = vsel %vm1615, %v2397, 0
  %v3175 = vsel %vm1615, %v2398, 0
  %v3177 = vsel %vm1615, %v2399, 0
  %v3179 = vsel %vm1615, %v2400, 0
  %v3181 = vsel %vm1615, %v2401, 0
  %v3183 = vsel %vm1615, %v2402, 0
  %v3185 = vsel %vm1615, %v2403, 0
  %v3187 = vsel %vm1615, %v2404, 0
  %v3189 = vsel %vm1615, %v2405, 0
  %v3191 = vsel %vm1615, %v2406, 0
  %v3193 = vsel %vm1615, %v2407, 0
  %v3195 = vsel %vm1615, %v2408, 0
  %v3197 = vsel %vm1615, %v2409, 0
  %v3199 = vsel %vm1615, %v2410, 0
  %v3201 = vsel %vm1615, %v2411, 0
  %v3203 = vsel %vm1615, %v2412, 0
  %v3205 = vsel %vm1615, %v2413, 0
  %v3207 = vsel %vm1615, %v2414, 0
  %v3209 = vsel %vm1615, %v2415, 0
  %v3211 = vsel %vm1615, %v2416, 0
  %v3213 = vsel %vm1615, %v2417, 0
  %v3215 = vsel %vm1615, %v2418, 0
  %v3217 = vsel %vm1615, %v2419, 0
  %v3219 = vsel %vm1615, %v2420, 0
  %v3221 = vsel %vm1615, %v2421, 0
  %v3223 = vsel %vm1615, %v2422, 0
  %v3225 = vsel %vm1615, %v2423, 0
  %v3227 = vsel %vm1615, %v2424, 0
  %v3229 = vsel %vm1615, %v2425, 0
  %v3231 = vsel %vm1615, %v2426, 0
  %v3233 = vsel %vm1615, %v2427, 0
  %v3235 = vsel %vm1615, %v2428, 0
  %v3237 = vsel %vm1615, %v2429, 0
  %v3239 = vsel %vm1615, %v2430, 0
  %v3241 = vsel %vm1615, %v2431, 0
  %v3243 = vsel %vm1615, %v2432, 0
  %v3245 = vsel %vm1615, %v2433, 0
  %v3247 = vsel %vm1615, %v2434, 0
  %v3249 = vsel %vm1615, %v2435, 0
  %v3251 = vsel %vm1615, %v2436, 0
  %v3253 = vsel %vm1615, %v2437, 0
  %v3255 = vsel %vm1615, %v2438, 0
  %v3257 = vsel %vm1615, %v2439, 0
  %v3259 = vsel %vm1615, %v2440, 0
  %v3261 = vsel %vm1615, %v2441, 0
  %v3263 = vsel %vm1615, %v2442, 0
  %v3266 = vsel %vm2762, %v2449, 0
  %3268 = vmatprep.subr.mxu0 0.0
  %3269 = vmatpush1.msra.mxu0 %v2448
  %3270 = vmatprep.subr.mxu0 0.0
  %3271 = vmatpush1.msra.mxu0 %v3266
  %3272 = vmatprep.subr.mxu0 0.0
  %3273 = vmatpush1.msra.mxu0 0.0
  %3274 = vmatprep.subr.mxu0 0.0
  %3275 = vmatpush1.msra.mxu0 0.0
  %3276 = vmatprep.subr.mxu0 0.0
  %3277 = vmatpush1.msra.mxu0 0.0
  %3278 = vmatprep.subr.mxu0 0.0
  %3279 = vmatpush1.msra.mxu0 0.0
  %3280 = vmatprep.subr.mxu0 0.0
  %3281 = vmatpush1.msra.mxu0 0.0
  %3282 = vmatprep.subr.mxu0 0.0
  %3283 = vmatpush1.msra.mxu0 0.0
  %3284 = vmatprep.subr.mxu0 0.0
  %3285 = vmatpush1.msra.mxu0 0.0
  %3286 = vmatprep.subr.mxu0 0.0
  %3287 = vmatpush1.msra.mxu0 0.0
  %3288 = vmatprep.subr.mxu0 0.0
  %3289 = vmatpush1.msra.mxu0 0.0
  %3290 = vmatprep.subr.mxu0 0.0
  %3291 = vmatpush1.msra.mxu0 0.0
  %3292 = vmatprep.subr.mxu0 0.0
  %3293 = vmatpush1.msra.mxu0 0.0
  %3294 = vmatprep.subr.mxu0 0.0
  %3295 = vmatpush1.msra.mxu0 0.0
  %3296 = vmatprep.subr.mxu0 0.0
  %3297 = vmatpush1.msra.mxu0 0.0
  %3298 = vmatprep.subr.mxu0 0.0
  %3299 = vmatpush1.msra.mxu0 0.0
  %3300 = vmatprep.subr.mxu0 0.0
  %3301 = vmatpush1.msra.mxu0 0.0
  %3302 = vmatprep.subr.mxu0 0.0
  %3303 = vmatpush1.msra.mxu0 0.0
  %3304 = vmatprep.subr.mxu0 0.0
  %3305 = vmatpush1.msra.mxu0 0.0
  %3306 = vmatprep.subr.mxu0 0.0
  %3307 = vmatpush1.msra.mxu0 0.0
  %3308 = vmatprep.subr.mxu0 0.0
  %3309 = vmatpush1.msra.mxu0 0.0
  %3310 = vmatprep.subr.mxu0 0.0
  %3311 = vmatpush1.msra.mxu0 0.0
  %3312 = vmatprep.subr.mxu0 0.0
  %3313 = vmatpush1.msra.mxu0 0.0
  %3314 = vmatprep.subr.mxu0 0.0
  %3315 = vmatpush1.msra.mxu0 0.0
  %3316 = vmatprep.subr.mxu0 0.0
  %3317 = vmatpush1.msra.mxu0 0.0
  %3318 = vmatprep.subr.mxu0 0.0
  %3319 = vmatpush1.msra.mxu0 0.0
  %3320 = vmatprep.subr.mxu0 0.0
  %3321 = vmatpush1.msra.mxu0 0.0
  %3322 = vmatprep.subr.mxu0 0.0
  %3323 = vmatpush1.msra.mxu0 0.0
  %3324 = vmatprep.subr.mxu0 0.0
  %3325 = vmatpush1.msra.mxu0 0.0
  %3326 = vmatprep.subr.mxu0 0.0
  %3327 = vmatpush1.msra.mxu0 0.0
  %3328 = vmatprep.subr.mxu0 0.0
  %3329 = vmatpush1.msra.mxu0 0.0
  %3330 = vmatprep.subr.mxu0 0.0
  %3331 = vmatpush1.msra.mxu0 0.0
  %3332 = vmatprep.mubr.f32.mxu0 0.0
  %3333 = vmatmul.mubr.f32.gmra.mrb[0].mxu0 %v3141
  %v3334 = vpop.f32.mrb[0].mxu0
  %v3335 = vadd.f32 %v2833, %v3334
  %v3336 = vpop.f32.mrb[0].mxu0
  %3337 = vmatprep.mubr.f32.mxu0 0.0
  %3338 = vmatmul.mubr.f32.gmra.mrb[0].mxu0 %v3143
  %v3339 = vpop.f32.mrb[0].mxu0
  %v3340 = vadd.f32 %v2838, %v3339
  %v3341 = vpop.f32.mrb[0].mxu0
  %3342 = vmatprep.mubr.f32.mxu0 0.0
  %3343 = vmatmul.mubr.f32.gmra.mrb[0].mxu0 %v3145
  %v3344 = vpop.f32.mrb[0].mxu0
  %v3345 = vadd.f32 %v2843, %v3344
  %v3346 = vpop.f32.mrb[0].mxu0
  %3347 = vmatprep.mubr.f32.mxu0 0.0
  %3348 = vmatmul.mubr.f32.gmra.mrb[0].mxu0 %v3147
  %v3349 = vpop.f32.mrb[0].mxu0
  %v3350 = vadd.f32 %v2848, %v3349
  %v3351 = vpop.f32.mrb[0].mxu0
  %3352 = vmatprep.mubr.f32.mxu0 0.0
  %3353 = vmatmul.mubr.f32.gmra.mrb[0].mxu0 %v3149
  %v3354 = vpop.f32.mrb[0].mxu0
  %v3355 = vadd.f32 %v2853, %v3354
  %v3356 = vpop.f32.mrb[0].mxu0
  %3357 = vmatprep.mubr.f32.mxu0 0.0
  %3358 = vmatmul.mubr.f32.gmra.mrb[0].mxu0 %v3151
  %v3359 = vpop.f32.mrb[0].mxu0
  %v3360 = vadd.f32 %v2858, %v3359
  %v3361 = vpop.f32.mrb[0].mxu0
  %3362 = vmatprep.mubr.f32.mxu0 0.0
  %3363 = vmatmul.mubr.f32.gmra.mrb[0].mxu0 %v3153
  %v3364 = vpop.f32.mrb[0].mxu0
  %v3365 = vadd.f32 %v2863, %v3364
  %v3366 = vpop.f32.mrb[0].mxu0
  %3367 = vmatprep.mubr.f32.mxu0 0.0
  %3368 = vmatmul.mubr.f32.gmra.mrb[0].mxu0 %v3155
  %v3369 = vpop.f32.mrb[0].mxu0
  %v3370 = vadd.f32 %v2868, %v3369
  %v3371 = vpop.f32.mrb[0].mxu0
  %3372 = vmatprep.mubr.f32.mxu0 0.0
  %3373 = vmatmul.mubr.f32.gmra.mrb[0].mxu0 %v3157
  %v3374 = vpop.f32.mrb[0].mxu0
  %v3375 = vadd.f32 %v2873, %v3374
  %v3376 = vpop.f32.mrb[0].mxu0
  %3377 = vmatprep.mubr.f32.mxu0 0.0
  %3378 = vmatmul.mubr.f32.gmra.mrb[0].mxu0 %v3159
  %v3379 = vpop.f32.mrb[0].mxu0
  %v3380 = vadd.f32 %v2878, %v3379
  %v3381 = vpop.f32.mrb[0].mxu0
  %3382 = vmatprep.mubr.f32.mxu0 0.0
  %3383 = vmatmul.mubr.f32.gmra.mrb[0].mxu0 %v3161
  %v3384 = vpop.f32.mrb[0].mxu0
  %v3385 = vadd.f32 %v2883, %v3384
  %v3386 = vpop.f32.mrb[0].mxu0
  %3387 = vmatprep.mubr.f32.mxu0 0.0
  %3388 = vmatmul.mubr.f32.gmra.mrb[0].mxu0 %v3163
  %v3389 = vpop.f32.mrb[0].mxu0
  %v3390 = vadd.f32 %v2888, %v3389
  %v3391 = vpop.f32.mrb[0].mxu0
  %3392 = vmatprep.mubr.f32.mxu0 0.0
  %3393 = vmatmul.mubr.f32.gmra.mrb[0].mxu0 %v3165
  %v3394 = vpop.f32.mrb[0].mxu0
  %v3395 = vadd.f32 %v2893, %v3394
  %v3396 = vpop.f32.mrb[0].mxu0
  %3397 = vmatprep.mubr.f32.mxu0 0.0
  %3398 = vmatmul.mubr.f32.gmra.mrb[0].mxu0 %v3167
  %v3399 = vpop.f32.mrb[0].mxu0
  %v3400 = vadd.f32 %v2898, %v3399
  %v3401 = vpop.f32.mrb[0].mxu0
  %3402 = vmatprep.mubr.f32.mxu0 0.0
  %3403 = vmatmul.mubr.f32.gmra.mrb[0].mxu0 %v3169
  %v3404 = vpop.f32.mrb[0].mxu0
  %v3405 = vadd.f32 %v2903, %v3404
  %v3406 = vpop.f32.mrb[0].mxu0
  %3407 = vmatprep.mubr.f32.mxu0 0.0
  %3408 = vmatmul.mubr.f32.gmra.mrb[0].mxu0 %v3171
  %v3409 = vpop.f32.mrb[0].mxu0
  %v3410 = vadd.f32 %v2908, %v3409
  %v3411 = vpop.f32.mrb[0].mxu0
  %3412 = vmatprep.mubr.f32.mxu0 0.0
  %3413 = vmatmul.mubr.f32.gmra.mrb[0].mxu0 %v3173
  %v3414 = vpop.f32.mrb[0].mxu0
  %v3415 = vadd.f32 %v2913, %v3414
  %v3416 = vpop.f32.mrb[0].mxu0
  %3417 = vmatprep.mubr.f32.mxu0 0.0
  %3418 = vmatmul.mubr.f32.gmra.mrb[0].mxu0 %v3175
  %v3419 = vpop.f32.mrb[0].mxu0
  %v3420 = vadd.f32 %v2918, %v3419
  %v3421 = vpop.f32.mrb[0].mxu0
  %3422 = vmatprep.mubr.f32.mxu0 0.0
  %3423 = vmatmul.mubr.f32.gmra.mrb[0].mxu0 %v3177
  %v3424 = vpop.f32.mrb[0].mxu0
  %v3425 = vadd.f32 %v2923, %v3424
  %v3426 = vpop.f32.mrb[0].mxu0
  %3427 = vmatprep.mubr.f32.mxu0 0.0
  %3428 = vmatmul.mubr.f32.gmra.mrb[0].mxu0 %v3179
  %v3429 = vpop.f32.mrb[0].mxu0
  %v3430 = vadd.f32 %v2928, %v3429
  %v3431 = vpop.f32.mrb[0].mxu0
  %3432 = vmatprep.mubr.f32.mxu0 0.0
  %3433 = vmatmul.mubr.f32.gmra.mrb[0].mxu0 %v3181
  %v3434 = vpop.f32.mrb[0].mxu0
  %v3435 = vadd.f32 %v2933, %v3434
  %v3436 = vpop.f32.mrb[0].mxu0
  %3437 = vmatprep.mubr.f32.mxu0 0.0
  %3438 = vmatmul.mubr.f32.gmra.mrb[0].mxu0 %v3183
  %v3439 = vpop.f32.mrb[0].mxu0
  %v3440 = vadd.f32 %v2938, %v3439
  %v3441 = vpop.f32.mrb[0].mxu0
  %3442 = vmatprep.mubr.f32.mxu0 0.0
  %3443 = vmatmul.mubr.f32.gmra.mrb[0].mxu0 %v3185
  %v3444 = vpop.f32.mrb[0].mxu0
  %v3445 = vadd.f32 %v2943, %v3444
  %v3446 = vpop.f32.mrb[0].mxu0
  %3447 = vmatprep.mubr.f32.mxu0 0.0
  %3448 = vmatmul.mubr.f32.gmra.mrb[0].mxu0 %v3187
  %v3449 = vpop.f32.mrb[0].mxu0
  %v3450 = vadd.f32 %v2948, %v3449
  %v3451 = vpop.f32.mrb[0].mxu0
  %3452 = vmatprep.mubr.f32.mxu0 0.0
  %3453 = vmatmul.mubr.f32.gmra.mrb[0].mxu0 %v3189
  %v3454 = vpop.f32.mrb[0].mxu0
  %v3455 = vadd.f32 %v2953, %v3454
  %v3456 = vpop.f32.mrb[0].mxu0
  %3457 = vmatprep.mubr.f32.mxu0 0.0
  %3458 = vmatmul.mubr.f32.gmra.mrb[0].mxu0 %v3191
  %v3459 = vpop.f32.mrb[0].mxu0
  %v3460 = vadd.f32 %v2958, %v3459
  %v3461 = vpop.f32.mrb[0].mxu0
  %3462 = vmatprep.mubr.f32.mxu0 0.0
  %3463 = vmatmul.mubr.f32.gmra.mrb[0].mxu0 %v3193
  %v3464 = vpop.f32.mrb[0].mxu0
  %v3465 = vadd.f32 %v2963, %v3464
  %v3466 = vpop.f32.mrb[0].mxu0
  %3467 = vmatprep.mubr.f32.mxu0 0.0
  %3468 = vmatmul.mubr.f32.gmra.mrb[0].mxu0 %v3195
  %v3469 = vpop.f32.mrb[0].mxu0
  %v3470 = vadd.f32 %v2968, %v3469
  %v3471 = vpop.f32.mrb[0].mxu0
  %3472 = vmatprep.mubr.f32.mxu0 0.0
  %3473 = vmatmul.mubr.f32.gmra.mrb[0].mxu0 %v3197
  %v3474 = vpop.f32.mrb[0].mxu0
  %v3475 = vadd.f32 %v2973, %v3474
  %v3476 = vpop.f32.mrb[0].mxu0
  %3477 = vmatprep.mubr.f32.mxu0 0.0
  %3478 = vmatmul.mubr.f32.gmra.mrb[0].mxu0 %v3199
  %v3479 = vpop.f32.mrb[0].mxu0
  %v3480 = vadd.f32 %v2978, %v3479
  %v3481 = vpop.f32.mrb[0].mxu0
  %3482 = vmatprep.mubr.f32.mxu0 0.0
  %3483 = vmatmul.mubr.f32.gmra.mrb[0].mxu0 %v3201
  %v3484 = vpop.f32.mrb[0].mxu0
  %v3485 = vadd.f32 %v2983, %v3484
  %v3486 = vpop.f32.mrb[0].mxu0
  %3487 = vmatprep.mubr.f32.mxu0 0.0
  %3488 = vmatmul.mubr.f32.gmra.mrb[0].mxu0 %v3203
  %v3489 = vpop.f32.mrb[0].mxu0
  %v3490 = vadd.f32 %v2988, %v3489
  %v3491 = vpop.f32.mrb[0].mxu0
  %3492 = vmatprep.mubr.f32.mxu0 0.0
  %3493 = vmatmul.mubr.f32.gmra.mrb[0].mxu0 %v3205
  %v3494 = vpop.f32.mrb[0].mxu0
  %v3495 = vadd.f32 %v2993, %v3494
  %v3496 = vpop.f32.mrb[0].mxu0
  %3497 = vmatprep.mubr.f32.mxu0 0.0
  %3498 = vmatmul.mubr.f32.gmra.mrb[0].mxu0 %v3207
  %v3499 = vpop.f32.mrb[0].mxu0
  %v3500 = vadd.f32 %v2998, %v3499
  %v3501 = vpop.f32.mrb[0].mxu0
  %3502 = vmatprep.mubr.f32.mxu0 0.0
  %3503 = vmatmul.mubr.f32.gmra.mrb[0].mxu0 %v3209
  %v3504 = vpop.f32.mrb[0].mxu0
  %v3505 = vadd.f32 %v3003, %v3504
  %v3506 = vpop.f32.mrb[0].mxu0
  %3507 = vmatprep.mubr.f32.mxu0 0.0
  %3508 = vmatmul.mubr.f32.gmra.mrb[0].mxu0 %v3211
  %v3509 = vpop.f32.mrb[0].mxu0
  %v3510 = vadd.f32 %v3008, %v3509
  %v3511 = vpop.f32.mrb[0].mxu0
  %3512 = vmatprep.mubr.f32.mxu0 0.0
  %3513 = vmatmul.mubr.f32.gmra.mrb[0].mxu0 %v3213
  %v3514 = vpop.f32.mrb[0].mxu0
  %v3515 = vadd.f32 %v3013, %v3514
  %v3516 = vpop.f32.mrb[0].mxu0
  %3517 = vmatprep.mubr.f32.mxu0 0.0
  %3518 = vmatmul.mubr.f32.gmra.mrb[0].mxu0 %v3215
  %v3519 = vpop.f32.mrb[0].mxu0
  %v3520 = vadd.f32 %v3018, %v3519
  %v3521 = vpop.f32.mrb[0].mxu0
  %3522 = vmatprep.mubr.f32.mxu0 0.0
  %3523 = vmatmul.mubr.f32.gmra.mrb[0].mxu0 %v3217
  %v3524 = vpop.f32.mrb[0].mxu0
  %v3525 = vadd.f32 %v3023, %v3524
  %v3526 = vpop.f32.mrb[0].mxu0
  %3527 = vmatprep.mubr.f32.mxu0 0.0
  %3528 = vmatmul.mubr.f32.gmra.mrb[0].mxu0 %v3219
  %v3529 = vpop.f32.mrb[0].mxu0
  %v3530 = vadd.f32 %v3028, %v3529
  %v3531 = vpop.f32.mrb[0].mxu0
  %3532 = vmatprep.mubr.f32.mxu0 0.0
  %3533 = vmatmul.mubr.f32.gmra.mrb[0].mxu0 %v3221
  %v3534 = vpop.f32.mrb[0].mxu0
  %v3535 = vadd.f32 %v3033, %v3534
  %v3536 = vpop.f32.mrb[0].mxu0
  %3537 = vmatprep.mubr.f32.mxu0 0.0
  %3538 = vmatmul.mubr.f32.gmra.mrb[0].mxu0 %v3223
  %v3539 = vpop.f32.mrb[0].mxu0
  %v3540 = vadd.f32 %v3038, %v3539
  %v3541 = vpop.f32.mrb[0].mxu0
  %3542 = vmatprep.mubr.f32.mxu0 0.0
  %3543 = vmatmul.mubr.f32.gmra.mrb[0].mxu0 %v3225
  %v3544 = vpop.f32.mrb[0].mxu0
  %v3545 = vadd.f32 %v3043, %v3544
  %v3546 = vpop.f32.mrb[0].mxu0
  %3547 = vmatprep.mubr.f32.mxu0 0.0
  %3548 = vmatmul.mubr.f32.gmra.mrb[0].mxu0 %v3227
  %v3549 = vpop.f32.mrb[0].mxu0
  %v3550 = vadd.f32 %v3048, %v3549
  %v3551 = vpop.f32.mrb[0].mxu0
  %3552 = vmatprep.mubr.f32.mxu0 0.0
  %3553 = vmatmul.mubr.f32.gmra.mrb[0].mxu0 %v3229
  %v3554 = vpop.f32.mrb[0].mxu0
  %v3555 = vadd.f32 %v3053, %v3554
  %v3556 = vpop.f32.mrb[0].mxu0
  %3557 = vmatprep.mubr.f32.mxu0 0.0
  %3558 = vmatmul.mubr.f32.gmra.mrb[0].mxu0 %v3231
  %v3559 = vpop.f32.mrb[0].mxu0
  %v3560 = vadd.f32 %v3058, %v3559
  %v3561 = vpop.f32.mrb[0].mxu0
  %3562 = vmatprep.mubr.f32.mxu0 0.0
  %3563 = vmatmul.mubr.f32.gmra.mrb[0].mxu0 %v3233
  %v3564 = vpop.f32.mrb[0].mxu0
  %v3565 = vadd.f32 %v3063, %v3564
  %v3566 = vpop.f32.mrb[0].mxu0
  %3567 = vmatprep.mubr.f32.mxu0 0.0
  %3568 = vmatmul.mubr.f32.gmra.mrb[0].mxu0 %v3235
  %v3569 = vpop.f32.mrb[0].mxu0
  %v3570 = vadd.f32 %v3068, %v3569
  %v3571 = vpop.f32.mrb[0].mxu0
  %3572 = vmatprep.mubr.f32.mxu0 0.0
  %3573 = vmatmul.mubr.f32.gmra.mrb[0].mxu0 %v3237
  %v3574 = vpop.f32.mrb[0].mxu0
  %v3575 = vadd.f32 %v3073, %v3574
  %v3576 = vpop.f32.mrb[0].mxu0
  %3577 = vmatprep.mubr.f32.mxu0 0.0
  %3578 = vmatmul.mubr.f32.gmra.mrb[0].mxu0 %v3239
  %v3579 = vpop.f32.mrb[0].mxu0
  %v3580 = vadd.f32 %v3078, %v3579
  %v3581 = vpop.f32.mrb[0].mxu0
  %3582 = vmatprep.mubr.f32.mxu0 0.0
  %3583 = vmatmul.mubr.f32.gmra.mrb[0].mxu0 %v3241
  %v3584 = vpop.f32.mrb[0].mxu0
  %v3585 = vadd.f32 %v3083, %v3584
  %v3586 = vpop.f32.mrb[0].mxu0
  %3587 = vmatprep.mubr.f32.mxu0 0.0
  %3588 = vmatmul.mubr.f32.gmra.mrb[0].mxu0 %v3243
  %v3589 = vpop.f32.mrb[0].mxu0
  %v3590 = vadd.f32 %v3088, %v3589
  %v3591 = vpop.f32.mrb[0].mxu0
  %3592 = vmatprep.mubr.f32.mxu0 0.0
  %3593 = vmatmul.mubr.f32.gmra.mrb[0].mxu0 %v3245
  %v3594 = vpop.f32.mrb[0].mxu0
  %v3595 = vadd.f32 %v3093, %v3594
  %v3596 = vpop.f32.mrb[0].mxu0
  %3597 = vmatprep.mubr.f32.mxu0 0.0
  %3598 = vmatmul.mubr.f32.gmra.mrb[0].mxu0 %v3247
  %v3599 = vpop.f32.mrb[0].mxu0
  %v3600 = vadd.f32 %v3098, %v3599
  %v3601 = vpop.f32.mrb[0].mxu0
  %3602 = vmatprep.mubr.f32.mxu0 0.0
  %3603 = vmatmul.mubr.f32.gmra.mrb[0].mxu0 %v3249
  %v3604 = vpop.f32.mrb[0].mxu0
  %v3605 = vadd.f32 %v3103, %v3604
  %v3606 = vpop.f32.mrb[0].mxu0
  %3607 = vmatprep.mubr.f32.mxu0 0.0
  %3608 = vmatmul.mubr.f32.gmra.mrb[0].mxu0 %v3251
  %v3609 = vpop.f32.mrb[0].mxu0
  %v3610 = vadd.f32 %v3108, %v3609
  %v3611 = vpop.f32.mrb[0].mxu0
  %3612 = vmatprep.mubr.f32.mxu0 0.0
  %3613 = vmatmul.mubr.f32.gmra.mrb[0].mxu0 %v3253
  %v3614 = vpop.f32.mrb[0].mxu0
  %v3615 = vadd.f32 %v3113, %v3614
  %v3616 = vpop.f32.mrb[0].mxu0
  %3617 = vmatprep.mubr.f32.mxu0 0.0
  %3618 = vmatmul.mubr.f32.gmra.mrb[0].mxu0 %v3255
  %v3619 = vpop.f32.mrb[0].mxu0
  %v3620 = vadd.f32 %v3118, %v3619
  %v3621 = vpop.f32.mrb[0].mxu0
  %3622 = vmatprep.mubr.f32.mxu0 0.0
  %3623 = vmatmul.mubr.f32.gmra.mrb[0].mxu0 %v3257
  %v3624 = vpop.f32.mrb[0].mxu0
  %v3625 = vadd.f32 %v3123, %v3624
  %v3626 = vpop.f32.mrb[0].mxu0
  %3627 = vmatprep.mubr.f32.mxu0 0.0
  %3628 = vmatmul.mubr.f32.gmra.mrb[0].mxu0 %v3259
  %v3629 = vpop.f32.mrb[0].mxu0
  %v3630 = vadd.f32 %v3128, %v3629
  %v3631 = vpop.f32.mrb[0].mxu0
  %3632 = vmatprep.mubr.f32.mxu0 0.0
  %3633 = vmatmul.mubr.f32.gmra.mrb[0].mxu0 %v3261
  %v3634 = vpop.f32.mrb[0].mxu0
  %v3635 = vadd.f32 %v3133, %v3634
  %v3636 = vpop.f32.mrb[0].mxu0
  %3637 = vmatprep.mubr.f32.mxu0 0.0
  %3638 = vmatmul.mubr.f32.gmra.mrb[0].mxu0 %v3263
  %v3639 = vpop.f32.mrb[0].mxu0
  %v3640 = vadd.f32 %v3138, %v3639
  %v3641 = vpop.f32.mrb[0].mxu0
  %3642 = vdwg.mxu0
  %s3643 = scalar_lea.vmem %s6, 32
  %v3644 = vld [vmem:[%s3643] sm:$0xff]
  %v3645 = vld [vmem:[%s3643 + $0x8] sm:$0x3]
  %vm3647 = vcmask 1045504
  %v3648 = vrot.slane %v2381, 2
  %v3649 = vrot.slane %v2382, 2
  %v3650 = vsel %vm3647, %v3648, %v3649
  %v3651 = vrot.slane %v2383, 2
  %v3652 = vsel %vm3647, %v3649, %v3651
  %v3653 = vrot.slane %v2384, 2
  %v3654 = vsel %vm3647, %v3651, %v3653
  %v3655 = vrot.slane %v2385, 2
  %v3656 = vsel %vm3647, %v3653, %v3655
  %v3657 = vrot.slane %v2386, 2
  %v3658 = vsel %vm3647, %v3655, %v3657
  %v3659 = vrot.slane %v2387, 2
  %v3660 = vsel %vm3647, %v3657, %v3659
  %v3661 = vrot.slane %v2388, 2
  %v3662 = vsel %vm3647, %v3659, %v3661
  %v3663 = vrot.slane %v2389, 2
  %v3664 = vsel %vm3647, %v3661, %v3663
  %v3665 = vrot.slane %v2390, 2
  %v3666 = vsel %vm3647, %v3663, %v3665
  %v3667 = vrot.slane %v2391, 2
  %v3668 = vsel %vm3647, %v3665, %v3667
  %v3669 = vrot.slane %v2392, 2
  %v3670 = vsel %vm3647, %v3667, %v3669
  %v3671 = vrot.slane %v2393, 2
  %v3672 = vsel %vm3647, %v3669, %v3671
  %v3673 = vrot.slane %v2394, 2
  %v3674 = vsel %vm3647, %v3671, %v3673
  %v3675 = vrot.slane %v2395, 2
  %v3676 = vsel %vm3647, %v3673, %v3675
  %v3677 = vrot.slane %v2396, 2
  %v3678 = vsel %vm3647, %v3675, %v3677
  %v3679 = vrot.slane %v2397, 2
  %v3680 = vsel %vm3647, %v3677, %v3679
  %v3681 = vrot.slane %v2398, 2
  %v3682 = vsel %vm3647, %v3679, %v3681
  %v3683 = vrot.slane %v2399, 2
  %v3684 = vsel %vm3647, %v3681, %v3683
  %v3685 = vrot.slane %v2400, 2
  %v3686 = vsel %vm3647, %v3683, %v3685
  %v3687 = vrot.slane %v2401, 2
  %v3688 = vsel %vm3647, %v3685, %v3687
  %v3689 = vrot.slane %v2402, 2
  %v3690 = vsel %vm3647, %v3687, %v3689
  %v3691 = vrot.slane %v2403, 2
  %v3692 = vsel %vm3647, %v3689, %v3691
  %v3693 = vrot.slane %v2404, 2
  %v3694 = vsel %vm3647, %v3691, %v3693
  %v3695 = vrot.slane %v2405, 2
  %v3696 = vsel %vm3647, %v3693, %v3695
  %v3697 = vrot.slane %v2406, 2
  %v3698 = vsel %vm3647, %v3695, %v3697
  %v3699 = vrot.slane %v2407, 2
  %v3700 = vsel %vm3647, %v3697, %v3699
  %v3701 = vrot.slane %v2408, 2
  %v3702 = vsel %vm3647, %v3699, %v3701
  %v3703 = vrot.slane %v2409, 2
  %v3704 = vsel %vm3647, %v3701, %v3703
  %v3705 = vrot.slane %v2410, 2
  %v3706 = vsel %vm3647, %v3703, %v3705
  %v3707 = vrot.slane %v2411, 2
  %v3708 = vsel %vm3647, %v3705, %v3707
  %v3709 = vrot.slane %v2412, 2
  %v3710 = vsel %vm3647, %v3707, %v3709
  %v3711 = vrot.slane %v2413, 2
  %v3712 = vsel %vm3647, %v3709, %v3711
  %v3713 = vrot.slane %v2414, 2
  %v3714 = vsel %vm3647, %v3711, %v3713
  %v3715 = vrot.slane %v2415, 2
  %v3716 = vsel %vm3647, %v3713, %v3715
  %v3717 = vrot.slane %v2416, 2
  %v3718 = vsel %vm3647, %v3715, %v3717
  %v3719 = vrot.slane %v2417, 2
  %v3720 = vsel %vm3647, %v3717, %v3719
  %v3721 = vrot.slane %v2418, 2
  %v3722 = vsel %vm3647, %v3719, %v3721
  %v3723 = vrot.slane %v2419, 2
  %v3724 = vsel %vm3647, %v3721, %v3723
  %v3725 = vrot.slane %v2420, 2
  %v3726 = vsel %vm3647, %v3723, %v3725
  %v3727 = vrot.slane %v2421, 2
  %v3728 = vsel %vm3647, %v3725, %v3727
  %v3729 = vrot.slane %v2422, 2
  %v3730 = vsel %vm3647, %v3727, %v3729
  %v3731 = vrot.slane %v2423, 2
  %v3732 = vsel %vm3647, %v3729, %v3731
  %v3733 = vrot.slane %v2424, 2
  %v3734 = vsel %vm3647, %v3731, %v3733
  %v3735 = vrot.slane %v2425, 2
  %v3736 = vsel %vm3647, %v3733, %v3735
  %v3737 = vrot.slane %v2426, 2
  %v3738 = vsel %vm3647, %v3735, %v3737
  %v3739 = vrot.slane %v2427, 2
  %v3740 = vsel %vm3647, %v3737, %v3739
  %v3741 = vrot.slane %v2428, 2
  %v3742 = vsel %vm3647, %v3739, %v3741
  %v3743 = vrot.slane %v2429, 2
  %v3744 = vsel %vm3647, %v3741, %v3743
  %v3745 = vrot.slane %v2430, 2
  %v3746 = vsel %vm3647, %v3743, %v3745
  %v3747 = vrot.slane %v2431, 2
  %v3748 = vsel %vm3647, %v3745, %v3747
  %v3749 = vrot.slane %v2432, 2
  %v3750 = vsel %vm3647, %v3747, %v3749
  %v3751 = vrot.slane %v2433, 2
  %v3752 = vsel %vm3647, %v3749, %v3751
  %v3753 = vrot.slane %v2434, 2
  %v3754 = vsel %vm3647, %v3751, %v3753
  %v3755 = vrot.slane %v2435, 2
  %v3756 = vsel %vm3647, %v3753, %v3755
  %v3757 = vrot.slane %v2436, 2
  %v3758 = vsel %vm3647, %v3755, %v3757
  %v3759 = vrot.slane %v2437, 2
  %v3760 = vsel %vm3647, %v3757, %v3759
  %v3761 = vrot.slane %v2438, 2
  %v3762 = vsel %vm3647, %v3759, %v3761
  %v3763 = vrot.slane %v2439, 2
  %v3764 = vsel %vm3647, %v3761, %v3763
  %v3765 = vrot.slane %v2440, 2
  %v3766 = vsel %vm3647, %v3763, %v3765
  %v3767 = vrot.slane %v2441, 2
  %v3768 = vsel %vm3647, %v3765, %v3767
  %v3769 = vrot.slane %v2442, 2
  %v3770 = vsel %vm3647, %v3767, %v3769
  %v3771 = vrot.slane %v2443, 2
  %v3772 = vsel %vm3647, %v3769, %v3771
  %v3773 = vsel %vm1615, %v3650, 0
  %v3775 = vsel %vm1615, %v3652, 0
  %v3777 = vsel %vm1615, %v3654, 0
  %v3779 = vsel %vm1615, %v3656, 0
  %v3781 = vsel %vm1615, %v3658, 0
  %v3783 = vsel %vm1615, %v3660, 0
  %v3785 = vsel %vm1615, %v3662, 0
  %v3787 = vsel %vm1615, %v3664, 0
  %v3789 = vsel %vm1615, %v3666, 0
  %v3791 = vsel %vm1615, %v3668, 0
  %v3793 = vsel %vm1615, %v3670, 0
  %v3795 = vsel %vm1615, %v3672, 0
  %v3797 = vsel %vm1615, %v3674, 0
  %v3799 = vsel %vm1615, %v3676, 0
  %v3801 = vsel %vm1615, %v3678, 0
  %v3803 = vsel %vm1615, %v3680, 0
  %v3805 = vsel %vm1615, %v3682, 0
  %v3807 = vsel %vm1615, %v3684, 0
  %v3809 = vsel %vm1615, %v3686, 0
  %v3811 = vsel %vm1615, %v3688, 0
  %v3813 = vsel %vm1615, %v3690, 0
  %v3815 = vsel %vm1615, %v3692, 0
  %v3817 = vsel %vm1615, %v3694, 0
  %v3819 = vsel %vm1615, %v3696, 0
  %v3821 = vsel %vm1615, %v3698, 0
  %v3823 = vsel %vm1615, %v3700, 0
  %v3825 = vsel %vm1615, %v3702, 0
  %v3827 = vsel %vm1615, %v3704, 0
  %v3829 = vsel %vm1615, %v3706, 0
  %v3831 = vsel %vm1615, %v3708, 0
  %v3833 = vsel %vm1615, %v3710, 0
  %v3835 = vsel %vm1615, %v3712, 0
  %v3837 = vsel %vm1615, %v3714, 0
  %v3839 = vsel %vm1615, %v3716, 0
  %v3841 = vsel %vm1615, %v3718, 0
  %v3843 = vsel %vm1615, %v3720, 0
  %v3845 = vsel %vm1615, %v3722, 0
  %v3847 = vsel %vm1615, %v3724, 0
  %v3849 = vsel %vm1615, %v3726, 0
  %v3851 = vsel %vm1615, %v3728, 0
  %v3853 = vsel %vm1615, %v3730, 0
  %v3855 = vsel %vm1615, %v3732, 0
  %v3857 = vsel %vm1615, %v3734, 0
  %v3859 = vsel %vm1615, %v3736, 0
  %v3861 = vsel %vm1615, %v3738, 0
  %v3863 = vsel %vm1615, %v3740, 0
  %v3865 = vsel %vm1615, %v3742, 0
  %v3867 = vsel %vm1615, %v3744, 0
  %v3869 = vsel %vm1615, %v3746, 0
  %v3871 = vsel %vm1615, %v3748, 0
  %v3873 = vsel %vm1615, %v3750, 0
  %v3875 = vsel %vm1615, %v3752, 0
  %v3877 = vsel %vm1615, %v3754, 0
  %v3879 = vsel %vm1615, %v3756, 0
  %v3881 = vsel %vm1615, %v3758, 0
  %v3883 = vsel %vm1615, %v3760, 0
  %v3885 = vsel %vm1615, %v3762, 0
  %v3887 = vsel %vm1615, %v3764, 0
  %v3889 = vsel %vm1615, %v3766, 0
  %v3891 = vsel %vm1615, %v3768, 0
  %v3893 = vsel %vm1615, %v3770, 0
  %v3895 = vsel %vm1615, %v3772, 0
  %v3898 = vsel %vm2762, %v3645, 0
  %3900 = vmatprep.subr.mxu0 0.0
  %3901 = vmatpush1.msra.mxu0 %v3644
  %3902 = vmatprep.subr.mxu0 0.0
  %3903 = vmatpush1.msra.mxu0 %v3898
  %3904 = vmatprep.subr.mxu0 0.0
  %3905 = vmatpush1.msra.mxu0 0.0
  %3906 = vmatprep.subr.mxu0 0.0
  %3907 = vmatpush1.msra.mxu0 0.0
  %3908 = vmatprep.subr.mxu0 0.0
  %3909 = vmatpush1.msra.mxu0 0.0
  %3910 = vmatprep.subr.mxu0 0.0
  %3911 = vmatpush1.msra.mxu0 0.0
  %3912 = vmatprep.subr.mxu0 0.0
  %3913 = vmatpush1.msra.mxu0 0.0
  %3914 = vmatprep.subr.mxu0 0.0
  %3915 = vmatpush1.msra.mxu0 0.0
  %3916 = vmatprep.subr.mxu0 0.0
  %3917 = vmatpush1.msra.mxu0 0.0
  %3918 = vmatprep.subr.mxu0 0.0
  %3919 = vmatpush1.msra.mxu0 0.0
  %3920 = vmatprep.subr.mxu0 0.0
  %3921 = vmatpush1.msra.mxu0 0.0
  %3922 = vmatprep.subr.mxu0 0.0
  %3923 = vmatpush1.msra.mxu0 0.0
  %3924 = vmatprep.subr.mxu0 0.0
  %3925 = vmatpush1.msra.mxu0 0.0
  %3926 = vmatprep.subr.mxu0 0.0
  %3927 = vmatpush1.msra.mxu0 0.0
  %3928 = vmatprep.subr.mxu0 0.0
  %3929 = vmatpush1.msra.mxu0 0.0
  %3930 = vmatprep.subr.mxu0 0.0
  %3931 = vmatpush1.msra.mxu0 0.0
  %3932 = vmatprep.subr.mxu0 0.0
  %3933 = vmatpush1.msra.mxu0 0.0
  %3934 = vmatprep.subr.mxu0 0.0
  %3935 = vmatpush1.msra.mxu0 0.0
  %3936 = vmatprep.subr.mxu0 0.0
  %3937 = vmatpush1.msra.mxu0 0.0
  %3938 = vmatprep.subr.mxu0 0.0
  %3939 = vmatpush1.msra.mxu0 0.0
  %3940 = vmatprep.subr.mxu0 0.0
  %3941 = vmatpush1.msra.mxu0 0.0
  %3942 = vmatprep.subr.mxu0 0.0
  %3943 = vmatpush1.msra.mxu0 0.0
  %3944 = vmatprep.subr.mxu0 0.0
  %3945 = vmatpush1.msra.mxu0 0.0
  %3946 = vmatprep.subr.mxu0 0.0
  %3947 = vmatpush1.msra.mxu0 0.0
  %3948 = vmatprep.subr.mxu0 0.0
  %3949 = vmatpush1.msra.mxu0 0.0
  %3950 = vmatprep.subr.mxu0 0.0
  %3951 = vmatpush1.msra.mxu0 0.0
  %3952 = vmatprep.subr.mxu0 0.0
  %3953 = vmatpush1.msra.mxu0 0.0
  %3954 = vmatprep.subr.mxu0 0.0
  %3955 = vmatpush1.msra.mxu0 0.0
  %3956 = vmatprep.subr.mxu0 0.0
  %3957 = vmatpush1.msra.mxu0 0.0
  %3958 = vmatprep.subr.mxu0 0.0
  %3959 = vmatpush1.msra.mxu0 0.0
  %3960 = vmatprep.subr.mxu0 0.0
  %3961 = vmatpush1.msra.mxu0 0.0
  %3962 = vmatprep.subr.mxu0 0.0
  %3963 = vmatpush1.msra.mxu0 0.0
  %3964 = vmatprep.mubr.f32.mxu0 0.0
  %3965 = vmatmul.mubr.f32.gmra.mrb[0].mxu0 %v3773
  %v3966 = vpop.f32.mrb[0].mxu0
  %v3967 = vadd.f32 0.0, %v3966
  %v3968 = vpop.f32.mrb[0].mxu0
  %3969 = vmatprep.mubr.f32.mxu0 0.0
  %3970 = vmatmul.mubr.f32.gmra.mrb[0].mxu0 %v3775
  %v3971 = vpop.f32.mrb[0].mxu0
  %v3972 = vadd.f32 0.0, %v3971
  %v3973 = vpop.f32.mrb[0].mxu0
  %3974 = vmatprep.mubr.f32.mxu0 0.0
  %3975 = vmatmul.mubr.f32.gmra.mrb[0].mxu0 %v3777
  %v3976 = vpop.f32.mrb[0].mxu0
  %v3977 = vadd.f32 0.0, %v3976
  %v3978 = vpop.f32.mrb[0].mxu0
  %3979 = vmatprep.mubr.f32.mxu0 0.0
  %3980 = vmatmul.mubr.f32.gmra.mrb[0].mxu0 %v3779
  %v3981 = vpop.f32.mrb[0].mxu0
  %v3982 = vadd.f32 0.0, %v3981
  %v3983 = vpop.f32.mrb[0].mxu0
  %3984 = vmatprep.mubr.f32.mxu0 0.0
  %3985 = vmatmul.mubr.f32.gmra.mrb[0].mxu0 %v3781
  %v3986 = vpop.f32.mrb[0].mxu0
  %v3987 = vadd.f32 0.0, %v3986
  %v3988 = vpop.f32.mrb[0].mxu0
  %3989 = vmatprep.mubr.f32.mxu0 0.0
  %3990 = vmatmul.mubr.f32.gmra.mrb[0].mxu0 %v3783
  %v3991 = vpop.f32.mrb[0].mxu0
  %v3992 = vadd.f32 0.0, %v3991
  %v3993 = vpop.f32.mrb[0].mxu0
  %3994 = vmatprep.mubr.f32.mxu0 0.0
  %3995 = vmatmul.mubr.f32.gmra.mrb[0].mxu0 %v3785
  %v3996 = vpop.f32.mrb[0].mxu0
  %v3997 = vadd.f32 0.0, %v3996
  %v3998 = vpop.f32.mrb[0].mxu0
  %3999 = vmatprep.mubr.f32.mxu0 0.0
  %4000 = vmatmul.mubr.f32.gmra.mrb[0].mxu0 %v3787
  %v4001 = vpop.f32.mrb[0].mxu0
  %v4002 = vadd.f32 0.0, %v4001
  %v4003 = vpop.f32.mrb[0].mxu0
  %4004 = vmatprep.mubr.f32.mxu0 0.0
  %4005 = vmatmul.mubr.f32.gmra.mrb[0].mxu0 %v3789
  %v4006 = vpop.f32.mrb[0].mxu0
  %v4007 = vadd.f32 0.0, %v4006
  %v4008 = vpop.f32.mrb[0].mxu0
  %4009 = vmatprep.mubr.f32.mxu0 0.0
  %4010 = vmatmul.mubr.f32.gmra.mrb[0].mxu0 %v3791
  %v4011 = vpop.f32.mrb[0].mxu0
  %v4012 = vadd.f32 0.0, %v4011
  %v4013 = vpop.f32.mrb[0].mxu0
  %4014 = vmatprep.mubr.f32.mxu0 0.0
  %4015 = vmatmul.mubr.f32.gmra.mrb[0].mxu0 %v3793
  %v4016 = vpop.f32.mrb[0].mxu0
  %v4017 = vadd.f32 0.0, %v4016
  %v4018 = vpop.f32.mrb[0].mxu0
  %4019 = vmatprep.mubr.f32.mxu0 0.0
  %4020 = vmatmul.mubr.f32.gmra.mrb[0].mxu0 %v3795
  %v4021 = vpop.f32.mrb[0].mxu0
  %v4022 = vadd.f32 0.0, %v4021
  %v4023 = vpop.f32.mrb[0].mxu0
  %4024 = vmatprep.mubr.f32.mxu0 0.0
  %4025 = vmatmul.mubr.f32.gmra.mrb[0].mxu0 %v3797
  %v4026 = vpop.f32.mrb[0].mxu0
  %v4027 = vadd.f32 0.0, %v4026
  %v4028 = vpop.f32.mrb[0].mxu0
  %4029 = vmatprep.mubr.f32.mxu0 0.0
  %4030 = vmatmul.mubr.f32.gmra.mrb[0].mxu0 %v3799
  %v4031 = vpop.f32.mrb[0].mxu0
  %v4032 = vadd.f32 0.0, %v4031
  %v4033 = vpop.f32.mrb[0].mxu0
  %4034 = vmatprep.mubr.f32.mxu0 0.0
  %4035 = vmatmul.mubr.f32.gmra.mrb[0].mxu0 %v3801
  %v4036 = vpop.f32.mrb[0].mxu0
  %v4037 = vadd.f32 0.0, %v4036
  %v4038 = vpop.f32.mrb[0].mxu0
  %4039 = vmatprep.mubr.f32.mxu0 0.0
  %4040 = vmatmul.mubr.f32.gmra.mrb[0].mxu0 %v3803
  %v4041 = vpop.f32.mrb[0].mxu0
  %v4042 = vadd.f32 0.0, %v4041
  %v4043 = vpop.f32.mrb[0].mxu0
  %4044 = vmatprep.mubr.f32.mxu0 0.0
  %4045 = vmatmul.mubr.f32.gmra.mrb[0].mxu0 %v3805
  %v4046 = vpop.f32.mrb[0].mxu0
  %v4047 = vadd.f32 0.0, %v4046
  %v4048 = vpop.f32.mrb[0].mxu0
  %4049 = vmatprep.mubr.f32.mxu0 0.0
  %4050 = vmatmul.mubr.f32.gmra.mrb[0].mxu0 %v3807
  %v4051 = vpop.f32.mrb[0].mxu0
  %v4052 = vadd.f32 0.0, %v4051
  %v4053 = vpop.f32.mrb[0].mxu0
  %4054 = vmatprep.mubr.f32.mxu0 0.0
  %4055 = vmatmul.mubr.f32.gmra.mrb[0].mxu0 %v3809
  %v4056 = vpop.f32.mrb[0].mxu0
  %v4057 = vadd.f32 0.0, %v4056
  %v4058 = vpop.f32.mrb[0].mxu0
  %4059 = vmatprep.mubr.f32.mxu0 0.0
  %4060 = vmatmul.mubr.f32.gmra.mrb[0].mxu0 %v3811
  %v4061 = vpop.f32.mrb[0].mxu0
  %v4062 = vadd.f32 0.0, %v4061
  %v4063 = vpop.f32.mrb[0].mxu0
  %4064 = vmatprep.mubr.f32.mxu0 0.0
  %4065 = vmatmul.mubr.f32.gmra.mrb[0].mxu0 %v3813
  %v4066 = vpop.f32.mrb[0].mxu0
  %v4067 = vadd.f32 0.0, %v4066
  %v4068 = vpop.f32.mrb[0].mxu0
  %4069 = vmatprep.mubr.f32.mxu0 0.0
  %4070 = vmatmul.mubr.f32.gmra.mrb[0].mxu0 %v3815
  %v4071 = vpop.f32.mrb[0].mxu0
  %v4072 = vadd.f32 0.0, %v4071
  %v4073 = vpop.f32.mrb[0].mxu0
  %4074 = vmatprep.mubr.f32.mxu0 0.0
  %4075 = vmatmul.mubr.f32.gmra.mrb[0].mxu0 %v3817
  %v4076 = vpop.f32.mrb[0].mxu0
  %v4077 = vadd.f32 0.0, %v4076
  %v4078 = vpop.f32.mrb[0].mxu0
  %4079 = vmatprep.mubr.f32.mxu0 0.0
  %4080 = vmatmul.mubr.f32.gmra.mrb[0].mxu0 %v3819
  %v4081 = vpop.f32.mrb[0].mxu0
  %v4082 = vadd.f32 0.0, %v4081
  %v4083 = vpop.f32.mrb[0].mxu0
  %4084 = vmatprep.mubr.f32.mxu0 0.0
  %4085 = vmatmul.mubr.f32.gmra.mrb[0].mxu0 %v3821
  %v4086 = vpop.f32.mrb[0].mxu0
  %v4087 = vadd.f32 0.0, %v4086
  %v4088 = vpop.f32.mrb[0].mxu0
  %4089 = vmatprep.mubr.f32.mxu0 0.0
  %4090 = vmatmul.mubr.f32.gmra.mrb[0].mxu0 %v3823
  %v4091 = vpop.f32.mrb[0].mxu0
  %v4092 = vadd.f32 0.0, %v4091
  %v4093 = vpop.f32.mrb[0].mxu0
  %4094 = vmatprep.mubr.f32.mxu0 0.0
  %4095 = vmatmul.mubr.f32.gmra.mrb[0].mxu0 %v3825
  %v4096 = vpop.f32.mrb[0].mxu0
  %v4097 = vadd.f32 0.0, %v4096
  %v4098 = vpop.f32.mrb[0].mxu0
  %4099 = vmatprep.mubr.f32.mxu0 0.0
  %4100 = vmatmul.mubr.f32.gmra.mrb[0].mxu0 %v3827
  %v4101 = vpop.f32.mrb[0].mxu0
  %v4102 = vadd.f32 0.0, %v4101
  %v4103 = vpop.f32.mrb[0].mxu0
  %4104 = vmatprep.mubr.f32.mxu0 0.0
  %4105 = vmatmul.mubr.f32.gmra.mrb[0].mxu0 %v3829
  %v4106 = vpop.f32.mrb[0].mxu0
  %v4107 = vadd.f32 0.0, %v4106
  %v4108 = vpop.f32.mrb[0].mxu0
  %4109 = vmatprep.mubr.f32.mxu0 0.0
  %4110 = vmatmul.mubr.f32.gmra.mrb[0].mxu0 %v3831
  %v4111 = vpop.f32.mrb[0].mxu0
  %v4112 = vadd.f32 0.0, %v4111
  %v4113 = vpop.f32.mrb[0].mxu0
  %4114 = vmatprep.mubr.f32.mxu0 0.0
  %4115 = vmatmul.mubr.f32.gmra.mrb[0].mxu0 %v3833
  %v4116 = vpop.f32.mrb[0].mxu0
  %v4117 = vadd.f32 0.0, %v4116
  %v4118 = vpop.f32.mrb[0].mxu0
  %4119 = vmatprep.mubr.f32.mxu0 0.0
  %4120 = vmatmul.mubr.f32.gmra.mrb[0].mxu0 %v3835
  %v4121 = vpop.f32.mrb[0].mxu0
  %v4122 = vadd.f32 0.0, %v4121
  %v4123 = vpop.f32.mrb[0].mxu0
  %4124 = vmatprep.mubr.f32.mxu0 0.0
  %4125 = vmatmul.mubr.f32.gmra.mrb[0].mxu0 %v3837
  %v4126 = vpop.f32.mrb[0].mxu0
  %v4127 = vadd.f32 0.0, %v4126
  %v4128 = vpop.f32.mrb[0].mxu0
  %4129 = vmatprep.mubr.f32.mxu0 0.0
  %4130 = vmatmul.mubr.f32.gmra.mrb[0].mxu0 %v3839
  %v4131 = vpop.f32.mrb[0].mxu0
  %v4132 = vadd.f32 0.0, %v4131
  %v4133 = vpop.f32.mrb[0].mxu0
  %4134 = vmatprep.mubr.f32.mxu0 0.0
  %4135 = vmatmul.mubr.f32.gmra.mrb[0].mxu0 %v3841
  %v4136 = vpop.f32.mrb[0].mxu0
  %v4137 = vadd.f32 0.0, %v4136
  %v4138 = vpop.f32.mrb[0].mxu0
  %4139 = vmatprep.mubr.f32.mxu0 0.0
  %4140 = vmatmul.mubr.f32.gmra.mrb[0].mxu0 %v3843
  %v4141 = vpop.f32.mrb[0].mxu0
  %v4142 = vadd.f32 0.0, %v4141
  %v4143 = vpop.f32.mrb[0].mxu0
  %4144 = vmatprep.mubr.f32.mxu0 0.0
  %4145 = vmatmul.mubr.f32.gmra.mrb[0].mxu0 %v3845
  %v4146 = vpop.f32.mrb[0].mxu0
  %v4147 = vadd.f32 0.0, %v4146
  %v4148 = vpop.f32.mrb[0].mxu0
  %4149 = vmatprep.mubr.f32.mxu0 0.0
  %4150 = vmatmul.mubr.f32.gmra.mrb[0].mxu0 %v3847
  %v4151 = vpop.f32.mrb[0].mxu0
  %v4152 = vadd.f32 0.0, %v4151
  %v4153 = vpop.f32.mrb[0].mxu0
  %4154 = vmatprep.mubr.f32.mxu0 0.0
  %4155 = vmatmul.mubr.f32.gmra.mrb[0].mxu0 %v3849
  %v4156 = vpop.f32.mrb[0].mxu0
  %v4157 = vadd.f32 0.0, %v4156
  %v4158 = vpop.f32.mrb[0].mxu0
  %4159 = vmatprep.mubr.f32.mxu0 0.0
  %4160 = vmatmul.mubr.f32.gmra.mrb[0].mxu0 %v3851
  %v4161 = vpop.f32.mrb[0].mxu0
  %v4162 = vadd.f32 0.0, %v4161
  %v4163 = vpop.f32.mrb[0].mxu0
  %4164 = vmatprep.mubr.f32.mxu0 0.0
  %4165 = vmatmul.mubr.f32.gmra.mrb[0].mxu0 %v3853
  %v4166 = vpop.f32.mrb[0].mxu0
  %v4167 = vadd.f32 0.0, %v4166
  %v4168 = vpop.f32.mrb[0].mxu0
  %4169 = vmatprep.mubr.f32.mxu0 0.0
  %4170 = vmatmul.mubr.f32.gmra.mrb[0].mxu0 %v3855
  %v4171 = vpop.f32.mrb[0].mxu0
  %v4172 = vadd.f32 0.0, %v4171
  %v4173 = vpop.f32.mrb[0].mxu0
  %4174 = vmatprep.mubr.f32.mxu0 0.0
  %4175 = vmatmul.mubr.f32.gmra.mrb[0].mxu0 %v3857
  %v4176 = vpop.f32.mrb[0].mxu0
  %v4177 = vadd.f32 0.0, %v4176
  %v4178 = vpop.f32.mrb[0].mxu0
  %4179 = vmatprep.mubr.f32.mxu0 0.0
  %4180 = vmatmul.mubr.f32.gmra.mrb[0].mxu0 %v3859
  %v4181 = vpop.f32.mrb[0].mxu0
  %v4182 = vadd.f32 0.0, %v4181
  %v4183 = vpop.f32.mrb[0].mxu0
  %4184 = vmatprep.mubr.f32.mxu0 0.0
  %4185 = vmatmul.mubr.f32.gmra.mrb[0].mxu0 %v3861
  %v4186 = vpop.f32.mrb[0].mxu0
  %v4187 = vadd.f32 0.0, %v4186
  %v4188 = vpop.f32.mrb[0].mxu0
  %4189 = vmatprep.mubr.f32.mxu0 0.0
  %4190 = vmatmul.mubr.f32.gmra.mrb[0].mxu0 %v3863
  %v4191 = vpop.f32.mrb[0].mxu0
  %v4192 = vadd.f32 0.0, %v4191
  %v4193 = vpop.f32.mrb[0].mxu0
  %4194 = vmatprep.mubr.f32.mxu0 0.0
  %4195 = vmatmul.mubr.f32.gmra.mrb[0].mxu0 %v3865
  %v4196 = vpop.f32.mrb[0].mxu0
  %v4197 = vadd.f32 0.0, %v4196
  %v4198 = vpop.f32.mrb[0].mxu0
  %4199 = vmatprep.mubr.f32.mxu0 0.0
  %4200 = vmatmul.mubr.f32.gmra.mrb[0].mxu0 %v3867
  %v4201 = vpop.f32.mrb[0].mxu0
  %v4202 = vadd.f32 0.0, %v4201
  %v4203 = vpop.f32.mrb[0].mxu0
  %4204 = vmatprep.mubr.f32.mxu0 0.0
  %4205 = vmatmul.mubr.f32.gmra.mrb[0].mxu0 %v3869
  %v4206 = vpop.f32.mrb[0].mxu0
  %v4207 = vadd.f32 0.0, %v4206
  %v4208 = vpop.f32.mrb[0].mxu0
  %4209 = vmatprep.mubr.f32.mxu0 0.0
  %4210 = vmatmul.mubr.f32.gmra.mrb[0].mxu0 %v3871
  %v4211 = vpop.f32.mrb[0].mxu0
  %v4212 = vadd.f32 0.0, %v4211
  %v4213 = vpop.f32.mrb[0].mxu0
  %4214 = vmatprep.mubr.f32.mxu0 0.0
  %4215 = vmatmul.mubr.f32.gmra.mrb[0].mxu0 %v3873
  %v4216 = vpop.f32.mrb[0].mxu0
  %v4217 = vadd.f32 0.0, %v4216
  %v4218 = vpop.f32.mrb[0].mxu0
  %4219 = vmatprep.mubr.f32.mxu0 0.0
  %4220 = vmatmul.mubr.f32.gmra.mrb[0].mxu0 %v3875
  %v4221 = vpop.f32.mrb[0].mxu0
  %v4222 = vadd.f32 0.0, %v4221
  %v4223 = vpop.f32.mrb[0].mxu0
  %4224 = vmatprep.mubr.f32.mxu0 0.0
  %4225 = vmatmul.mubr.f32.gmra.mrb[0].mxu0 %v3877
  %v4226 = vpop.f32.mrb[0].mxu0
  %v4227 = vadd.f32 0.0, %v4226
  %v4228 = vpop.f32.mrb[0].mxu0
  %4229 = vmatprep.mubr.f32.mxu0 0.0
  %4230 = vmatmul.mubr.f32.gmra.mrb[0].mxu0 %v3879
  %v4231 = vpop.f32.mrb[0].mxu0
  %v4232 = vadd.f32 0.0, %v4231
  %v4233 = vpop.f32.mrb[0].mxu0
  %4234 = vmatprep.mubr.f32.mxu0 0.0
  %4235 = vmatmul.mubr.f32.gmra.mrb[0].mxu0 %v3881
  %v4236 = vpop.f32.mrb[0].mxu0
  %v4237 = vadd.f32 0.0, %v4236
  %v4238 = vpop.f32.mrb[0].mxu0
  %4239 = vmatprep.mubr.f32.mxu0 0.0
  %4240 = vmatmul.mubr.f32.gmra.mrb[0].mxu0 %v3883
  %v4241 = vpop.f32.mrb[0].mxu0
  %v4242 = vadd.f32 0.0, %v4241
  %v4243 = vpop.f32.mrb[0].mxu0
  %4244 = vmatprep.mubr.f32.mxu0 0.0
  %4245 = vmatmul.mubr.f32.gmra.mrb[0].mxu0 %v3885
  %v4246 = vpop.f32.mrb[0].mxu0
  %v4247 = vadd.f32 0.0, %v4246
  %v4248 = vpop.f32.mrb[0].mxu0
  %4249 = vmatprep.mubr.f32.mxu0 0.0
  %4250 = vmatmul.mubr.f32.gmra.mrb[0].mxu0 %v3887
  %v4251 = vpop.f32.mrb[0].mxu0
  %v4252 = vadd.f32 0.0, %v4251
  %v4253 = vpop.f32.mrb[0].mxu0
  %4254 = vmatprep.mubr.f32.mxu0 0.0
  %4255 = vmatmul.mubr.f32.gmra.mrb[0].mxu0 %v3889
  %v4256 = vpop.f32.mrb[0].mxu0
  %v4257 = vadd.f32 0.0, %v4256
  %v4258 = vpop.f32.mrb[0].mxu0
  %4259 = vmatprep.mubr.f32.mxu0 0.0
  %4260 = vmatmul.mubr.f32.gmra.mrb[0].mxu0 %v3891
  %v4261 = vpop.f32.mrb[0].mxu0
  %v4262 = vadd.f32 0.0, %v4261
  %v4263 = vpop.f32.mrb[0].mxu0
  %4264 = vmatprep.mubr.f32.mxu0 0.0
  %4265 = vmatmul.mubr.f32.gmra.mrb[0].mxu0 %v3893
  %v4266 = vpop.f32.mrb[0].mxu0
  %v4267 = vadd.f32 0.0, %v4266
  %v4268 = vpop.f32.mrb[0].mxu0
  %4269 = vmatprep.mubr.f32.mxu0 0.0
  %4270 = vmatmul.mubr.f32.gmra.mrb[0].mxu0 %v3895
  %v4271 = vpop.f32.mrb[0].mxu0
  %v4272 = vadd.f32 0.0, %v4271
  %v4273 = vpop.f32.mrb[0].mxu0
  %4274 = vdwg.mxu0
  %v4275 = vadd.f32 %v3335, %v3967
  %v4276 = vadd.f32 %v3340, %v3972
  %v4277 = vadd.f32 %v3345, %v3977
  %v4278 = vadd.f32 %v3350, %v3982
  %v4279 = vadd.f32 %v3355, %v3987
  %v4280 = vadd.f32 %v3360, %v3992
  %v4281 = vadd.f32 %v3365, %v3997
  %v4282 = vadd.f32 %v3370, %v4002
  %v4283 = vadd.f32 %v3375, %v4007
  %v4284 = vadd.f32 %v3380, %v4012
  %v4285 = vadd.f32 %v3385, %v4017
  %v4286 = vadd.f32 %v3390, %v4022
  %v4287 = vadd.f32 %v3395, %v4027
  %v4288 = vadd.f32 %v3400, %v4032
  %v4289 = vadd.f32 %v3405, %v4037
  %v4290 = vadd.f32 %v3410, %v4042
  %v4291 = vadd.f32 %v3415, %v4047
  %v4292 = vadd.f32 %v3420, %v4052
  %v4293 = vadd.f32 %v3425, %v4057
  %v4294 = vadd.f32 %v3430, %v4062
  %v4295 = vadd.f32 %v3435, %v4067
  %v4296 = vadd.f32 %v3440, %v4072
  %v4297 = vadd.f32 %v3445, %v4077
  %v4298 = vadd.f32 %v3450, %v4082
  %v4299 = vadd.f32 %v3455, %v4087
  %v4300 = vadd.f32 %v3460, %v4092
  %v4301 = vadd.f32 %v3465, %v4097
  %v4302 = vadd.f32 %v3470, %v4102
  %v4303 = vadd.f32 %v3475, %v4107
  %v4304 = vadd.f32 %v3480, %v4112
  %v4305 = vadd.f32 %v3485, %v4117
  %v4306 = vadd.f32 %v3490, %v4122
  %v4307 = vadd.f32 %v3495, %v4127
  %v4308 = vadd.f32 %v3500, %v4132
  %v4309 = vadd.f32 %v3505, %v4137
  %v4310 = vadd.f32 %v3510, %v4142
  %v4311 = vadd.f32 %v3515, %v4147
  %v4312 = vadd.f32 %v3520, %v4152
  %v4313 = vadd.f32 %v3525, %v4157
  %v4314 = vadd.f32 %v3530, %v4162
  %v4315 = vadd.f32 %v3535, %v4167
  %v4316 = vadd.f32 %v3540, %v4172
  %v4317 = vadd.f32 %v3545, %v4177
  %v4318 = vadd.f32 %v3550, %v4182
  %v4319 = vadd.f32 %v3555, %v4187
  %v4320 = vadd.f32 %v3560, %v4192
  %v4321 = vadd.f32 %v3565, %v4197
  %v4322 = vadd.f32 %v3570, %v4202
  %v4323 = vadd.f32 %v3575, %v4207
  %v4324 = vadd.f32 %v3580, %v4212
  %v4325 = vadd.f32 %v3585, %v4217
  %v4326 = vadd.f32 %v3590, %v4222
  %v4327 = vadd.f32 %v3595, %v4227
  %v4328 = vadd.f32 %v3600, %v4232
  %v4329 = vadd.f32 %v3605, %v4237
  %v4330 = vadd.f32 %v3610, %v4242
  %v4331 = vadd.f32 %v3615, %v4247
  %v4332 = vadd.f32 %v3620, %v4252
  %v4333 = vadd.f32 %v3625, %v4257
  %v4334 = vadd.f32 %v3630, %v4262
  %v4335 = vadd.f32 %v3635, %v4267
  %v4336 = vadd.f32 %v3640, %v4272
  %s4337 = scalar_lea.vmem %s6, 48
  %v4338 = vld [vmem:[%s4337] sm:$0xff]
  %v4339 = vld [vmem:[%s4337 + $0x8] sm:$0x3]
  %v4340 = vsel %vm1615, %v2443, 0
  %v4343 = vsel %vm1615, %v2444, 0
  %v4346 = vsel %vm2762, %v4339, 0
  %4348 = vmatprep.subr.mxu0 0.0
  %4349 = vmatpush1.msra.mxu0 %v4338
  %4350 = vmatprep.subr.mxu0 0.0
  %4351 = vmatpush1.msra.mxu0 %v4346
  %4352 = vmatprep.subr.mxu0 0.0
  %4353 = vmatpush1.msra.mxu0 0.0
  %4354 = vmatprep.subr.mxu0 0.0
  %4355 = vmatpush1.msra.mxu0 0.0
  %4356 = vmatprep.subr.mxu0 0.0
  %4357 = vmatpush1.msra.mxu0 0.0
  %4358 = vmatprep.subr.mxu0 0.0
  %4359 = vmatpush1.msra.mxu0 0.0
  %4360 = vmatprep.subr.mxu0 0.0
  %4361 = vmatpush1.msra.mxu0 0.0
  %4362 = vmatprep.subr.mxu0 0.0
  %4363 = vmatpush1.msra.mxu0 0.0
  %4364 = vmatprep.subr.mxu0 0.0
  %4365 = vmatpush1.msra.mxu0 0.0
  %4366 = vmatprep.subr.mxu0 0.0
  %4367 = vmatpush1.msra.mxu0 0.0
  %4368 = vmatprep.subr.mxu0 0.0
  %4369 = vmatpush1.msra.mxu0 0.0
  %4370 = vmatprep.subr.mxu0 0.0
  %4371 = vmatpush1.msra.mxu0 0.0
  %4372 = vmatprep.subr.mxu0 0.0
  %4373 = vmatpush1.msra.mxu0 0.0
  %4374 = vmatprep.subr.mxu0 0.0
  %4375 = vmatpush1.msra.mxu0 0.0
  %4376 = vmatprep.subr.mxu0 0.0
  %4377 = vmatpush1.msra.mxu0 0.0
  %4378 = vmatprep.subr.mxu0 0.0
  %4379 = vmatpush1.msra.mxu0 0.0
  %4380 = vmatprep.subr.mxu0 0.0
  %4381 = vmatpush1.msra.mxu0 0.0
  %4382 = vmatprep.subr.mxu0 0.0
  %4383 = vmatpush1.msra.mxu0 0.0
  %4384 = vmatprep.subr.mxu0 0.0
  %4385 = vmatpush1.msra.mxu0 0.0
  %4386 = vmatprep.subr.mxu0 0.0
  %4387 = vmatpush1.msra.mxu0 0.0
  %4388 = vmatprep.subr.mxu0 0.0
  %4389 = vmatpush1.msra.mxu0 0.0
  %4390 = vmatprep.subr.mxu0 0.0
  %4391 = vmatpush1.msra.mxu0 0.0
  %4392 = vmatprep.subr.mxu0 0.0
  %4393 = vmatpush1.msra.mxu0 0.0
  %4394 = vmatprep.subr.mxu0 0.0
  %4395 = vmatpush1.msra.mxu0 0.0
  %4396 = vmatprep.subr.mxu0 0.0
  %4397 = vmatpush1.msra.mxu0 0.0
  %4398 = vmatprep.subr.mxu0 0.0
  %4399 = vmatpush1.msra.mxu0 0.0
  %4400 = vmatprep.subr.mxu0 0.0
  %4401 = vmatpush1.msra.mxu0 0.0
  %4402 = vmatprep.subr.mxu0 0.0
  %4403 = vmatpush1.msra.mxu0 0.0
  %4404 = vmatprep.subr.mxu0 0.0
  %4405 = vmatpush1.msra.mxu0 0.0
  %4406 = vmatprep.subr.mxu0 0.0
  %4407 = vmatpush1.msra.mxu0 0.0
  %4408 = vmatprep.subr.mxu0 0.0
  %4409 = vmatpush1.msra.mxu0 0.0
  %4410 = vmatprep.subr.mxu0 0.0
  %4411 = vmatpush1.msra.mxu0 0.0
  %4412 = vmatprep.mubr.f32.mxu0 0.0
  %4413 = vmatmul.mubr.f32.gmra.mrb[0].mxu0 %v3145
  %v4414 = vpop.f32.mrb[0].mxu0
  %v4415 = vadd.f32 0.0, %v4414
  %v4416 = vpop.f32.mrb[0].mxu0
  %4417 = vmatprep.mubr.f32.mxu0 0.0
  %4418 = vmatmul.mubr.f32.gmra.mrb[0].mxu0 %v3147
  %v4419 = vpop.f32.mrb[0].mxu0
  %v4420 = vadd.f32 0.0, %v4419
  %v4421 = vpop.f32.mrb[0].mxu0
  %4422 = vmatprep.mubr.f32.mxu0 0.0
  %4423 = vmatmul.mubr.f32.gmra.mrb[0].mxu0 %v3149
  %v4424 = vpop.f32.mrb[0].mxu0
  %v4425 = vadd.f32 0.0, %v4424
  %v4426 = vpop.f32.mrb[0].mxu0
  %4427 = vmatprep.mubr.f32.mxu0 0.0
  %4428 = vmatmul.mubr.f32.gmra.mrb[0].mxu0 %v3151
  %v4429 = vpop.f32.mrb[0].mxu0
  %v4430 = vadd.f32 0.0, %v4429
  %v4431 = vpop.f32.mrb[0].mxu0
  %4432 = vmatprep.mubr.f32.mxu0 0.0
  %4433 = vmatmul.mubr.f32.gmra.mrb[0].mxu0 %v3153
  %v4434 = vpop.f32.mrb[0].mxu0
  %v4435 = vadd.f32 0.0, %v4434
  %v4436 = vpop.f32.mrb[0].mxu0
  %4437 = vmatprep.mubr.f32.mxu0 0.0
  %4438 = vmatmul.mubr.f32.gmra.mrb[0].mxu0 %v3155
  %v4439 = vpop.f32.mrb[0].mxu0
  %v4440 = vadd.f32 0.0, %v4439
  %v4441 = vpop.f32.mrb[0].mxu0
  %4442 = vmatprep.mubr.f32.mxu0 0.0
  %4443 = vmatmul.mubr.f32.gmra.mrb[0].mxu0 %v3157
  %v4444 = vpop.f32.mrb[0].mxu0
  %v4445 = vadd.f32 0.0, %v4444
  %v4446 = vpop.f32.mrb[0].mxu0
  %4447 = vmatprep.mubr.f32.mxu0 0.0
  %4448 = vmatmul.mubr.f32.gmra.mrb[0].mxu0 %v3159
  %v4449 = vpop.f32.mrb[0].mxu0
  %v4450 = vadd.f32 0.0, %v4449
  %v4451 = vpop.f32.mrb[0].mxu0
  %4452 = vmatprep.mubr.f32.mxu0 0.0
  %4453 = vmatmul.mubr.f32.gmra.mrb[0].mxu0 %v3161
  %v4454 = vpop.f32.mrb[0].mxu0
  %v4455 = vadd.f32 0.0, %v4454
  %v4456 = vpop.f32.mrb[0].mxu0
  %4457 = vmatprep.mubr.f32.mxu0 0.0
  %4458 = vmatmul.mubr.f32.gmra.mrb[0].mxu0 %v3163
  %v4459 = vpop.f32.mrb[0].mxu0
  %v4460 = vadd.f32 0.0, %v4459
  %v4461 = vpop.f32.mrb[0].mxu0
  %4462 = vmatprep.mubr.f32.mxu0 0.0
  %4463 = vmatmul.mubr.f32.gmra.mrb[0].mxu0 %v3165
  %v4464 = vpop.f32.mrb[0].mxu0
  %v4465 = vadd.f32 0.0, %v4464
  %v4466 = vpop.f32.mrb[0].mxu0
  %4467 = vmatprep.mubr.f32.mxu0 0.0
  %4468 = vmatmul.mubr.f32.gmra.mrb[0].mxu0 %v3167
  %v4469 = vpop.f32.mrb[0].mxu0
  %v4470 = vadd.f32 0.0, %v4469
  %v4471 = vpop.f32.mrb[0].mxu0
  %4472 = vmatprep.mubr.f32.mxu0 0.0
  %4473 = vmatmul.mubr.f32.gmra.mrb[0].mxu0 %v3169
  %v4474 = vpop.f32.mrb[0].mxu0
  %v4475 = vadd.f32 0.0, %v4474
  %v4476 = vpop.f32.mrb[0].mxu0
  %4477 = vmatprep.mubr.f32.mxu0 0.0
  %4478 = vmatmul.mubr.f32.gmra.mrb[0].mxu0 %v3171
  %v4479 = vpop.f32.mrb[0].mxu0
  %v4480 = vadd.f32 0.0, %v4479
  %v4481 = vpop.f32.mrb[0].mxu0
  %4482 = vmatprep.mubr.f32.mxu0 0.0
  %4483 = vmatmul.mubr.f32.gmra.mrb[0].mxu0 %v3173
  %v4484 = vpop.f32.mrb[0].mxu0
  %v4485 = vadd.f32 0.0, %v4484
  %v4486 = vpop.f32.mrb[0].mxu0
  %4487 = vmatprep.mubr.f32.mxu0 0.0
  %4488 = vmatmul.mubr.f32.gmra.mrb[0].mxu0 %v3175
  %v4489 = vpop.f32.mrb[0].mxu0
  %v4490 = vadd.f32 0.0, %v4489
  %v4491 = vpop.f32.mrb[0].mxu0
  %4492 = vmatprep.mubr.f32.mxu0 0.0
  %4493 = vmatmul.mubr.f32.gmra.mrb[0].mxu0 %v3177
  %v4494 = vpop.f32.mrb[0].mxu0
  %v4495 = vadd.f32 0.0, %v4494
  %v4496 = vpop.f32.mrb[0].mxu0
  %4497 = vmatprep.mubr.f32.mxu0 0.0
  %4498 = vmatmul.mubr.f32.gmra.mrb[0].mxu0 %v3179
  %v4499 = vpop.f32.mrb[0].mxu0
  %v4500 = vadd.f32 0.0, %v4499
  %v4501 = vpop.f32.mrb[0].mxu0
  %4502 = vmatprep.mubr.f32.mxu0 0.0
  %4503 = vmatmul.mubr.f32.gmra.mrb[0].mxu0 %v3181
  %v4504 = vpop.f32.mrb[0].mxu0
  %v4505 = vadd.f32 0.0, %v4504
  %v4506 = vpop.f32.mrb[0].mxu0
  %4507 = vmatprep.mubr.f32.mxu0 0.0
  %4508 = vmatmul.mubr.f32.gmra.mrb[0].mxu0 %v3183
  %v4509 = vpop.f32.mrb[0].mxu0
  %v4510 = vadd.f32 0.0, %v4509
  %v4511 = vpop.f32.mrb[0].mxu0
  %4512 = vmatprep.mubr.f32.mxu0 0.0
  %4513 = vmatmul.mubr.f32.gmra.mrb[0].mxu0 %v3185
  %v4514 = vpop.f32.mrb[0].mxu0
  %v4515 = vadd.f32 0.0, %v4514
  %v4516 = vpop.f32.mrb[0].mxu0
  %4517 = vmatprep.mubr.f32.mxu0 0.0
  %4518 = vmatmul.mubr.f32.gmra.mrb[0].mxu0 %v3187
  %v4519 = vpop.f32.mrb[0].mxu0
  %v4520 = vadd.f32 0.0, %v4519
  %v4521 = vpop.f32.mrb[0].mxu0
  %4522 = vmatprep.mubr.f32.mxu0 0.0
  %4523 = vmatmul.mubr.f32.gmra.mrb[0].mxu0 %v3189
  %v4524 = vpop.f32.mrb[0].mxu0
  %v4525 = vadd.f32 0.0, %v4524
  %v4526 = vpop.f32.mrb[0].mxu0
  %4527 = vmatprep.mubr.f32.mxu0 0.0
  %4528 = vmatmul.mubr.f32.gmra.mrb[0].mxu0 %v3191
  %v4529 = vpop.f32.mrb[0].mxu0
  %v4530 = vadd.f32 0.0, %v4529
  %v4531 = vpop.f32.mrb[0].mxu0
  %4532 = vmatprep.mubr.f32.mxu0 0.0
  %4533 = vmatmul.mubr.f32.gmra.mrb[0].mxu0 %v3193
  %v4534 = vpop.f32.mrb[0].mxu0
  %v4535 = vadd.f32 0.0, %v4534
  %v4536 = vpop.f32.mrb[0].mxu0
  %4537 = vmatprep.mubr.f32.mxu0 0.0
  %4538 = vmatmul.mubr.f32.gmra.mrb[0].mxu0 %v3195
  %v4539 = vpop.f32.mrb[0].mxu0
  %v4540 = vadd.f32 0.0, %v4539
  %v4541 = vpop.f32.mrb[0].mxu0
  %4542 = vmatprep.mubr.f32.mxu0 0.0
  %4543 = vmatmul.mubr.f32.gmra.mrb[0].mxu0 %v3197
  %v4544 = vpop.f32.mrb[0].mxu0
  %v4545 = vadd.f32 0.0, %v4544
  %v4546 = vpop.f32.mrb[0].mxu0
  %4547 = vmatprep.mubr.f32.mxu0 0.0
  %4548 = vmatmul.mubr.f32.gmra.mrb[0].mxu0 %v3199
  %v4549 = vpop.f32.mrb[0].mxu0
  %v4550 = vadd.f32 0.0, %v4549
  %v4551 = vpop.f32.mrb[0].mxu0
  %4552 = vmatprep.mubr.f32.mxu0 0.0
  %4553 = vmatmul.mubr.f32.gmra.mrb[0].mxu0 %v3201
  %v4554 = vpop.f32.mrb[0].mxu0
  %v4555 = vadd.f32 0.0, %v4554
  %v4556 = vpop.f32.mrb[0].mxu0
  %4557 = vmatprep.mubr.f32.mxu0 0.0
  %4558 = vmatmul.mubr.f32.gmra.mrb[0].mxu0 %v3203
  %v4559 = vpop.f32.mrb[0].mxu0
  %v4560 = vadd.f32 0.0, %v4559
  %v4561 = vpop.f32.mrb[0].mxu0
  %4562 = vmatprep.mubr.f32.mxu0 0.0
  %4563 = vmatmul.mubr.f32.gmra.mrb[0].mxu0 %v3205
  %v4564 = vpop.f32.mrb[0].mxu0
  %v4565 = vadd.f32 0.0, %v4564
  %v4566 = vpop.f32.mrb[0].mxu0
  %4567 = vmatprep.mubr.f32.mxu0 0.0
  %4568 = vmatmul.mubr.f32.gmra.mrb[0].mxu0 %v3207
  %v4569 = vpop.f32.mrb[0].mxu0
  %v4570 = vadd.f32 0.0, %v4569
  %v4571 = vpop.f32.mrb[0].mxu0
  %4572 = vmatprep.mubr.f32.mxu0 0.0
  %4573 = vmatmul.mubr.f32.gmra.mrb[0].mxu0 %v3209
  %v4574 = vpop.f32.mrb[0].mxu0
  %v4575 = vadd.f32 0.0, %v4574
  %v4576 = vpop.f32.mrb[0].mxu0
  %4577 = vmatprep.mubr.f32.mxu0 0.0
  %4578 = vmatmul.mubr.f32.gmra.mrb[0].mxu0 %v3211
  %v4579 = vpop.f32.mrb[0].mxu0
  %v4580 = vadd.f32 0.0, %v4579
  %v4581 = vpop.f32.mrb[0].mxu0
  %4582 = vmatprep.mubr.f32.mxu0 0.0
  %4583 = vmatmul.mubr.f32.gmra.mrb[0].mxu0 %v3213
  %v4584 = vpop.f32.mrb[0].mxu0
  %v4585 = vadd.f32 0.0, %v4584
  %v4586 = vpop.f32.mrb[0].mxu0
  %4587 = vmatprep.mubr.f32.mxu0 0.0
  %4588 = vmatmul.mubr.f32.gmra.mrb[0].mxu0 %v3215
  %v4589 = vpop.f32.mrb[0].mxu0
  %v4590 = vadd.f32 0.0, %v4589
  %v4591 = vpop.f32.mrb[0].mxu0
  %4592 = vmatprep.mubr.f32.mxu0 0.0
  %4593 = vmatmul.mubr.f32.gmra.mrb[0].mxu0 %v3217
  %v4594 = vpop.f32.mrb[0].mxu0
  %v4595 = vadd.f32 0.0, %v4594
  %v4596 = vpop.f32.mrb[0].mxu0
  %4597 = vmatprep.mubr.f32.mxu0 0.0
  %4598 = vmatmul.mubr.f32.gmra.mrb[0].mxu0 %v3219
  %v4599 = vpop.f32.mrb[0].mxu0
  %v4600 = vadd.f32 0.0, %v4599
  %v4601 = vpop.f32.mrb[0].mxu0
  %4602 = vmatprep.mubr.f32.mxu0 0.0
  %4603 = vmatmul.mubr.f32.gmra.mrb[0].mxu0 %v3221
  %v4604 = vpop.f32.mrb[0].mxu0
  %v4605 = vadd.f32 0.0, %v4604
  %v4606 = vpop.f32.mrb[0].mxu0
  %4607 = vmatprep.mubr.f32.mxu0 0.0
  %4608 = vmatmul.mubr.f32.gmra.mrb[0].mxu0 %v3223
  %v4609 = vpop.f32.mrb[0].mxu0
  %v4610 = vadd.f32 0.0, %v4609
  %v4611 = vpop.f32.mrb[0].mxu0
  %4612 = vmatprep.mubr.f32.mxu0 0.0
  %4613 = vmatmul.mubr.f32.gmra.mrb[0].mxu0 %v3225
  %v4614 = vpop.f32.mrb[0].mxu0
  %v4615 = vadd.f32 0.0, %v4614
  %v4616 = vpop.f32.mrb[0].mxu0
  %4617 = vmatprep.mubr.f32.mxu0 0.0
  %4618 = vmatmul.mubr.f32.gmra.mrb[0].mxu0 %v3227
  %v4619 = vpop.f32.mrb[0].mxu0
  %v4620 = vadd.f32 0.0, %v4619
  %v4621 = vpop.f32.mrb[0].mxu0
  %4622 = vmatprep.mubr.f32.mxu0 0.0
  %4623 = vmatmul.mubr.f32.gmra.mrb[0].mxu0 %v3229
  %v4624 = vpop.f32.mrb[0].mxu0
  %v4625 = vadd.f32 0.0, %v4624
  %v4626 = vpop.f32.mrb[0].mxu0
  %4627 = vmatprep.mubr.f32.mxu0 0.0
  %4628 = vmatmul.mubr.f32.gmra.mrb[0].mxu0 %v3231
  %v4629 = vpop.f32.mrb[0].mxu0
  %v4630 = vadd.f32 0.0, %v4629
  %v4631 = vpop.f32.mrb[0].mxu0
  %4632 = vmatprep.mubr.f32.mxu0 0.0
  %4633 = vmatmul.mubr.f32.gmra.mrb[0].mxu0 %v3233
  %v4634 = vpop.f32.mrb[0].mxu0
  %v4635 = vadd.f32 0.0, %v4634
  %v4636 = vpop.f32.mrb[0].mxu0
  %4637 = vmatprep.mubr.f32.mxu0 0.0
  %4638 = vmatmul.mubr.f32.gmra.mrb[0].mxu0 %v3235
  %v4639 = vpop.f32.mrb[0].mxu0
  %v4640 = vadd.f32 0.0, %v4639
  %v4641 = vpop.f32.mrb[0].mxu0
  %4642 = vmatprep.mubr.f32.mxu0 0.0
  %4643 = vmatmul.mubr.f32.gmra.mrb[0].mxu0 %v3237
  %v4644 = vpop.f32.mrb[0].mxu0
  %v4645 = vadd.f32 0.0, %v4644
  %v4646 = vpop.f32.mrb[0].mxu0
  %4647 = vmatprep.mubr.f32.mxu0 0.0
  %4648 = vmatmul.mubr.f32.gmra.mrb[0].mxu0 %v3239
  %v4649 = vpop.f32.mrb[0].mxu0
  %v4650 = vadd.f32 0.0, %v4649
  %v4651 = vpop.f32.mrb[0].mxu0
  %4652 = vmatprep.mubr.f32.mxu0 0.0
  %4653 = vmatmul.mubr.f32.gmra.mrb[0].mxu0 %v3241
  %v4654 = vpop.f32.mrb[0].mxu0
  %v4655 = vadd.f32 0.0, %v4654
  %v4656 = vpop.f32.mrb[0].mxu0
  %4657 = vmatprep.mubr.f32.mxu0 0.0
  %4658 = vmatmul.mubr.f32.gmra.mrb[0].mxu0 %v3243
  %v4659 = vpop.f32.mrb[0].mxu0
  %v4660 = vadd.f32 0.0, %v4659
  %v4661 = vpop.f32.mrb[0].mxu0
  %4662 = vmatprep.mubr.f32.mxu0 0.0
  %4663 = vmatmul.mubr.f32.gmra.mrb[0].mxu0 %v3245
  %v4664 = vpop.f32.mrb[0].mxu0
  %v4665 = vadd.f32 0.0, %v4664
  %v4666 = vpop.f32.mrb[0].mxu0
  %4667 = vmatprep.mubr.f32.mxu0 0.0
  %4668 = vmatmul.mubr.f32.gmra.mrb[0].mxu0 %v3247
  %v4669 = vpop.f32.mrb[0].mxu0
  %v4670 = vadd.f32 0.0, %v4669
  %v4671 = vpop.f32.mrb[0].mxu0
  %4672 = vmatprep.mubr.f32.mxu0 0.0
  %4673 = vmatmul.mubr.f32.gmra.mrb[0].mxu0 %v3249
  %v4674 = vpop.f32.mrb[0].mxu0
  %v4675 = vadd.f32 0.0, %v4674
  %v4676 = vpop.f32.mrb[0].mxu0
  %4677 = vmatprep.mubr.f32.mxu0 0.0
  %4678 = vmatmul.mubr.f32.gmra.mrb[0].mxu0 %v3251
  %v4679 = vpop.f32.mrb[0].mxu0
  %v4680 = vadd.f32 0.0, %v4679
  %v4681 = vpop.f32.mrb[0].mxu0
  %4682 = vmatprep.mubr.f32.mxu0 0.0
  %4683 = vmatmul.mubr.f32.gmra.mrb[0].mxu0 %v3253
  %v4684 = vpop.f32.mrb[0].mxu0
  %v4685 = vadd.f32 0.0, %v4684
  %v4686 = vpop.f32.mrb[0].mxu0
  %4687 = vmatprep.mubr.f32.mxu0 0.0
  %4688 = vmatmul.mubr.f32.gmra.mrb[0].mxu0 %v3255
  %v4689 = vpop.f32.mrb[0].mxu0
  %v4690 = vadd.f32 0.0, %v4689
  %v4691 = vpop.f32.mrb[0].mxu0
  %4692 = vmatprep.mubr.f32.mxu0 0.0
  %4693 = vmatmul.mubr.f32.gmra.mrb[0].mxu0 %v3257
  %v4694 = vpop.f32.mrb[0].mxu0
  %v4695 = vadd.f32 0.0, %v4694
  %v4696 = vpop.f32.mrb[0].mxu0
  %4697 = vmatprep.mubr.f32.mxu0 0.0
  %4698 = vmatmul.mubr.f32.gmra.mrb[0].mxu0 %v3259
  %v4699 = vpop.f32.mrb[0].mxu0
  %v4700 = vadd.f32 0.0, %v4699
  %v4701 = vpop.f32.mrb[0].mxu0
  %4702 = vmatprep.mubr.f32.mxu0 0.0
  %4703 = vmatmul.mubr.f32.gmra.mrb[0].mxu0 %v3261
  %v4704 = vpop.f32.mrb[0].mxu0
  %v4705 = vadd.f32 0.0, %v4704
  %v4706 = vpop.f32.mrb[0].mxu0
  %4707 = vmatprep.mubr.f32.mxu0 0.0
  %4708 = vmatmul.mubr.f32.gmra.mrb[0].mxu0 %v3263
  %v4709 = vpop.f32.mrb[0].mxu0
  %v4710 = vadd.f32 0.0, %v4709
  %v4711 = vpop.f32.mrb[0].mxu0
  %4712 = vmatprep.mubr.f32.mxu0 0.0
  %4713 = vmatmul.mubr.f32.gmra.mrb[0].mxu0 %v4340
  %v4714 = vpop.f32.mrb[0].mxu0
  %v4715 = vadd.f32 0.0, %v4714
  %v4716 = vpop.f32.mrb[0].mxu0
  %4717 = vmatprep.mubr.f32.mxu0 0.0
  %4718 = vmatmul.mubr.f32.gmra.mrb[0].mxu0 %v4343
  %v4719 = vpop.f32.mrb[0].mxu0
  %v4720 = vadd.f32 0.0, %v4719
  %v4721 = vpop.f32.mrb[0].mxu0
  %4722 = vdwg.mxu0
  %v4723 = vadd.f32 %v4275, %v4415
  %v4724 = vadd.f32 %v4276, %v4420
  %v4725 = vadd.f32 %v4277, %v4425
  %v4726 = vadd.f32 %v4278, %v4430
  %v4727 = vadd.f32 %v4279, %v4435
  %v4728 = vadd.f32 %v4280, %v4440
  %v4729 = vadd.f32 %v4281, %v4445
  %v4730 = vadd.f32 %v4282, %v4450
  %v4731 = vadd.f32 %v4283, %v4455
  %v4732 = vadd.f32 %v4284, %v4460
  %v4733 = vadd.f32 %v4285, %v4465
  %v4734 = vadd.f32 %v4286, %v4470
  %v4735 = vadd.f32 %v4287, %v4475
  %v4736 = vadd.f32 %v4288, %v4480
  %v4737 = vadd.f32 %v4289, %v4485
  %v4738 = vadd.f32 %v4290, %v4490
  %v4739 = vadd.f32 %v4291, %v4495
  %v4740 = vadd.f32 %v4292, %v4500
  %v4741 = vadd.f32 %v4293, %v4505
  %v4742 = vadd.f32 %v4294, %v4510
  %v4743 = vadd.f32 %v4295, %v4515
  %v4744 = vadd.f32 %v4296, %v4520
  %v4745 = vadd.f32 %v4297, %v4525
  %v4746 = vadd.f32 %v4298, %v4530
  %v4747 = vadd.f32 %v4299, %v4535
  %v4748 = vadd.f32 %v4300, %v4540
  %v4749 = vadd.f32 %v4301, %v4545
  %v4750 = vadd.f32 %v4302, %v4550
  %v4751 = vadd.f32 %v4303, %v4555
  %v4752 = vadd.f32 %v4304, %v4560
  %v4753 = vadd.f32 %v4305, %v4565
  %v4754 = vadd.f32 %v4306, %v4570
  %v4755 = vadd.f32 %v4307, %v4575
  %v4756 = vadd.f32 %v4308, %v4580
  %v4757 = vadd.f32 %v4309, %v4585
  %v4758 = vadd.f32 %v4310, %v4590
  %v4759 = vadd.f32 %v4311, %v4595
  %v4760 = vadd.f32 %v4312, %v4600
  %v4761 = vadd.f32 %v4313, %v4605
  %v4762 = vadd.f32 %v4314, %v4610
  %v4763 = vadd.f32 %v4315, %v4615
  %v4764 = vadd.f32 %v4316, %v4620
  %v4765 = vadd.f32 %v4317, %v4625
  %v4766 = vadd.f32 %v4318, %v4630
  %v4767 = vadd.f32 %v4319, %v4635
  %v4768 = vadd.f32 %v4320, %v4640
  %v4769 = vadd.f32 %v4321, %v4645
  %v4770 = vadd.f32 %v4322, %v4650
  %v4771 = vadd.f32 %v4323, %v4655
  %v4772 = vadd.f32 %v4324, %v4660
  %v4773 = vadd.f32 %v4325, %v4665
  %v4774 = vadd.f32 %v4326, %v4670
  %v4775 = vadd.f32 %v4327, %v4675
  %v4776 = vadd.f32 %v4328, %v4680
  %v4777 = vadd.f32 %v4329, %v4685
  %v4778 = vadd.f32 %v4330, %v4690
  %v4779 = vadd.f32 %v4331, %v4695
  %v4780 = vadd.f32 %v4332, %v4700
  %v4781 = vadd.f32 %v4333, %v4705
  %v4782 = vadd.f32 %v4334, %v4710
  %v4783 = vadd.f32 %v4335, %v4715
  %v4784 = vadd.f32 %v4336, %v4720
  %s4785 = scalar_lea.vmem %s6, 64
  %v4786 = vld [vmem:[%s4785] sm:$0xff]
  %v4787 = vld [vmem:[%s4785 + $0x8] sm:$0x3]
  %v4788 = vrot.slane %v2443, 1
  %v4789 = vsel %vm866, %v2636, %v4788
  %v4790 = vrot.slane %v2444, 1
  %v4791 = vsel %vm866, %v4788, %v4790
  %v4792 = vsel %vm1615, %v4789, 0
  %v4794 = vsel %vm1615, %v4791, 0
  %v4796 = vsel %vm1615, %v4790, 0
  %v4799 = vsel %vm2762, %v4787, 0
  %4801 = vmatprep.subr.mxu0 0.0
  %4802 = vmatpush1.msra.mxu0 %v4786
  %4803 = vmatprep.subr.mxu0 0.0
  %4804 = vmatpush1.msra.mxu0 %v4799
  %4805 = vmatprep.subr.mxu0 0.0
  %4806 = vmatpush1.msra.mxu0 0.0
  %4807 = vmatprep.subr.mxu0 0.0
  %4808 = vmatpush1.msra.mxu0 0.0
  %4809 = vmatprep.subr.mxu0 0.0
  %4810 = vmatpush1.msra.mxu0 0.0
  %4811 = vmatprep.subr.mxu0 0.0
  %4812 = vmatpush1.msra.mxu0 0.0
  %4813 = vmatprep.subr.mxu0 0.0
  %4814 = vmatpush1.msra.mxu0 0.0
  %4815 = vmatprep.subr.mxu0 0.0
  %4816 = vmatpush1.msra.mxu0 0.0
  %4817 = vmatprep.subr.mxu0 0.0
  %4818 = vmatpush1.msra.mxu0 0.0
  %4819 = vmatprep.subr.mxu0 0.0
  %4820 = vmatpush1.msra.mxu0 0.0
  %4821 = vmatprep.subr.mxu0 0.0
  %4822 = vmatpush1.msra.mxu0 0.0
  %4823 = vmatprep.subr.mxu0 0.0
  %4824 = vmatpush1.msra.mxu0 0.0
  %4825 = vmatprep.subr.mxu0 0.0
  %4826 = vmatpush1.msra.mxu0 0.0
  %4827 = vmatprep.subr.mxu0 0.0
  %4828 = vmatpush1.msra.mxu0 0.0
  %4829 = vmatprep.subr.mxu0 0.0
  %4830 = vmatpush1.msra.mxu0 0.0
  %4831 = vmatprep.subr.mxu0 0.0
  %4832 = vmatpush1.msra.mxu0 0.0
  %4833 = vmatprep.subr.mxu0 0.0
  %4834 = vmatpush1.msra.mxu0 0.0
  %4835 = vmatprep.subr.mxu0 0.0
  %4836 = vmatpush1.msra.mxu0 0.0
  %4837 = vmatprep.subr.mxu0 0.0
  %4838 = vmatpush1.msra.mxu0 0.0
  %4839 = vmatprep.subr.mxu0 0.0
  %4840 = vmatpush1.msra.mxu0 0.0
  %4841 = vmatprep.subr.mxu0 0.0
  %4842 = vmatpush1.msra.mxu0 0.0
  %4843 = vmatprep.subr.mxu0 0.0
  %4844 = vmatpush1.msra.mxu0 0.0
  %4845 = vmatprep.subr.mxu0 0.0
  %4846 = vmatpush1.msra.mxu0 0.0
  %4847 = vmatprep.subr.mxu0 0.0
  %4848 = vmatpush1.msra.mxu0 0.0
  %4849 = vmatprep.subr.mxu0 0.0
  %4850 = vmatpush1.msra.mxu0 0.0
  %4851 = vmatprep.subr.mxu0 0.0
  %4852 = vmatpush1.msra.mxu0 0.0
  %4853 = vmatprep.subr.mxu0 0.0
  %4854 = vmatpush1.msra.mxu0 0.0
  %4855 = vmatprep.subr.mxu0 0.0
  %4856 = vmatpush1.msra.mxu0 0.0
  %4857 = vmatprep.subr.mxu0 0.0
  %4858 = vmatpush1.msra.mxu0 0.0
  %4859 = vmatprep.subr.mxu0 0.0
  %4860 = vmatpush1.msra.mxu0 0.0
  %4861 = vmatprep.subr.mxu0 0.0
  %4862 = vmatpush1.msra.mxu0 0.0
  %4863 = vmatprep.subr.mxu0 0.0
  %4864 = vmatpush1.msra.mxu0 0.0
  %4865 = vmatprep.mubr.f32.mxu0 0.0
  %4866 = vmatmul.mubr.f32.gmra.mrb[0].mxu0 %v2642
  %v4867 = vpop.f32.mrb[0].mxu0
  %v4868 = vadd.f32 0.0, %v4867
  %v4869 = vpop.f32.mrb[0].mxu0
  %4870 = vmatprep.mubr.f32.mxu0 0.0
  %4871 = vmatmul.mubr.f32.gmra.mrb[0].mxu0 %v2644
  %v4872 = vpop.f32.mrb[0].mxu0
  %v4873 = vadd.f32 0.0, %v4872
  %v4874 = vpop.f32.mrb[0].mxu0
  %4875 = vmatprep.mubr.f32.mxu0 0.0
  %4876 = vmatmul.mubr.f32.gmra.mrb[0].mxu0 %v2646
  %v4877 = vpop.f32.mrb[0].mxu0
  %v4878 = vadd.f32 0.0, %v4877
  %v4879 = vpop.f32.mrb[0].mxu0
  %4880 = vmatprep.mubr.f32.mxu0 0.0
  %4881 = vmatmul.mubr.f32.gmra.mrb[0].mxu0 %v2648
  %v4882 = vpop.f32.mrb[0].mxu0
  %v4883 = vadd.f32 0.0, %v4882
  %v4884 = vpop.f32.mrb[0].mxu0
  %4885 = vmatprep.mubr.f32.mxu0 0.0
  %4886 = vmatmul.mubr.f32.gmra.mrb[0].mxu0 %v2650
  %v4887 = vpop.f32.mrb[0].mxu0
  %v4888 = vadd.f32 0.0, %v4887
  %v4889 = vpop.f32.mrb[0].mxu0
  %4890 = vmatprep.mubr.f32.mxu0 0.0
  %4891 = vmatmul.mubr.f32.gmra.mrb[0].mxu0 %v2652
  %v4892 = vpop.f32.mrb[0].mxu0
  %v4893 = vadd.f32 0.0, %v4892
  %v4894 = vpop.f32.mrb[0].mxu0
  %4895 = vmatprep.mubr.f32.mxu0 0.0
  %4896 = vmatmul.mubr.f32.gmra.mrb[0].mxu0 %v2654
  %v4897 = vpop.f32.mrb[0].mxu0
  %v4898 = vadd.f32 0.0, %v4897
  %v4899 = vpop.f32.mrb[0].mxu0
  %4900 = vmatprep.mubr.f32.mxu0 0.0
  %4901 = vmatmul.mubr.f32.gmra.mrb[0].mxu0 %v2656
  %v4902 = vpop.f32.mrb[0].mxu0
  %v4903 = vadd.f32 0.0, %v4902
  %v4904 = vpop.f32.mrb[0].mxu0
  %4905 = vmatprep.mubr.f32.mxu0 0.0
  %4906 = vmatmul.mubr.f32.gmra.mrb[0].mxu0 %v2658
  %v4907 = vpop.f32.mrb[0].mxu0
  %v4908 = vadd.f32 0.0, %v4907
  %v4909 = vpop.f32.mrb[0].mxu0
  %4910 = vmatprep.mubr.f32.mxu0 0.0
  %4911 = vmatmul.mubr.f32.gmra.mrb[0].mxu0 %v2660
  %v4912 = vpop.f32.mrb[0].mxu0
  %v4913 = vadd.f32 0.0, %v4912
  %v4914 = vpop.f32.mrb[0].mxu0
  %4915 = vmatprep.mubr.f32.mxu0 0.0
  %4916 = vmatmul.mubr.f32.gmra.mrb[0].mxu0 %v2662
  %v4917 = vpop.f32.mrb[0].mxu0
  %v4918 = vadd.f32 0.0, %v4917
  %v4919 = vpop.f32.mrb[0].mxu0
  %4920 = vmatprep.mubr.f32.mxu0 0.0
  %4921 = vmatmul.mubr.f32.gmra.mrb[0].mxu0 %v2664
  %v4922 = vpop.f32.mrb[0].mxu0
  %v4923 = vadd.f32 0.0, %v4922
  %v4924 = vpop.f32.mrb[0].mxu0
  %4925 = vmatprep.mubr.f32.mxu0 0.0
  %4926 = vmatmul.mubr.f32.gmra.mrb[0].mxu0 %v2666
  %v4927 = vpop.f32.mrb[0].mxu0
  %v4928 = vadd.f32 0.0, %v4927
  %v4929 = vpop.f32.mrb[0].mxu0
  %4930 = vmatprep.mubr.f32.mxu0 0.0
  %4931 = vmatmul.mubr.f32.gmra.mrb[0].mxu0 %v2668
  %v4932 = vpop.f32.mrb[0].mxu0
  %v4933 = vadd.f32 0.0, %v4932
  %v4934 = vpop.f32.mrb[0].mxu0
  %4935 = vmatprep.mubr.f32.mxu0 0.0
  %4936 = vmatmul.mubr.f32.gmra.mrb[0].mxu0 %v2670
  %v4937 = vpop.f32.mrb[0].mxu0
  %v4938 = vadd.f32 0.0, %v4937
  %v4939 = vpop.f32.mrb[0].mxu0
  %4940 = vmatprep.mubr.f32.mxu0 0.0
  %4941 = vmatmul.mubr.f32.gmra.mrb[0].mxu0 %v2672
  %v4942 = vpop.f32.mrb[0].mxu0
  %v4943 = vadd.f32 0.0, %v4942
  %v4944 = vpop.f32.mrb[0].mxu0
  %4945 = vmatprep.mubr.f32.mxu0 0.0
  %4946 = vmatmul.mubr.f32.gmra.mrb[0].mxu0 %v2674
  %v4947 = vpop.f32.mrb[0].mxu0
  %v4948 = vadd.f32 0.0, %v4947
  %v4949 = vpop.f32.mrb[0].mxu0
  %4950 = vmatprep.mubr.f32.mxu0 0.0
  %4951 = vmatmul.mubr.f32.gmra.mrb[0].mxu0 %v2676
  %v4952 = vpop.f32.mrb[0].mxu0
  %v4953 = vadd.f32 0.0, %v4952
  %v4954 = vpop.f32.mrb[0].mxu0
  %4955 = vmatprep.mubr.f32.mxu0 0.0
  %4956 = vmatmul.mubr.f32.gmra.mrb[0].mxu0 %v2678
  %v4957 = vpop.f32.mrb[0].mxu0
  %v4958 = vadd.f32 0.0, %v4957
  %v4959 = vpop.f32.mrb[0].mxu0
  %4960 = vmatprep.mubr.f32.mxu0 0.0
  %4961 = vmatmul.mubr.f32.gmra.mrb[0].mxu0 %v2680
  %v4962 = vpop.f32.mrb[0].mxu0
  %v4963 = vadd.f32 0.0, %v4962
  %v4964 = vpop.f32.mrb[0].mxu0
  %4965 = vmatprep.mubr.f32.mxu0 0.0
  %4966 = vmatmul.mubr.f32.gmra.mrb[0].mxu0 %v2682
  %v4967 = vpop.f32.mrb[0].mxu0
  %v4968 = vadd.f32 0.0, %v4967
  %v4969 = vpop.f32.mrb[0].mxu0
  %4970 = vmatprep.mubr.f32.mxu0 0.0
  %4971 = vmatmul.mubr.f32.gmra.mrb[0].mxu0 %v2684
  %v4972 = vpop.f32.mrb[0].mxu0
  %v4973 = vadd.f32 0.0, %v4972
  %v4974 = vpop.f32.mrb[0].mxu0
  %4975 = vmatprep.mubr.f32.mxu0 0.0
  %4976 = vmatmul.mubr.f32.gmra.mrb[0].mxu0 %v2686
  %v4977 = vpop.f32.mrb[0].mxu0
  %v4978 = vadd.f32 0.0, %v4977
  %v4979 = vpop.f32.mrb[0].mxu0
  %4980 = vmatprep.mubr.f32.mxu0 0.0
  %4981 = vmatmul.mubr.f32.gmra.mrb[0].mxu0 %v2688
  %v4982 = vpop.f32.mrb[0].mxu0
  %v4983 = vadd.f32 0.0, %v4982
  %v4984 = vpop.f32.mrb[0].mxu0
  %4985 = vmatprep.mubr.f32.mxu0 0.0
  %4986 = vmatmul.mubr.f32.gmra.mrb[0].mxu0 %v2690
  %v4987 = vpop.f32.mrb[0].mxu0
  %v4988 = vadd.f32 0.0, %v4987
  %v4989 = vpop.f32.mrb[0].mxu0
  %4990 = vmatprep.mubr.f32.mxu0 0.0
  %4991 = vmatmul.mubr.f32.gmra.mrb[0].mxu0 %v2692
  %v4992 = vpop.f32.mrb[0].mxu0
  %v4993 = vadd.f32 0.0, %v4992
  %v4994 = vpop.f32.mrb[0].mxu0
  %4995 = vmatprep.mubr.f32.mxu0 0.0
  %4996 = vmatmul.mubr.f32.gmra.mrb[0].mxu0 %v2694
  %v4997 = vpop.f32.mrb[0].mxu0
  %v4998 = vadd.f32 0.0, %v4997
  %v4999 = vpop.f32.mrb[0].mxu0
  %5000 = vmatprep.mubr.f32.mxu0 0.0
  %5001 = vmatmul.mubr.f32.gmra.mrb[0].mxu0 %v2696
  %v5002 = vpop.f32.mrb[0].mxu0
  %v5003 = vadd.f32 0.0, %v5002
  %v5004 = vpop.f32.mrb[0].mxu0
  %5005 = vmatprep.mubr.f32.mxu0 0.0
  %5006 = vmatmul.mubr.f32.gmra.mrb[0].mxu0 %v2698
  %v5007 = vpop.f32.mrb[0].mxu0
  %v5008 = vadd.f32 0.0, %v5007
  %v5009 = vpop.f32.mrb[0].mxu0
  %5010 = vmatprep.mubr.f32.mxu0 0.0
  %5011 = vmatmul.mubr.f32.gmra.mrb[0].mxu0 %v2700
  %v5012 = vpop.f32.mrb[0].mxu0
  %v5013 = vadd.f32 0.0, %v5012
  %v5014 = vpop.f32.mrb[0].mxu0
  %5015 = vmatprep.mubr.f32.mxu0 0.0
  %5016 = vmatmul.mubr.f32.gmra.mrb[0].mxu0 %v2702
  %v5017 = vpop.f32.mrb[0].mxu0
  %v5018 = vadd.f32 0.0, %v5017
  %v5019 = vpop.f32.mrb[0].mxu0
  %5020 = vmatprep.mubr.f32.mxu0 0.0
  %5021 = vmatmul.mubr.f32.gmra.mrb[0].mxu0 %v2704
  %v5022 = vpop.f32.mrb[0].mxu0
  %v5023 = vadd.f32 0.0, %v5022
  %v5024 = vpop.f32.mrb[0].mxu0
  %5025 = vmatprep.mubr.f32.mxu0 0.0
  %5026 = vmatmul.mubr.f32.gmra.mrb[0].mxu0 %v2706
  %v5027 = vpop.f32.mrb[0].mxu0
  %v5028 = vadd.f32 0.0, %v5027
  %v5029 = vpop.f32.mrb[0].mxu0
  %5030 = vmatprep.mubr.f32.mxu0 0.0
  %5031 = vmatmul.mubr.f32.gmra.mrb[0].mxu0 %v2708
  %v5032 = vpop.f32.mrb[0].mxu0
  %v5033 = vadd.f32 0.0, %v5032
  %v5034 = vpop.f32.mrb[0].mxu0
  %5035 = vmatprep.mubr.f32.mxu0 0.0
  %5036 = vmatmul.mubr.f32.gmra.mrb[0].mxu0 %v2710
  %v5037 = vpop.f32.mrb[0].mxu0
  %v5038 = vadd.f32 0.0, %v5037
  %v5039 = vpop.f32.mrb[0].mxu0
  %5040 = vmatprep.mubr.f32.mxu0 0.0
  %5041 = vmatmul.mubr.f32.gmra.mrb[0].mxu0 %v2712
  %v5042 = vpop.f32.mrb[0].mxu0
  %v5043 = vadd.f32 0.0, %v5042
  %v5044 = vpop.f32.mrb[0].mxu0
  %5045 = vmatprep.mubr.f32.mxu0 0.0
  %5046 = vmatmul.mubr.f32.gmra.mrb[0].mxu0 %v2714
  %v5047 = vpop.f32.mrb[0].mxu0
  %v5048 = vadd.f32 0.0, %v5047
  %v5049 = vpop.f32.mrb[0].mxu0
  %5050 = vmatprep.mubr.f32.mxu0 0.0
  %5051 = vmatmul.mubr.f32.gmra.mrb[0].mxu0 %v2716
  %v5052 = vpop.f32.mrb[0].mxu0
  %v5053 = vadd.f32 0.0, %v5052
  %v5054 = vpop.f32.mrb[0].mxu0
  %5055 = vmatprep.mubr.f32.mxu0 0.0
  %5056 = vmatmul.mubr.f32.gmra.mrb[0].mxu0 %v2718
  %v5057 = vpop.f32.mrb[0].mxu0
  %v5058 = vadd.f32 0.0, %v5057
  %v5059 = vpop.f32.mrb[0].mxu0
  %5060 = vmatprep.mubr.f32.mxu0 0.0
  %5061 = vmatmul.mubr.f32.gmra.mrb[0].mxu0 %v2720
  %v5062 = vpop.f32.mrb[0].mxu0
  %v5063 = vadd.f32 0.0, %v5062
  %v5064 = vpop.f32.mrb[0].mxu0
  %5065 = vmatprep.mubr.f32.mxu0 0.0
  %5066 = vmatmul.mubr.f32.gmra.mrb[0].mxu0 %v2722
  %v5067 = vpop.f32.mrb[0].mxu0
  %v5068 = vadd.f32 0.0, %v5067
  %v5069 = vpop.f32.mrb[0].mxu0
  %5070 = vmatprep.mubr.f32.mxu0 0.0
  %5071 = vmatmul.mubr.f32.gmra.mrb[0].mxu0 %v2724
  %v5072 = vpop.f32.mrb[0].mxu0
  %v5073 = vadd.f32 0.0, %v5072
  %v5074 = vpop.f32.mrb[0].mxu0
  %5075 = vmatprep.mubr.f32.mxu0 0.0
  %5076 = vmatmul.mubr.f32.gmra.mrb[0].mxu0 %v2726
  %v5077 = vpop.f32.mrb[0].mxu0
  %v5078 = vadd.f32 0.0, %v5077
  %v5079 = vpop.f32.mrb[0].mxu0
  %5080 = vmatprep.mubr.f32.mxu0 0.0
  %5081 = vmatmul.mubr.f32.gmra.mrb[0].mxu0 %v2728
  %v5082 = vpop.f32.mrb[0].mxu0
  %v5083 = vadd.f32 0.0, %v5082
  %v5084 = vpop.f32.mrb[0].mxu0
  %5085 = vmatprep.mubr.f32.mxu0 0.0
  %5086 = vmatmul.mubr.f32.gmra.mrb[0].mxu0 %v2730
  %v5087 = vpop.f32.mrb[0].mxu0
  %v5088 = vadd.f32 0.0, %v5087
  %v5089 = vpop.f32.mrb[0].mxu0
  %5090 = vmatprep.mubr.f32.mxu0 0.0
  %5091 = vmatmul.mubr.f32.gmra.mrb[0].mxu0 %v2732
  %v5092 = vpop.f32.mrb[0].mxu0
  %v5093 = vadd.f32 0.0, %v5092
  %v5094 = vpop.f32.mrb[0].mxu0
  %5095 = vmatprep.mubr.f32.mxu0 0.0
  %5096 = vmatmul.mubr.f32.gmra.mrb[0].mxu0 %v2734
  %v5097 = vpop.f32.mrb[0].mxu0
  %v5098 = vadd.f32 0.0, %v5097
  %v5099 = vpop.f32.mrb[0].mxu0
  %5100 = vmatprep.mubr.f32.mxu0 0.0
  %5101 = vmatmul.mubr.f32.gmra.mrb[0].mxu0 %v2736
  %v5102 = vpop.f32.mrb[0].mxu0
  %v5103 = vadd.f32 0.0, %v5102
  %v5104 = vpop.f32.mrb[0].mxu0
  %5105 = vmatprep.mubr.f32.mxu0 0.0
  %5106 = vmatmul.mubr.f32.gmra.mrb[0].mxu0 %v2738
  %v5107 = vpop.f32.mrb[0].mxu0
  %v5108 = vadd.f32 0.0, %v5107
  %v5109 = vpop.f32.mrb[0].mxu0
  %5110 = vmatprep.mubr.f32.mxu0 0.0
  %5111 = vmatmul.mubr.f32.gmra.mrb[0].mxu0 %v2740
  %v5112 = vpop.f32.mrb[0].mxu0
  %v5113 = vadd.f32 0.0, %v5112
  %v5114 = vpop.f32.mrb[0].mxu0
  %5115 = vmatprep.mubr.f32.mxu0 0.0
  %5116 = vmatmul.mubr.f32.gmra.mrb[0].mxu0 %v2742
  %v5117 = vpop.f32.mrb[0].mxu0
  %v5118 = vadd.f32 0.0, %v5117
  %v5119 = vpop.f32.mrb[0].mxu0
  %5120 = vmatprep.mubr.f32.mxu0 0.0
  %5121 = vmatmul.mubr.f32.gmra.mrb[0].mxu0 %v2744
  %v5122 = vpop.f32.mrb[0].mxu0
  %v5123 = vadd.f32 0.0, %v5122
  %v5124 = vpop.f32.mrb[0].mxu0
  %5125 = vmatprep.mubr.f32.mxu0 0.0
  %5126 = vmatmul.mubr.f32.gmra.mrb[0].mxu0 %v2746
  %v5127 = vpop.f32.mrb[0].mxu0
  %v5128 = vadd.f32 0.0, %v5127
  %v5129 = vpop.f32.mrb[0].mxu0
  %5130 = vmatprep.mubr.f32.mxu0 0.0
  %5131 = vmatmul.mubr.f32.gmra.mrb[0].mxu0 %v2748
  %v5132 = vpop.f32.mrb[0].mxu0
  %v5133 = vadd.f32 0.0, %v5132
  %v5134 = vpop.f32.mrb[0].mxu0
  %5135 = vmatprep.mubr.f32.mxu0 0.0
  %5136 = vmatmul.mubr.f32.gmra.mrb[0].mxu0 %v2750
  %v5137 = vpop.f32.mrb[0].mxu0
  %v5138 = vadd.f32 0.0, %v5137
  %v5139 = vpop.f32.mrb[0].mxu0
  %5140 = vmatprep.mubr.f32.mxu0 0.0
  %5141 = vmatmul.mubr.f32.gmra.mrb[0].mxu0 %v2752
  %v5142 = vpop.f32.mrb[0].mxu0
  %v5143 = vadd.f32 0.0, %v5142
  %v5144 = vpop.f32.mrb[0].mxu0
  %5145 = vmatprep.mubr.f32.mxu0 0.0
  %5146 = vmatmul.mubr.f32.gmra.mrb[0].mxu0 %v2754
  %v5147 = vpop.f32.mrb[0].mxu0
  %v5148 = vadd.f32 0.0, %v5147
  %v5149 = vpop.f32.mrb[0].mxu0
  %5150 = vmatprep.mubr.f32.mxu0 0.0
  %5151 = vmatmul.mubr.f32.gmra.mrb[0].mxu0 %v2756
  %v5152 = vpop.f32.mrb[0].mxu0
  %v5153 = vadd.f32 0.0, %v5152
  %v5154 = vpop.f32.mrb[0].mxu0
  %5155 = vmatprep.mubr.f32.mxu0 0.0
  %5156 = vmatmul.mubr.f32.gmra.mrb[0].mxu0 %v2758
  %v5157 = vpop.f32.mrb[0].mxu0
  %v5158 = vadd.f32 0.0, %v5157
  %v5159 = vpop.f32.mrb[0].mxu0
  %5160 = vmatprep.mubr.f32.mxu0 0.0
  %5161 = vmatmul.mubr.f32.gmra.mrb[0].mxu0 %v4792
  %v5162 = vpop.f32.mrb[0].mxu0
  %v5163 = vadd.f32 0.0, %v5162
  %v5164 = vpop.f32.mrb[0].mxu0
  %5165 = vmatprep.mubr.f32.mxu0 0.0
  %5166 = vmatmul.mubr.f32.gmra.mrb[0].mxu0 %v4794
  %v5167 = vpop.f32.mrb[0].mxu0
  %v5168 = vadd.f32 0.0, %v5167
  %v5169 = vpop.f32.mrb[0].mxu0
  %5170 = vmatprep.mubr.f32.mxu0 0.0
  %5171 = vmatmul.mubr.f32.gmra.mrb[0].mxu0 %v4796
  %v5172 = vpop.f32.mrb[0].mxu0
  %v5173 = vadd.f32 0.0, %v5172
  %v5174 = vpop.f32.mrb[0].mxu0
  %5175 = vdwg.mxu0
  %v5176 = vadd.f32 %v4723, %v4868
  %v5177 = vadd.f32 %v4724, %v4873
  %v5178 = vadd.f32 %v4725, %v4878
  %v5179 = vadd.f32 %v4726, %v4883
  %v5180 = vadd.f32 %v4727, %v4888
  %v5181 = vadd.f32 %v4728, %v4893
  %v5182 = vadd.f32 %v4729, %v4898
  %v5183 = vadd.f32 %v4730, %v4903
  %v5184 = vadd.f32 %v4731, %v4908
  %v5185 = vadd.f32 %v4732, %v4913
  %v5186 = vadd.f32 %v4733, %v4918
  %v5187 = vadd.f32 %v4734, %v4923
  %v5188 = vadd.f32 %v4735, %v4928
  %v5189 = vadd.f32 %v4736, %v4933
  %v5190 = vadd.f32 %v4737, %v4938
  %v5191 = vadd.f32 %v4738, %v4943
  %v5192 = vadd.f32 %v4739, %v4948
  %v5193 = vadd.f32 %v4740, %v4953
  %v5194 = vadd.f32 %v4741, %v4958
  %v5195 = vadd.f32 %v4742, %v4963
  %v5196 = vadd.f32 %v4743, %v4968
  %v5197 = vadd.f32 %v4744, %v4973
  %v5198 = vadd.f32 %v4745, %v4978
  %v5199 = vadd.f32 %v4746, %v4983
  %v5200 = vadd.f32 %v4747, %v4988
  %v5201 = vadd.f32 %v4748, %v4993
  %v5202 = vadd.f32 %v4749, %v4998
  %v5203 = vadd.f32 %v4750, %v5003
  %v5204 = vadd.f32 %v4751, %v5008
  %v5205 = vadd.f32 %v4752, %v5013
  %v5206 = vadd.f32 %v4753, %v5018
  %v5207 = vadd.f32 %v4754, %v5023
  %v5208 = vadd.f32 %v4755, %v5028
  %v5209 = vadd.f32 %v4756, %v5033
  %v5210 = vadd.f32 %v4757, %v5038
  %v5211 = vadd.f32 %v4758, %v5043
  %v5212 = vadd.f32 %v4759, %v5048
  %v5213 = vadd.f32 %v4760, %v5053
  %v5214 = vadd.f32 %v4761, %v5058
  %v5215 = vadd.f32 %v4762, %v5063
  %v5216 = vadd.f32 %v4763, %v5068
  %v5217 = vadd.f32 %v4764, %v5073
  %v5218 = vadd.f32 %v4765, %v5078
  %v5219 = vadd.f32 %v4766, %v5083
  %v5220 = vadd.f32 %v4767, %v5088
  %v5221 = vadd.f32 %v4768, %v5093
  %v5222 = vadd.f32 %v4769, %v5098
  %v5223 = vadd.f32 %v4770, %v5103
  %v5224 = vadd.f32 %v4771, %v5108
  %v5225 = vadd.f32 %v4772, %v5113
  %v5226 = vadd.f32 %v4773, %v5118
  %v5227 = vadd.f32 %v4774, %v5123
  %v5228 = vadd.f32 %v4775, %v5128
  %v5229 = vadd.f32 %v4776, %v5133
  %v5230 = vadd.f32 %v4777, %v5138
  %v5231 = vadd.f32 %v4778, %v5143
  %v5232 = vadd.f32 %v4779, %v5148
  %v5233 = vadd.f32 %v4780, %v5153
  %v5234 = vadd.f32 %v4781, %v5158
  %v5235 = vadd.f32 %v4782, %v5163
  %v5236 = vadd.f32 %v4783, %v5168
  %v5237 = vadd.f32 %v4784, %v5173
  %s5238 = scalar_lea.vmem %s6, 80
  %v5239 = vld [vmem:[%s5238] sm:$0xff]
  %v5240 = vld [vmem:[%s5238 + $0x8] sm:$0x3]
  %v5242 = vrot.slane %v2444, 2
  %v5243 = vsel %vm3647, %v3771, %v5242
  %v5244 = vrot.slane %v2445, 2
  %v5245 = vsel %vm3647, %v5242, %v5244
  %v5246 = vsel %vm1615, %v5243, 0
  %v5248 = vsel %vm1615, %v5245, 0
  %v5251 = vsel %vm2762, %v5240, 0
  %5253 = vmatprep.subr.mxu0 0.0
  %5254 = vmatpush1.msra.mxu0 %v5239
  %5255 = vmatprep.subr.mxu0 0.0
  %5256 = vmatpush1.msra.mxu0 %v5251
  %5257 = vmatprep.subr.mxu0 0.0
  %5258 = vmatpush1.msra.mxu0 0.0
  %5259 = vmatprep.subr.mxu0 0.0
  %5260 = vmatpush1.msra.mxu0 0.0
  %5261 = vmatprep.subr.mxu0 0.0
  %5262 = vmatpush1.msra.mxu0 0.0
  %5263 = vmatprep.subr.mxu0 0.0
  %5264 = vmatpush1.msra.mxu0 0.0
  %5265 = vmatprep.subr.mxu0 0.0
  %5266 = vmatpush1.msra.mxu0 0.0
  %5267 = vmatprep.subr.mxu0 0.0
  %5268 = vmatpush1.msra.mxu0 0.0
  %5269 = vmatprep.subr.mxu0 0.0
  %5270 = vmatpush1.msra.mxu0 0.0
  %5271 = vmatprep.subr.mxu0 0.0
  %5272 = vmatpush1.msra.mxu0 0.0
  %5273 = vmatprep.subr.mxu0 0.0
  %5274 = vmatpush1.msra.mxu0 0.0
  %5275 = vmatprep.subr.mxu0 0.0
  %5276 = vmatpush1.msra.mxu0 0.0
  %5277 = vmatprep.subr.mxu0 0.0
  %5278 = vmatpush1.msra.mxu0 0.0
  %5279 = vmatprep.subr.mxu0 0.0
  %5280 = vmatpush1.msra.mxu0 0.0
  %5281 = vmatprep.subr.mxu0 0.0
  %5282 = vmatpush1.msra.mxu0 0.0
  %5283 = vmatprep.subr.mxu0 0.0
  %5284 = vmatpush1.msra.mxu0 0.0
  %5285 = vmatprep.subr.mxu0 0.0
  %5286 = vmatpush1.msra.mxu0 0.0
  %5287 = vmatprep.subr.mxu0 0.0
  %5288 = vmatpush1.msra.mxu0 0.0
  %5289 = vmatprep.subr.mxu0 0.0
  %5290 = vmatpush1.msra.mxu0 0.0
  %5291 = vmatprep.subr.mxu0 0.0
  %5292 = vmatpush1.msra.mxu0 0.0
  %5293 = vmatprep.subr.mxu0 0.0
  %5294 = vmatpush1.msra.mxu0 0.0
  %5295 = vmatprep.subr.mxu0 0.0
  %5296 = vmatpush1.msra.mxu0 0.0
  %5297 = vmatprep.subr.mxu0 0.0
  %5298 = vmatpush1.msra.mxu0 0.0
  %5299 = vmatprep.subr.mxu0 0.0
  %5300 = vmatpush1.msra.mxu0 0.0
  %5301 = vmatprep.subr.mxu0 0.0
  %5302 = vmatpush1.msra.mxu0 0.0
  %5303 = vmatprep.subr.mxu0 0.0
  %5304 = vmatpush1.msra.mxu0 0.0
  %5305 = vmatprep.subr.mxu0 0.0
  %5306 = vmatpush1.msra.mxu0 0.0
  %5307 = vmatprep.subr.mxu0 0.0
  %5308 = vmatpush1.msra.mxu0 0.0
  %5309 = vmatprep.subr.mxu0 0.0
  %5310 = vmatpush1.msra.mxu0 0.0
  %5311 = vmatprep.subr.mxu0 0.0
  %5312 = vmatpush1.msra.mxu0 0.0
  %5313 = vmatprep.subr.mxu0 0.0
  %5314 = vmatpush1.msra.mxu0 0.0
  %5315 = vmatprep.subr.mxu0 0.0
  %5316 = vmatpush1.msra.mxu0 0.0
  %5317 = vmatprep.mubr.f32.mxu0 0.0
  %5318 = vmatmul.mubr.f32.gmra.mrb[0].mxu0 %v3777
  %v5319 = vpop.f32.mrb[0].mxu0
  %v5320 = vadd.f32 0.0, %v5319
  %v5321 = vpop.f32.mrb[0].mxu0
  %5322 = vmatprep.mubr.f32.mxu0 0.0
  %5323 = vmatmul.mubr.f32.gmra.mrb[0].mxu0 %v3779
  %v5324 = vpop.f32.mrb[0].mxu0
  %v5325 = vadd.f32 0.0, %v5324
  %v5326 = vpop.f32.mrb[0].mxu0
  %5327 = vmatprep.mubr.f32.mxu0 0.0
  %5328 = vmatmul.mubr.f32.gmra.mrb[0].mxu0 %v3781
  %v5329 = vpop.f32.mrb[0].mxu0
  %v5330 = vadd.f32 0.0, %v5329
  %v5331 = vpop.f32.mrb[0].mxu0
  %5332 = vmatprep.mubr.f32.mxu0 0.0
  %5333 = vmatmul.mubr.f32.gmra.mrb[0].mxu0 %v3783
  %v5334 = vpop.f32.mrb[0].mxu0
  %v5335 = vadd.f32 0.0, %v5334
  %v5336 = vpop.f32.mrb[0].mxu0
  %5337 = vmatprep.mubr.f32.mxu0 0.0
  %5338 = vmatmul.mubr.f32.gmra.mrb[0].mxu0 %v3785
  %v5339 = vpop.f32.mrb[0].mxu0
  %v5340 = vadd.f32 0.0, %v5339
  %v5341 = vpop.f32.mrb[0].mxu0
  %5342 = vmatprep.mubr.f32.mxu0 0.0
  %5343 = vmatmul.mubr.f32.gmra.mrb[0].mxu0 %v3787
  %v5344 = vpop.f32.mrb[0].mxu0
  %v5345 = vadd.f32 0.0, %v5344
  %v5346 = vpop.f32.mrb[0].mxu0
  %5347 = vmatprep.mubr.f32.mxu0 0.0
  %5348 = vmatmul.mubr.f32.gmra.mrb[0].mxu0 %v3789
  %v5349 = vpop.f32.mrb[0].mxu0
  %v5350 = vadd.f32 0.0, %v5349
  %v5351 = vpop.f32.mrb[0].mxu0
  %5352 = vmatprep.mubr.f32.mxu0 0.0
  %5353 = vmatmul.mubr.f32.gmra.mrb[0].mxu0 %v3791
  %v5354 = vpop.f32.mrb[0].mxu0
  %v5355 = vadd.f32 0.0, %v5354
  %v5356 = vpop.f32.mrb[0].mxu0
  %5357 = vmatprep.mubr.f32.mxu0 0.0
  %5358 = vmatmul.mubr.f32.gmra.mrb[0].mxu0 %v3793
  %v5359 = vpop.f32.mrb[0].mxu0
  %v5360 = vadd.f32 0.0, %v5359
  %v5361 = vpop.f32.mrb[0].mxu0
  %5362 = vmatprep.mubr.f32.mxu0 0.0
  %5363 = vmatmul.mubr.f32.gmra.mrb[0].mxu0 %v3795
  %v5364 = vpop.f32.mrb[0].mxu0
  %v5365 = vadd.f32 0.0, %v5364
  %v5366 = vpop.f32.mrb[0].mxu0
  %5367 = vmatprep.mubr.f32.mxu0 0.0
  %5368 = vmatmul.mubr.f32.gmra.mrb[0].mxu0 %v3797
  %v5369 = vpop.f32.mrb[0].mxu0
  %v5370 = vadd.f32 0.0, %v5369
  %v5371 = vpop.f32.mrb[0].mxu0
  %5372 = vmatprep.mubr.f32.mxu0 0.0
  %5373 = vmatmul.mubr.f32.gmra.mrb[0].mxu0 %v3799
  %v5374 = vpop.f32.mrb[0].mxu0
  %v5375 = vadd.f32 0.0, %v5374
  %v5376 = vpop.f32.mrb[0].mxu0
  %5377 = vmatprep.mubr.f32.mxu0 0.0
  %5378 = vmatmul.mubr.f32.gmra.mrb[0].mxu0 %v3801
  %v5379 = vpop.f32.mrb[0].mxu0
  %v5380 = vadd.f32 0.0, %v5379
  %v5381 = vpop.f32.mrb[0].mxu0
  %5382 = vmatprep.mubr.f32.mxu0 0.0
  %5383 = vmatmul.mubr.f32.gmra.mrb[0].mxu0 %v3803
  %v5384 = vpop.f32.mrb[0].mxu0
  %v5385 = vadd.f32 0.0, %v5384
  %v5386 = vpop.f32.mrb[0].mxu0
  %5387 = vmatprep.mubr.f32.mxu0 0.0
  %5388 = vmatmul.mubr.f32.gmra.mrb[0].mxu0 %v3805
  %v5389 = vpop.f32.mrb[0].mxu0
  %v5390 = vadd.f32 0.0, %v5389
  %v5391 = vpop.f32.mrb[0].mxu0
  %5392 = vmatprep.mubr.f32.mxu0 0.0
  %5393 = vmatmul.mubr.f32.gmra.mrb[0].mxu0 %v3807
  %v5394 = vpop.f32.mrb[0].mxu0
  %v5395 = vadd.f32 0.0, %v5394
  %v5396 = vpop.f32.mrb[0].mxu0
  %5397 = vmatprep.mubr.f32.mxu0 0.0
  %5398 = vmatmul.mubr.f32.gmra.mrb[0].mxu0 %v3809
  %v5399 = vpop.f32.mrb[0].mxu0
  %v5400 = vadd.f32 0.0, %v5399
  %v5401 = vpop.f32.mrb[0].mxu0
  %5402 = vmatprep.mubr.f32.mxu0 0.0
  %5403 = vmatmul.mubr.f32.gmra.mrb[0].mxu0 %v3811
  %v5404 = vpop.f32.mrb[0].mxu0
  %v5405 = vadd.f32 0.0, %v5404
  %v5406 = vpop.f32.mrb[0].mxu0
  %5407 = vmatprep.mubr.f32.mxu0 0.0
  %5408 = vmatmul.mubr.f32.gmra.mrb[0].mxu0 %v3813
  %v5409 = vpop.f32.mrb[0].mxu0
  %v5410 = vadd.f32 0.0, %v5409
  %v5411 = vpop.f32.mrb[0].mxu0
  %5412 = vmatprep.mubr.f32.mxu0 0.0
  %5413 = vmatmul.mubr.f32.gmra.mrb[0].mxu0 %v3815
  %v5414 = vpop.f32.mrb[0].mxu0
  %v5415 = vadd.f32 0.0, %v5414
  %v5416 = vpop.f32.mrb[0].mxu0
  %5417 = vmatprep.mubr.f32.mxu0 0.0
  %5418 = vmatmul.mubr.f32.gmra.mrb[0].mxu0 %v3817
  %v5419 = vpop.f32.mrb[0].mxu0
  %v5420 = vadd.f32 0.0, %v5419
  %v5421 = vpop.f32.mrb[0].mxu0
  %5422 = vmatprep.mubr.f32.mxu0 0.0
  %5423 = vmatmul.mubr.f32.gmra.mrb[0].mxu0 %v3819
  %v5424 = vpop.f32.mrb[0].mxu0
  %v5425 = vadd.f32 0.0, %v5424
  %v5426 = vpop.f32.mrb[0].mxu0
  %5427 = vmatprep.mubr.f32.mxu0 0.0
  %5428 = vmatmul.mubr.f32.gmra.mrb[0].mxu0 %v3821
  %v5429 = vpop.f32.mrb[0].mxu0
  %v5430 = vadd.f32 0.0, %v5429
  %v5431 = vpop.f32.mrb[0].mxu0
  %5432 = vmatprep.mubr.f32.mxu0 0.0
  %5433 = vmatmul.mubr.f32.gmra.mrb[0].mxu0 %v3823
  %v5434 = vpop.f32.mrb[0].mxu0
  %v5435 = vadd.f32 0.0, %v5434
  %v5436 = vpop.f32.mrb[0].mxu0
  %5437 = vmatprep.mubr.f32.mxu0 0.0
  %5438 = vmatmul.mubr.f32.gmra.mrb[0].mxu0 %v3825
  %v5439 = vpop.f32.mrb[0].mxu0
  %v5440 = vadd.f32 0.0, %v5439
  %v5441 = vpop.f32.mrb[0].mxu0
  %5442 = vmatprep.mubr.f32.mxu0 0.0
  %5443 = vmatmul.mubr.f32.gmra.mrb[0].mxu0 %v3827
  %v5444 = vpop.f32.mrb[0].mxu0
  %v5445 = vadd.f32 0.0, %v5444
  %v5446 = vpop.f32.mrb[0].mxu0
  %5447 = vmatprep.mubr.f32.mxu0 0.0
  %5448 = vmatmul.mubr.f32.gmra.mrb[0].mxu0 %v3829
  %v5449 = vpop.f32.mrb[0].mxu0
  %v5450 = vadd.f32 0.0, %v5449
  %v5451 = vpop.f32.mrb[0].mxu0
  %5452 = vmatprep.mubr.f32.mxu0 0.0
  %5453 = vmatmul.mubr.f32.gmra.mrb[0].mxu0 %v3831
  %v5454 = vpop.f32.mrb[0].mxu0
  %v5455 = vadd.f32 0.0, %v5454
  %v5456 = vpop.f32.mrb[0].mxu0
  %5457 = vmatprep.mubr.f32.mxu0 0.0
  %5458 = vmatmul.mubr.f32.gmra.mrb[0].mxu0 %v3833
  %v5459 = vpop.f32.mrb[0].mxu0
  %v5460 = vadd.f32 0.0, %v5459
  %v5461 = vpop.f32.mrb[0].mxu0
  %5462 = vmatprep.mubr.f32.mxu0 0.0
  %5463 = vmatmul.mubr.f32.gmra.mrb[0].mxu0 %v3835
  %v5464 = vpop.f32.mrb[0].mxu0
  %v5465 = vadd.f32 0.0, %v5464
  %v5466 = vpop.f32.mrb[0].mxu0
  %5467 = vmatprep.mubr.f32.mxu0 0.0
  %5468 = vmatmul.mubr.f32.gmra.mrb[0].mxu0 %v3837
  %v5469 = vpop.f32.mrb[0].mxu0
  %v5470 = vadd.f32 0.0, %v5469
  %v5471 = vpop.f32.mrb[0].mxu0
  %5472 = vmatprep.mubr.f32.mxu0 0.0
  %5473 = vmatmul.mubr.f32.gmra.mrb[0].mxu0 %v3839
  %v5474 = vpop.f32.mrb[0].mxu0
  %v5475 = vadd.f32 0.0, %v5474
  %v5476 = vpop.f32.mrb[0].mxu0
  %5477 = vmatprep.mubr.f32.mxu0 0.0
  %5478 = vmatmul.mubr.f32.gmra.mrb[0].mxu0 %v3841
  %v5479 = vpop.f32.mrb[0].mxu0
  %v5480 = vadd.f32 0.0, %v5479
  %v5481 = vpop.f32.mrb[0].mxu0
  %5482 = vmatprep.mubr.f32.mxu0 0.0
  %5483 = vmatmul.mubr.f32.gmra.mrb[0].mxu0 %v3843
  %v5484 = vpop.f32.mrb[0].mxu0
  %v5485 = vadd.f32 0.0, %v5484
  %v5486 = vpop.f32.mrb[0].mxu0
  %5487 = vmatprep.mubr.f32.mxu0 0.0
  %5488 = vmatmul.mubr.f32.gmra.mrb[0].mxu0 %v3845
  %v5489 = vpop.f32.mrb[0].mxu0
  %v5490 = vadd.f32 0.0, %v5489
  %v5491 = vpop.f32.mrb[0].mxu0
  %5492 = vmatprep.mubr.f32.mxu0 0.0
  %5493 = vmatmul.mubr.f32.gmra.mrb[0].mxu0 %v3847
  %v5494 = vpop.f32.mrb[0].mxu0
  %v5495 = vadd.f32 0.0, %v5494
  %v5496 = vpop.f32.mrb[0].mxu0
  %5497 = vmatprep.mubr.f32.mxu0 0.0
  %5498 = vmatmul.mubr.f32.gmra.mrb[0].mxu0 %v3849
  %v5499 = vpop.f32.mrb[0].mxu0
  %v5500 = vadd.f32 0.0, %v5499
  %v5501 = vpop.f32.mrb[0].mxu0
  %5502 = vmatprep.mubr.f32.mxu0 0.0
  %5503 = vmatmul.mubr.f32.gmra.mrb[0].mxu0 %v3851
  %v5504 = vpop.f32.mrb[0].mxu0
  %v5505 = vadd.f32 0.0, %v5504
  %v5506 = vpop.f32.mrb[0].mxu0
  %5507 = vmatprep.mubr.f32.mxu0 0.0
  %5508 = vmatmul.mubr.f32.gmra.mrb[0].mxu0 %v3853
  %v5509 = vpop.f32.mrb[0].mxu0
  %v5510 = vadd.f32 0.0, %v5509
  %v5511 = vpop.f32.mrb[0].mxu0
  %5512 = vmatprep.mubr.f32.mxu0 0.0
  %5513 = vmatmul.mubr.f32.gmra.mrb[0].mxu0 %v3855
  %v5514 = vpop.f32.mrb[0].mxu0
  %v5515 = vadd.f32 0.0, %v5514
  %v5516 = vpop.f32.mrb[0].mxu0
  %5517 = vmatprep.mubr.f32.mxu0 0.0
  %5518 = vmatmul.mubr.f32.gmra.mrb[0].mxu0 %v3857
  %v5519 = vpop.f32.mrb[0].mxu0
  %v5520 = vadd.f32 0.0, %v5519
  %v5521 = vpop.f32.mrb[0].mxu0
  %5522 = vmatprep.mubr.f32.mxu0 0.0
  %5523 = vmatmul.mubr.f32.gmra.mrb[0].mxu0 %v3859
  %v5524 = vpop.f32.mrb[0].mxu0
  %v5525 = vadd.f32 0.0, %v5524
  %v5526 = vpop.f32.mrb[0].mxu0
  %5527 = vmatprep.mubr.f32.mxu0 0.0
  %5528 = vmatmul.mubr.f32.gmra.mrb[0].mxu0 %v3861
  %v5529 = vpop.f32.mrb[0].mxu0
  %v5530 = vadd.f32 0.0, %v5529
  %v5531 = vpop.f32.mrb[0].mxu0
  %5532 = vmatprep.mubr.f32.mxu0 0.0
  %5533 = vmatmul.mubr.f32.gmra.mrb[0].mxu0 %v3863
  %v5534 = vpop.f32.mrb[0].mxu0
  %v5535 = vadd.f32 0.0, %v5534
  %v5536 = vpop.f32.mrb[0].mxu0
  %5537 = vmatprep.mubr.f32.mxu0 0.0
  %5538 = vmatmul.mubr.f32.gmra.mrb[0].mxu0 %v3865
  %v5539 = vpop.f32.mrb[0].mxu0
  %v5540 = vadd.f32 0.0, %v5539
  %v5541 = vpop.f32.mrb[0].mxu0
  %5542 = vmatprep.mubr.f32.mxu0 0.0
  %5543 = vmatmul.mubr.f32.gmra.mrb[0].mxu0 %v3867
  %v5544 = vpop.f32.mrb[0].mxu0
  %v5545 = vadd.f32 0.0, %v5544
  %v5546 = vpop.f32.mrb[0].mxu0
  %5547 = vmatprep.mubr.f32.mxu0 0.0
  %5548 = vmatmul.mubr.f32.gmra.mrb[0].mxu0 %v3869
  %v5549 = vpop.f32.mrb[0].mxu0
  %v5550 = vadd.f32 0.0, %v5549
  %v5551 = vpop.f32.mrb[0].mxu0
  %5552 = vmatprep.mubr.f32.mxu0 0.0
  %5553 = vmatmul.mubr.f32.gmra.mrb[0].mxu0 %v3871
  %v5554 = vpop.f32.mrb[0].mxu0
  %v5555 = vadd.f32 0.0, %v5554
  %v5556 = vpop.f32.mrb[0].mxu0
  %5557 = vmatprep.mubr.f32.mxu0 0.0
  %5558 = vmatmul.mubr.f32.gmra.mrb[0].mxu0 %v3873
  %v5559 = vpop.f32.mrb[0].mxu0
  %v5560 = vadd.f32 0.0, %v5559
  %v5561 = vpop.f32.mrb[0].mxu0
  %5562 = vmatprep.mubr.f32.mxu0 0.0
  %5563 = vmatmul.mubr.f32.gmra.mrb[0].mxu0 %v3875
  %v5564 = vpop.f32.mrb[0].mxu0
  %v5565 = vadd.f32 0.0, %v5564
  %v5566 = vpop.f32.mrb[0].mxu0
  %5567 = vmatprep.mubr.f32.mxu0 0.0
  %5568 = vmatmul.mubr.f32.gmra.mrb[0].mxu0 %v3877
  %v5569 = vpop.f32.mrb[0].mxu0
  %v5570 = vadd.f32 0.0, %v5569
  %v5571 = vpop.f32.mrb[0].mxu0
  %5572 = vmatprep.mubr.f32.mxu0 0.0
  %5573 = vmatmul.mubr.f32.gmra.mrb[0].mxu0 %v3879
  %v5574 = vpop.f32.mrb[0].mxu0
  %v5575 = vadd.f32 0.0, %v5574
  %v5576 = vpop.f32.mrb[0].mxu0
  %5577 = vmatprep.mubr.f32.mxu0 0.0
  %5578 = vmatmul.mubr.f32.gmra.mrb[0].mxu0 %v3881
  %v5579 = vpop.f32.mrb[0].mxu0
  %v5580 = vadd.f32 0.0, %v5579
  %v5581 = vpop.f32.mrb[0].mxu0
  %5582 = vmatprep.mubr.f32.mxu0 0.0
  %5583 = vmatmul.mubr.f32.gmra.mrb[0].mxu0 %v3883
  %v5584 = vpop.f32.mrb[0].mxu0
  %v5585 = vadd.f32 0.0, %v5584
  %v5586 = vpop.f32.mrb[0].mxu0
  %5587 = vmatprep.mubr.f32.mxu0 0.0
  %5588 = vmatmul.mubr.f32.gmra.mrb[0].mxu0 %v3885
  %v5589 = vpop.f32.mrb[0].mxu0
  %v5590 = vadd.f32 0.0, %v5589
  %v5591 = vpop.f32.mrb[0].mxu0
  %5592 = vmatprep.mubr.f32.mxu0 0.0
  %5593 = vmatmul.mubr.f32.gmra.mrb[0].mxu0 %v3887
  %v5594 = vpop.f32.mrb[0].mxu0
  %v5595 = vadd.f32 0.0, %v5594
  %v5596 = vpop.f32.mrb[0].mxu0
  %5597 = vmatprep.mubr.f32.mxu0 0.0
  %5598 = vmatmul.mubr.f32.gmra.mrb[0].mxu0 %v3889
  %v5599 = vpop.f32.mrb[0].mxu0
  %v5600 = vadd.f32 0.0, %v5599
  %v5601 = vpop.f32.mrb[0].mxu0
  %5602 = vmatprep.mubr.f32.mxu0 0.0
  %5603 = vmatmul.mubr.f32.gmra.mrb[0].mxu0 %v3891
  %v5604 = vpop.f32.mrb[0].mxu0
  %v5605 = vadd.f32 0.0, %v5604
  %v5606 = vpop.f32.mrb[0].mxu0
  %5607 = vmatprep.mubr.f32.mxu0 0.0
  %5608 = vmatmul.mubr.f32.gmra.mrb[0].mxu0 %v3893
  %v5609 = vpop.f32.mrb[0].mxu0
  %v5610 = vadd.f32 0.0, %v5609
  %v5611 = vpop.f32.mrb[0].mxu0
  %5612 = vmatprep.mubr.f32.mxu0 0.0
  %5613 = vmatmul.mubr.f32.gmra.mrb[0].mxu0 %v3895
  %v5614 = vpop.f32.mrb[0].mxu0
  %v5615 = vadd.f32 0.0, %v5614
  %v5616 = vpop.f32.mrb[0].mxu0
  %5617 = vmatprep.mubr.f32.mxu0 0.0
  %5618 = vmatmul.mubr.f32.gmra.mrb[0].mxu0 %v5246
  %v5619 = vpop.f32.mrb[0].mxu0
  %v5620 = vadd.f32 0.0, %v5619
  %v5621 = vpop.f32.mrb[0].mxu0
  %5622 = vmatprep.mubr.f32.mxu0 0.0
  %5623 = vmatmul.mubr.f32.gmra.mrb[0].mxu0 %v5248
  %v5624 = vpop.f32.mrb[0].mxu0
  %v5625 = vadd.f32 0.0, %v5624
  %v5626 = vpop.f32.mrb[0].mxu0
  %5627 = vdwg.mxu0
  %v5628 = vadd.f32 %v5176, %v5320
  %v5629 = vadd.f32 %v5177, %v5325
  %v5630 = vadd.f32 %v5178, %v5330
  %v5631 = vadd.f32 %v5179, %v5335
  %v5632 = vadd.f32 %v5180, %v5340
  %v5633 = vadd.f32 %v5181, %v5345
  %v5634 = vadd.f32 %v5182, %v5350
  %v5635 = vadd.f32 %v5183, %v5355
  %v5636 = vadd.f32 %v5184, %v5360
  %v5637 = vadd.f32 %v5185, %v5365
  %v5638 = vadd.f32 %v5186, %v5370
  %v5639 = vadd.f32 %v5187, %v5375
  %v5640 = vadd.f32 %v5188, %v5380
  %v5641 = vadd.f32 %v5189, %v5385
  %v5642 = vadd.f32 %v5190, %v5390
  %v5643 = vadd.f32 %v5191, %v5395
  %v5644 = vadd.f32 %v5192, %v5400
  %v5645 = vadd.f32 %v5193, %v5405
  %v5646 = vadd.f32 %v5194, %v5410
  %v5647 = vadd.f32 %v5195, %v5415
  %v5648 = vadd.f32 %v5196, %v5420
  %v5649 = vadd.f32 %v5197, %v5425
  %v5650 = vadd.f32 %v5198, %v5430
  %v5651 = vadd.f32 %v5199, %v5435
  %v5652 = vadd.f32 %v5200, %v5440
  %v5653 = vadd.f32 %v5201, %v5445
  %v5654 = vadd.f32 %v5202, %v5450
  %v5655 = vadd.f32 %v5203, %v5455
  %v5656 = vadd.f32 %v5204, %v5460
  %v5657 = vadd.f32 %v5205, %v5465
  %v5658 = vadd.f32 %v5206, %v5470
  %v5659 = vadd.f32 %v5207, %v5475
  %v5660 = vadd.f32 %v5208, %v5480
  %v5661 = vadd.f32 %v5209, %v5485
  %v5662 = vadd.f32 %v5210, %v5490
  %v5663 = vadd.f32 %v5211, %v5495
  %v5664 = vadd.f32 %v5212, %v5500
  %v5665 = vadd.f32 %v5213, %v5505
  %v5666 = vadd.f32 %v5214, %v5510
  %v5667 = vadd.f32 %v5215, %v5515
  %v5668 = vadd.f32 %v5216, %v5520
  %v5669 = vadd.f32 %v5217, %v5525
  %v5670 = vadd.f32 %v5218, %v5530
  %v5671 = vadd.f32 %v5219, %v5535
  %v5672 = vadd.f32 %v5220, %v5540
  %v5673 = vadd.f32 %v5221, %v5545
  %v5674 = vadd.f32 %v5222, %v5550
  %v5675 = vadd.f32 %v5223, %v5555
  %v5676 = vadd.f32 %v5224, %v5560
  %v5677 = vadd.f32 %v5225, %v5565
  %v5678 = vadd.f32 %v5226, %v5570
  %v5679 = vadd.f32 %v5227, %v5575
  %v5680 = vadd.f32 %v5228, %v5580
  %v5681 = vadd.f32 %v5229, %v5585
  %v5682 = vadd.f32 %v5230, %v5590
  %v5683 = vadd.f32 %v5231, %v5595
  %v5684 = vadd.f32 %v5232, %v5600
  %v5685 = vadd.f32 %v5233, %v5605
  %v5686 = vadd.f32 %v5234, %v5610
  %v5687 = vadd.f32 %v5235, %v5615
  %v5688 = vadd.f32 %v5236, %v5620
  %v5689 = vadd.f32 %v5237, %v5625
  %s5690 = scalar_lea.vmem %s6, 96
  %v5691 = vld [vmem:[%s5690] sm:$0xff]
  %v5692 = vld [vmem:[%s5690 + $0x8] sm:$0x3]
  %v5693 = vsel %vm1615, %v2445, 0
  %v5696 = vsel %vm1615, %v2446, 0
  %v5699 = vsel %vm2762, %v5692, 0
  %5701 = vmatprep.subr.mxu0 0.0
  %5702 = vmatpush1.msra.mxu0 %v5691
  %5703 = vmatprep.subr.mxu0 0.0
  %5704 = vmatpush1.msra.mxu0 %v5699
  %5705 = vmatprep.subr.mxu0 0.0
  %5706 = vmatpush1.msra.mxu0 0.0
  %5707 = vmatprep.subr.mxu0 0.0
  %5708 = vmatpush1.msra.mxu0 0.0
  %5709 = vmatprep.subr.mxu0 0.0
  %5710 = vmatpush1.msra.mxu0 0.0
  %5711 = vmatprep.subr.mxu0 0.0
  %5712 = vmatpush1.msra.mxu0 0.0
  %5713 = vmatprep.subr.mxu0 0.0
  %5714 = vmatpush1.msra.mxu0 0.0
  %5715 = vmatprep.subr.mxu0 0.0
  %5716 = vmatpush1.msra.mxu0 0.0
  %5717 = vmatprep.subr.mxu0 0.0
  %5718 = vmatpush1.msra.mxu0 0.0
  %5719 = vmatprep.subr.mxu0 0.0
  %5720 = vmatpush1.msra.mxu0 0.0
  %5721 = vmatprep.subr.mxu0 0.0
  %5722 = vmatpush1.msra.mxu0 0.0
  %5723 = vmatprep.subr.mxu0 0.0
  %5724 = vmatpush1.msra.mxu0 0.0
  %5725 = vmatprep.subr.mxu0 0.0
  %5726 = vmatpush1.msra.mxu0 0.0
  %5727 = vmatprep.subr.mxu0 0.0
  %5728 = vmatpush1.msra.mxu0 0.0
  %5729 = vmatprep.subr.mxu0 0.0
  %5730 = vmatpush1.msra.mxu0 0.0
  %5731 = vmatprep.subr.mxu0 0.0
  %5732 = vmatpush1.msra.mxu0 0.0
  %5733 = vmatprep.subr.mxu0 0.0
  %5734 = vmatpush1.msra.mxu0 0.0
  %5735 = vmatprep.subr.mxu0 0.0
  %5736 = vmatpush1.msra.mxu0 0.0
  %5737 = vmatprep.subr.mxu0 0.0
  %5738 = vmatpush1.msra.mxu0 0.0
  %5739 = vmatprep.subr.mxu0 0.0
  %5740 = vmatpush1.msra.mxu0 0.0
  %5741 = vmatprep.subr.mxu0 0.0
  %5742 = vmatpush1.msra.mxu0 0.0
  %5743 = vmatprep.subr.mxu0 0.0
  %5744 = vmatpush1.msra.mxu0 0.0
  %5745 = vmatprep.subr.mxu0 0.0
  %5746 = vmatpush1.msra.mxu0 0.0
  %5747 = vmatprep.subr.mxu0 0.0
  %5748 = vmatpush1.msra.mxu0 0.0
  %5749 = vmatprep.subr.mxu0 0.0
  %5750 = vmatpush1.msra.mxu0 0.0
  %5751 = vmatprep.subr.mxu0 0.0
  %5752 = vmatpush1.msra.mxu0 0.0
  %5753 = vmatprep.subr.mxu0 0.0
  %5754 = vmatpush1.msra.mxu0 0.0
  %5755 = vmatprep.subr.mxu0 0.0
  %5756 = vmatpush1.msra.mxu0 0.0
  %5757 = vmatprep.subr.mxu0 0.0
  %5758 = vmatpush1.msra.mxu0 0.0
  %5759 = vmatprep.subr.mxu0 0.0
  %5760 = vmatpush1.msra.mxu0 0.0
  %5761 = vmatprep.subr.mxu0 0.0
  %5762 = vmatpush1.msra.mxu0 0.0
  %5763 = vmatprep.subr.mxu0 0.0
  %5764 = vmatpush1.msra.mxu0 0.0
  %5765 = vmatprep.mubr.f32.mxu0 0.0
  %5766 = vmatmul.mubr.f32.gmra.mrb[0].mxu0 %v3149
  %v5767 = vpop.f32.mrb[0].mxu0
  %v5768 = vadd.f32 0.0, %v5767
  %v5769 = vpop.f32.mrb[0].mxu0
  %5770 = vmatprep.mubr.f32.mxu0 0.0
  %5771 = vmatmul.mubr.f32.gmra.mrb[0].mxu0 %v3151
  %v5772 = vpop.f32.mrb[0].mxu0
  %v5773 = vadd.f32 0.0, %v5772
  %v5774 = vpop.f32.mrb[0].mxu0
  %5775 = vmatprep.mubr.f32.mxu0 0.0
  %5776 = vmatmul.mubr.f32.gmra.mrb[0].mxu0 %v3153
  %v5777 = vpop.f32.mrb[0].mxu0
  %v5778 = vadd.f32 0.0, %v5777
  %v5779 = vpop.f32.mrb[0].mxu0
  %5780 = vmatprep.mubr.f32.mxu0 0.0
  %5781 = vmatmul.mubr.f32.gmra.mrb[0].mxu0 %v3155
  %v5782 = vpop.f32.mrb[0].mxu0
  %v5783 = vadd.f32 0.0, %v5782
  %v5784 = vpop.f32.mrb[0].mxu0
  %5785 = vmatprep.mubr.f32.mxu0 0.0
  %5786 = vmatmul.mubr.f32.gmra.mrb[0].mxu0 %v3157
  %v5787 = vpop.f32.mrb[0].mxu0
  %v5788 = vadd.f32 0.0, %v5787
  %v5789 = vpop.f32.mrb[0].mxu0
  %5790 = vmatprep.mubr.f32.mxu0 0.0
  %5791 = vmatmul.mubr.f32.gmra.mrb[0].mxu0 %v3159
  %v5792 = vpop.f32.mrb[0].mxu0
  %v5793 = vadd.f32 0.0, %v5792
  %v5794 = vpop.f32.mrb[0].mxu0
  %5795 = vmatprep.mubr.f32.mxu0 0.0
  %5796 = vmatmul.mubr.f32.gmra.mrb[0].mxu0 %v3161
  %v5797 = vpop.f32.mrb[0].mxu0
  %v5798 = vadd.f32 0.0, %v5797
  %v5799 = vpop.f32.mrb[0].mxu0
  %5800 = vmatprep.mubr.f32.mxu0 0.0
  %5801 = vmatmul.mubr.f32.gmra.mrb[0].mxu0 %v3163
  %v5802 = vpop.f32.mrb[0].mxu0
  %v5803 = vadd.f32 0.0, %v5802
  %v5804 = vpop.f32.mrb[0].mxu0
  %5805 = vmatprep.mubr.f32.mxu0 0.0
  %5806 = vmatmul.mubr.f32.gmra.mrb[0].mxu0 %v3165
  %v5807 = vpop.f32.mrb[0].mxu0
  %v5808 = vadd.f32 0.0, %v5807
  %v5809 = vpop.f32.mrb[0].mxu0
  %5810 = vmatprep.mubr.f32.mxu0 0.0
  %5811 = vmatmul.mubr.f32.gmra.mrb[0].mxu0 %v3167
  %v5812 = vpop.f32.mrb[0].mxu0
  %v5813 = vadd.f32 0.0, %v5812
  %v5814 = vpop.f32.mrb[0].mxu0
  %5815 = vmatprep.mubr.f32.mxu0 0.0
  %5816 = vmatmul.mubr.f32.gmra.mrb[0].mxu0 %v3169
  %v5817 = vpop.f32.mrb[0].mxu0
  %v5818 = vadd.f32 0.0, %v5817
  %v5819 = vpop.f32.mrb[0].mxu0
  %5820 = vmatprep.mubr.f32.mxu0 0.0
  %5821 = vmatmul.mubr.f32.gmra.mrb[0].mxu0 %v3171
  %v5822 = vpop.f32.mrb[0].mxu0
  %v5823 = vadd.f32 0.0, %v5822
  %v5824 = vpop.f32.mrb[0].mxu0
  %5825 = vmatprep.mubr.f32.mxu0 0.0
  %5826 = vmatmul.mubr.f32.gmra.mrb[0].mxu0 %v3173
  %v5827 = vpop.f32.mrb[0].mxu0
  %v5828 = vadd.f32 0.0, %v5827
  %v5829 = vpop.f32.mrb[0].mxu0
  %5830 = vmatprep.mubr.f32.mxu0 0.0
  %5831 = vmatmul.mubr.f32.gmra.mrb[0].mxu0 %v3175
  %v5832 = vpop.f32.mrb[0].mxu0
  %v5833 = vadd.f32 0.0, %v5832
  %v5834 = vpop.f32.mrb[0].mxu0
  %5835 = vmatprep.mubr.f32.mxu0 0.0
  %5836 = vmatmul.mubr.f32.gmra.mrb[0].mxu0 %v3177
  %v5837 = vpop.f32.mrb[0].mxu0
  %v5838 = vadd.f32 0.0, %v5837
  %v5839 = vpop.f32.mrb[0].mxu0
  %5840 = vmatprep.mubr.f32.mxu0 0.0
  %5841 = vmatmul.mubr.f32.gmra.mrb[0].mxu0 %v3179
  %v5842 = vpop.f32.mrb[0].mxu0
  %v5843 = vadd.f32 0.0, %v5842
  %v5844 = vpop.f32.mrb[0].mxu0
  %5845 = vmatprep.mubr.f32.mxu0 0.0
  %5846 = vmatmul.mubr.f32.gmra.mrb[0].mxu0 %v3181
  %v5847 = vpop.f32.mrb[0].mxu0
  %v5848 = vadd.f32 0.0, %v5847
  %v5849 = vpop.f32.mrb[0].mxu0
  %5850 = vmatprep.mubr.f32.mxu0 0.0
  %5851 = vmatmul.mubr.f32.gmra.mrb[0].mxu0 %v3183
  %v5852 = vpop.f32.mrb[0].mxu0
  %v5853 = vadd.f32 0.0, %v5852
  %v5854 = vpop.f32.mrb[0].mxu0
  %5855 = vmatprep.mubr.f32.mxu0 0.0
  %5856 = vmatmul.mubr.f32.gmra.mrb[0].mxu0 %v3185
  %v5857 = vpop.f32.mrb[0].mxu0
  %v5858 = vadd.f32 0.0, %v5857
  %v5859 = vpop.f32.mrb[0].mxu0
  %5860 = vmatprep.mubr.f32.mxu0 0.0
  %5861 = vmatmul.mubr.f32.gmra.mrb[0].mxu0 %v3187
  %v5862 = vpop.f32.mrb[0].mxu0
  %v5863 = vadd.f32 0.0, %v5862
  %v5864 = vpop.f32.mrb[0].mxu0
  %5865 = vmatprep.mubr.f32.mxu0 0.0
  %5866 = vmatmul.mubr.f32.gmra.mrb[0].mxu0 %v3189
  %v5867 = vpop.f32.mrb[0].mxu0
  %v5868 = vadd.f32 0.0, %v5867
  %v5869 = vpop.f32.mrb[0].mxu0
  %5870 = vmatprep.mubr.f32.mxu0 0.0
  %5871 = vmatmul.mubr.f32.gmra.mrb[0].mxu0 %v3191
  %v5872 = vpop.f32.mrb[0].mxu0
  %v5873 = vadd.f32 0.0, %v5872
  %v5874 = vpop.f32.mrb[0].mxu0
  %5875 = vmatprep.mubr.f32.mxu0 0.0
  %5876 = vmatmul.mubr.f32.gmra.mrb[0].mxu0 %v3193
  %v5877 = vpop.f32.mrb[0].mxu0
  %v5878 = vadd.f32 0.0, %v5877
  %v5879 = vpop.f32.mrb[0].mxu0
  %5880 = vmatprep.mubr.f32.mxu0 0.0
  %5881 = vmatmul.mubr.f32.gmra.mrb[0].mxu0 %v3195
  %v5882 = vpop.f32.mrb[0].mxu0
  %v5883 = vadd.f32 0.0, %v5882
  %v5884 = vpop.f32.mrb[0].mxu0
  %5885 = vmatprep.mubr.f32.mxu0 0.0
  %5886 = vmatmul.mubr.f32.gmra.mrb[0].mxu0 %v3197
  %v5887 = vpop.f32.mrb[0].mxu0
  %v5888 = vadd.f32 0.0, %v5887
  %v5889 = vpop.f32.mrb[0].mxu0
  %5890 = vmatprep.mubr.f32.mxu0 0.0
  %5891 = vmatmul.mubr.f32.gmra.mrb[0].mxu0 %v3199
  %v5892 = vpop.f32.mrb[0].mxu0
  %v5893 = vadd.f32 0.0, %v5892
  %v5894 = vpop.f32.mrb[0].mxu0
  %5895 = vmatprep.mubr.f32.mxu0 0.0
  %5896 = vmatmul.mubr.f32.gmra.mrb[0].mxu0 %v3201
  %v5897 = vpop.f32.mrb[0].mxu0
  %v5898 = vadd.f32 0.0, %v5897
  %v5899 = vpop.f32.mrb[0].mxu0
  %5900 = vmatprep.mubr.f32.mxu0 0.0
  %5901 = vmatmul.mubr.f32.gmra.mrb[0].mxu0 %v3203
  %v5902 = vpop.f32.mrb[0].mxu0
  %v5903 = vadd.f32 0.0, %v5902
  %v5904 = vpop.f32.mrb[0].mxu0
  %5905 = vmatprep.mubr.f32.mxu0 0.0
  %5906 = vmatmul.mubr.f32.gmra.mrb[0].mxu0 %v3205
  %v5907 = vpop.f32.mrb[0].mxu0
  %v5908 = vadd.f32 0.0, %v5907
  %v5909 = vpop.f32.mrb[0].mxu0
  %5910 = vmatprep.mubr.f32.mxu0 0.0
  %5911 = vmatmul.mubr.f32.gmra.mrb[0].mxu0 %v3207
  %v5912 = vpop.f32.mrb[0].mxu0
  %v5913 = vadd.f32 0.0, %v5912
  %v5914 = vpop.f32.mrb[0].mxu0
  %5915 = vmatprep.mubr.f32.mxu0 0.0
  %5916 = vmatmul.mubr.f32.gmra.mrb[0].mxu0 %v3209
  %v5917 = vpop.f32.mrb[0].mxu0
  %v5918 = vadd.f32 0.0, %v5917
  %v5919 = vpop.f32.mrb[0].mxu0
  %5920 = vmatprep.mubr.f32.mxu0 0.0
  %5921 = vmatmul.mubr.f32.gmra.mrb[0].mxu0 %v3211
  %v5922 = vpop.f32.mrb[0].mxu0
  %v5923 = vadd.f32 0.0, %v5922
  %v5924 = vpop.f32.mrb[0].mxu0
  %5925 = vmatprep.mubr.f32.mxu0 0.0
  %5926 = vmatmul.mubr.f32.gmra.mrb[0].mxu0 %v3213
  %v5927 = vpop.f32.mrb[0].mxu0
  %v5928 = vadd.f32 0.0, %v5927
  %v5929 = vpop.f32.mrb[0].mxu0
  %5930 = vmatprep.mubr.f32.mxu0 0.0
  %5931 = vmatmul.mubr.f32.gmra.mrb[0].mxu0 %v3215
  %v5932 = vpop.f32.mrb[0].mxu0
  %v5933 = vadd.f32 0.0, %v5932
  %v5934 = vpop.f32.mrb[0].mxu0
  %5935 = vmatprep.mubr.f32.mxu0 0.0
  %5936 = vmatmul.mubr.f32.gmra.mrb[0].mxu0 %v3217
  %v5937 = vpop.f32.mrb[0].mxu0
  %v5938 = vadd.f32 0.0, %v5937
  %v5939 = vpop.f32.mrb[0].mxu0
  %5940 = vmatprep.mubr.f32.mxu0 0.0
  %5941 = vmatmul.mubr.f32.gmra.mrb[0].mxu0 %v3219
  %v5942 = vpop.f32.mrb[0].mxu0
  %v5943 = vadd.f32 0.0, %v5942
  %v5944 = vpop.f32.mrb[0].mxu0
  %5945 = vmatprep.mubr.f32.mxu0 0.0
  %5946 = vmatmul.mubr.f32.gmra.mrb[0].mxu0 %v3221
  %v5947 = vpop.f32.mrb[0].mxu0
  %v5948 = vadd.f32 0.0, %v5947
  %v5949 = vpop.f32.mrb[0].mxu0
  %5950 = vmatprep.mubr.f32.mxu0 0.0
  %5951 = vmatmul.mubr.f32.gmra.mrb[0].mxu0 %v3223
  %v5952 = vpop.f32.mrb[0].mxu0
  %v5953 = vadd.f32 0.0, %v5952
  %v5954 = vpop.f32.mrb[0].mxu0
  %5955 = vmatprep.mubr.f32.mxu0 0.0
  %5956 = vmatmul.mubr.f32.gmra.mrb[0].mxu0 %v3225
  %v5957 = vpop.f32.mrb[0].mxu0
  %v5958 = vadd.f32 0.0, %v5957
  %v5959 = vpop.f32.mrb[0].mxu0
  %5960 = vmatprep.mubr.f32.mxu0 0.0
  %5961 = vmatmul.mubr.f32.gmra.mrb[0].mxu0 %v3227
  %v5962 = vpop.f32.mrb[0].mxu0
  %v5963 = vadd.f32 0.0, %v5962
  %v5964 = vpop.f32.mrb[0].mxu0
  %5965 = vmatprep.mubr.f32.mxu0 0.0
  %5966 = vmatmul.mubr.f32.gmra.mrb[0].mxu0 %v3229
  %v5967 = vpop.f32.mrb[0].mxu0
  %v5968 = vadd.f32 0.0, %v5967
  %v5969 = vpop.f32.mrb[0].mxu0
  %5970 = vmatprep.mubr.f32.mxu0 0.0
  %5971 = vmatmul.mubr.f32.gmra.mrb[0].mxu0 %v3231
  %v5972 = vpop.f32.mrb[0].mxu0
  %v5973 = vadd.f32 0.0, %v5972
  %v5974 = vpop.f32.mrb[0].mxu0
  %5975 = vmatprep.mubr.f32.mxu0 0.0
  %5976 = vmatmul.mubr.f32.gmra.mrb[0].mxu0 %v3233
  %v5977 = vpop.f32.mrb[0].mxu0
  %v5978 = vadd.f32 0.0, %v5977
  %v5979 = vpop.f32.mrb[0].mxu0
  %5980 = vmatprep.mubr.f32.mxu0 0.0
  %5981 = vmatmul.mubr.f32.gmra.mrb[0].mxu0 %v3235
  %v5982 = vpop.f32.mrb[0].mxu0
  %v5983 = vadd.f32 0.0, %v5982
  %v5984 = vpop.f32.mrb[0].mxu0
  %5985 = vmatprep.mubr.f32.mxu0 0.0
  %5986 = vmatmul.mubr.f32.gmra.mrb[0].mxu0 %v3237
  %v5987 = vpop.f32.mrb[0].mxu0
  %v5988 = vadd.f32 0.0, %v5987
  %v5989 = vpop.f32.mrb[0].mxu0
  %5990 = vmatprep.mubr.f32.mxu0 0.0
  %5991 = vmatmul.mubr.f32.gmra.mrb[0].mxu0 %v3239
  %v5992 = vpop.f32.mrb[0].mxu0
  %v5993 = vadd.f32 0.0, %v5992
  %v5994 = vpop.f32.mrb[0].mxu0
  %5995 = vmatprep.mubr.f32.mxu0 0.0
  %5996 = vmatmul.mubr.f32.gmra.mrb[0].mxu0 %v3241
  %v5997 = vpop.f32.mrb[0].mxu0
  %v5998 = vadd.f32 0.0, %v5997
  %v5999 = vpop.f32.mrb[0].mxu0
  %6000 = vmatprep.mubr.f32.mxu0 0.0
  %6001 = vmatmul.mubr.f32.gmra.mrb[0].mxu0 %v3243
  %v6002 = vpop.f32.mrb[0].mxu0
  %v6003 = vadd.f32 0.0, %v6002
  %v6004 = vpop.f32.mrb[0].mxu0
  %6005 = vmatprep.mubr.f32.mxu0 0.0
  %6006 = vmatmul.mubr.f32.gmra.mrb[0].mxu0 %v3245
  %v6007 = vpop.f32.mrb[0].mxu0
  %v6008 = vadd.f32 0.0, %v6007
  %v6009 = vpop.f32.mrb[0].mxu0
  %6010 = vmatprep.mubr.f32.mxu0 0.0
  %6011 = vmatmul.mubr.f32.gmra.mrb[0].mxu0 %v3247
  %v6012 = vpop.f32.mrb[0].mxu0
  %v6013 = vadd.f32 0.0, %v6012
  %v6014 = vpop.f32.mrb[0].mxu0
  %6015 = vmatprep.mubr.f32.mxu0 0.0
  %6016 = vmatmul.mubr.f32.gmra.mrb[0].mxu0 %v3249
  %v6017 = vpop.f32.mrb[0].mxu0
  %v6018 = vadd.f32 0.0, %v6017
  %v6019 = vpop.f32.mrb[0].mxu0
  %6020 = vmatprep.mubr.f32.mxu0 0.0
  %6021 = vmatmul.mubr.f32.gmra.mrb[0].mxu0 %v3251
  %v6022 = vpop.f32.mrb[0].mxu0
  %v6023 = vadd.f32 0.0, %v6022
  %v6024 = vpop.f32.mrb[0].mxu0
  %6025 = vmatprep.mubr.f32.mxu0 0.0
  %6026 = vmatmul.mubr.f32.gmra.mrb[0].mxu0 %v3253
  %v6027 = vpop.f32.mrb[0].mxu0
  %v6028 = vadd.f32 0.0, %v6027
  %v6029 = vpop.f32.mrb[0].mxu0
  %6030 = vmatprep.mubr.f32.mxu0 0.0
  %6031 = vmatmul.mubr.f32.gmra.mrb[0].mxu0 %v3255
  %v6032 = vpop.f32.mrb[0].mxu0
  %v6033 = vadd.f32 0.0, %v6032
  %v6034 = vpop.f32.mrb[0].mxu0
  %6035 = vmatprep.mubr.f32.mxu0 0.0
  %6036 = vmatmul.mubr.f32.gmra.mrb[0].mxu0 %v3257
  %v6037 = vpop.f32.mrb[0].mxu0
  %v6038 = vadd.f32 0.0, %v6037
  %v6039 = vpop.f32.mrb[0].mxu0
  %6040 = vmatprep.mubr.f32.mxu0 0.0
  %6041 = vmatmul.mubr.f32.gmra.mrb[0].mxu0 %v3259
  %v6042 = vpop.f32.mrb[0].mxu0
  %v6043 = vadd.f32 0.0, %v6042
  %v6044 = vpop.f32.mrb[0].mxu0
  %6045 = vmatprep.mubr.f32.mxu0 0.0
  %6046 = vmatmul.mubr.f32.gmra.mrb[0].mxu0 %v3261
  %v6047 = vpop.f32.mrb[0].mxu0
  %v6048 = vadd.f32 0.0, %v6047
  %v6049 = vpop.f32.mrb[0].mxu0
  %6050 = vmatprep.mubr.f32.mxu0 0.0
  %6051 = vmatmul.mubr.f32.gmra.mrb[0].mxu0 %v3263
  %v6052 = vpop.f32.mrb[0].mxu0
  %v6053 = vadd.f32 0.0, %v6052
  %v6054 = vpop.f32.mrb[0].mxu0
  %6055 = vmatprep.mubr.f32.mxu0 0.0
  %6056 = vmatmul.mubr.f32.gmra.mrb[0].mxu0 %v4340
  %v6057 = vpop.f32.mrb[0].mxu0
  %v6058 = vadd.f32 0.0, %v6057
  %v6059 = vpop.f32.mrb[0].mxu0
  %6060 = vmatprep.mubr.f32.mxu0 0.0
  %6061 = vmatmul.mubr.f32.gmra.mrb[0].mxu0 %v4343
  %v6062 = vpop.f32.mrb[0].mxu0
  %v6063 = vadd.f32 0.0, %v6062
  %v6064 = vpop.f32.mrb[0].mxu0
  %6065 = vmatprep.mubr.f32.mxu0 0.0
  %6066 = vmatmul.mubr.f32.gmra.mrb[0].mxu0 %v5693
  %v6067 = vpop.f32.mrb[0].mxu0
  %v6068 = vadd.f32 0.0, %v6067
  %v6069 = vpop.f32.mrb[0].mxu0
  %6070 = vmatprep.mubr.f32.mxu0 0.0
  %6071 = vmatmul.mubr.f32.gmra.mrb[0].mxu0 %v5696
  %v6072 = vpop.f32.mrb[0].mxu0
  %v6073 = vadd.f32 0.0, %v6072
  %v6074 = vpop.f32.mrb[0].mxu0
  %6075 = vdwg.mxu0
  %v6076 = vadd.f32 %v5628, %v5768
  %v6077 = vadd.f32 %v5629, %v5773
  %v6078 = vadd.f32 %v5630, %v5778
  %v6079 = vadd.f32 %v5631, %v5783
  %v6080 = vadd.f32 %v5632, %v5788
  %v6081 = vadd.f32 %v5633, %v5793
  %v6082 = vadd.f32 %v5634, %v5798
  %v6083 = vadd.f32 %v5635, %v5803
  %v6084 = vadd.f32 %v5636, %v5808
  %v6085 = vadd.f32 %v5637, %v5813
  %v6086 = vadd.f32 %v5638, %v5818
  %v6087 = vadd.f32 %v5639, %v5823
  %v6088 = vadd.f32 %v5640, %v5828
  %v6089 = vadd.f32 %v5641, %v5833
  %v6090 = vadd.f32 %v5642, %v5838
  %v6091 = vadd.f32 %v5643, %v5843
  %v6092 = vadd.f32 %v5644, %v5848
  %v6093 = vadd.f32 %v5645, %v5853
  %v6094 = vadd.f32 %v5646, %v5858
  %v6095 = vadd.f32 %v5647, %v5863
  %v6096 = vadd.f32 %v5648, %v5868
  %v6097 = vadd.f32 %v5649, %v5873
  %v6098 = vadd.f32 %v5650, %v5878
  %v6099 = vadd.f32 %v5651, %v5883
  %v6100 = vadd.f32 %v5652, %v5888
  %v6101 = vadd.f32 %v5653, %v5893
  %v6102 = vadd.f32 %v5654, %v5898
  %v6103 = vadd.f32 %v5655, %v5903
  %v6104 = vadd.f32 %v5656, %v5908
  %v6105 = vadd.f32 %v5657, %v5913
  %v6106 = vadd.f32 %v5658, %v5918
  %v6107 = vadd.f32 %v5659, %v5923
  %v6108 = vadd.f32 %v5660, %v5928
  %v6109 = vadd.f32 %v5661, %v5933
  %v6110 = vadd.f32 %v5662, %v5938
  %v6111 = vadd.f32 %v5663, %v5943
  %v6112 = vadd.f32 %v5664, %v5948
  %v6113 = vadd.f32 %v5665, %v5953
  %v6114 = vadd.f32 %v5666, %v5958
  %v6115 = vadd.f32 %v5667, %v5963
  %v6116 = vadd.f32 %v5668, %v5968
  %v6117 = vadd.f32 %v5669, %v5973
  %v6118 = vadd.f32 %v5670, %v5978
  %v6119 = vadd.f32 %v5671, %v5983
  %v6120 = vadd.f32 %v5672, %v5988
  %v6121 = vadd.f32 %v5673, %v5993
  %v6122 = vadd.f32 %v5674, %v5998
  %v6123 = vadd.f32 %v5675, %v6003
  %v6124 = vadd.f32 %v5676, %v6008
  %v6125 = vadd.f32 %v5677, %v6013
  %v6126 = vadd.f32 %v5678, %v6018
  %v6127 = vadd.f32 %v5679, %v6023
  %v6128 = vadd.f32 %v5680, %v6028
  %v6129 = vadd.f32 %v5681, %v6033
  %v6130 = vadd.f32 %v5682, %v6038
  %v6131 = vadd.f32 %v5683, %v6043
  %v6132 = vadd.f32 %v5684, %v6048
  %v6133 = vadd.f32 %v5685, %v6053
  %v6134 = vadd.f32 %v5686, %v6058
  %v6135 = vadd.f32 %v5687, %v6063
  %v6136 = vadd.f32 %v5688, %v6068
  %v6137 = vadd.f32 %v5689, %v6073
  %s6138 = scalar_lea.vmem %s6, 112
  %v6139 = vld [vmem:[%s6138] sm:$0xff]
  %v6140 = vld [vmem:[%s6138 + $0x8] sm:$0x3]
  %v6141 = vrot.slane %v2445, 1
  %v6142 = vsel %vm866, %v4790, %v6141
  %v6143 = vrot.slane %v2446, 1
  %v6144 = vsel %vm866, %v6141, %v6143
  %v6145 = vsel %vm1615, %v6142, 0
  %v6147 = vsel %vm1615, %v6144, 0
  %v6149 = vsel %vm1615, %v6143, 0
  %v6152 = vsel %vm2762, %v6140, 0
  %6154 = vmatprep.subr.mxu0 0.0
  %6155 = vmatpush1.msra.mxu0 %v6139
  %6156 = vmatprep.subr.mxu0 0.0
  %6157 = vmatpush1.msra.mxu0 %v6152
  %6158 = vmatprep.subr.mxu0 0.0
  %6159 = vmatpush1.msra.mxu0 0.0
  %6160 = vmatprep.subr.mxu0 0.0
  %6161 = vmatpush1.msra.mxu0 0.0
  %6162 = vmatprep.subr.mxu0 0.0
  %6163 = vmatpush1.msra.mxu0 0.0
  %6164 = vmatprep.subr.mxu0 0.0
  %6165 = vmatpush1.msra.mxu0 0.0
  %6166 = vmatprep.subr.mxu0 0.0
  %6167 = vmatpush1.msra.mxu0 0.0
  %6168 = vmatprep.subr.mxu0 0.0
  %6169 = vmatpush1.msra.mxu0 0.0
  %6170 = vmatprep.subr.mxu0 0.0
  %6171 = vmatpush1.msra.mxu0 0.0
  %6172 = vmatprep.subr.mxu0 0.0
  %6173 = vmatpush1.msra.mxu0 0.0
  %6174 = vmatprep.subr.mxu0 0.0
  %6175 = vmatpush1.msra.mxu0 0.0
  %6176 = vmatprep.subr.mxu0 0.0
  %6177 = vmatpush1.msra.mxu0 0.0
  %6178 = vmatprep.subr.mxu0 0.0
  %6179 = vmatpush1.msra.mxu0 0.0
  %6180 = vmatprep.subr.mxu0 0.0
  %6181 = vmatpush1.msra.mxu0 0.0
  %6182 = vmatprep.subr.mxu0 0.0
  %6183 = vmatpush1.msra.mxu0 0.0
  %6184 = vmatprep.subr.mxu0 0.0
  %6185 = vmatpush1.msra.mxu0 0.0
  %6186 = vmatprep.subr.mxu0 0.0
  %6187 = vmatpush1.msra.mxu0 0.0
  %6188 = vmatprep.subr.mxu0 0.0
  %6189 = vmatpush1.msra.mxu0 0.0
  %6190 = vmatprep.subr.mxu0 0.0
  %6191 = vmatpush1.msra.mxu0 0.0
  %6192 = vmatprep.subr.mxu0 0.0
  %6193 = vmatpush1.msra.mxu0 0.0
  %6194 = vmatprep.subr.mxu0 0.0
  %6195 = vmatpush1.msra.mxu0 0.0
  %6196 = vmatprep.subr.mxu0 0.0
  %6197 = vmatpush1.msra.mxu0 0.0
  %6198 = vmatprep.subr.mxu0 0.0
  %6199 = vmatpush1.msra.mxu0 0.0
  %6200 = vmatprep.subr.mxu0 0.0
  %6201 = vmatpush1.msra.mxu0 0.0
  %6202 = vmatprep.subr.mxu0 0.0
  %6203 = vmatpush1.msra.mxu0 0.0
  %6204 = vmatprep.subr.mxu0 0.0
  %6205 = vmatpush1.msra.mxu0 0.0
  %6206 = vmatprep.subr.mxu0 0.0
  %6207 = vmatpush1.msra.mxu0 0.0
  %6208 = vmatprep.subr.mxu0 0.0
  %6209 = vmatpush1.msra.mxu0 0.0
  %6210 = vmatprep.subr.mxu0 0.0
  %6211 = vmatpush1.msra.mxu0 0.0
  %6212 = vmatprep.subr.mxu0 0.0
  %6213 = vmatpush1.msra.mxu0 0.0
  %6214 = vmatprep.subr.mxu0 0.0
  %6215 = vmatpush1.msra.mxu0 0.0
  %6216 = vmatprep.subr.mxu0 0.0
  %6217 = vmatpush1.msra.mxu0 0.0
  %6218 = vmatprep.mubr.f32.mxu0 0.0
  %6219 = vmatmul.mubr.f32.gmra.mrb[0].mxu0 %v2646
  %v6220 = vpop.f32.mrb[0].mxu0
  %v6221 = vadd.f32 0.0, %v6220
  %v6222 = vpop.f32.mrb[0].mxu0
  %6223 = vmatprep.mubr.f32.mxu0 0.0
  %6224 = vmatmul.mubr.f32.gmra.mrb[0].mxu0 %v2648
  %v6225 = vpop.f32.mrb[0].mxu0
  %v6226 = vadd.f32 0.0, %v6225
  %v6227 = vpop.f32.mrb[0].mxu0
  %6228 = vmatprep.mubr.f32.mxu0 0.0
  %6229 = vmatmul.mubr.f32.gmra.mrb[0].mxu0 %v2650
  %v6230 = vpop.f32.mrb[0].mxu0
  %v6231 = vadd.f32 0.0, %v6230
  %v6232 = vpop.f32.mrb[0].mxu0
  %6233 = vmatprep.mubr.f32.mxu0 0.0
  %6234 = vmatmul.mubr.f32.gmra.mrb[0].mxu0 %v2652
  %v6235 = vpop.f32.mrb[0].mxu0
  %v6236 = vadd.f32 0.0, %v6235
  %v6237 = vpop.f32.mrb[0].mxu0
  %6238 = vmatprep.mubr.f32.mxu0 0.0
  %6239 = vmatmul.mubr.f32.gmra.mrb[0].mxu0 %v2654
  %v6240 = vpop.f32.mrb[0].mxu0
  %v6241 = vadd.f32 0.0, %v6240
  %v6242 = vpop.f32.mrb[0].mxu0
  %6243 = vmatprep.mubr.f32.mxu0 0.0
  %6244 = vmatmul.mubr.f32.gmra.mrb[0].mxu0 %v2656
  %v6245 = vpop.f32.mrb[0].mxu0
  %v6246 = vadd.f32 0.0, %v6245
  %v6247 = vpop.f32.mrb[0].mxu0
  %6248 = vmatprep.mubr.f32.mxu0 0.0
  %6249 = vmatmul.mubr.f32.gmra.mrb[0].mxu0 %v2658
  %v6250 = vpop.f32.mrb[0].mxu0
  %v6251 = vadd.f32 0.0, %v6250
  %v6252 = vpop.f32.mrb[0].mxu0
  %6253 = vmatprep.mubr.f32.mxu0 0.0
  %6254 = vmatmul.mubr.f32.gmra.mrb[0].mxu0 %v2660
  %v6255 = vpop.f32.mrb[0].mxu0
  %v6256 = vadd.f32 0.0, %v6255
  %v6257 = vpop.f32.mrb[0].mxu0
  %6258 = vmatprep.mubr.f32.mxu0 0.0
  %6259 = vmatmul.mubr.f32.gmra.mrb[0].mxu0 %v2662
  %v6260 = vpop.f32.mrb[0].mxu0
  %v6261 = vadd.f32 0.0, %v6260
  %v6262 = vpop.f32.mrb[0].mxu0
  %6263 = vmatprep.mubr.f32.mxu0 0.0
  %6264 = vmatmul.mubr.f32.gmra.mrb[0].mxu0 %v2664
  %v6265 = vpop.f32.mrb[0].mxu0
  %v6266 = vadd.f32 0.0, %v6265
  %v6267 = vpop.f32.mrb[0].mxu0
  %6268 = vmatprep.mubr.f32.mxu0 0.0
  %6269 = vmatmul.mubr.f32.gmra.mrb[0].mxu0 %v2666
  %v6270 = vpop.f32.mrb[0].mxu0
  %v6271 = vadd.f32 0.0, %v6270
  %v6272 = vpop.f32.mrb[0].mxu0
  %6273 = vmatprep.mubr.f32.mxu0 0.0
  %6274 = vmatmul.mubr.f32.gmra.mrb[0].mxu0 %v2668
  %v6275 = vpop.f32.mrb[0].mxu0
  %v6276 = vadd.f32 0.0, %v6275
  %v6277 = vpop.f32.mrb[0].mxu0
  %6278 = vmatprep.mubr.f32.mxu0 0.0
  %6279 = vmatmul.mubr.f32.gmra.mrb[0].mxu0 %v2670
  %v6280 = vpop.f32.mrb[0].mxu0
  %v6281 = vadd.f32 0.0, %v6280
  %v6282 = vpop.f32.mrb[0].mxu0
  %6283 = vmatprep.mubr.f32.mxu0 0.0
  %6284 = vmatmul.mubr.f32.gmra.mrb[0].mxu0 %v2672
  %v6285 = vpop.f32.mrb[0].mxu0
  %v6286 = vadd.f32 0.0, %v6285
  %v6287 = vpop.f32.mrb[0].mxu0
  %6288 = vmatprep.mubr.f32.mxu0 0.0
  %6289 = vmatmul.mubr.f32.gmra.mrb[0].mxu0 %v2674
  %v6290 = vpop.f32.mrb[0].mxu0
  %v6291 = vadd.f32 0.0, %v6290
  %v6292 = vpop.f32.mrb[0].mxu0
  %6293 = vmatprep.mubr.f32.mxu0 0.0
  %6294 = vmatmul.mubr.f32.gmra.mrb[0].mxu0 %v2676
  %v6295 = vpop.f32.mrb[0].mxu0
  %v6296 = vadd.f32 0.0, %v6295
  %v6297 = vpop.f32.mrb[0].mxu0
  %6298 = vmatprep.mubr.f32.mxu0 0.0
  %6299 = vmatmul.mubr.f32.gmra.mrb[0].mxu0 %v2678
  %v6300 = vpop.f32.mrb[0].mxu0
  %v6301 = vadd.f32 0.0, %v6300
  %v6302 = vpop.f32.mrb[0].mxu0
  %6303 = vmatprep.mubr.f32.mxu0 0.0
  %6304 = vmatmul.mubr.f32.gmra.mrb[0].mxu0 %v2680
  %v6305 = vpop.f32.mrb[0].mxu0
  %v6306 = vadd.f32 0.0, %v6305
  %v6307 = vpop.f32.mrb[0].mxu0
  %6308 = vmatprep.mubr.f32.mxu0 0.0
  %6309 = vmatmul.mubr.f32.gmra.mrb[0].mxu0 %v2682
  %v6310 = vpop.f32.mrb[0].mxu0
  %v6311 = vadd.f32 0.0, %v6310
  %v6312 = vpop.f32.mrb[0].mxu0
  %6313 = vmatprep.mubr.f32.mxu0 0.0
  %6314 = vmatmul.mubr.f32.gmra.mrb[0].mxu0 %v2684
  %v6315 = vpop.f32.mrb[0].mxu0
  %v6316 = vadd.f32 0.0, %v6315
  %v6317 = vpop.f32.mrb[0].mxu0
  %6318 = vmatprep.mubr.f32.mxu0 0.0
  %6319 = vmatmul.mubr.f32.gmra.mrb[0].mxu0 %v2686
  %v6320 = vpop.f32.mrb[0].mxu0
  %v6321 = vadd.f32 0.0, %v6320
  %v6322 = vpop.f32.mrb[0].mxu0
  %6323 = vmatprep.mubr.f32.mxu0 0.0
  %6324 = vmatmul.mubr.f32.gmra.mrb[0].mxu0 %v2688
  %v6325 = vpop.f32.mrb[0].mxu0
  %v6326 = vadd.f32 0.0, %v6325
  %v6327 = vpop.f32.mrb[0].mxu0
  %6328 = vmatprep.mubr.f32.mxu0 0.0
  %6329 = vmatmul.mubr.f32.gmra.mrb[0].mxu0 %v2690
  %v6330 = vpop.f32.mrb[0].mxu0
  %v6331 = vadd.f32 0.0, %v6330
  %v6332 = vpop.f32.mrb[0].mxu0
  %6333 = vmatprep.mubr.f32.mxu0 0.0
  %6334 = vmatmul.mubr.f32.gmra.mrb[0].mxu0 %v2692
  %v6335 = vpop.f32.mrb[0].mxu0
  %v6336 = vadd.f32 0.0, %v6335
  %v6337 = vpop.f32.mrb[0].mxu0
  %6338 = vmatprep.mubr.f32.mxu0 0.0
  %6339 = vmatmul.mubr.f32.gmra.mrb[0].mxu0 %v2694
  %v6340 = vpop.f32.mrb[0].mxu0
  %v6341 = vadd.f32 0.0, %v6340
  %v6342 = vpop.f32.mrb[0].mxu0
  %6343 = vmatprep.mubr.f32.mxu0 0.0
  %6344 = vmatmul.mubr.f32.gmra.mrb[0].mxu0 %v2696
  %v6345 = vpop.f32.mrb[0].mxu0
  %v6346 = vadd.f32 0.0, %v6345
  %v6347 = vpop.f32.mrb[0].mxu0
  %6348 = vmatprep.mubr.f32.mxu0 0.0
  %6349 = vmatmul.mubr.f32.gmra.mrb[0].mxu0 %v2698
  %v6350 = vpop.f32.mrb[0].mxu0
  %v6351 = vadd.f32 0.0, %v6350
  %v6352 = vpop.f32.mrb[0].mxu0
  %6353 = vmatprep.mubr.f32.mxu0 0.0
  %6354 = vmatmul.mubr.f32.gmra.mrb[0].mxu0 %v2700
  %v6355 = vpop.f32.mrb[0].mxu0
  %v6356 = vadd.f32 0.0, %v6355
  %v6357 = vpop.f32.mrb[0].mxu0
  %6358 = vmatprep.mubr.f32.mxu0 0.0
  %6359 = vmatmul.mubr.f32.gmra.mrb[0].mxu0 %v2702
  %v6360 = vpop.f32.mrb[0].mxu0
  %v6361 = vadd.f32 0.0, %v6360
  %v6362 = vpop.f32.mrb[0].mxu0
  %6363 = vmatprep.mubr.f32.mxu0 0.0
  %6364 = vmatmul.mubr.f32.gmra.mrb[0].mxu0 %v2704
  %v6365 = vpop.f32.mrb[0].mxu0
  %v6366 = vadd.f32 0.0, %v6365
  %v6367 = vpop.f32.mrb[0].mxu0
  %6368 = vmatprep.mubr.f32.mxu0 0.0
  %6369 = vmatmul.mubr.f32.gmra.mrb[0].mxu0 %v2706
  %v6370 = vpop.f32.mrb[0].mxu0
  %v6371 = vadd.f32 0.0, %v6370
  %v6372 = vpop.f32.mrb[0].mxu0
  %6373 = vmatprep.mubr.f32.mxu0 0.0
  %6374 = vmatmul.mubr.f32.gmra.mrb[0].mxu0 %v2708
  %v6375 = vpop.f32.mrb[0].mxu0
  %v6376 = vadd.f32 0.0, %v6375
  %v6377 = vpop.f32.mrb[0].mxu0
  %6378 = vmatprep.mubr.f32.mxu0 0.0
  %6379 = vmatmul.mubr.f32.gmra.mrb[0].mxu0 %v2710
  %v6380 = vpop.f32.mrb[0].mxu0
  %v6381 = vadd.f32 0.0, %v6380
  %v6382 = vpop.f32.mrb[0].mxu0
  %6383 = vmatprep.mubr.f32.mxu0 0.0
  %6384 = vmatmul.mubr.f32.gmra.mrb[0].mxu0 %v2712
  %v6385 = vpop.f32.mrb[0].mxu0
  %v6386 = vadd.f32 0.0, %v6385
  %v6387 = vpop.f32.mrb[0].mxu0
  %6388 = vmatprep.mubr.f32.mxu0 0.0
  %6389 = vmatmul.mubr.f32.gmra.mrb[0].mxu0 %v2714
  %v6390 = vpop.f32.mrb[0].mxu0
  %v6391 = vadd.f32 0.0, %v6390
  %v6392 = vpop.f32.mrb[0].mxu0
  %6393 = vmatprep.mubr.f32.mxu0 0.0
  %6394 = vmatmul.mubr.f32.gmra.mrb[0].mxu0 %v2716
  %v6395 = vpop.f32.mrb[0].mxu0
  %v6396 = vadd.f32 0.0, %v6395
  %v6397 = vpop.f32.mrb[0].mxu0
  %6398 = vmatprep.mubr.f32.mxu0 0.0
  %6399 = vmatmul.mubr.f32.gmra.mrb[0].mxu0 %v2718
  %v6400 = vpop.f32.mrb[0].mxu0
  %v6401 = vadd.f32 0.0, %v6400
  %v6402 = vpop.f32.mrb[0].mxu0
  %6403 = vmatprep.mubr.f32.mxu0 0.0
  %6404 = vmatmul.mubr.f32.gmra.mrb[0].mxu0 %v2720
  %v6405 = vpop.f32.mrb[0].mxu0
  %v6406 = vadd.f32 0.0, %v6405
  %v6407 = vpop.f32.mrb[0].mxu0
  %6408 = vmatprep.mubr.f32.mxu0 0.0
  %6409 = vmatmul.mubr.f32.gmra.mrb[0].mxu0 %v2722
  %v6410 = vpop.f32.mrb[0].mxu0
  %v6411 = vadd.f32 0.0, %v6410
  %v6412 = vpop.f32.mrb[0].mxu0
  %6413 = vmatprep.mubr.f32.mxu0 0.0
  %6414 = vmatmul.mubr.f32.gmra.mrb[0].mxu0 %v2724
  %v6415 = vpop.f32.mrb[0].mxu0
  %v6416 = vadd.f32 0.0, %v6415
  %v6417 = vpop.f32.mrb[0].mxu0
  %6418 = vmatprep.mubr.f32.mxu0 0.0
  %6419 = vmatmul.mubr.f32.gmra.mrb[0].mxu0 %v2726
  %v6420 = vpop.f32.mrb[0].mxu0
  %v6421 = vadd.f32 0.0, %v6420
  %v6422 = vpop.f32.mrb[0].mxu0
  %6423 = vmatprep.mubr.f32.mxu0 0.0
  %6424 = vmatmul.mubr.f32.gmra.mrb[0].mxu0 %v2728
  %v6425 = vpop.f32.mrb[0].mxu0
  %v6426 = vadd.f32 0.0, %v6425
  %v6427 = vpop.f32.mrb[0].mxu0
  %6428 = vmatprep.mubr.f32.mxu0 0.0
  %6429 = vmatmul.mubr.f32.gmra.mrb[0].mxu0 %v2730
  %v6430 = vpop.f32.mrb[0].mxu0
  %v6431 = vadd.f32 0.0, %v6430
  %v6432 = vpop.f32.mrb[0].mxu0
  %6433 = vmatprep.mubr.f32.mxu0 0.0
  %6434 = vmatmul.mubr.f32.gmra.mrb[0].mxu0 %v2732
  %v6435 = vpop.f32.mrb[0].mxu0
  %v6436 = vadd.f32 0.0, %v6435
  %v6437 = vpop.f32.mrb[0].mxu0
  %6438 = vmatprep.mubr.f32.mxu0 0.0
  %6439 = vmatmul.mubr.f32.gmra.mrb[0].mxu0 %v2734
  %v6440 = vpop.f32.mrb[0].mxu0
  %v6441 = vadd.f32 0.0, %v6440
  %v6442 = vpop.f32.mrb[0].mxu0
  %6443 = vmatprep.mubr.f32.mxu0 0.0
  %6444 = vmatmul.mubr.f32.gmra.mrb[0].mxu0 %v2736
  %v6445 = vpop.f32.mrb[0].mxu0
  %v6446 = vadd.f32 0.0, %v6445
  %v6447 = vpop.f32.mrb[0].mxu0
  %6448 = vmatprep.mubr.f32.mxu0 0.0
  %6449 = vmatmul.mubr.f32.gmra.mrb[0].mxu0 %v2738
  %v6450 = vpop.f32.mrb[0].mxu0
  %v6451 = vadd.f32 0.0, %v6450
  %v6452 = vpop.f32.mrb[0].mxu0
  %6453 = vmatprep.mubr.f32.mxu0 0.0
  %6454 = vmatmul.mubr.f32.gmra.mrb[0].mxu0 %v2740
  %v6455 = vpop.f32.mrb[0].mxu0
  %v6456 = vadd.f32 0.0, %v6455
  %v6457 = vpop.f32.mrb[0].mxu0
  %6458 = vmatprep.mubr.f32.mxu0 0.0
  %6459 = vmatmul.mubr.f32.gmra.mrb[0].mxu0 %v2742
  %v6460 = vpop.f32.mrb[0].mxu0
  %v6461 = vadd.f32 0.0, %v6460
  %v6462 = vpop.f32.mrb[0].mxu0
  %6463 = vmatprep.mubr.f32.mxu0 0.0
  %6464 = vmatmul.mubr.f32.gmra.mrb[0].mxu0 %v2744
  %v6465 = vpop.f32.mrb[0].mxu0
  %v6466 = vadd.f32 0.0, %v6465
  %v6467 = vpop.f32.mrb[0].mxu0
  %6468 = vmatprep.mubr.f32.mxu0 0.0
  %6469 = vmatmul.mubr.f32.gmra.mrb[0].mxu0 %v2746
  %v6470 = vpop.f32.mrb[0].mxu0
  %v6471 = vadd.f32 0.0, %v6470
  %v6472 = vpop.f32.mrb[0].mxu0
  %6473 = vmatprep.mubr.f32.mxu0 0.0
  %6474 = vmatmul.mubr.f32.gmra.mrb[0].mxu0 %v2748
  %v6475 = vpop.f32.mrb[0].mxu0
  %v6476 = vadd.f32 0.0, %v6475
  %v6477 = vpop.f32.mrb[0].mxu0
  %6478 = vmatprep.mubr.f32.mxu0 0.0
  %6479 = vmatmul.mubr.f32.gmra.mrb[0].mxu0 %v2750
  %v6480 = vpop.f32.mrb[0].mxu0
  %v6481 = vadd.f32 0.0, %v6480
  %v6482 = vpop.f32.mrb[0].mxu0
  %6483 = vmatprep.mubr.f32.mxu0 0.0
  %6484 = vmatmul.mubr.f32.gmra.mrb[0].mxu0 %v2752
  %v6485 = vpop.f32.mrb[0].mxu0
  %v6486 = vadd.f32 0.0, %v6485
  %v6487 = vpop.f32.mrb[0].mxu0
  %6488 = vmatprep.mubr.f32.mxu0 0.0
  %6489 = vmatmul.mubr.f32.gmra.mrb[0].mxu0 %v2754
  %v6490 = vpop.f32.mrb[0].mxu0
  %v6491 = vadd.f32 0.0, %v6490
  %v6492 = vpop.f32.mrb[0].mxu0
  %6493 = vmatprep.mubr.f32.mxu0 0.0
  %6494 = vmatmul.mubr.f32.gmra.mrb[0].mxu0 %v2756
  %v6495 = vpop.f32.mrb[0].mxu0
  %v6496 = vadd.f32 0.0, %v6495
  %v6497 = vpop.f32.mrb[0].mxu0
  %6498 = vmatprep.mubr.f32.mxu0 0.0
  %6499 = vmatmul.mubr.f32.gmra.mrb[0].mxu0 %v2758
  %v6500 = vpop.f32.mrb[0].mxu0
  %v6501 = vadd.f32 0.0, %v6500
  %v6502 = vpop.f32.mrb[0].mxu0
  %6503 = vmatprep.mubr.f32.mxu0 0.0
  %6504 = vmatmul.mubr.f32.gmra.mrb[0].mxu0 %v4792
  %v6505 = vpop.f32.mrb[0].mxu0
  %v6506 = vadd.f32 0.0, %v6505
  %v6507 = vpop.f32.mrb[0].mxu0
  %6508 = vmatprep.mubr.f32.mxu0 0.0
  %6509 = vmatmul.mubr.f32.gmra.mrb[0].mxu0 %v4794
  %v6510 = vpop.f32.mrb[0].mxu0
  %v6511 = vadd.f32 0.0, %v6510
  %v6512 = vpop.f32.mrb[0].mxu0
  %6513 = vmatprep.mubr.f32.mxu0 0.0
  %6514 = vmatmul.mubr.f32.gmra.mrb[0].mxu0 %v6145
  %v6515 = vpop.f32.mrb[0].mxu0
  %v6516 = vadd.f32 0.0, %v6515
  %v6517 = vpop.f32.mrb[0].mxu0
  %6518 = vmatprep.mubr.f32.mxu0 0.0
  %6519 = vmatmul.mubr.f32.gmra.mrb[0].mxu0 %v6147
  %v6520 = vpop.f32.mrb[0].mxu0
  %v6521 = vadd.f32 0.0, %v6520
  %v6522 = vpop.f32.mrb[0].mxu0
  %6523 = vmatprep.mubr.f32.mxu0 0.0
  %6524 = vmatmul.mubr.f32.gmra.mrb[0].mxu0 %v6149
  %v6525 = vpop.f32.mrb[0].mxu0
  %v6526 = vadd.f32 0.0, %v6525
  %v6527 = vpop.f32.mrb[0].mxu0
  %6528 = vdwg.mxu0
  %v6529 = vadd.f32 %v6076, %v6221
  %v6530 = vadd.f32 %v6077, %v6226
  %v6531 = vadd.f32 %v6078, %v6231
  %v6532 = vadd.f32 %v6079, %v6236
  %v6533 = vadd.f32 %v6080, %v6241
  %v6534 = vadd.f32 %v6081, %v6246
  %v6535 = vadd.f32 %v6082, %v6251
  %v6536 = vadd.f32 %v6083, %v6256
  %v6537 = vadd.f32 %v6084, %v6261
  %v6538 = vadd.f32 %v6085, %v6266
  %v6539 = vadd.f32 %v6086, %v6271
  %v6540 = vadd.f32 %v6087, %v6276
  %v6541 = vadd.f32 %v6088, %v6281
  %v6542 = vadd.f32 %v6089, %v6286
  %v6543 = vadd.f32 %v6090, %v6291
  %v6544 = vadd.f32 %v6091, %v6296
  %v6545 = vadd.f32 %v6092, %v6301
  %v6546 = vadd.f32 %v6093, %v6306
  %v6547 = vadd.f32 %v6094, %v6311
  %v6548 = vadd.f32 %v6095, %v6316
  %v6549 = vadd.f32 %v6096, %v6321
  %v6550 = vadd.f32 %v6097, %v6326
  %v6551 = vadd.f32 %v6098, %v6331
  %v6552 = vadd.f32 %v6099, %v6336
  %v6553 = vadd.f32 %v6100, %v6341
  %v6554 = vadd.f32 %v6101, %v6346
  %v6555 = vadd.f32 %v6102, %v6351
  %v6556 = vadd.f32 %v6103, %v6356
  %v6557 = vadd.f32 %v6104, %v6361
  %v6558 = vadd.f32 %v6105, %v6366
  %v6559 = vadd.f32 %v6106, %v6371
  %v6560 = vadd.f32 %v6107, %v6376
  %v6561 = vadd.f32 %v6108, %v6381
  %v6562 = vadd.f32 %v6109, %v6386
  %v6563 = vadd.f32 %v6110, %v6391
  %v6564 = vadd.f32 %v6111, %v6396
  %v6565 = vadd.f32 %v6112, %v6401
  %v6566 = vadd.f32 %v6113, %v6406
  %v6567 = vadd.f32 %v6114, %v6411
  %v6568 = vadd.f32 %v6115, %v6416
  %v6569 = vadd.f32 %v6116, %v6421
  %v6570 = vadd.f32 %v6117, %v6426
  %v6571 = vadd.f32 %v6118, %v6431
  %v6572 = vadd.f32 %v6119, %v6436
  %v6573 = vadd.f32 %v6120, %v6441
  %v6574 = vadd.f32 %v6121, %v6446
  %v6575 = vadd.f32 %v6122, %v6451
  %v6576 = vadd.f32 %v6123, %v6456
  %v6577 = vadd.f32 %v6124, %v6461
  %v6578 = vadd.f32 %v6125, %v6466
  %v6579 = vadd.f32 %v6126, %v6471
  %v6580 = vadd.f32 %v6127, %v6476
  %v6581 = vadd.f32 %v6128, %v6481
  %v6582 = vadd.f32 %v6129, %v6486
  %v6583 = vadd.f32 %v6130, %v6491
  %v6584 = vadd.f32 %v6131, %v6496
  %v6585 = vadd.f32 %v6132, %v6501
  %v6586 = vadd.f32 %v6133, %v6506
  %v6587 = vadd.f32 %v6134, %v6511
  %v6588 = vadd.f32 %v6135, %v6516
  %v6589 = vadd.f32 %v6136, %v6521
  %v6590 = vadd.f32 %v6137, %v6526
  %s6591 = scalar_lea.vmem %s6, 128
  %v6592 = vld [vmem:[%s6591] sm:$0xff]
  %v6593 = vld [vmem:[%s6591 + $0x8] sm:$0x3]
  %v6595 = vrot.slane %v2446, 2
  %v6596 = vsel %vm3647, %v5244, %v6595
  %v6597 = vrot.slane %v2447, 2
  %v6598 = vsel %vm3647, %v6595, %v6597
  %v6599 = vsel %vm1615, %v6596, 0
  %v6601 = vsel %vm1615, %v6598, 0
  %v6604 = vsel %vm2762, %v6593, 0
  %6606 = vmatprep.subr.mxu0 0.0
  %6607 = vmatpush1.msra.mxu0 %v6592
  %6608 = vmatprep.subr.mxu0 0.0
  %6609 = vmatpush1.msra.mxu0 %v6604
  %6610 = vmatprep.subr.mxu0 0.0
  %6611 = vmatpush1.msra.mxu0 0.0
  %6612 = vmatprep.subr.mxu0 0.0
  %6613 = vmatpush1.msra.mxu0 0.0
  %6614 = vmatprep.subr.mxu0 0.0
  %6615 = vmatpush1.msra.mxu0 0.0
  %6616 = vmatprep.subr.mxu0 0.0
  %6617 = vmatpush1.msra.mxu0 0.0
  %6618 = vmatprep.subr.mxu0 0.0
  %6619 = vmatpush1.msra.mxu0 0.0
  %6620 = vmatprep.subr.mxu0 0.0
  %6621 = vmatpush1.msra.mxu0 0.0
  %6622 = vmatprep.subr.mxu0 0.0
  %6623 = vmatpush1.msra.mxu0 0.0
  %6624 = vmatprep.subr.mxu0 0.0
  %6625 = vmatpush1.msra.mxu0 0.0
  %6626 = vmatprep.subr.mxu0 0.0
  %6627 = vmatpush1.msra.mxu0 0.0
  %6628 = vmatprep.subr.mxu0 0.0
  %6629 = vmatpush1.msra.mxu0 0.0
  %6630 = vmatprep.subr.mxu0 0.0
  %6631 = vmatpush1.msra.mxu0 0.0
  %6632 = vmatprep.subr.mxu0 0.0
  %6633 = vmatpush1.msra.mxu0 0.0
  %6634 = vmatprep.subr.mxu0 0.0
  %6635 = vmatpush1.msra.mxu0 0.0
  %6636 = vmatprep.subr.mxu0 0.0
  %6637 = vmatpush1.msra.mxu0 0.0
  %6638 = vmatprep.subr.mxu0 0.0
  %6639 = vmatpush1.msra.mxu0 0.0
  %6640 = vmatprep.subr.mxu0 0.0
  %6641 = vmatpush1.msra.mxu0 0.0
  %6642 = vmatprep.subr.mxu0 0.0
  %6643 = vmatpush1.msra.mxu0 0.0
  %6644 = vmatprep.subr.mxu0 0.0
  %6645 = vmatpush1.msra.mxu0 0.0
  %6646 = vmatprep.subr.mxu0 0.0
  %6647 = vmatpush1.msra.mxu0 0.0
  %6648 = vmatprep.subr.mxu0 0.0
  %6649 = vmatpush1.msra.mxu0 0.0
  %6650 = vmatprep.subr.mxu0 0.0
  %6651 = vmatpush1.msra.mxu0 0.0
  %6652 = vmatprep.subr.mxu0 0.0
  %6653 = vmatpush1.msra.mxu0 0.0
  %6654 = vmatprep.subr.mxu0 0.0
  %6655 = vmatpush1.msra.mxu0 0.0
  %6656 = vmatprep.subr.mxu0 0.0
  %6657 = vmatpush1.msra.mxu0 0.0
  %6658 = vmatprep.subr.mxu0 0.0
  %6659 = vmatpush1.msra.mxu0 0.0
  %6660 = vmatprep.subr.mxu0 0.0
  %6661 = vmatpush1.msra.mxu0 0.0
  %6662 = vmatprep.subr.mxu0 0.0
  %6663 = vmatpush1.msra.mxu0 0.0
  %6664 = vmatprep.subr.mxu0 0.0
  %6665 = vmatpush1.msra.mxu0 0.0
  %6666 = vmatprep.subr.mxu0 0.0
  %6667 = vmatpush1.msra.mxu0 0.0
  %6668 = vmatprep.subr.mxu0 0.0
  %6669 = vmatpush1.msra.mxu0 0.0
  %6670 = vmatprep.mubr.f32.mxu0 0.0
  %6671 = vmatmul.mubr.f32.gmra.mrb[0].mxu0 %v3781
  %v6672 = vpop.f32.mrb[0].mxu0
  %v6673 = vadd.f32 0.0, %v6672
  %v6674 = vpop.f32.mrb[0].mxu0
  %6675 = vmatprep.mubr.f32.mxu0 0.0
  %6676 = vmatmul.mubr.f32.gmra.mrb[0].mxu0 %v3783
  %v6677 = vpop.f32.mrb[0].mxu0
  %v6678 = vadd.f32 0.0, %v6677
  %v6679 = vpop.f32.mrb[0].mxu0
  %6680 = vmatprep.mubr.f32.mxu0 0.0
  %6681 = vmatmul.mubr.f32.gmra.mrb[0].mxu0 %v3785
  %v6682 = vpop.f32.mrb[0].mxu0
  %v6683 = vadd.f32 0.0, %v6682
  %v6684 = vpop.f32.mrb[0].mxu0
  %6685 = vmatprep.mubr.f32.mxu0 0.0
  %6686 = vmatmul.mubr.f32.gmra.mrb[0].mxu0 %v3787
  %v6687 = vpop.f32.mrb[0].mxu0
  %v6688 = vadd.f32 0.0, %v6687
  %v6689 = vpop.f32.mrb[0].mxu0
  %6690 = vmatprep.mubr.f32.mxu0 0.0
  %6691 = vmatmul.mubr.f32.gmra.mrb[0].mxu0 %v3789
  %v6692 = vpop.f32.mrb[0].mxu0
  %v6693 = vadd.f32 0.0, %v6692
  %v6694 = vpop.f32.mrb[0].mxu0
  %6695 = vmatprep.mubr.f32.mxu0 0.0
  %6696 = vmatmul.mubr.f32.gmra.mrb[0].mxu0 %v3791
  %v6697 = vpop.f32.mrb[0].mxu0
  %v6698 = vadd.f32 0.0, %v6697
  %v6699 = vpop.f32.mrb[0].mxu0
  %6700 = vmatprep.mubr.f32.mxu0 0.0
  %6701 = vmatmul.mubr.f32.gmra.mrb[0].mxu0 %v3793
  %v6702 = vpop.f32.mrb[0].mxu0
  %v6703 = vadd.f32 0.0, %v6702
  %v6704 = vpop.f32.mrb[0].mxu0
  %6705 = vmatprep.mubr.f32.mxu0 0.0
  %6706 = vmatmul.mubr.f32.gmra.mrb[0].mxu0 %v3795
  %v6707 = vpop.f32.mrb[0].mxu0
  %v6708 = vadd.f32 0.0, %v6707
  %v6709 = vpop.f32.mrb[0].mxu0
  %6710 = vmatprep.mubr.f32.mxu0 0.0
  %6711 = vmatmul.mubr.f32.gmra.mrb[0].mxu0 %v3797
  %v6712 = vpop.f32.mrb[0].mxu0
  %v6713 = vadd.f32 0.0, %v6712
  %v6714 = vpop.f32.mrb[0].mxu0
  %6715 = vmatprep.mubr.f32.mxu0 0.0
  %6716 = vmatmul.mubr.f32.gmra.mrb[0].mxu0 %v3799
  %v6717 = vpop.f32.mrb[0].mxu0
  %v6718 = vadd.f32 0.0, %v6717
  %v6719 = vpop.f32.mrb[0].mxu0
  %6720 = vmatprep.mubr.f32.mxu0 0.0
  %6721 = vmatmul.mubr.f32.gmra.mrb[0].mxu0 %v3801
  %v6722 = vpop.f32.mrb[0].mxu0
  %v6723 = vadd.f32 0.0, %v6722
  %v6724 = vpop.f32.mrb[0].mxu0
  %6725 = vmatprep.mubr.f32.mxu0 0.0
  %6726 = vmatmul.mubr.f32.gmra.mrb[0].mxu0 %v3803
  %v6727 = vpop.f32.mrb[0].mxu0
  %v6728 = vadd.f32 0.0, %v6727
  %v6729 = vpop.f32.mrb[0].mxu0
  %6730 = vmatprep.mubr.f32.mxu0 0.0
  %6731 = vmatmul.mubr.f32.gmra.mrb[0].mxu0 %v3805
  %v6732 = vpop.f32.mrb[0].mxu0
  %v6733 = vadd.f32 0.0, %v6732
  %v6734 = vpop.f32.mrb[0].mxu0
  %6735 = vmatprep.mubr.f32.mxu0 0.0
  %6736 = vmatmul.mubr.f32.gmra.mrb[0].mxu0 %v3807
  %v6737 = vpop.f32.mrb[0].mxu0
  %v6738 = vadd.f32 0.0, %v6737
  %v6739 = vpop.f32.mrb[0].mxu0
  %6740 = vmatprep.mubr.f32.mxu0 0.0
  %6741 = vmatmul.mubr.f32.gmra.mrb[0].mxu0 %v3809
  %v6742 = vpop.f32.mrb[0].mxu0
  %v6743 = vadd.f32 0.0, %v6742
  %v6744 = vpop.f32.mrb[0].mxu0
  %6745 = vmatprep.mubr.f32.mxu0 0.0
  %6746 = vmatmul.mubr.f32.gmra.mrb[0].mxu0 %v3811
  %v6747 = vpop.f32.mrb[0].mxu0
  %v6748 = vadd.f32 0.0, %v6747
  %v6749 = vpop.f32.mrb[0].mxu0
  %6750 = vmatprep.mubr.f32.mxu0 0.0
  %6751 = vmatmul.mubr.f32.gmra.mrb[0].mxu0 %v3813
  %v6752 = vpop.f32.mrb[0].mxu0
  %v6753 = vadd.f32 0.0, %v6752
  %v6754 = vpop.f32.mrb[0].mxu0
  %6755 = vmatprep.mubr.f32.mxu0 0.0
  %6756 = vmatmul.mubr.f32.gmra.mrb[0].mxu0 %v3815
  %v6757 = vpop.f32.mrb[0].mxu0
  %v6758 = vadd.f32 0.0, %v6757
  %v6759 = vpop.f32.mrb[0].mxu0
  %6760 = vmatprep.mubr.f32.mxu0 0.0
  %6761 = vmatmul.mubr.f32.gmra.mrb[0].mxu0 %v3817
  %v6762 = vpop.f32.mrb[0].mxu0
  %v6763 = vadd.f32 0.0, %v6762
  %v6764 = vpop.f32.mrb[0].mxu0
  %6765 = vmatprep.mubr.f32.mxu0 0.0
  %6766 = vmatmul.mubr.f32.gmra.mrb[0].mxu0 %v3819
  %v6767 = vpop.f32.mrb[0].mxu0
  %v6768 = vadd.f32 0.0, %v6767
  %v6769 = vpop.f32.mrb[0].mxu0
  %6770 = vmatprep.mubr.f32.mxu0 0.0
  %6771 = vmatmul.mubr.f32.gmra.mrb[0].mxu0 %v3821
  %v6772 = vpop.f32.mrb[0].mxu0
  %v6773 = vadd.f32 0.0, %v6772
  %v6774 = vpop.f32.mrb[0].mxu0
  %6775 = vmatprep.mubr.f32.mxu0 0.0
  %6776 = vmatmul.mubr.f32.gmra.mrb[0].mxu0 %v3823
  %v6777 = vpop.f32.mrb[0].mxu0
  %v6778 = vadd.f32 0.0, %v6777
  %v6779 = vpop.f32.mrb[0].mxu0
  %6780 = vmatprep.mubr.f32.mxu0 0.0
  %6781 = vmatmul.mubr.f32.gmra.mrb[0].mxu0 %v3825
  %v6782 = vpop.f32.mrb[0].mxu0
  %v6783 = vadd.f32 0.0, %v6782
  %v6784 = vpop.f32.mrb[0].mxu0
  %6785 = vmatprep.mubr.f32.mxu0 0.0
  %6786 = vmatmul.mubr.f32.gmra.mrb[0].mxu0 %v3827
  %v6787 = vpop.f32.mrb[0].mxu0
  %v6788 = vadd.f32 0.0, %v6787
  %v6789 = vpop.f32.mrb[0].mxu0
  %6790 = vmatprep.mubr.f32.mxu0 0.0
  %6791 = vmatmul.mubr.f32.gmra.mrb[0].mxu0 %v3829
  %v6792 = vpop.f32.mrb[0].mxu0
  %v6793 = vadd.f32 0.0, %v6792
  %v6794 = vpop.f32.mrb[0].mxu0
  %6795 = vmatprep.mubr.f32.mxu0 0.0
  %6796 = vmatmul.mubr.f32.gmra.mrb[0].mxu0 %v3831
  %v6797 = vpop.f32.mrb[0].mxu0
  %v6798 = vadd.f32 0.0, %v6797
  %v6799 = vpop.f32.mrb[0].mxu0
  %6800 = vmatprep.mubr.f32.mxu0 0.0
  %6801 = vmatmul.mubr.f32.gmra.mrb[0].mxu0 %v3833
  %v6802 = vpop.f32.mrb[0].mxu0
  %v6803 = vadd.f32 0.0, %v6802
  %v6804 = vpop.f32.mrb[0].mxu0
  %6805 = vmatprep.mubr.f32.mxu0 0.0
  %6806 = vmatmul.mubr.f32.gmra.mrb[0].mxu0 %v3835
  %v6807 = vpop.f32.mrb[0].mxu0
  %v6808 = vadd.f32 0.0, %v6807
  %v6809 = vpop.f32.mrb[0].mxu0
  %6810 = vmatprep.mubr.f32.mxu0 0.0
  %6811 = vmatmul.mubr.f32.gmra.mrb[0].mxu0 %v3837
  %v6812 = vpop.f32.mrb[0].mxu0
  %v6813 = vadd.f32 0.0, %v6812
  %v6814 = vpop.f32.mrb[0].mxu0
  %6815 = vmatprep.mubr.f32.mxu0 0.0
  %6816 = vmatmul.mubr.f32.gmra.mrb[0].mxu0 %v3839
  %v6817 = vpop.f32.mrb[0].mxu0
  %v6818 = vadd.f32 0.0, %v6817
  %v6819 = vpop.f32.mrb[0].mxu0
  %6820 = vmatprep.mubr.f32.mxu0 0.0
  %6821 = vmatmul.mubr.f32.gmra.mrb[0].mxu0 %v3841
  %v6822 = vpop.f32.mrb[0].mxu0
  %v6823 = vadd.f32 0.0, %v6822
  %v6824 = vpop.f32.mrb[0].mxu0
  %6825 = vmatprep.mubr.f32.mxu0 0.0
  %6826 = vmatmul.mubr.f32.gmra.mrb[0].mxu0 %v3843
  %v6827 = vpop.f32.mrb[0].mxu0
  %v6828 = vadd.f32 0.0, %v6827
  %v6829 = vpop.f32.mrb[0].mxu0
  %6830 = vmatprep.mubr.f32.mxu0 0.0
  %6831 = vmatmul.mubr.f32.gmra.mrb[0].mxu0 %v3845
  %v6832 = vpop.f32.mrb[0].mxu0
  %v6833 = vadd.f32 0.0, %v6832
  %v6834 = vpop.f32.mrb[0].mxu0
  %6835 = vmatprep.mubr.f32.mxu0 0.0
  %6836 = vmatmul.mubr.f32.gmra.mrb[0].mxu0 %v3847
  %v6837 = vpop.f32.mrb[0].mxu0
  %v6838 = vadd.f32 0.0, %v6837
  %v6839 = vpop.f32.mrb[0].mxu0
  %6840 = vmatprep.mubr.f32.mxu0 0.0
  %6841 = vmatmul.mubr.f32.gmra.mrb[0].mxu0 %v3849
  %v6842 = vpop.f32.mrb[0].mxu0
  %v6843 = vadd.f32 0.0, %v6842
  %v6844 = vpop.f32.mrb[0].mxu0
  %6845 = vmatprep.mubr.f32.mxu0 0.0
  %6846 = vmatmul.mubr.f32.gmra.mrb[0].mxu0 %v3851
  %v6847 = vpop.f32.mrb[0].mxu0
  %v6848 = vadd.f32 0.0, %v6847
  %v6849 = vpop.f32.mrb[0].mxu0
  %6850 = vmatprep.mubr.f32.mxu0 0.0
  %6851 = vmatmul.mubr.f32.gmra.mrb[0].mxu0 %v3853
  %v6852 = vpop.f32.mrb[0].mxu0
  %v6853 = vadd.f32 0.0, %v6852
  %v6854 = vpop.f32.mrb[0].mxu0
  %6855 = vmatprep.mubr.f32.mxu0 0.0
  %6856 = vmatmul.mubr.f32.gmra.mrb[0].mxu0 %v3855
  %v6857 = vpop.f32.mrb[0].mxu0
  %v6858 = vadd.f32 0.0, %v6857
  %v6859 = vpop.f32.mrb[0].mxu0
  %6860 = vmatprep.mubr.f32.mxu0 0.0
  %6861 = vmatmul.mubr.f32.gmra.mrb[0].mxu0 %v3857
  %v6862 = vpop.f32.mrb[0].mxu0
  %v6863 = vadd.f32 0.0, %v6862
  %v6864 = vpop.f32.mrb[0].mxu0
  %6865 = vmatprep.mubr.f32.mxu0 0.0
  %6866 = vmatmul.mubr.f32.gmra.mrb[0].mxu0 %v3859
  %v6867 = vpop.f32.mrb[0].mxu0
  %v6868 = vadd.f32 0.0, %v6867
  %v6869 = vpop.f32.mrb[0].mxu0
  %6870 = vmatprep.mubr.f32.mxu0 0.0
  %6871 = vmatmul.mubr.f32.gmra.mrb[0].mxu0 %v3861
  %v6872 = vpop.f32.mrb[0].mxu0
  %v6873 = vadd.f32 0.0, %v6872
  %v6874 = vpop.f32.mrb[0].mxu0
  %6875 = vmatprep.mubr.f32.mxu0 0.0
  %6876 = vmatmul.mubr.f32.gmra.mrb[0].mxu0 %v3863
  %v6877 = vpop.f32.mrb[0].mxu0
  %v6878 = vadd.f32 0.0, %v6877
  %v6879 = vpop.f32.mrb[0].mxu0
  %6880 = vmatprep.mubr.f32.mxu0 0.0
  %6881 = vmatmul.mubr.f32.gmra.mrb[0].mxu0 %v3865
  %v6882 = vpop.f32.mrb[0].mxu0
  %v6883 = vadd.f32 0.0, %v6882
  %v6884 = vpop.f32.mrb[0].mxu0
  %6885 = vmatprep.mubr.f32.mxu0 0.0
  %6886 = vmatmul.mubr.f32.gmra.mrb[0].mxu0 %v3867
  %v6887 = vpop.f32.mrb[0].mxu0
  %v6888 = vadd.f32 0.0, %v6887
  %v6889 = vpop.f32.mrb[0].mxu0
  %6890 = vmatprep.mubr.f32.mxu0 0.0
  %6891 = vmatmul.mubr.f32.gmra.mrb[0].mxu0 %v3869
  %v6892 = vpop.f32.mrb[0].mxu0
  %v6893 = vadd.f32 0.0, %v6892
  %v6894 = vpop.f32.mrb[0].mxu0
  %6895 = vmatprep.mubr.f32.mxu0 0.0
  %6896 = vmatmul.mubr.f32.gmra.mrb[0].mxu0 %v3871
  %v6897 = vpop.f32.mrb[0].mxu0
  %v6898 = vadd.f32 0.0, %v6897
  %v6899 = vpop.f32.mrb[0].mxu0
  %6900 = vmatprep.mubr.f32.mxu0 0.0
  %6901 = vmatmul.mubr.f32.gmra.mrb[0].mxu0 %v3873
  %v6902 = vpop.f32.mrb[0].mxu0
  %v6903 = vadd.f32 0.0, %v6902
  %v6904 = vpop.f32.mrb[0].mxu0
  %6905 = vmatprep.mubr.f32.mxu0 0.0
  %6906 = vmatmul.mubr.f32.gmra.mrb[0].mxu0 %v3875
  %v6907 = vpop.f32.mrb[0].mxu0
  %v6908 = vadd.f32 0.0, %v6907
  %v6909 = vpop.f32.mrb[0].mxu0
  %6910 = vmatprep.mubr.f32.mxu0 0.0
  %6911 = vmatmul.mubr.f32.gmra.mrb[0].mxu0 %v3877
  %v6912 = vpop.f32.mrb[0].mxu0
  %v6913 = vadd.f32 0.0, %v6912
  %v6914 = vpop.f32.mrb[0].mxu0
  %6915 = vmatprep.mubr.f32.mxu0 0.0
  %6916 = vmatmul.mubr.f32.gmra.mrb[0].mxu0 %v3879
  %v6917 = vpop.f32.mrb[0].mxu0
  %v6918 = vadd.f32 0.0, %v6917
  %v6919 = vpop.f32.mrb[0].mxu0
  %6920 = vmatprep.mubr.f32.mxu0 0.0
  %6921 = vmatmul.mubr.f32.gmra.mrb[0].mxu0 %v3881
  %v6922 = vpop.f32.mrb[0].mxu0
  %v6923 = vadd.f32 0.0, %v6922
  %v6924 = vpop.f32.mrb[0].mxu0
  %6925 = vmatprep.mubr.f32.mxu0 0.0
  %6926 = vmatmul.mubr.f32.gmra.mrb[0].mxu0 %v3883
  %v6927 = vpop.f32.mrb[0].mxu0
  %v6928 = vadd.f32 0.0, %v6927
  %v6929 = vpop.f32.mrb[0].mxu0
  %6930 = vmatprep.mubr.f32.mxu0 0.0
  %6931 = vmatmul.mubr.f32.gmra.mrb[0].mxu0 %v3885
  %v6932 = vpop.f32.mrb[0].mxu0
  %v6933 = vadd.f32 0.0, %v6932
  %v6934 = vpop.f32.mrb[0].mxu0
  %6935 = vmatprep.mubr.f32.mxu0 0.0
  %6936 = vmatmul.mubr.f32.gmra.mrb[0].mxu0 %v3887
  %v6937 = vpop.f32.mrb[0].mxu0
  %v6938 = vadd.f32 0.0, %v6937
  %v6939 = vpop.f32.mrb[0].mxu0
  %6940 = vmatprep.mubr.f32.mxu0 0.0
  %6941 = vmatmul.mubr.f32.gmra.mrb[0].mxu0 %v3889
  %v6942 = vpop.f32.mrb[0].mxu0
  %v6943 = vadd.f32 0.0, %v6942
  %v6944 = vpop.f32.mrb[0].mxu0
  %6945 = vmatprep.mubr.f32.mxu0 0.0
  %6946 = vmatmul.mubr.f32.gmra.mrb[0].mxu0 %v3891
  %v6947 = vpop.f32.mrb[0].mxu0
  %v6948 = vadd.f32 0.0, %v6947
  %v6949 = vpop.f32.mrb[0].mxu0
  %6950 = vmatprep.mubr.f32.mxu0 0.0
  %6951 = vmatmul.mubr.f32.gmra.mrb[0].mxu0 %v3893
  %v6952 = vpop.f32.mrb[0].mxu0
  %v6953 = vadd.f32 0.0, %v6952
  %v6954 = vpop.f32.mrb[0].mxu0
  %6955 = vmatprep.mubr.f32.mxu0 0.0
  %6956 = vmatmul.mubr.f32.gmra.mrb[0].mxu0 %v3895
  %v6957 = vpop.f32.mrb[0].mxu0
  %v6958 = vadd.f32 0.0, %v6957
  %v6959 = vpop.f32.mrb[0].mxu0
  %6960 = vmatprep.mubr.f32.mxu0 0.0
  %6961 = vmatmul.mubr.f32.gmra.mrb[0].mxu0 %v5246
  %v6962 = vpop.f32.mrb[0].mxu0
  %v6963 = vadd.f32 0.0, %v6962
  %v6964 = vpop.f32.mrb[0].mxu0
  %6965 = vmatprep.mubr.f32.mxu0 0.0
  %6966 = vmatmul.mubr.f32.gmra.mrb[0].mxu0 %v5248
  %v6967 = vpop.f32.mrb[0].mxu0
  %v6968 = vadd.f32 0.0, %v6967
  %v6969 = vpop.f32.mrb[0].mxu0
  %6970 = vmatprep.mubr.f32.mxu0 0.0
  %6971 = vmatmul.mubr.f32.gmra.mrb[0].mxu0 %v6599
  %v6972 = vpop.f32.mrb[0].mxu0
  %v6973 = vadd.f32 0.0, %v6972
  %v6974 = vpop.f32.mrb[0].mxu0
  %6975 = vmatprep.mubr.f32.mxu0 0.0
  %6976 = vmatmul.mubr.f32.gmra.mrb[0].mxu0 %v6601
  %v6977 = vpop.f32.mrb[0].mxu0
  %v6978 = vadd.f32 0.0, %v6977
  %v6979 = vpop.f32.mrb[0].mxu0
  %6980 = vdwg.mxu0
  %v6981 = vadd.f32 %v6529, %v6673
  %v6982 = vadd.f32 %v6530, %v6678
  %v6983 = vadd.f32 %v6531, %v6683
  %v6984 = vadd.f32 %v6532, %v6688
  %v6985 = vadd.f32 %v6533, %v6693
  %v6986 = vadd.f32 %v6534, %v6698
  %v6987 = vadd.f32 %v6535, %v6703
  %v6988 = vadd.f32 %v6536, %v6708
  %v6989 = vadd.f32 %v6537, %v6713
  %v6990 = vadd.f32 %v6538, %v6718
  %v6991 = vadd.f32 %v6539, %v6723
  %v6992 = vadd.f32 %v6540, %v6728
  %v6993 = vadd.f32 %v6541, %v6733
  %v6994 = vadd.f32 %v6542, %v6738
  %v6995 = vadd.f32 %v6543, %v6743
  %v6996 = vadd.f32 %v6544, %v6748
  %v6997 = vadd.f32 %v6545, %v6753
  %v6998 = vadd.f32 %v6546, %v6758
  %v6999 = vadd.f32 %v6547, %v6763
  %v7000 = vadd.f32 %v6548, %v6768
  %v7001 = vadd.f32 %v6549, %v6773
  %v7002 = vadd.f32 %v6550, %v6778
  %v7003 = vadd.f32 %v6551, %v6783
  %v7004 = vadd.f32 %v6552, %v6788
  %v7005 = vadd.f32 %v6553, %v6793
  %v7006 = vadd.f32 %v6554, %v6798
  %v7007 = vadd.f32 %v6555, %v6803
  %v7008 = vadd.f32 %v6556, %v6808
  %v7009 = vadd.f32 %v6557, %v6813
  %v7010 = vadd.f32 %v6558, %v6818
  %v7011 = vadd.f32 %v6559, %v6823
  %v7012 = vadd.f32 %v6560, %v6828
  %v7013 = vadd.f32 %v6561, %v6833
  %v7014 = vadd.f32 %v6562, %v6838
  %v7015 = vadd.f32 %v6563, %v6843
  %v7016 = vadd.f32 %v6564, %v6848
  %v7017 = vadd.f32 %v6565, %v6853
  %v7018 = vadd.f32 %v6566, %v6858
  %v7019 = vadd.f32 %v6567, %v6863
  %v7020 = vadd.f32 %v6568, %v6868
  %v7021 = vadd.f32 %v6569, %v6873
  %v7022 = vadd.f32 %v6570, %v6878
  %v7023 = vadd.f32 %v6571, %v6883
  %v7024 = vadd.f32 %v6572, %v6888
  %v7025 = vadd.f32 %v6573, %v6893
  %v7026 = vadd.f32 %v6574, %v6898
  %v7027 = vadd.f32 %v6575, %v6903
  %v7028 = vadd.f32 %v6576, %v6908
  %v7029 = vadd.f32 %v6577, %v6913
  %v7030 = vadd.f32 %v6578, %v6918
  %v7031 = vadd.f32 %v6579, %v6923
  %v7032 = vadd.f32 %v6580, %v6928
  %v7033 = vadd.f32 %v6581, %v6933
  %v7034 = vadd.f32 %v6582, %v6938
  %v7035 = vadd.f32 %v6583, %v6943
  %v7036 = vadd.f32 %v6584, %v6948
  %v7037 = vadd.f32 %v6585, %v6953
  %v7038 = vadd.f32 %v6586, %v6958
  %v7039 = vadd.f32 %v6587, %v6963
  %v7040 = vadd.f32 %v6588, %v6968
  %v7041 = vadd.f32 %v6589, %v6973
  %v7042 = vadd.f32 %v6590, %v6978
  %v7044 = vlaneseq
  %v7045 = vshrl.u32 %v7044, 7
  %v7046 = vsub.s32 0, %v7045
  %v7047 = vrot.slane %v101, %v7046
  %v7049 = vadd.f32 %v6981, %v7047
  %v7050 = vadd.f32 %v6982, %v7047
  %v7051 = vadd.f32 %v6983, %v7047
  %v7052 = vadd.f32 %v6984, %v7047
  %v7053 = vadd.f32 %v6985, %v7047
  %v7054 = vadd.f32 %v6986, %v7047
  %v7055 = vadd.f32 %v6987, %v7047
  %v7056 = vadd.f32 %v6988, %v7047
  %v7057 = vadd.f32 %v6989, %v7047
  %v7058 = vadd.f32 %v6990, %v7047
  %v7059 = vadd.f32 %v6991, %v7047
  %v7060 = vadd.f32 %v6992, %v7047
  %v7061 = vadd.f32 %v6993, %v7047
  %v7062 = vadd.f32 %v6994, %v7047
  %v7063 = vadd.f32 %v6995, %v7047
  %v7064 = vadd.f32 %v6996, %v7047
  %v7065 = vadd.f32 %v6997, %v7047
  %v7066 = vadd.f32 %v6998, %v7047
  %v7067 = vadd.f32 %v6999, %v7047
  %v7068 = vadd.f32 %v7000, %v7047
  %v7069 = vadd.f32 %v7001, %v7047
  %v7070 = vadd.f32 %v7002, %v7047
  %v7071 = vadd.f32 %v7003, %v7047
  %v7072 = vadd.f32 %v7004, %v7047
  %v7073 = vadd.f32 %v7005, %v7047
  %v7074 = vadd.f32 %v7006, %v7047
  %v7075 = vadd.f32 %v7007, %v7047
  %v7076 = vadd.f32 %v7008, %v7047
  %v7077 = vadd.f32 %v7009, %v7047
  %v7078 = vadd.f32 %v7010, %v7047
  %v7079 = vadd.f32 %v7011, %v7047
  %v7080 = vadd.f32 %v7012, %v7047
  %v7081 = vadd.f32 %v7013, %v7047
  %v7082 = vadd.f32 %v7014, %v7047
  %v7083 = vadd.f32 %v7015, %v7047
  %v7084 = vadd.f32 %v7016, %v7047
  %v7085 = vadd.f32 %v7017, %v7047
  %v7086 = vadd.f32 %v7018, %v7047
  %v7087 = vadd.f32 %v7019, %v7047
  %v7088 = vadd.f32 %v7020, %v7047
  %v7089 = vadd.f32 %v7021, %v7047
  %v7090 = vadd.f32 %v7022, %v7047
  %v7091 = vadd.f32 %v7023, %v7047
  %v7092 = vadd.f32 %v7024, %v7047
  %v7093 = vadd.f32 %v7025, %v7047
  %v7094 = vadd.f32 %v7026, %v7047
  %v7095 = vadd.f32 %v7027, %v7047
  %v7096 = vadd.f32 %v7028, %v7047
  %v7097 = vadd.f32 %v7029, %v7047
  %v7098 = vadd.f32 %v7030, %v7047
  %v7099 = vadd.f32 %v7031, %v7047
  %v7100 = vadd.f32 %v7032, %v7047
  %v7101 = vadd.f32 %v7033, %v7047
  %v7102 = vadd.f32 %v7034, %v7047
  %v7103 = vadd.f32 %v7035, %v7047
  %v7104 = vadd.f32 %v7036, %v7047
  %v7105 = vadd.f32 %v7037, %v7047
  %v7106 = vadd.f32 %v7038, %v7047
  %v7107 = vadd.f32 %v7039, %v7047
  %v7108 = vadd.f32 %v7040, %v7047
  %v7109 = vadd.f32 %v7041, %v7047
  %v7110 = vadd.f32 %v7042, %v7047
  %v7171 = vrot.slane %v7049, 1
  %v7172 = vrot.slane %v7050, 1
  %v7173 = vsel %vm866, %v7171, %v7172
  %v7174 = vrot.slane %v7051, 1
  %v7175 = vsel %vm866, %v7172, %v7174
  %v7176 = vrot.slane %v7052, 1
  %v7177 = vsel %vm866, %v7174, %v7176
  %v7178 = vrot.slane %v7053, 1
  %v7179 = vsel %vm866, %v7176, %v7178
  %v7180 = vrot.slane %v7054, 1
  %v7181 = vsel %vm866, %v7178, %v7180
  %v7182 = vrot.slane %v7055, 1
  %v7183 = vsel %vm866, %v7180, %v7182
  %v7184 = vrot.slane %v7056, 1
  %v7185 = vsel %vm866, %v7182, %v7184
  %v7186 = vrot.slane %v7057, 1
  %v7187 = vsel %vm866, %v7184, %v7186
  %v7188 = vrot.slane %v7058, 1
  %v7189 = vsel %vm866, %v7186, %v7188
  %v7190 = vrot.slane %v7059, 1
  %v7191 = vsel %vm866, %v7188, %v7190
  %v7192 = vrot.slane %v7060, 1
  %v7193 = vsel %vm866, %v7190, %v7192
  %v7194 = vrot.slane %v7061, 1
  %v7195 = vsel %vm866, %v7192, %v7194
  %v7196 = vrot.slane %v7062, 1
  %v7197 = vsel %vm866, %v7194, %v7196
  %v7198 = vrot.slane %v7063, 1
  %v7199 = vsel %vm866, %v7196, %v7198
  %v7200 = vrot.slane %v7064, 1
  %v7201 = vsel %vm866, %v7198, %v7200
  %v7202 = vrot.slane %v7065, 1
  %v7203 = vsel %vm866, %v7200, %v7202
  %v7204 = vrot.slane %v7066, 1
  %v7205 = vsel %vm866, %v7202, %v7204
  %v7206 = vrot.slane %v7067, 1
  %v7207 = vsel %vm866, %v7204, %v7206
  %v7208 = vrot.slane %v7068, 1
  %v7209 = vsel %vm866, %v7206, %v7208
  %v7210 = vrot.slane %v7069, 1
  %v7211 = vsel %vm866, %v7208, %v7210
  %v7212 = vrot.slane %v7070, 1
  %v7213 = vsel %vm866, %v7210, %v7212
  %v7214 = vrot.slane %v7071, 1
  %v7215 = vsel %vm866, %v7212, %v7214
  %v7216 = vrot.slane %v7072, 1
  %v7217 = vsel %vm866, %v7214, %v7216
  %v7218 = vrot.slane %v7073, 1
  %v7219 = vsel %vm866, %v7216, %v7218
  %v7220 = vrot.slane %v7074, 1
  %v7221 = vsel %vm866, %v7218, %v7220
  %v7222 = vrot.slane %v7075, 1
  %v7223 = vsel %vm866, %v7220, %v7222
  %v7224 = vrot.slane %v7076, 1
  %v7225 = vsel %vm866, %v7222, %v7224
  %v7226 = vrot.slane %v7077, 1
  %v7227 = vsel %vm866, %v7224, %v7226
  %v7228 = vrot.slane %v7078, 1
  %v7229 = vsel %vm866, %v7226, %v7228
  %v7230 = vrot.slane %v7079, 1
  %v7231 = vsel %vm866, %v7228, %v7230
  %v7232 = vrot.slane %v7080, 1
  %v7233 = vsel %vm866, %v7230, %v7232
  %v7234 = vrot.slane %v7081, 1
  %v7235 = vsel %vm866, %v7232, %v7234
  %v7236 = vrot.slane %v7082, 1
  %v7237 = vsel %vm866, %v7234, %v7236
  %v7238 = vrot.slane %v7083, 1
  %v7239 = vsel %vm866, %v7236, %v7238
  %v7240 = vrot.slane %v7084, 1
  %v7241 = vsel %vm866, %v7238, %v7240
  %v7242 = vrot.slane %v7085, 1
  %v7243 = vsel %vm866, %v7240, %v7242
  %v7244 = vrot.slane %v7086, 1
  %v7245 = vsel %vm866, %v7242, %v7244
  %v7246 = vrot.slane %v7087, 1
  %v7247 = vsel %vm866, %v7244, %v7246
  %v7248 = vrot.slane %v7088, 1
  %v7249 = vsel %vm866, %v7246, %v7248
  %v7250 = vrot.slane %v7089, 1
  %v7251 = vsel %vm866, %v7248, %v7250
  %v7252 = vrot.slane %v7090, 1
  %v7253 = vsel %vm866, %v7250, %v7252
  %v7254 = vrot.slane %v7091, 1
  %v7255 = vsel %vm866, %v7252, %v7254
  %v7256 = vrot.slane %v7092, 1
  %v7257 = vsel %vm866, %v7254, %v7256
  %v7258 = vrot.slane %v7093, 1
  %v7259 = vsel %vm866, %v7256, %v7258
  %v7260 = vrot.slane %v7094, 1
  %v7261 = vsel %vm866, %v7258, %v7260
  %v7262 = vrot.slane %v7095, 1
  %v7263 = vsel %vm866, %v7260, %v7262
  %v7264 = vrot.slane %v7096, 1
  %v7265 = vsel %vm866, %v7262, %v7264
  %v7266 = vrot.slane %v7097, 1
  %v7267 = vsel %vm866, %v7264, %v7266
  %v7268 = vrot.slane %v7098, 1
  %v7269 = vsel %vm866, %v7266, %v7268
  %v7270 = vrot.slane %v7099, 1
  %v7271 = vsel %vm866, %v7268, %v7270
  %v7272 = vrot.slane %v7100, 1
  %v7273 = vsel %vm866, %v7270, %v7272
  %v7274 = vrot.slane %v7101, 1
  %v7275 = vsel %vm866, %v7272, %v7274
  %v7276 = vrot.slane %v7102, 1
  %v7277 = vsel %vm866, %v7274, %v7276
  %v7278 = vrot.slane %v7103, 1
  %v7279 = vsel %vm866, %v7276, %v7278
  %v7280 = vrot.slane %v7104, 1
  %v7281 = vsel %vm866, %v7278, %v7280
  %v7282 = vrot.slane %v7105, 1
  %v7283 = vsel %vm866, %v7280, %v7282
  %v7284 = vrot.slane %v7106, 1
  %v7285 = vsel %vm866, %v7282, %v7284
  %v7286 = vrot.slane %v7107, 1
  %v7287 = vsel %vm866, %v7284, %v7286
  %v7288 = vrot.slane %v7108, 1
  %v7289 = vsel %vm866, %v7286, %v7288
  %v7350 = vmax.f32 %v7049, %v7173
  %v7351 = vmax.f32 %v7050, %v7175
  %v7352 = vmax.f32 %v7051, %v7177
  %v7353 = vmax.f32 %v7052, %v7179
  %v7354 = vmax.f32 %v7053, %v7181
  %v7355 = vmax.f32 %v7054, %v7183
  %v7356 = vmax.f32 %v7055, %v7185
  %v7357 = vmax.f32 %v7056, %v7187
  %v7358 = vmax.f32 %v7057, %v7189
  %v7359 = vmax.f32 %v7058, %v7191
  %v7360 = vmax.f32 %v7059, %v7193
  %v7361 = vmax.f32 %v7060, %v7195
  %v7362 = vmax.f32 %v7061, %v7197
  %v7363 = vmax.f32 %v7062, %v7199
  %v7364 = vmax.f32 %v7063, %v7201
  %v7365 = vmax.f32 %v7064, %v7203
  %v7366 = vmax.f32 %v7065, %v7205
  %v7367 = vmax.f32 %v7066, %v7207
  %v7368 = vmax.f32 %v7067, %v7209
  %v7369 = vmax.f32 %v7068, %v7211
  %v7370 = vmax.f32 %v7069, %v7213
  %v7371 = vmax.f32 %v7070, %v7215
  %v7372 = vmax.f32 %v7071, %v7217
  %v7373 = vmax.f32 %v7072, %v7219
  %v7374 = vmax.f32 %v7073, %v7221
  %v7375 = vmax.f32 %v7074, %v7223
  %v7376 = vmax.f32 %v7075, %v7225
  %v7377 = vmax.f32 %v7076, %v7227
  %v7378 = vmax.f32 %v7077, %v7229
  %v7379 = vmax.f32 %v7078, %v7231
  %v7380 = vmax.f32 %v7079, %v7233
  %v7381 = vmax.f32 %v7080, %v7235
  %v7382 = vmax.f32 %v7081, %v7237
  %v7383 = vmax.f32 %v7082, %v7239
  %v7384 = vmax.f32 %v7083, %v7241
  %v7385 = vmax.f32 %v7084, %v7243
  %v7386 = vmax.f32 %v7085, %v7245
  %v7387 = vmax.f32 %v7086, %v7247
  %v7388 = vmax.f32 %v7087, %v7249
  %v7389 = vmax.f32 %v7088, %v7251
  %v7390 = vmax.f32 %v7089, %v7253
  %v7391 = vmax.f32 %v7090, %v7255
  %v7392 = vmax.f32 %v7091, %v7257
  %v7393 = vmax.f32 %v7092, %v7259
  %v7394 = vmax.f32 %v7093, %v7261
  %v7395 = vmax.f32 %v7094, %v7263
  %v7396 = vmax.f32 %v7095, %v7265
  %v7397 = vmax.f32 %v7096, %v7267
  %v7398 = vmax.f32 %v7097, %v7269
  %v7399 = vmax.f32 %v7098, %v7271
  %v7400 = vmax.f32 %v7099, %v7273
  %v7401 = vmax.f32 %v7100, %v7275
  %v7402 = vmax.f32 %v7101, %v7277
  %v7403 = vmax.f32 %v7102, %v7279
  %v7404 = vmax.f32 %v7103, %v7281
  %v7405 = vmax.f32 %v7104, %v7283
  %v7406 = vmax.f32 %v7105, %v7285
  %v7407 = vmax.f32 %v7106, %v7287
  %v7408 = vmax.f32 %v7107, %v7289
  %v7409 = vmax.f32 %v7108, %v7288
  %v7412 = vrot.slane %v7109, 1
  %v7413 = vsel %vm866, %v7288, %v7412
  %v7414 = vrot.slane %v7110, 1
  %v7415 = vsel %vm866, %v7412, %v7414
  %v7419 = vmax.f32 %v7108, %v7413
  %v7420 = vmax.f32 %v7109, %v7415
  %v7421 = vmax.f32 %v7110, %v7414
  %v7422 = vmax.f32 %v7350, %v7352
  %v7423 = vmax.f32 %v7351, %v7353
  %v7424 = vmax.f32 %v7352, %v7354
  %v7425 = vmax.f32 %v7353, %v7355
  %v7426 = vmax.f32 %v7354, %v7356
  %v7427 = vmax.f32 %v7355, %v7357
  %v7428 = vmax.f32 %v7356, %v7358
  %v7429 = vmax.f32 %v7357, %v7359
  %v7430 = vmax.f32 %v7358, %v7360
  %v7431 = vmax.f32 %v7359, %v7361
  %v7432 = vmax.f32 %v7360, %v7362
  %v7433 = vmax.f32 %v7361, %v7363
  %v7434 = vmax.f32 %v7362, %v7364
  %v7435 = vmax.f32 %v7363, %v7365
  %v7436 = vmax.f32 %v7364, %v7366
  %v7437 = vmax.f32 %v7365, %v7367
  %v7438 = vmax.f32 %v7366, %v7368
  %v7439 = vmax.f32 %v7367, %v7369
  %v7440 = vmax.f32 %v7368, %v7370
  %v7441 = vmax.f32 %v7369, %v7371
  %v7442 = vmax.f32 %v7370, %v7372
  %v7443 = vmax.f32 %v7371, %v7373
  %v7444 = vmax.f32 %v7372, %v7374
  %v7445 = vmax.f32 %v7373, %v7375
  %v7446 = vmax.f32 %v7374, %v7376
  %v7447 = vmax.f32 %v7375, %v7377
  %v7448 = vmax.f32 %v7376, %v7378
  %v7449 = vmax.f32 %v7377, %v7379
  %v7450 = vmax.f32 %v7378, %v7380
  %v7451 = vmax.f32 %v7379, %v7381
  %v7452 = vmax.f32 %v7380, %v7382
  %v7453 = vmax.f32 %v7381, %v7383
  %v7454 = vmax.f32 %v7382, %v7384
  %v7455 = vmax.f32 %v7383, %v7385
  %v7456 = vmax.f32 %v7384, %v7386
  %v7457 = vmax.f32 %v7385, %v7387
  %v7458 = vmax.f32 %v7386, %v7388
  %v7459 = vmax.f32 %v7387, %v7389
  %v7460 = vmax.f32 %v7388, %v7390
  %v7461 = vmax.f32 %v7389, %v7391
  %v7462 = vmax.f32 %v7390, %v7392
  %v7463 = vmax.f32 %v7391, %v7393
  %v7464 = vmax.f32 %v7392, %v7394
  %v7465 = vmax.f32 %v7393, %v7395
  %v7466 = vmax.f32 %v7394, %v7396
  %v7467 = vmax.f32 %v7395, %v7397
  %v7468 = vmax.f32 %v7396, %v7398
  %v7469 = vmax.f32 %v7397, %v7399
  %v7470 = vmax.f32 %v7398, %v7400
  %v7471 = vmax.f32 %v7399, %v7401
  %v7472 = vmax.f32 %v7400, %v7402
  %v7473 = vmax.f32 %v7401, %v7403
  %v7474 = vmax.f32 %v7402, %v7404
  %v7475 = vmax.f32 %v7403, %v7405
  %v7476 = vmax.f32 %v7404, %v7406
  %v7477 = vmax.f32 %v7405, %v7407
  %v7478 = vmax.f32 %v7406, %v7408
  %v7479 = vmax.f32 %v7407, %v7419
  %v7480 = vmax.f32 %v7408, %v7420
  %v7481 = vmax.f32 %v7409, %v7421
  %v7482 = vmax.f32 %v7422, 0.0
  %v7483 = vmax.f32 %v7423, 0.0
  %v7484 = vmax.f32 %v7424, 0.0
  %v7485 = vmax.f32 %v7425, 0.0
  %v7486 = vmax.f32 %v7426, 0.0
  %v7487 = vmax.f32 %v7427, 0.0
  %v7488 = vmax.f32 %v7428, 0.0
  %v7489 = vmax.f32 %v7429, 0.0
  %v7490 = vmax.f32 %v7430, 0.0
  %v7491 = vmax.f32 %v7431, 0.0
  %v7492 = vmax.f32 %v7432, 0.0
  %v7493 = vmax.f32 %v7433, 0.0
  %v7494 = vmax.f32 %v7434, 0.0
  %v7495 = vmax.f32 %v7435, 0.0
  %v7496 = vmax.f32 %v7436, 0.0
  %v7497 = vmax.f32 %v7437, 0.0
  %v7498 = vmax.f32 %v7438, 0.0
  %v7499 = vmax.f32 %v7439, 0.0
  %v7500 = vmax.f32 %v7440, 0.0
  %v7501 = vmax.f32 %v7441, 0.0
  %v7502 = vmax.f32 %v7442, 0.0
  %v7503 = vmax.f32 %v7443, 0.0
  %v7504 = vmax.f32 %v7444, 0.0
  %v7505 = vmax.f32 %v7445, 0.0
  %v7506 = vmax.f32 %v7446, 0.0
  %v7507 = vmax.f32 %v7447, 0.0
  %v7508 = vmax.f32 %v7448, 0.0
  %v7509 = vmax.f32 %v7449, 0.0
  %v7510 = vmax.f32 %v7450, 0.0
  %v7511 = vmax.f32 %v7451, 0.0
  %v7512 = vmax.f32 %v7452, 0.0
  %v7513 = vmax.f32 %v7453, 0.0
  %v7514 = vmax.f32 %v7454, 0.0
  %v7515 = vmax.f32 %v7455, 0.0
  %v7516 = vmax.f32 %v7456, 0.0
  %v7517 = vmax.f32 %v7457, 0.0
  %v7518 = vmax.f32 %v7458, 0.0
  %v7519 = vmax.f32 %v7459, 0.0
  %v7520 = vmax.f32 %v7460, 0.0
  %v7521 = vmax.f32 %v7461, 0.0
  %v7522 = vmax.f32 %v7462, 0.0
  %v7523 = vmax.f32 %v7463, 0.0
  %v7524 = vmax.f32 %v7464, 0.0
  %v7525 = vmax.f32 %v7465, 0.0
  %v7526 = vmax.f32 %v7466, 0.0
  %v7527 = vmax.f32 %v7467, 0.0
  %v7528 = vmax.f32 %v7468, 0.0
  %v7529 = vmax.f32 %v7469, 0.0
  %v7530 = vmax.f32 %v7470, 0.0
  %v7531 = vmax.f32 %v7471, 0.0
  %v7532 = vmax.f32 %v7472, 0.0
  %v7533 = vmax.f32 %v7473, 0.0
  %v7534 = vmax.f32 %v7474, 0.0
  %v7535 = vmax.f32 %v7475, 0.0
  %v7536 = vmax.f32 %v7476, 0.0
  %v7537 = vmax.f32 %v7477, 0.0
  %v7538 = vmax.f32 %v7478, 0.0
  %v7539 = vmax.f32 %v7479, 0.0
  %v7540 = vmax.f32 %v7480, 0.0
  %v7541 = vmax.f32 %v7481, 0.0
  %vm7542 = vcmask 162816
  %7543 = vst.msk [vmem:[%s8] sm:$0xff] %vm7542, %v7482
  %7544 = vst.msk [vmem:[%s8 + $0x8] sm:$0xff] %vm7542, %v7483
  %7545 = vst.msk [vmem:[%s8 + $0x10] sm:$0xff] %vm7542, %v7484
  %7546 = vst.msk [vmem:[%s8 + $0x18] sm:$0xff] %vm7542, %v7485
  %7547 = vst.msk [vmem:[%s8 + $0x20] sm:$0xff] %vm7542, %v7486
  %7548 = vst.msk [vmem:[%s8 + $0x28] sm:$0xff] %vm7542, %v7487
  %7549 = vst.msk [vmem:[%s8 + $0x30] sm:$0xff] %vm7542, %v7488
  %7550 = vst.msk [vmem:[%s8 + $0x38] sm:$0xff] %vm7542, %v7489
  %7551 = vst.msk [vmem:[%s8 + $0x40] sm:$0xff] %vm7542, %v7490
  %7552 = vst.msk [vmem:[%s8 + $0x48] sm:$0xff] %vm7542, %v7491
  %7553 = vst.msk [vmem:[%s8 + $0x50] sm:$0xff] %vm7542, %v7492
  %7554 = vst.msk [vmem:[%s8 + $0x58] sm:$0xff] %vm7542, %v7493
  %7555 = vst.msk [vmem:[%s8 + $0x60] sm:$0xff] %vm7542, %v7494
  %7556 = vst.msk [vmem:[%s8 + $0x68] sm:$0xff] %vm7542, %v7495
  %7557 = vst.msk [vmem:[%s8 + $0x70] sm:$0xff] %vm7542, %v7496
  %7558 = vst.msk [vmem:[%s8 + $0x78] sm:$0xff] %vm7542, %v7497
  %7559 = vst.msk [vmem:[%s8 + $0x80] sm:$0xff] %vm7542, %v7498
  %7560 = vst.msk [vmem:[%s8 + $0x88] sm:$0xff] %vm7542, %v7499
  %7561 = vst.msk [vmem:[%s8 + $0x90] sm:$0xff] %vm7542, %v7500
  %7562 = vst.msk [vmem:[%s8 + $0x98] sm:$0xff] %vm7542, %v7501
  %7563 = vst.msk [vmem:[%s8 + $0xa0] sm:$0xff] %vm7542, %v7502
  %7564 = vst.msk [vmem:[%s8 + $0xa8] sm:$0xff] %vm7542, %v7503
  %7565 = vst.msk [vmem:[%s8 + $0xb0] sm:$0xff] %vm7542, %v7504
  %7566 = vst.msk [vmem:[%s8 + $0xb8] sm:$0xff] %vm7542, %v7505
  %7567 = vst.msk [vmem:[%s8 + $0xc0] sm:$0xff] %vm7542, %v7506
  %7568 = vst.msk [vmem:[%s8 + $0xc8] sm:$0xff] %vm7542, %v7507
  %7569 = vst.msk [vmem:[%s8 + $0xd0] sm:$0xff] %vm7542, %v7508
  %7570 = vst.msk [vmem:[%s8 + $0xd8] sm:$0xff] %vm7542, %v7509
  %7571 = vst.msk [vmem:[%s8 + $0xe0] sm:$0xff] %vm7542, %v7510
  %7572 = vst.msk [vmem:[%s8 + $0xe8] sm:$0xff] %vm7542, %v7511
  %7573 = vst.msk [vmem:[%s8 + $0xf0] sm:$0xff] %vm7542, %v7512
  %7574 = vst.msk [vmem:[%s8 + $0xf8] sm:$0xff] %vm7542, %v7513
  %7575 = vst.msk [vmem:[%s8 + $0x100] sm:$0xff] %vm7542, %v7514
  %7576 = vst.msk [vmem:[%s8 + $0x108] sm:$0xff] %vm7542, %v7515
  %7577 = vst.msk [vmem:[%s8 + $0x110] sm:$0xff] %vm7542, %v7516
  %7578 = vst.msk [vmem:[%s8 + $0x118] sm:$0xff] %vm7542, %v7517
  %7579 = vst.msk [vmem:[%s8 + $0x120] sm:$0xff] %vm7542, %v7518
  %7580 = vst.msk [vmem:[%s8 + $0x128] sm:$0xff] %vm7542, %v7519
  %7581 = vst.msk [vmem:[%s8 + $0x130] sm:$0xff] %vm7542, %v7520
  %7582 = vst.msk [vmem:[%s8 + $0x138] sm:$0xff] %vm7542, %v7521
  %7583 = vst.msk [vmem:[%s8 + $0x140] sm:$0xff] %vm7542, %v7522
  %7584 = vst.msk [vmem:[%s8 + $0x148] sm:$0xff] %vm7542, %v7523
  %7585 = vst.msk [vmem:[%s8 + $0x150] sm:$0xff] %vm7542, %v7524
  %7586 = vst.msk [vmem:[%s8 + $0x158] sm:$0xff] %vm7542, %v7525
  %7587 = vst.msk [vmem:[%s8 + $0x160] sm:$0xff] %vm7542, %v7526
  %7588 = vst.msk [vmem:[%s8 + $0x168] sm:$0xff] %vm7542, %v7527
  %7589 = vst.msk [vmem:[%s8 + $0x170] sm:$0xff] %vm7542, %v7528
  %7590 = vst.msk [vmem:[%s8 + $0x178] sm:$0xff] %vm7542, %v7529
  %7591 = vst.msk [vmem:[%s8 + $0x180] sm:$0xff] %vm7542, %v7530
  %7592 = vst.msk [vmem:[%s8 + $0x188] sm:$0xff] %vm7542, %v7531
  %7593 = vst.msk [vmem:[%s8 + $0x190] sm:$0xff] %vm7542, %v7532
  %7594 = vst.msk [vmem:[%s8 + $0x198] sm:$0xff] %vm7542, %v7533
  %7595 = vst.msk [vmem:[%s8 + $0x1a0] sm:$0xff] %vm7542, %v7534
  %7596 = vst.msk [vmem:[%s8 + $0x1a8] sm:$0xff] %vm7542, %v7535
  %7597 = vst.msk [vmem:[%s8 + $0x1b0] sm:$0xff] %vm7542, %v7536
  %7598 = vst.msk [vmem:[%s8 + $0x1b8] sm:$0xff] %vm7542, %v7537
  %7599 = vst.msk [vmem:[%s8 + $0x1c0] sm:$0xff] %vm7542, %v7538
  %7600 = vst.msk [vmem:[%s8 + $0x1c8] sm:$0xff] %vm7542, %v7539
  %7601 = vst.msk [vmem:[%s8 + $0x1d0] sm:$0xff] %vm7542, %v7540
  %vm7602 = vcmask 160768
  %7603 = vst.msk [vmem:[%s8 + $0x1d8] sm:$0x3f] %vm7602, %v7541
  // Predicated region
  $region34: #{tpu_custom_call.1} parent=0 // pred_check
    _
  $region35: #{tpu_custom_call.1} parent=0 // pred_check_branch
    %7605 = sbr.rel (0) target = $region37
  $region36: #{tpu_custom_call.1} parent=0 // pred_region
    _
  $region37: #{tpu_custom_call.1} parent=0 // pred_fallthru
    _
  // Predicated region
  $region38: #{tpu_custom_call.1} parent=0 // pred_check
    _
  $region39: #{tpu_custom_call.1} parent=0 // pred_check_branch
    %7607 = sbr.rel (0) target = $region41
  $region40: #{tpu_custom_call.1} parent=0 // pred_region
    _
  $region41: #{tpu_custom_call.1} parent=0 // pred_fallthru
    _

</llo_original>
